<compile_context>
chip_gen: v5e
topology: v5e:2x2
jax: 0.10.0
libtpu: 0.0.40
codegen_flags: <defaults>
</compile_context>

<pallas_src>
import math

import jax
import jax.numpy as jnp
from jax.experimental import pallas as pl
from jax.experimental.pallas import tpu as pltpu

IN_OUT_DIM = 33
LATENT_DIM = 2
BN_EPS = 1e-5
LANE = 128
SUBLANE = 8  # f32 activation sublane granularity


def _round_up(n, m):
    return ((n + m - 1) // m) * m


def _choose_batch_tiling(B, tile_b_max, *, min_steps=2):
    """Pick a batch tile that (a) avoids padding B up to a huge fixed tile and
    (b) yields at least `min_steps` grid steps when B is large enough, so both
    v7x TensorCores get work under "parallel" dimension semantics."""
    b8 = _round_up(max(B, 1), SUBLANE)
    n_steps = max(pl.cdiv(b8, tile_b_max), 1)
    if b8 >= min_steps * SUBLANE:
        n_steps = max(n_steps, min_steps)
    tile = _round_up(pl.cdiv(b8, n_steps), SUBLANE)
    tile = max(min(tile, tile_b_max), SUBLANE)
    b_pad = _round_up(b8, tile)
    return tile, b_pad


def _make_kernel(has_bn_flags):
    """Fused MLP kernel for a static sequence of Linear [+ ReLU + folded BN] layers."""

    def kernel(*refs):
        x_ref = refs[0]
        o_ref = refs[-1]
        prm = refs[1:-1]

        h = x_ref[...]                      # (tile_b, 128) f32
        idx = 0
        for has_bn in has_bn_flags:
            w = prm[idx][...]               # (din_p, dout_p) matmul dtype
            b = prm[idx + 1][...]           # (1, dout_p) f32
            idx += 2
            z = jnp.dot(h.astype(w.dtype), w,
                        preferred_element_type=jnp.float32) + b
            if has_bn:
                a = prm[idx][...]           # (1, dout_p) f32
                c = prm[idx + 1][...]       # (1, dout_p) f32
                idx += 2
                # ReLU then eval-mode BatchNorm folded to scale/shift (f32).
                z = jnp.maximum(z, 0.0) * a + c
            h = z
        o_ref[...] = h.astype(o_ref.dtype)

    return kernel


def autoencoder_forward(x, params, *, tile_b=512, matmul_dtype=jnp.bfloat16):
    """x: (B, 33) float32.

    params: list of dicts {'w': (in, out), 'b': (out,),
                           'bn': None | (gamma, beta, running_mean, running_var)}
    Weights are stored transposed relative to PyTorch: (in_dim, out_dim).

    matmul_dtype=bf16 is the production default on v5e, v6e and v7x alike (the
    MXU is bf16-native on all three; f32 operands cost extra MXU passes and
    double resident-weight VMEM).  Use matmul_dtype=f32 only for validation.
    """
    B, D = x.shape
    assert D == IN_OUT_DIM

    in_pad = _round_up(IN_OUT_DIM, LANE)     # 128
    out_pad = _round_up(IN_OUT_DIM, LANE)    # 128

    tile_b_eff, b_pad = _choose_batch_tiling(B, tile_b)

    # Pad batch (to the adaptive tile only) + input features to lane-dense shapes.
    x_p = jnp.zeros((b_pad, in_pad), jnp.float32).at[:B, :D].set(x)

    flat_params = []
    has_bn_flags = []
    matmul_flops = 0
    for layer in params:
        w = layer["w"]
        b = layer["b"]
        din, dout = w.shape
        din_p = _round_up(din, LANE)
        dout_p = _round_up(dout, LANE)
        matmul_flops += 2 * b_pad * din_p * dout_p

        w_p = (jnp.zeros((din_p, dout_p), jnp.float32)
               .at[:din, :dout].set(w).astype(matmul_dtype))
        b_p = jnp.zeros((1, dout_p), jnp.float32).at[0, :dout].set(b)
        flat_params += [w_p, b_p]

        bn = layer["bn"]
        has_bn_flags.append(bn is not None)
        if bn is not None:
            gamma, beta, mean, var = bn
            a = gamma / jnp.sqrt(var + BN_EPS)
            c = beta - mean * a
            a_p = jnp.zeros((1, dout_p), jnp.float32).at[0, :dout].set(a)
            c_p = jnp.zeros((1, dout_p), jnp.float32).at[0, :dout].set(c)
            flat_params += [a_p, c_p]

    kernel = _make_kernel(tuple(has_bn_flags))

    resident_bytes = sum(int(p_.size) * p_.dtype.itemsize for p_ in flat_params)
    bytes_accessed = int(x_p.size) * 4 + int(b_pad * out_pad) * 4 + resident_bytes

    grid = (pl.cdiv(b_pad, tile_b_eff),)

    # Explicit VMEM budget: resident params + generous per-row activation
    # budget (live f32 activations + bf16 casts across the 1024-wide layers)
    # + double-buffered in/out tiles.  Clamp to v7x's 64 MiB physical VMEM.
    act_bytes_per_row = 32 * 1024
    io_bytes = 2 * tile_b_eff * (in_pad + out_pad) * 4
    vmem_limit = resident_bytes + tile_b_eff * act_bytes_per_row + io_bytes + (4 << 20)
    vmem_limit = int(min(max(vmem_limit, 24 << 20), 64 << 20))

    # Whole-array, non-pipelined VMEM residents for all weights / biases / BN.
    resident = pl.BlockSpec(memory_space=pltpu.MemorySpace.VMEM)

    out = pl.pallas_call(
        kernel,
        out_shape=jax.ShapeDtypeStruct((b_pad, out_pad), jnp.float32),
        grid=grid,
        in_specs=[pl.BlockSpec((tile_b_eff, in_pad), lambda i: (i, 0))]
                 + [resident] * len(flat_params),
        out_specs=pl.BlockSpec((tile_b_eff, out_pad), lambda i: (i, 0)),
        compiler_params=pltpu.CompilerParams(
            dimension_semantics=("parallel",),
            vmem_limit_bytes=vmem_limit,
        ),
        cost_estimate=pl.CostEstimate(
            flops=int(matmul_flops),
            transcendentals=0,
            bytes_accessed=int(bytes_accessed),
        ),
    )(x_p, *flat_params)

    # Strip batch padding and lane padding (columns 33..127 are exact zeros).
    return out[:B, :IN_OUT_DIM]


def init_params(key, in_out_dim=IN_OUT_DIM, latent_dim=LATENT_DIM):
    """Deterministic init mimicking nn.Linear defaults (uniform +/- 1/sqrt(fan_in)).

    BN params use non-trivial running stats / affine values so the BN math is
    actually exercised (PyTorch default-inits BN to the identity transform).
    """
    dims = [
        (in_out_dim, 1024), (1024, 512), (512, 256), (256, 128), (128, latent_dim),
        (latent_dim, 128), (128, 256), (256, 512), (512, 1024), (1024, in_out_dim),
    ]
    bn_flags = [True, True, True, True, False,
                True, True, True, True, False]

    params = []
    for (din, dout), has_bn in zip(dims, bn_flags):
        key, kw, kb, kg, kbe, km, kv = jax.random.split(key, 7)
        bound = 1.0 / math.sqrt(din)
        w = jax.random.uniform(kw, (din, dout), jnp.float32, -bound, bound)
        b = jax.random.uniform(kb, (dout,), jnp.float32, -bound, bound)
        bn = None
        if has_bn:
            gamma = jax.random.uniform(kg, (dout,), jnp.float32, 0.5, 1.5)
            beta = jax.random.uniform(kbe, (dout,), jnp.float32, -0.5, 0.5)
            mean = jax.random.normal(km, (dout,), jnp.float32) * 0.1
            var = jax.random.uniform(kv, (dout,), jnp.float32, 0.5, 1.5)
            bn = (gamma, beta, mean, var)
        params.append({"w": w, "b": b, "bn": bn})
    return params


def autoencoder_reference(x, params):
    """Pure-JAX reference of the same (eval-mode) forward pass."""
    h = x
    for layer in params:
        h = h @ layer["w"] + layer["b"]
        if layer["bn"] is not None:
            gamma, beta, mean, var = layer["bn"]
            h = jnp.maximum(h, 0.0)
            h = (h - mean) / jnp.sqrt(var + BN_EPS) * gamma + beta
        # Dropout(p=0.0) is identity.
    return h


if __name__ == "__main__":
    key = jax.random.PRNGKey(0)
    key, kx = jax.random.split(key)

    batch = 16
    x = jax.random.normal(kx, (batch, IN_OUT_DIM), jnp.float32)
    params = init_params(key)

    ref = autoencoder_reference(x, params)

    # Exact-semantics path: f32 MXU operands, tight tolerance.
    out_f32 = autoencoder_forward(x, params, matmul_dtype=jnp.float32)
    out_f32 = jax.block_until_ready(out_f32)
    assert out_f32.shape == (batch, IN_OUT_DIM)
    err_f32 = jnp.max(jnp.abs(out_f32 - ref))
    assert jnp.allclose(out_f32, ref, atol=1e-3, rtol=1e-3), (
        f"f32 max abs err = {err_f32}"
    )

    # Production path: bf16 MXU operands, f32 accumulation, looser tolerance.
    out_bf16 = autoencoder_forward(x, params, matmul_dtype=jnp.bfloat16)
    out_bf16 = jax.block_until_ready(out_bf16)
    err_bf16 = jnp.max(jnp.abs(out_bf16 - ref))
    assert jnp.allclose(out_bf16, ref, atol=5e-2, rtol=5e-2), (
        f"bf16 max abs err = {err_bf16}"
    )

    # Exercise a batch that is not a multiple of the sublane / tile size to
    # cover the adaptive-tiling path (odd batch, >=2 grid steps).
    batch2 = 21
    key, kx2 = jax.random.split(key)
    x2 = jax.random.normal(kx2, (batch2, IN_OUT_DIM), jnp.float32)
    ref2 = autoencoder_reference(x2, params)
    out2 = jax.block_until_ready(
        autoencoder_forward(x2, params, matmul_dtype=jnp.float32))
    assert out2.shape == (batch2, IN_OUT_DIM)
    assert jnp.allclose(out2, ref2, atol=1e-3, rtol=1e-3), (
        f"odd-batch max abs err = {jnp.max(jnp.abs(out2 - ref2))}"
    )

    print("KERNEL_OK")
</pallas_src>

<mosaic_0001>
module attributes {stable_mosaic.version = 11 : i64} {
  func.func @kernel(%arg0: i32, %arg1: memref<8x128xf32, #tpu.memory_space<vmem>>, %arg2: memref<128x1024xf32, #tpu.memory_space<vmem>>, %arg3: memref<1x1024xf32, #tpu.memory_space<vmem>>, %arg4: memref<1x1024xf32, #tpu.memory_space<vmem>>, %arg5: memref<1x1024xf32, #tpu.memory_space<vmem>>, %arg6: memref<1024x512xf32, #tpu.memory_space<vmem>>, %arg7: memref<1x512xf32, #tpu.memory_space<vmem>>, %arg8: memref<1x512xf32, #tpu.memory_space<vmem>>, %arg9: memref<1x512xf32, #tpu.memory_space<vmem>>, %arg10: memref<512x256xf32, #tpu.memory_space<vmem>>, %arg11: memref<1x256xf32, #tpu.memory_space<vmem>>, %arg12: memref<1x256xf32, #tpu.memory_space<vmem>>, %arg13: memref<1x256xf32, #tpu.memory_space<vmem>>, %arg14: memref<256x128xf32, #tpu.memory_space<vmem>>, %arg15: memref<1x128xf32, #tpu.memory_space<vmem>>, %arg16: memref<1x128xf32, #tpu.memory_space<vmem>>, %arg17: memref<1x128xf32, #tpu.memory_space<vmem>>, %arg18: memref<128x128xf32, #tpu.memory_space<vmem>>, %arg19: memref<1x128xf32, #tpu.memory_space<vmem>>, %arg20: memref<128x128xf32, #tpu.memory_space<vmem>>, %arg21: memref<1x128xf32, #tpu.memory_space<vmem>>, %arg22: memref<1x128xf32, #tpu.memory_space<vmem>>, %arg23: memref<1x128xf32, #tpu.memory_space<vmem>>, %arg24: memref<128x256xf32, #tpu.memory_space<vmem>>, %arg25: memref<1x256xf32, #tpu.memory_space<vmem>>, %arg26: memref<1x256xf32, #tpu.memory_space<vmem>>, %arg27: memref<1x256xf32, #tpu.memory_space<vmem>>, %arg28: memref<256x512xf32, #tpu.memory_space<vmem>>, %arg29: memref<1x512xf32, #tpu.memory_space<vmem>>, %arg30: memref<1x512xf32, #tpu.memory_space<vmem>>, %arg31: memref<1x512xf32, #tpu.memory_space<vmem>>, %arg32: memref<512x1024xf32, #tpu.memory_space<vmem>>, %arg33: memref<1x1024xf32, #tpu.memory_space<vmem>>, %arg34: memref<1x1024xf32, #tpu.memory_space<vmem>>, %arg35: memref<1x1024xf32, #tpu.memory_space<vmem>>, %arg36: memref<1024x128xf32, #tpu.memory_space<vmem>>, %arg37: memref<1x128xf32, #tpu.memory_space<vmem>>, %arg38: memref<8x128xf32, #tpu.memory_space<vmem>>) attributes {dimension_semantics = [#tpu.dimension_semantics<parallel>], iteration_bounds = array<i64: 2>, scalar_prefetch = 0 : i64, scratch_operands = 0 : i64, tpu.core_type = #tpu.core_type<tc>, window_params = [{transform_indices = @transform_0, window_bounds = array<i64: 8, 128>}, {pipeline_mode = #tpu.pipeline_mode<synchronous>, transform_indices = @transform_1, window_bounds = array<i64: 128, 1024>}, {pipeline_mode = #tpu.pipeline_mode<synchronous>, transform_indices = @transform_2, window_bounds = array<i64: 1, 1024>}, {pipeline_mode = #tpu.pipeline_mode<synchronous>, transform_indices = @transform_3, window_bounds = array<i64: 1, 1024>}, {pipeline_mode = #tpu.pipeline_mode<synchronous>, transform_indices = @transform_4, window_bounds = array<i64: 1, 1024>}, {pipeline_mode = #tpu.pipeline_mode<synchronous>, transform_indices = @transform_5, window_bounds = array<i64: 1024, 512>}, {pipeline_mode = #tpu.pipeline_mode<synchronous>, transform_indices = @transform_6, window_bounds = array<i64: 1, 512>}, {pipeline_mode = #tpu.pipeline_mode<synchronous>, transform_indices = @transform_7, window_bounds = array<i64: 1, 512>}, {pipeline_mode = #tpu.pipeline_mode<synchronous>, transform_indices = @transform_8, window_bounds = array<i64: 1, 512>}, {pipeline_mode = #tpu.pipeline_mode<synchronous>, transform_indices = @transform_9, window_bounds = array<i64: 512, 256>}, {pipeline_mode = #tpu.pipeline_mode<synchronous>, transform_indices = @transform_10, window_bounds = array<i64: 1, 256>}, {pipeline_mode = #tpu.pipeline_mode<synchronous>, transform_indices = @transform_11, window_bounds = array<i64: 1, 256>}, {pipeline_mode = #tpu.pipeline_mode<synchronous>, transform_indices = @transform_12, window_bounds = array<i64: 1, 256>}, {pipeline_mode = #tpu.pipeline_mode<synchronous>, transform_indices = @transform_13, window_bounds = array<i64: 256, 128>}, {pipeline_mode = #tpu.pipeline_mode<synchronous>, transform_indices = @transform_14, window_bounds = array<i64: 1, 128>}, {pipeline_mode = #tpu.pipeline_mode<synchronous>, transform_indices = @transform_15, window_bounds = array<i64: 1, 128>}, {pipeline_mode = #tpu.pipeline_mode<synchronous>, transform_indices = @transform_16, window_bounds = array<i64: 1, 128>}, {pipeline_mode = #tpu.pipeline_mode<synchronous>, transform_indices = @transform_17, window_bounds = array<i64: 128, 128>}, {pipeline_mode = #tpu.pipeline_mode<synchronous>, transform_indices = @transform_18, window_bounds = array<i64: 1, 128>}, {pipeline_mode = #tpu.pipeline_mode<synchronous>, transform_indices = @transform_19, window_bounds = array<i64: 128, 128>}, {pipeline_mode = #tpu.pipeline_mode<synchronous>, transform_indices = @transform_20, window_bounds = array<i64: 1, 128>}, {pipeline_mode = #tpu.pipeline_mode<synchronous>, transform_indices = @transform_21, window_bounds = array<i64: 1, 128>}, {pipeline_mode = #tpu.pipeline_mode<synchronous>, transform_indices = @transform_22, window_bounds = array<i64: 1, 128>}, {pipeline_mode = #tpu.pipeline_mode<synchronous>, transform_indices = @transform_23, window_bounds = array<i64: 128, 256>}, {pipeline_mode = #tpu.pipeline_mode<synchronous>, transform_indices = @transform_24, window_bounds = array<i64: 1, 256>}, {pipeline_mode = #tpu.pipeline_mode<synchronous>, transform_indices = @transform_25, window_bounds = array<i64: 1, 256>}, {pipeline_mode = #tpu.pipeline_mode<synchronous>, transform_indices = @transform_26, window_bounds = array<i64: 1, 256>}, {pipeline_mode = #tpu.pipeline_mode<synchronous>, transform_indices = @transform_27, window_bounds = array<i64: 256, 512>}, {pipeline_mode = #tpu.pipeline_mode<synchronous>, transform_indices = @transform_28, window_bounds = array<i64: 1, 512>}, {pipeline_mode = #tpu.pipeline_mode<synchronous>, transform_indices = @transform_29, window_bounds = array<i64: 1, 512>}, {pipeline_mode = #tpu.pipeline_mode<synchronous>, transform_indices = @transform_30, window_bounds = array<i64: 1, 512>}, {pipeline_mode = #tpu.pipeline_mode<synchronous>, transform_indices = @transform_31, window_bounds = array<i64: 512, 1024>}, {pipeline_mode = #tpu.pipeline_mode<synchronous>, transform_indices = @transform_32, window_bounds = array<i64: 1, 1024>}, {pipeline_mode = #tpu.pipeline_mode<synchronous>, transform_indices = @transform_33, window_bounds = array<i64: 1, 1024>}, {pipeline_mode = #tpu.pipeline_mode<synchronous>, transform_indices = @transform_34, window_bounds = array<i64: 1, 1024>}, {pipeline_mode = #tpu.pipeline_mode<synchronous>, transform_indices = @transform_35, window_bounds = array<i64: 1024, 128>}, {pipeline_mode = #tpu.pipeline_mode<synchronous>, transform_indices = @transform_36, window_bounds = array<i64: 1, 128>}, {transform_indices = @transform_37, window_bounds = array<i64: 8, 128>}]} {
    %c0 = arith.constant 0 : index
    %c0_0 = arith.constant 0 : index
    %0 = vector.load %arg1[%c0, %c0_0] : memref<8x128xf32, #tpu.memory_space<vmem>>, vector<8x128xf32>
    %c0_1 = arith.constant 0 : index
    %c0_2 = arith.constant 0 : index
    %1 = vector.load %arg2[%c0_1, %c0_2] : memref<128x1024xf32, #tpu.memory_space<vmem>>, vector<128x1024xf32>
    %c0_3 = arith.constant 0 : index
    %c0_4 = arith.constant 0 : index
    %2 = vector.load %arg3[%c0_3, %c0_4] : memref<1x1024xf32, #tpu.memory_space<vmem>>, vector<1x1024xf32>
    %cst = arith.constant dense<0.000000e+00> : vector<8x1024xf32>
    %3 = tpu.matmul %0, %1, %cst {dimension_numbers = #tpu.dot_dimension_numbers<[1], [0], [0], [1], [0, 0, 1, 1], [], []>} : vector<8x128xf32>, vector<128x1024xf32>, vector<8x1024xf32> -> vector<8x1024xf32>
    %4 = vector.broadcast %2 : vector<1x1024xf32> to vector<8x1024xf32>
    %5 = arith.addf %3, %4 : vector<8x1024xf32>
    %c0_5 = arith.constant 0 : index
    %c0_6 = arith.constant 0 : index
    %6 = vector.load %arg4[%c0_5, %c0_6] : memref<1x1024xf32, #tpu.memory_space<vmem>>, vector<1x1024xf32>
    %c0_7 = arith.constant 0 : index
    %c0_8 = arith.constant 0 : index
    %7 = vector.load %arg5[%c0_7, %c0_8] : memref<1x1024xf32, #tpu.memory_space<vmem>>, vector<1x1024xf32>
    %cst_9 = arith.constant 0.000000e+00 : f32
    %8 = vector.broadcast %cst_9 : f32 to vector<8x1024xf32>
    %9 = arith.maximumf %5, %8 : vector<8x1024xf32>
    %10 = vector.broadcast %6 : vector<1x1024xf32> to vector<8x1024xf32>
    %11 = arith.mulf %9, %10 : vector<8x1024xf32>
    %12 = vector.broadcast %7 : vector<1x1024xf32> to vector<8x1024xf32>
    %13 = arith.addf %11, %12 : vector<8x1024xf32>
    %c0_10 = arith.constant 0 : index
    %c0_11 = arith.constant 0 : index
    %14 = vector.load %arg6[%c0_10, %c0_11] : memref<1024x512xf32, #tpu.memory_space<vmem>>, vector<1024x512xf32>
    %c0_12 = arith.constant 0 : index
    %c0_13 = arith.constant 0 : index
    %15 = vector.load %arg7[%c0_12, %c0_13] : memref<1x512xf32, #tpu.memory_space<vmem>>, vector<1x512xf32>
    %cst_14 = arith.constant dense<0.000000e+00> : vector<8x512xf32>
    %16 = tpu.matmul %13, %14, %cst_14 {dimension_numbers = #tpu.dot_dimension_numbers<[1], [0], [0], [1], [0, 0, 1, 1], [], []>} : vector<8x1024xf32>, vector<1024x512xf32>, vector<8x512xf32> -> vector<8x512xf32>
    %17 = vector.broadcast %15 : vector<1x512xf32> to vector<8x512xf32>
    %18 = arith.addf %16, %17 : vector<8x512xf32>
    %c0_15 = arith.constant 0 : index
    %c0_16 = arith.constant 0 : index
    %19 = vector.load %arg8[%c0_15, %c0_16] : memref<1x512xf32, #tpu.memory_space<vmem>>, vector<1x512xf32>
    %c0_17 = arith.constant 0 : index
    %c0_18 = arith.constant 0 : index
    %20 = vector.load %arg9[%c0_17, %c0_18] : memref<1x512xf32, #tpu.memory_space<vmem>>, vector<1x512xf32>
    %cst_19 = arith.constant 0.000000e+00 : f32
    %21 = vector.broadcast %cst_19 : f32 to vector<8x512xf32>
    %22 = arith.maximumf %18, %21 : vector<8x512xf32>
    %23 = vector.broadcast %19 : vector<1x512xf32> to vector<8x512xf32>
    %24 = arith.mulf %22, %23 : vector<8x512xf32>
    %25 = vector.broadcast %20 : vector<1x512xf32> to vector<8x512xf32>
    %26 = arith.addf %24, %25 : vector<8x512xf32>
    %c0_20 = arith.constant 0 : index
    %c0_21 = arith.constant 0 : index
    %27 = vector.load %arg10[%c0_20, %c0_21] : memref<512x256xf32, #tpu.memory_space<vmem>>, vector<512x256xf32>
    %c0_22 = arith.constant 0 : index
    %c0_23 = arith.constant 0 : index
    %28 = vector.load %arg11[%c0_22, %c0_23] : memref<1x256xf32, #tpu.memory_space<vmem>>, vector<1x256xf32>
    %cst_24 = arith.constant dense<0.000000e+00> : vector<8x256xf32>
    %29 = tpu.matmul %26, %27, %cst_24 {dimension_numbers = #tpu.dot_dimension_numbers<[1], [0], [0], [1], [0, 0, 1, 1], [], []>} : vector<8x512xf32>, vector<512x256xf32>, vector<8x256xf32> -> vector<8x256xf32>
    %30 = vector.broadcast %28 : vector<1x256xf32> to vector<8x256xf32>
    %31 = arith.addf %29, %30 : vector<8x256xf32>
    %c0_25 = arith.constant 0 : index
    %c0_26 = arith.constant 0 : index
    %32 = vector.load %arg12[%c0_25, %c0_26] : memref<1x256xf32, #tpu.memory_space<vmem>>, vector<1x256xf32>
    %c0_27 = arith.constant 0 : index
    %c0_28 = arith.constant 0 : index
    %33 = vector.load %arg13[%c0_27, %c0_28] : memref<1x256xf32, #tpu.memory_space<vmem>>, vector<1x256xf32>
    %cst_29 = arith.constant 0.000000e+00 : f32
    %34 = vector.broadcast %cst_29 : f32 to vector<8x256xf32>
    %35 = arith.maximumf %31, %34 : vector<8x256xf32>
    %36 = vector.broadcast %32 : vector<1x256xf32> to vector<8x256xf32>
    %37 = arith.mulf %35, %36 : vector<8x256xf32>
    %38 = vector.broadcast %33 : vector<1x256xf32> to vector<8x256xf32>
    %39 = arith.addf %37, %38 : vector<8x256xf32>
    %c0_30 = arith.constant 0 : index
    %c0_31 = arith.constant 0 : index
    %40 = vector.load %arg14[%c0_30, %c0_31] : memref<256x128xf32, #tpu.memory_space<vmem>>, vector<256x128xf32>
    %c0_32 = arith.constant 0 : index
    %c0_33 = arith.constant 0 : index
    %41 = vector.load %arg15[%c0_32, %c0_33] : memref<1x128xf32, #tpu.memory_space<vmem>>, vector<1x128xf32>
    %cst_34 = arith.constant dense<0.000000e+00> : vector<8x128xf32>
    %42 = tpu.matmul %39, %40, %cst_34 {dimension_numbers = #tpu.dot_dimension_numbers<[1], [0], [0], [1], [0, 0, 1, 1], [], []>} : vector<8x256xf32>, vector<256x128xf32>, vector<8x128xf32> -> vector<8x128xf32>
    %43 = vector.broadcast %41 : vector<1x128xf32> to vector<8x128xf32>
    %44 = arith.addf %42, %43 : vector<8x128xf32>
    %c0_35 = arith.constant 0 : index
    %c0_36 = arith.constant 0 : index
    %45 = vector.load %arg16[%c0_35, %c0_36] : memref<1x128xf32, #tpu.memory_space<vmem>>, vector<1x128xf32>
    %c0_37 = arith.constant 0 : index
    %c0_38 = arith.constant 0 : index
    %46 = vector.load %arg17[%c0_37, %c0_38] : memref<1x128xf32, #tpu.memory_space<vmem>>, vector<1x128xf32>
    %cst_39 = arith.constant 0.000000e+00 : f32
    %47 = vector.broadcast %cst_39 : f32 to vector<8x128xf32>
    %48 = arith.maximumf %44, %47 : vector<8x128xf32>
    %49 = vector.broadcast %45 : vector<1x128xf32> to vector<8x128xf32>
    %50 = arith.mulf %48, %49 : vector<8x128xf32>
    %51 = vector.broadcast %46 : vector<1x128xf32> to vector<8x128xf32>
    %52 = arith.addf %50, %51 : vector<8x128xf32>
    %c0_40 = arith.constant 0 : index
    %c0_41 = arith.constant 0 : index
    %53 = vector.load %arg18[%c0_40, %c0_41] : memref<128x128xf32, #tpu.memory_space<vmem>>, vector<128x128xf32>
    %c0_42 = arith.constant 0 : index
    %c0_43 = arith.constant 0 : index
    %54 = vector.load %arg19[%c0_42, %c0_43] : memref<1x128xf32, #tpu.memory_space<vmem>>, vector<1x128xf32>
    %cst_44 = arith.constant dense<0.000000e+00> : vector<8x128xf32>
    %55 = tpu.matmul %52, %53, %cst_44 {dimension_numbers = #tpu.dot_dimension_numbers<[1], [0], [0], [1], [0, 0, 1, 1], [], []>} : vector<8x128xf32>, vector<128x128xf32>, vector<8x128xf32> -> vector<8x128xf32>
    %56 = vector.broadcast %54 : vector<1x128xf32> to vector<8x128xf32>
    %57 = arith.addf %55, %56 : vector<8x128xf32>
    %c0_45 = arith.constant 0 : index
    %c0_46 = arith.constant 0 : index
    %58 = vector.load %arg20[%c0_45, %c0_46] : memref<128x128xf32, #tpu.memory_space<vmem>>, vector<128x128xf32>
    %c0_47 = arith.constant 0 : index
    %c0_48 = arith.constant 0 : index
    %59 = vector.load %arg21[%c0_47, %c0_48] : memref<1x128xf32, #tpu.memory_space<vmem>>, vector<1x128xf32>
    %cst_49 = arith.constant dense<0.000000e+00> : vector<8x128xf32>
    %60 = tpu.matmul %57, %58, %cst_49 {dimension_numbers = #tpu.dot_dimension_numbers<[1], [0], [0], [1], [0, 0, 1, 1], [], []>} : vector<8x128xf32>, vector<128x128xf32>, vector<8x128xf32> -> vector<8x128xf32>
    %61 = vector.broadcast %59 : vector<1x128xf32> to vector<8x128xf32>
    %62 = arith.addf %60, %61 : vector<8x128xf32>
    %c0_50 = arith.constant 0 : index
    %c0_51 = arith.constant 0 : index
    %63 = vector.load %arg22[%c0_50, %c0_51] : memref<1x128xf32, #tpu.memory_space<vmem>>, vector<1x128xf32>
    %c0_52 = arith.constant 0 : index
    %c0_53 = arith.constant 0 : index
    %64 = vector.load %arg23[%c0_52, %c0_53] : memref<1x128xf32, #tpu.memory_space<vmem>>, vector<1x128xf32>
    %cst_54 = arith.constant 0.000000e+00 : f32
    %65 = vector.broadcast %cst_54 : f32 to vector<8x128xf32>
    %66 = arith.maximumf %62, %65 : vector<8x128xf32>
    %67 = vector.broadcast %63 : vector<1x128xf32> to vector<8x128xf32>
    %68 = arith.mulf %66, %67 : vector<8x128xf32>
    %69 = vector.broadcast %64 : vector<1x128xf32> to vector<8x128xf32>
    %70 = arith.addf %68, %69 : vector<8x128xf32>
    %c0_55 = arith.constant 0 : index
    %c0_56 = arith.constant 0 : index
    %71 = vector.load %arg24[%c0_55, %c0_56] : memref<128x256xf32, #tpu.memory_space<vmem>>, vector<128x256xf32>
    %c0_57 = arith.constant 0 : index
    %c0_58 = arith.constant 0 : index
    %72 = vector.load %arg25[%c0_57, %c0_58] : memref<1x256xf32, #tpu.memory_space<vmem>>, vector<1x256xf32>
    %cst_59 = arith.constant dense<0.000000e+00> : vector<8x256xf32>
    %73 = tpu.matmul %70, %71, %cst_59 {dimension_numbers = #tpu.dot_dimension_numbers<[1], [0], [0], [1], [0, 0, 1, 1], [], []>} : vector<8x128xf32>, vector<128x256xf32>, vector<8x256xf32> -> vector<8x256xf32>
    %74 = vector.broadcast %72 : vector<1x256xf32> to vector<8x256xf32>
    %75 = arith.addf %73, %74 : vector<8x256xf32>
    %c0_60 = arith.constant 0 : index
    %c0_61 = arith.constant 0 : index
    %76 = vector.load %arg26[%c0_60, %c0_61] : memref<1x256xf32, #tpu.memory_space<vmem>>, vector<1x256xf32>
    %c0_62 = arith.constant 0 : index
    %c0_63 = arith.constant 0 : index
    %77 = vector.load %arg27[%c0_62, %c0_63] : memref<1x256xf32, #tpu.memory_space<vmem>>, vector<1x256xf32>
    %cst_64 = arith.constant 0.000000e+00 : f32
    %78 = vector.broadcast %cst_64 : f32 to vector<8x256xf32>
    %79 = arith.maximumf %75, %78 : vector<8x256xf32>
    %80 = vector.broadcast %76 : vector<1x256xf32> to vector<8x256xf32>
    %81 = arith.mulf %79, %80 : vector<8x256xf32>
    %82 = vector.broadcast %77 : vector<1x256xf32> to vector<8x256xf32>
    %83 = arith.addf %81, %82 : vector<8x256xf32>
    %c0_65 = arith.constant 0 : index
    %c0_66 = arith.constant 0 : index
    %84 = vector.load %arg28[%c0_65, %c0_66] : memref<256x512xf32, #tpu.memory_space<vmem>>, vector<256x512xf32>
    %c0_67 = arith.constant 0 : index
    %c0_68 = arith.constant 0 : index
    %85 = vector.load %arg29[%c0_67, %c0_68] : memref<1x512xf32, #tpu.memory_space<vmem>>, vector<1x512xf32>
    %cst_69 = arith.constant dense<0.000000e+00> : vector<8x512xf32>
    %86 = tpu.matmul %83, %84, %cst_69 {dimension_numbers = #tpu.dot_dimension_numbers<[1], [0], [0], [1], [0, 0, 1, 1], [], []>} : vector<8x256xf32>, vector<256x512xf32>, vector<8x512xf32> -> vector<8x512xf32>
    %87 = vector.broadcast %85 : vector<1x512xf32> to vector<8x512xf32>
    %88 = arith.addf %86, %87 : vector<8x512xf32>
    %c0_70 = arith.constant 0 : index
    %c0_71 = arith.constant 0 : index
    %89 = vector.load %arg30[%c0_70, %c0_71] : memref<1x512xf32, #tpu.memory_space<vmem>>, vector<1x512xf32>
    %c0_72 = arith.constant 0 : index
    %c0_73 = arith.constant 0 : index
    %90 = vector.load %arg31[%c0_72, %c0_73] : memref<1x512xf32, #tpu.memory_space<vmem>>, vector<1x512xf32>
    %cst_74 = arith.constant 0.000000e+00 : f32
    %91 = vector.broadcast %cst_74 : f32 to vector<8x512xf32>
    %92 = arith.maximumf %88, %91 : vector<8x512xf32>
    %93 = vector.broadcast %89 : vector<1x512xf32> to vector<8x512xf32>
    %94 = arith.mulf %92, %93 : vector<8x512xf32>
    %95 = vector.broadcast %90 : vector<1x512xf32> to vector<8x512xf32>
    %96 = arith.addf %94, %95 : vector<8x512xf32>
    %c0_75 = arith.constant 0 : index
    %c0_76 = arith.constant 0 : index
    %97 = vector.load %arg32[%c0_75, %c0_76] : memref<512x1024xf32, #tpu.memory_space<vmem>>, vector<512x1024xf32>
    %c0_77 = arith.constant 0 : index
    %c0_78 = arith.constant 0 : index
    %98 = vector.load %arg33[%c0_77, %c0_78] : memref<1x1024xf32, #tpu.memory_space<vmem>>, vector<1x1024xf32>
    %cst_79 = arith.constant dense<0.000000e+00> : vector<8x1024xf32>
    %99 = tpu.matmul %96, %97, %cst_79 {dimension_numbers = #tpu.dot_dimension_numbers<[1], [0], [0], [1], [0, 0, 1, 1], [], []>} : vector<8x512xf32>, vector<512x1024xf32>, vector<8x1024xf32> -> vector<8x1024xf32>
    %100 = vector.broadcast %98 : vector<1x1024xf32> to vector<8x1024xf32>
    %101 = arith.addf %99, %100 : vector<8x1024xf32>
    %c0_80 = arith.constant 0 : index
    %c0_81 = arith.constant 0 : index
    %102 = vector.load %arg34[%c0_80, %c0_81] : memref<1x1024xf32, #tpu.memory_space<vmem>>, vector<1x1024xf32>
    %c0_82 = arith.constant 0 : index
    %c0_83 = arith.constant 0 : index
    %103 = vector.load %arg35[%c0_82, %c0_83] : memref<1x1024xf32, #tpu.memory_space<vmem>>, vector<1x1024xf32>
    %cst_84 = arith.constant 0.000000e+00 : f32
    %104 = vector.broadcast %cst_84 : f32 to vector<8x1024xf32>
    %105 = arith.maximumf %101, %104 : vector<8x1024xf32>
    %106 = vector.broadcast %102 : vector<1x1024xf32> to vector<8x1024xf32>
    %107 = arith.mulf %105, %106 : vector<8x1024xf32>
    %108 = vector.broadcast %103 : vector<1x1024xf32> to vector<8x1024xf32>
    %109 = arith.addf %107, %108 : vector<8x1024xf32>
    %c0_85 = arith.constant 0 : index
    %c0_86 = arith.constant 0 : index
    %110 = vector.load %arg36[%c0_85, %c0_86] : memref<1024x128xf32, #tpu.memory_space<vmem>>, vector<1024x128xf32>
    %c0_87 = arith.constant 0 : index
    %c0_88 = arith.constant 0 : index
    %111 = vector.load %arg37[%c0_87, %c0_88] : memref<1x128xf32, #tpu.memory_space<vmem>>, vector<1x128xf32>
    %cst_89 = arith.constant dense<0.000000e+00> : vector<8x128xf32>
    %112 = tpu.matmul %109, %110, %cst_89 {dimension_numbers = #tpu.dot_dimension_numbers<[1], [0], [0], [1], [0, 0, 1, 1], [], []>} : vector<8x1024xf32>, vector<1024x128xf32>, vector<8x128xf32> -> vector<8x128xf32>
    %113 = vector.broadcast %111 : vector<1x128xf32> to vector<8x128xf32>
    %114 = arith.addf %112, %113 : vector<8x128xf32>
    %c0_90 = arith.constant 0 : index
    %c0_91 = arith.constant 0 : index
    %115 = vector.load %arg38[%c0_90, %c0_91] : memref<8x128xf32, #tpu.memory_space<vmem>>, vector<8x128xf32>
    tpu.vector_store %arg38[%c0_90, %c0_91], %114 {strides = array<i32>} : memref<8x128xf32, #tpu.memory_space<vmem>>, vector<8x128xf32>,
    return
  }
  func.func @transform_0(%arg0: i32) -> (i32, i32) {
    %c0_i32 = arith.constant 0 : i32
    %c0_i32_0 = arith.constant 0 : i32
    return %arg0, %c0_i32 : i32, i32
  }
  func.func @transform_1(%arg0: i32) -> (i32, i32) {
    %c0_i32 = arith.constant 0 : i32
    %c0_i32_0 = arith.constant 0 : i32
    %c0_i32_1 = arith.constant 0 : i32
    return %c0_i32, %c0_i32_0 : i32, i32
  }
  func.func @transform_2(%arg0: i32) -> (i32, i32) {
    %c0_i32 = arith.constant 0 : i32
    %c0_i32_0 = arith.constant 0 : i32
    %c0_i32_1 = arith.constant 0 : i32
    return %c0_i32, %c0_i32_0 : i32, i32
  }
  func.func @transform_3(%arg0: i32) -> (i32, i32) {
    %c0_i32 = arith.constant 0 : i32
    %c0_i32_0 = arith.constant 0 : i32
    %c0_i32_1 = arith.constant 0 : i32
    return %c0_i32, %c0_i32_0 : i32, i32
  }
  func.func @transform_4(%arg0: i32) -> (i32, i32) {
    %c0_i32 = arith.constant 0 : i32
    %c0_i32_0 = arith.constant 0 : i32
    %c0_i32_1 = arith.constant 0 : i32
    return %c0_i32, %c0_i32_0 : i32, i32
  }
  func.func @transform_5(%arg0: i32) -> (i32, i32) {
    %c0_i32 = arith.constant 0 : i32
    %c0_i32_0 = arith.constant 0 : i32
    %c0_i32_1 = arith.constant 0 : i32
    return %c0_i32, %c0_i32_0 : i32, i32
  }
  func.func @transform_6(%arg0: i32) -> (i32, i32) {
    %c0_i32 = arith.constant 0 : i32
    %c0_i32_0 = arith.constant 0 : i32
    %c0_i32_1 = arith.constant 0 : i32
    return %c0_i32, %c0_i32_0 : i32, i32
  }
  func.func @transform_7(%arg0: i32) -> (i32, i32) {
    %c0_i32 = arith.constant 0 : i32
    %c0_i32_0 = arith.constant 0 : i32
    %c0_i32_1 = arith.constant 0 : i32
    return %c0_i32, %c0_i32_0 : i32, i32
  }
  func.func @transform_8(%arg0: i32) -> (i32, i32) {
    %c0_i32 = arith.constant 0 : i32
    %c0_i32_0 = arith.constant 0 : i32
    %c0_i32_1 = arith.constant 0 : i32
    return %c0_i32, %c0_i32_0 : i32, i32
  }
  func.func @transform_9(%arg0: i32) -> (i32, i32) {
    %c0_i32 = arith.constant 0 : i32
    %c0_i32_0 = arith.constant 0 : i32
    %c0_i32_1 = arith.constant 0 : i32
    return %c0_i32, %c0_i32_0 : i32, i32
  }
  func.func @transform_10(%arg0: i32) -> (i32, i32) {
    %c0_i32 = arith.constant 0 : i32
    %c0_i32_0 = arith.constant 0 : i32
    %c0_i32_1 = arith.constant 0 : i32
    return %c0_i32, %c0_i32_0 : i32, i32
  }
  func.func @transform_11(%arg0: i32) -> (i32, i32) {
    %c0_i32 = arith.constant 0 : i32
    %c0_i32_0 = arith.constant 0 : i32
    %c0_i32_1 = arith.constant 0 : i32
    return %c0_i32, %c0_i32_0 : i32, i32
  }
  func.func @transform_12(%arg0: i32) -> (i32, i32) {
    %c0_i32 = arith.constant 0 : i32
    %c0_i32_0 = arith.constant 0 : i32
    %c0_i32_1 = arith.constant 0 : i32
    return %c0_i32, %c0_i32_0 : i32, i32
  }
  func.func @transform_13(%arg0: i32) -> (i32, i32) {
    %c0_i32 = arith.constant 0 : i32
    %c0_i32_0 = arith.constant 0 : i32
    %c0_i32_1 = arith.constant 0 : i32
    return %c0_i32, %c0_i32_0 : i32, i32
  }
  func.func @transform_14(%arg0: i32) -> (i32, i32) {
    %c0_i32 = arith.constant 0 : i32
    %c0_i32_0 = arith.constant 0 : i32
    %c0_i32_1 = arith.constant 0 : i32
    return %c0_i32, %c0_i32_0 : i32, i32
  }
  func.func @transform_15(%arg0: i32) -> (i32, i32) {
    %c0_i32 = arith.constant 0 : i32
    %c0_i32_0 = arith.constant 0 : i32
    %c0_i32_1 = arith.constant 0 : i32
    return %c0_i32, %c0_i32_0 : i32, i32
  }
  func.func @transform_16(%arg0: i32) -> (i32, i32) {
    %c0_i32 = arith.constant 0 : i32
    %c0_i32_0 = arith.constant 0 : i32
    %c0_i32_1 = arith.constant 0 : i32
    return %c0_i32, %c0_i32_0 : i32, i32
  }
  func.func @transform_17(%arg0: i32) -> (i32, i32) {
    %c0_i32 = arith.constant 0 : i32
    %c0_i32_0 = arith.constant 0 : i32
    %c0_i32_1 = arith.constant 0 : i32
    return %c0_i32, %c0_i32_0 : i32, i32
  }
  func.func @transform_18(%arg0: i32) -> (i32, i32) {
    %c0_i32 = arith.constant 0 : i32
    %c0_i32_0 = arith.constant 0 : i32
    %c0_i32_1 = arith.constant 0 : i32
    return %c0_i32, %c0_i32_0 : i32, i32
  }
  func.func @transform_19(%arg0: i32) -> (i32, i32) {
    %c0_i32 = arith.constant 0 : i32
    %c0_i32_0 = arith.constant 0 : i32
    %c0_i32_1 = arith.constant 0 : i32
    return %c0_i32, %c0_i32_0 : i32, i32
  }
  func.func @transform_20(%arg0: i32) -> (i32, i32) {
    %c0_i32 = arith.constant 0 : i32
    %c0_i32_0 = arith.constant 0 : i32
    %c0_i32_1 = arith.constant 0 : i32
    return %c0_i32, %c0_i32_0 : i32, i32
  }
  func.func @transform_21(%arg0: i32) -> (i32, i32) {
    %c0_i32 = arith.constant 0 : i32
    %c0_i32_0 = arith.constant 0 : i32
    %c0_i32_1 = arith.constant 0 : i32
    return %c0_i32, %c0_i32_0 : i32, i32
  }
  func.func @transform_22(%arg0: i32) -> (i32, i32) {
    %c0_i32 = arith.constant 0 : i32
    %c0_i32_0 = arith.constant 0 : i32
    %c0_i32_1 = arith.constant 0 : i32
    return %c0_i32, %c0_i32_0 : i32, i32
  }
  func.func @transform_23(%arg0: i32) -> (i32, i32) {
    %c0_i32 = arith.constant 0 : i32
    %c0_i32_0 = arith.constant 0 : i32
    %c0_i32_1 = arith.constant 0 : i32
    return %c0_i32, %c0_i32_0 : i32, i32
  }
  func.func @transform_24(%arg0: i32) -> (i32, i32) {
    %c0_i32 = arith.constant 0 : i32
    %c0_i32_0 = arith.constant 0 : i32
    %c0_i32_1 = arith.constant 0 : i32
    return %c0_i32, %c0_i32_0 : i32, i32
  }
  func.func @transform_25(%arg0: i32) -> (i32, i32) {
    %c0_i32 = arith.constant 0 : i32
    %c0_i32_0 = arith.constant 0 : i32
    %c0_i32_1 = arith.constant 0 : i32
    return %c0_i32, %c0_i32_0 : i32, i32
  }
  func.func @transform_26(%arg0: i32) -> (i32, i32) {
    %c0_i32 = arith.constant 0 : i32
    %c0_i32_0 = arith.constant 0 : i32
    %c0_i32_1 = arith.constant 0 : i32
    return %c0_i32, %c0_i32_0 : i32, i32
  }
  func.func @transform_27(%arg0: i32) -> (i32, i32) {
    %c0_i32 = arith.constant 0 : i32
    %c0_i32_0 = arith.constant 0 : i32
    %c0_i32_1 = arith.constant 0 : i32
    return %c0_i32, %c0_i32_0 : i32, i32
  }
  func.func @transform_28(%arg0: i32) -> (i32, i32) {
    %c0_i32 = arith.constant 0 : i32
    %c0_i32_0 = arith.constant 0 : i32
    %c0_i32_1 = arith.constant 0 : i32
    return %c0_i32, %c0_i32_0 : i32, i32
  }
  func.func @transform_29(%arg0: i32) -> (i32, i32) {
    %c0_i32 = arith.constant 0 : i32
    %c0_i32_0 = arith.constant 0 : i32
    %c0_i32_1 = arith.constant 0 : i32
    return %c0_i32, %c0_i32_0 : i32, i32
  }
  func.func @transform_30(%arg0: i32) -> (i32, i32) {
    %c0_i32 = arith.constant 0 : i32
    %c0_i32_0 = arith.constant 0 : i32
    %c0_i32_1 = arith.constant 0 : i32
    return %c0_i32, %c0_i32_0 : i32, i32
  }
  func.func @transform_31(%arg0: i32) -> (i32, i32) {
    %c0_i32 = arith.constant 0 : i32
    %c0_i32_0 = arith.constant 0 : i32
    %c0_i32_1 = arith.constant 0 : i32
    return %c0_i32, %c0_i32_0 : i32, i32
  }
  func.func @transform_32(%arg0: i32) -> (i32, i32) {
    %c0_i32 = arith.constant 0 : i32
    %c0_i32_0 = arith.constant 0 : i32
    %c0_i32_1 = arith.constant 0 : i32
    return %c0_i32, %c0_i32_0 : i32, i32
  }
  func.func @transform_33(%arg0: i32) -> (i32, i32) {
    %c0_i32 = arith.constant 0 : i32
    %c0_i32_0 = arith.constant 0 : i32
    %c0_i32_1 = arith.constant 0 : i32
    return %c0_i32, %c0_i32_0 : i32, i32
  }
  func.func @transform_34(%arg0: i32) -> (i32, i32) {
    %c0_i32 = arith.constant 0 : i32
    %c0_i32_0 = arith.constant 0 : i32
    %c0_i32_1 = arith.constant 0 : i32
    return %c0_i32, %c0_i32_0 : i32, i32
  }
  func.func @transform_35(%arg0: i32) -> (i32, i32) {
    %c0_i32 = arith.constant 0 : i32
    %c0_i32_0 = arith.constant 0 : i32
    %c0_i32_1 = arith.constant 0 : i32
    return %c0_i32, %c0_i32_0 : i32, i32
  }
  func.func @transform_36(%arg0: i32) -> (i32, i32) {
    %c0_i32 = arith.constant 0 : i32
    %c0_i32_0 = arith.constant 0 : i32
    %c0_i32_1 = arith.constant 0 : i32
    return %c0_i32, %c0_i32_0 : i32, i32
  }
  func.func @transform_37(%arg0: i32) -> (i32, i32) {
    %c0_i32 = arith.constant 0 : i32
    %c0_i32_0 = arith.constant 0 : i32
    return %arg0, %c0_i32 : i32, i32
  }
}

</mosaic_0001>

<llo_original>
// kernel: tpu_custom_call.1
$region0: #{tpu_custom_call.1}
  #allocation0 [shape = 'u32[]', space=smem, size = 0x4, offset = 0x4, fixed_abs, tag = 'smem constant byte address 0x4 - core index']
  #allocation1 [shape = 'u32[72,128]{1,0:T(1,128)}', space=vmem, size = 0x9000, scoped, tag = 'internal scratch']
  %s0 = inlined_call_operand.smem [shape: u32[38], index: -1, kind: input, shape index: {}]
  %s1 = sld [smem:[%s0]]
  %s2 = scalar_lea.smem %s0, 1
  %s3 = sld [smem:[%s2]]
  %s4 = scalar_lea.smem %s0, 2
  %s5 = sld [smem:[%s4]]
  %s6 = scalar_lea.smem %s0, 3
  %s7 = sld [smem:[%s6]]
  %s8 = scalar_lea.smem %s0, 4
  %s9 = sld [smem:[%s8]]
  %s10 = scalar_lea.smem %s0, 5
  %s11 = sld [smem:[%s10]]
  %s12 = scalar_lea.smem %s0, 6
  %s13 = sld [smem:[%s12]]
  %s14 = scalar_lea.smem %s0, 7
  %s15 = sld [smem:[%s14]]
  %s16 = scalar_lea.smem %s0, 8
  %s17 = sld [smem:[%s16]]
  %s18 = scalar_lea.smem %s0, 9
  %s19 = sld [smem:[%s18]]
  %s20 = scalar_lea.smem %s0, 10
  %s21 = sld [smem:[%s20]]
  %s22 = scalar_lea.smem %s0, 11
  %s23 = sld [smem:[%s22]]
  %s24 = scalar_lea.smem %s0, 12
  %s25 = sld [smem:[%s24]]
  %s26 = scalar_lea.smem %s0, 13
  %s27 = sld [smem:[%s26]]
  %s28 = scalar_lea.smem %s0, 14
  %s29 = sld [smem:[%s28]]
  %s30 = scalar_lea.smem %s0, 15
  %s31 = sld [smem:[%s30]]
  %s32 = scalar_lea.smem %s0, 16
  %s33 = sld [smem:[%s32]]
  %s34 = scalar_lea.smem %s0, 17
  %s35 = sld [smem:[%s34]]
  %s36 = scalar_lea.smem %s0, 18
  %s37 = sld [smem:[%s36]]
  %s38 = scalar_lea.smem %s0, 19
  %s39 = sld [smem:[%s38]]
  %s40 = scalar_lea.smem %s0, 20
  %s41 = sld [smem:[%s40]]
  %s42 = scalar_lea.smem %s0, 21
  %s43 = sld [smem:[%s42]]
  %s44 = scalar_lea.smem %s0, 22
  %s45 = sld [smem:[%s44]]
  %s46 = scalar_lea.smem %s0, 23
  %s47 = sld [smem:[%s46]]
  %s48 = scalar_lea.smem %s0, 24
  %s49 = sld [smem:[%s48]]
  %s50 = scalar_lea.smem %s0, 25
  %s51 = sld [smem:[%s50]]
  %s52 = scalar_lea.smem %s0, 26
  %s53 = sld [smem:[%s52]]
  %s54 = scalar_lea.smem %s0, 27
  %s55 = sld [smem:[%s54]]
  %s56 = scalar_lea.smem %s0, 28
  %s57 = sld [smem:[%s56]]
  %s58 = scalar_lea.smem %s0, 29
  %s59 = sld [smem:[%s58]]
  %s60 = scalar_lea.smem %s0, 30
  %s61 = sld [smem:[%s60]]
  %s62 = scalar_lea.smem %s0, 31
  %s63 = sld [smem:[%s62]]
  %s64 = scalar_lea.smem %s0, 32
  %s65 = sld [smem:[%s64]]
  %s66 = scalar_lea.smem %s0, 33
  %s67 = sld [smem:[%s66]]
  %s68 = scalar_lea.smem %s0, 34
  %s69 = sld [smem:[%s68]]
  %s70 = scalar_lea.smem %s0, 35
  %s71 = sld [smem:[%s70]]
  %s72 = scalar_lea.smem %s0, 36
  %s73 = sld [smem:[%s72]]
  %s74 = scalar_lea.smem %s0, 37
  %s75 = sld [smem:[%s74]]
  %s76 = sld [smem:[#allocation0]]
  $region329: #{tpu_custom_call.1} parent=0
    _
  %s78 = ssub.s32 1, %s76
  %s79 = scalar_select 0, %s78, %s76
  $region1: #{tpu_custom_call.1} parent=0
    #allocation2 [shape = 'u8[8192]{0}', space=vmem, size = 0x2000, scoped, tag = 'input window, operand 0']
    #allocation3 [shape = 's32[2]{0}', space=sflag, size = 0x8, scoped, tag = 'scoped memory for tpu_custom_call.1']
    #allocation4 [shape = 's32[2]{0}', space=sflag, size = 0x8, scoped, tag = 'scoped memory for tpu_custom_call.1']
    #allocation5 [shape = 'u8[524288]{0}', space=vmem, size = 0x80000, scoped, tag = 'input window, operand 1, single buffered']
    #allocation6 [shape = 's32[1]{0}', space=sflag, size = 0x4, scoped, tag = 'scoped memory for tpu_custom_call.1']
    #allocation7 [shape = 'u8[4096]{0}', space=vmem, size = 0x1000, scoped, tag = 'input window, operand 2, single buffered']
    #allocation8 [shape = 'u8[4096]{0}', space=vmem, size = 0x1000, scoped, tag = 'input window, operand 3, single buffered']
    #allocation9 [shape = 's32[1]{0}', space=sflag, size = 0x4, scoped, tag = 'scoped memory for tpu_custom_call.1']
    #allocation10 [shape = 'u8[4096]{0}', space=vmem, size = 0x1000, scoped, tag = 'input window, operand 4, single buffered']
    #allocation11 [shape = 'u8[2097152]{0}', space=vmem, size = 0x200000, scoped, tag = 'input window, operand 5, single buffered']
    #allocation12 [shape = 's32[1]{0}', space=sflag, size = 0x4, scoped, tag = 'scoped memory for tpu_custom_call.1']
    #allocation13 [shape = 'u8[2048]{0}', space=vmem, size = 0x800, scoped, tag = 'input window, operand 6, single buffered']
    #allocation14 [shape = 'u8[2048]{0}', space=vmem, size = 0x800, scoped, tag = 'input window, operand 7, single buffered']
    #allocation15 [shape = 's32[1]{0}', space=sflag, size = 0x4, scoped, tag = 'scoped memory for tpu_custom_call.1']
    #allocation16 [shape = 'u8[2048]{0}', space=vmem, size = 0x800, scoped, tag = 'input window, operand 8, single buffered']
    #allocation17 [shape = 'u8[524288]{0}', space=vmem, size = 0x80000, scoped, tag = 'input window, operand 9, single buffered']
    #allocation18 [shape = 's32[1]{0}', space=sflag, size = 0x4, scoped, tag = 'scoped memory for tpu_custom_call.1']
    #allocation19 [shape = 'u8[1024]{0}', space=vmem, size = 0x400, scoped, tag = 'input window, operand 10, single buffered']
    #allocation20 [shape = 'u8[1024]{0}', space=vmem, size = 0x400, scoped, tag = 'input window, operand 11, single buffered']
    #allocation21 [shape = 's32[1]{0}', space=sflag, size = 0x4, scoped, tag = 'scoped memory for tpu_custom_call.1']
    #allocation22 [shape = 'u8[1024]{0}', space=vmem, size = 0x400, scoped, tag = 'input window, operand 12, single buffered']
    #allocation23 [shape = 'u8[131072]{0}', space=vmem, size = 0x20000, scoped, tag = 'input window, operand 13, single buffered']
    #allocation24 [shape = 's32[1]{0}', space=sflag, size = 0x4, scoped, tag = 'scoped memory for tpu_custom_call.1']
    #allocation25 [shape = 'u8[512]{0}', space=vmem, size = 0x400, scoped, tag = 'input window, operand 14, single buffered']
    #allocation26 [shape = 'u8[512]{0}', space=vmem, size = 0x400, scoped, tag = 'input window, operand 15, single buffered']
    #allocation27 [shape = 's32[1]{0}', space=sflag, size = 0x4, scoped, tag = 'scoped memory for tpu_custom_call.1']
    #allocation28 [shape = 'u8[512]{0}', space=vmem, size = 0x400, scoped, tag = 'input window, operand 16, single buffered']
    #allocation29 [shape = 'u8[65536]{0}', space=vmem, size = 0x10000, scoped, tag = 'input window, operand 17, single buffered']
    #allocation30 [shape = 's32[1]{0}', space=sflag, size = 0x4, scoped, tag = 'scoped memory for tpu_custom_call.1']
    #allocation31 [shape = 'u8[512]{0}', space=vmem, size = 0x400, scoped, tag = 'input window, operand 18, single buffered']
    #allocation32 [shape = 'u8[65536]{0}', space=vmem, size = 0x10000, scoped, tag = 'input window, operand 19, single buffered']
    #allocation33 [shape = 's32[1]{0}', space=sflag, size = 0x4, scoped, tag = 'scoped memory for tpu_custom_call.1']
    #allocation34 [shape = 'u8[512]{0}', space=vmem, size = 0x400, scoped, tag = 'input window, operand 20, single buffered']
    #allocation35 [shape = 'u8[512]{0}', space=vmem, size = 0x400, scoped, tag = 'input window, operand 21, single buffered']
    #allocation36 [shape = 's32[1]{0}', space=sflag, size = 0x4, scoped, tag = 'scoped memory for tpu_custom_call.1']
    #allocation37 [shape = 'u8[512]{0}', space=vmem, size = 0x400, scoped, tag = 'input window, operand 22, single buffered']
    #allocation38 [shape = 'u8[131072]{0}', space=vmem, size = 0x20000, scoped, tag = 'input window, operand 23, single buffered']
    #allocation39 [shape = 's32[1]{0}', space=sflag, size = 0x4, scoped, tag = 'scoped memory for tpu_custom_call.1']
    #allocation40 [shape = 'u8[1024]{0}', space=vmem, size = 0x400, scoped, tag = 'input window, operand 24, single buffered']
    #allocation41 [shape = 'u8[1024]{0}', space=vmem, size = 0x400, scoped, tag = 'input window, operand 25, single buffered']
    #allocation42 [shape = 's32[1]{0}', space=sflag, size = 0x4, scoped, tag = 'scoped memory for tpu_custom_call.1']
    #allocation43 [shape = 'u8[1024]{0}', space=vmem, size = 0x400, scoped, tag = 'input window, operand 26, single buffered']
    #allocation44 [shape = 'u8[524288]{0}', space=vmem, size = 0x80000, scoped, tag = 'input window, operand 27, single buffered']
    #allocation45 [shape = 's32[1]{0}', space=sflag, size = 0x4, scoped, tag = 'scoped memory for tpu_custom_call.1']
    #allocation46 [shape = 'u8[2048]{0}', space=vmem, size = 0x800, scoped, tag = 'input window, operand 28, single buffered']
    #allocation47 [shape = 'u8[2048]{0}', space=vmem, size = 0x800, scoped, tag = 'input window, operand 29, single buffered']
    #allocation48 [shape = 's32[1]{0}', space=sflag, size = 0x4, scoped, tag = 'scoped memory for tpu_custom_call.1']
    #allocation49 [shape = 'u8[2048]{0}', space=vmem, size = 0x800, scoped, tag = 'input window, operand 30, single buffered']
    #allocation50 [shape = 'u8[2097152]{0}', space=vmem, size = 0x200000, scoped, tag = 'input window, operand 31, single buffered']
    #allocation51 [shape = 's32[1]{0}', space=sflag, size = 0x4, scoped, tag = 'scoped memory for tpu_custom_call.1']
    #allocation52 [shape = 'u8[4096]{0}', space=vmem, size = 0x1000, scoped, tag = 'input window, operand 32, single buffered']
    #allocation53 [shape = 'u8[4096]{0}', space=vmem, size = 0x1000, scoped, tag = 'input window, operand 33, single buffered']
    #allocation54 [shape = 's32[1]{0}', space=sflag, size = 0x4, scoped, tag = 'scoped memory for tpu_custom_call.1']
    #allocation55 [shape = 'u8[4096]{0}', space=vmem, size = 0x1000, scoped, tag = 'input window, operand 34, single buffered']
    #allocation56 [shape = 'u8[524288]{0}', space=vmem, size = 0x80000, scoped, tag = 'input window, operand 35, single buffered']
    #allocation57 [shape = 's32[1]{0}', space=sflag, size = 0x4, scoped, tag = 'scoped memory for tpu_custom_call.1']
    #allocation58 [shape = 'u8[512]{0}', space=vmem, size = 0x400, scoped, tag = 'input window, operand 36, single buffered']
    #allocation59 [shape = 'u8[8192]{0}', space=vmem, size = 0x2000, scoped, tag = 'output window, operand 0']
    %80 = vsyncpa [#allocation3], 0
    %s81 = scalar_lea.sflag [#allocation3], 1
    %82 = vsyncpa %s81, 0
    %83 = vsyncpa [#allocation6], 0
    %84 = vsyncpa [#allocation9], 0
    %85 = vsyncpa [#allocation12], 0
    %86 = vsyncpa [#allocation15], 0
    %87 = vsyncpa [#allocation18], 0
    %88 = vsyncpa [#allocation21], 0
    %89 = vsyncpa [#allocation24], 0
    %90 = vsyncpa [#allocation27], 0
    %91 = vsyncpa [#allocation30], 0
    %92 = vsyncpa [#allocation33], 0
    %93 = vsyncpa [#allocation36], 0
    %94 = vsyncpa [#allocation39], 0
    %95 = vsyncpa [#allocation42], 0
    %96 = vsyncpa [#allocation45], 0
    %97 = vsyncpa [#allocation48], 0
    %98 = vsyncpa [#allocation51], 0
    %99 = vsyncpa [#allocation54], 0
    %100 = vsyncpa [#allocation57], 0
    %101 = vsyncpa [#allocation4], 0
    %s102 = scalar_lea.sflag [#allocation4], 1
    %103 = vsyncpa %s102, 0
    loop: start=0, step=1, limit=4
    $region2: #{tpu_custom_call.1} parent=1 // loop_pre_header
      _
    $region3: #{tpu_custom_call.1} parent=1 // loop_header
      %s105 = sphi 0, %s109
      %p106 = scmp.ge.s32.totalorder %s105, 4
      %s115 = sphi 0, %s117
      %s118 = sphi 0, %s115
      %s119 = sphi 0, %s118
      %s135 = sphi 0, %s119
      %s139 = sphi 0, %s139
      %s141 = sphi 0, %s139
      %s142 = sphi 0, %s141
      %s156 = sphi 0, %s142
      %s160 = sphi 0, %s160
      %s162 = sphi 0, %s160
      %s163 = sphi 0, %s162
      %s177 = sphi 0, %s163
      %s181 = sphi 0, %s181
      %s183 = sphi 0, %s181
      %s184 = sphi 0, %s183
      %s198 = sphi 0, %s184
      %s202 = sphi 0, %s202
      %s204 = sphi 0, %s202
      %s205 = sphi 0, %s204
      %s219 = sphi 0, %s205
      %s223 = sphi 0, %s223
      %s225 = sphi 0, %s223
      %s226 = sphi 0, %s225
      %s240 = sphi 0, %s226
      %s244 = sphi 0, %s244
      %s246 = sphi 0, %s244
      %s247 = sphi 0, %s246
      %s261 = sphi 0, %s247
      %s265 = sphi 0, %s265
      %s267 = sphi 0, %s265
      %s268 = sphi 0, %s267
      %s282 = sphi 0, %s268
      %s286 = sphi 0, %s286
      %s288 = sphi 0, %s286
      %s289 = sphi 0, %s288
      %s303 = sphi 0, %s289
      %s307 = sphi 0, %s307
      %s309 = sphi 0, %s307
      %s310 = sphi 0, %s309
      %s324 = sphi 0, %s310
      %s328 = sphi 0, %s328
      %s330 = sphi 0, %s328
      %s331 = sphi 0, %s330
      %s345 = sphi 0, %s331
      %s349 = sphi 0, %s349
      %s351 = sphi 0, %s349
      %s352 = sphi 0, %s351
      %s366 = sphi 0, %s352
      %s370 = sphi 0, %s370
      %s372 = sphi 0, %s370
      %s373 = sphi 0, %s372
      %s387 = sphi 0, %s373
      %s391 = sphi 0, %s391
      %s393 = sphi 0, %s391
      %s394 = sphi 0, %s393
      %s408 = sphi 0, %s394
      %s412 = sphi 0, %s412
      %s414 = sphi 0, %s412
      %s415 = sphi 0, %s414
      %s429 = sphi 0, %s415
      %s433 = sphi 0, %s433
      %s435 = sphi 0, %s433
      %s436 = sphi 0, %s435
      %s450 = sphi 0, %s436
      %s454 = sphi 0, %s454
      %s456 = sphi 0, %s454
      %s457 = sphi 0, %s456
      %s471 = sphi 0, %s457
      %s475 = sphi 0, %s475
      %s477 = sphi 0, %s475
      %s478 = sphi 0, %s477
      %s492 = sphi 0, %s478
      %s496 = sphi 0, %s496
      %s498 = sphi 0, %s496
      %s499 = sphi 0, %s498
      %s513 = sphi 0, %s499
      %s517 = sphi 0, %s517
      %s519 = sphi 0, %s517
      %s520 = sphi 0, %s519
      %s534 = sphi 0, %s520
      %s538 = sphi 0, %s538
      %s540 = sphi 0, %s538
      %s541 = sphi 0, %s540
      %s555 = sphi 0, %s541
      %s559 = sphi 0, %s559
      %s561 = sphi 0, %s559
      %s562 = sphi 0, %s561
      %s576 = sphi 0, %s562
      %s580 = sphi 0, %s580
      %s582 = sphi 0, %s580
      %s583 = sphi 0, %s582
      %s597 = sphi 0, %s583
      %s601 = sphi 0, %s601
      %s603 = sphi 0, %s601
      %s604 = sphi 0, %s603
      %s618 = sphi 0, %s604
      %s622 = sphi 0, %s622
      %s624 = sphi 0, %s622
      %s625 = sphi 0, %s624
      %s639 = sphi 0, %s625
      %s643 = sphi 0, %s643
      %s645 = sphi 0, %s643
      %s646 = sphi 0, %s645
      %s660 = sphi 0, %s646
      %s664 = sphi 0, %s664
      %s666 = sphi 0, %s664
      %s667 = sphi 0, %s666
      %s681 = sphi 0, %s667
      %s685 = sphi 0, %s685
      %s687 = sphi 0, %s685
      %s688 = sphi 0, %s687
      %s702 = sphi 0, %s688
      %s706 = sphi 0, %s706
      %s708 = sphi 0, %s706
      %s709 = sphi 0, %s708
      %s723 = sphi 0, %s709
      %s727 = sphi 0, %s727
      %s729 = sphi 0, %s727
      %s730 = sphi 0, %s729
      %s744 = sphi 0, %s730
      %s748 = sphi 0, %s748
      %s750 = sphi 0, %s748
      %s751 = sphi 0, %s750
      %s765 = sphi 0, %s751
      %s769 = sphi 0, %s769
      %s771 = sphi 0, %s769
      %s772 = sphi 0, %s771
      %s786 = sphi 0, %s772
      %s790 = sphi 0, %s790
      %s792 = sphi 0, %s790
      %s793 = sphi 0, %s792
      %s807 = sphi 0, %s793
      %s811 = sphi 0, %s811
      %s813 = sphi 0, %s811
      %s814 = sphi 0, %s813
      %s828 = sphi 0, %s814
      %s832 = sphi 0, %s832
      %s834 = sphi 0, %s832
      %s835 = sphi 0, %s834
      %s849 = sphi 0, %s835
      %s853 = sphi 0, %s853
      %s855 = sphi 0, %s853
      %s856 = sphi 0, %s855
      %s870 = sphi 0, %s856
      %s874 = sphi 0, %s874
      %s876 = sphi 0, %s874
      %s877 = sphi 0, %s876
      %s891 = sphi 0, %s877
      %s897 = sphi 0, %s899
      %s900 = sphi 0, %s897
      %s901 = sphi 0, %s900
      %s917 = sphi 0, %s901
    $region4: #{tpu_custom_call.1} parent=1 // loop_header_branch
      %108 = sbr.rel (%p106) target = $region8
    $region5: #{tpu_custom_call.1} parent=1 // loop_body
      %s110 = ssub.s32 %s105, 1
      %s111 = ssub.s32 %s105, 2
      %s112 = sadd.s32 %s105, 1
      %s113 = ssub.s32 %s105, %s112
      %p114 = scmp.eq.s32.totalorder %s113, 0
      %s116 = sadd.s32 %s115, 1
      %s117 = scalar_select %p114, %s115, %s116
      %p120 = pneg %p114
      %p121 = scmp.eq.s32.totalorder %s105, 1
      %p122 = por %p120, %p121
      %p123 = scmp.ne.s32.totalorder %s115, %s118
      %p124 = scmp.eq.s32.totalorder %s105, 0
      %p125 = por %p123, %p124
      %p126 = scmp.ne.s32.totalorder %s115, %s118
      %p127 = scmp.eq.s32.totalorder %s110, 1
      %p128 = por %p126, %p127
      %p129 = scmp.ne.s32.totalorder %s118, %s119
      %p130 = scmp.eq.s32.totalorder %s110, 0
      %p131 = por %p129, %p130
      %p132 = scmp.ne.s32.totalorder %s118, %s119
      %p133 = scmp.eq.s32.totalorder %s111, 1
      %p134 = por %p132, %p133
      %p136 = scmp.ne.s32.totalorder %s119, %s135
      %p137 = scmp.eq.s32.totalorder %s111, 0
      %p138 = por %p136, %p137
      %s140 = sadd.s32 %s139, 1
      %p143 = scmp.eq.s32.totalorder %s105, 1
      %p144 = scmp.ne.s32.totalorder %s139, %s141
      %p145 = scmp.eq.s32.totalorder %s105, 0
      %p146 = por %p144, %p145
      %p147 = scmp.ne.s32.totalorder %s139, %s141
      %p148 = scmp.eq.s32.totalorder %s110, 1
      %p149 = por %p147, %p148
      %p150 = scmp.ne.s32.totalorder %s141, %s142
      %p151 = scmp.eq.s32.totalorder %s110, 0
      %p152 = por %p150, %p151
      %p153 = scmp.ne.s32.totalorder %s141, %s142
      %p154 = scmp.eq.s32.totalorder %s111, 1
      %p155 = por %p153, %p154
      %p157 = scmp.ne.s32.totalorder %s142, %s156
      %p158 = scmp.eq.s32.totalorder %s111, 0
      %p159 = por %p157, %p158
      %s161 = sadd.s32 %s160, 1
      %p164 = scmp.eq.s32.totalorder %s105, 1
      %p165 = scmp.ne.s32.totalorder %s160, %s162
      %p166 = scmp.eq.s32.totalorder %s105, 0
      %p167 = por %p165, %p166
      %p168 = scmp.ne.s32.totalorder %s160, %s162
      %p169 = scmp.eq.s32.totalorder %s110, 1
      %p170 = por %p168, %p169
      %p171 = scmp.ne.s32.totalorder %s162, %s163
      %p172 = scmp.eq.s32.totalorder %s110, 0
      %p173 = por %p171, %p172
      %p174 = scmp.ne.s32.totalorder %s162, %s163
      %p175 = scmp.eq.s32.totalorder %s111, 1
      %p176 = por %p174, %p175
      %p178 = scmp.ne.s32.totalorder %s163, %s177
      %p179 = scmp.eq.s32.totalorder %s111, 0
      %p180 = por %p178, %p179
      %s182 = sadd.s32 %s181, 1
      %p185 = scmp.eq.s32.totalorder %s105, 1
      %p186 = scmp.ne.s32.totalorder %s181, %s183
      %p187 = scmp.eq.s32.totalorder %s105, 0
      %p188 = por %p186, %p187
      %p189 = scmp.ne.s32.totalorder %s181, %s183
      %p190 = scmp.eq.s32.totalorder %s110, 1
      %p191 = por %p189, %p190
      %p192 = scmp.ne.s32.totalorder %s183, %s184
      %p193 = scmp.eq.s32.totalorder %s110, 0
      %p194 = por %p192, %p193
      %p195 = scmp.ne.s32.totalorder %s183, %s184
      %p196 = scmp.eq.s32.totalorder %s111, 1
      %p197 = por %p195, %p196
      %p199 = scmp.ne.s32.totalorder %s184, %s198
      %p200 = scmp.eq.s32.totalorder %s111, 0
      %p201 = por %p199, %p200
      %s203 = sadd.s32 %s202, 1
      %p206 = scmp.eq.s32.totalorder %s105, 1
      %p207 = scmp.ne.s32.totalorder %s202, %s204
      %p208 = scmp.eq.s32.totalorder %s105, 0
      %p209 = por %p207, %p208
      %p210 = scmp.ne.s32.totalorder %s202, %s204
      %p211 = scmp.eq.s32.totalorder %s110, 1
      %p212 = por %p210, %p211
      %p213 = scmp.ne.s32.totalorder %s204, %s205
      %p214 = scmp.eq.s32.totalorder %s110, 0
      %p215 = por %p213, %p214
      %p216 = scmp.ne.s32.totalorder %s204, %s205
      %p217 = scmp.eq.s32.totalorder %s111, 1
      %p218 = por %p216, %p217
      %p220 = scmp.ne.s32.totalorder %s205, %s219
      %p221 = scmp.eq.s32.totalorder %s111, 0
      %p222 = por %p220, %p221
      %s224 = sadd.s32 %s223, 1
      %p227 = scmp.eq.s32.totalorder %s105, 1
      %p228 = scmp.ne.s32.totalorder %s223, %s225
      %p229 = scmp.eq.s32.totalorder %s105, 0
      %p230 = por %p228, %p229
      %p231 = scmp.ne.s32.totalorder %s223, %s225
      %p232 = scmp.eq.s32.totalorder %s110, 1
      %p233 = por %p231, %p232
      %p234 = scmp.ne.s32.totalorder %s225, %s226
      %p235 = scmp.eq.s32.totalorder %s110, 0
      %p236 = por %p234, %p235
      %p237 = scmp.ne.s32.totalorder %s225, %s226
      %p238 = scmp.eq.s32.totalorder %s111, 1
      %p239 = por %p237, %p238
      %p241 = scmp.ne.s32.totalorder %s226, %s240
      %p242 = scmp.eq.s32.totalorder %s111, 0
      %p243 = por %p241, %p242
      %s245 = sadd.s32 %s244, 1
      %p248 = scmp.eq.s32.totalorder %s105, 1
      %p249 = scmp.ne.s32.totalorder %s244, %s246
      %p250 = scmp.eq.s32.totalorder %s105, 0
      %p251 = por %p249, %p250
      %p252 = scmp.ne.s32.totalorder %s244, %s246
      %p253 = scmp.eq.s32.totalorder %s110, 1
      %p254 = por %p252, %p253
      %p255 = scmp.ne.s32.totalorder %s246, %s247
      %p256 = scmp.eq.s32.totalorder %s110, 0
      %p257 = por %p255, %p256
      %p258 = scmp.ne.s32.totalorder %s246, %s247
      %p259 = scmp.eq.s32.totalorder %s111, 1
      %p260 = por %p258, %p259
      %p262 = scmp.ne.s32.totalorder %s247, %s261
      %p263 = scmp.eq.s32.totalorder %s111, 0
      %p264 = por %p262, %p263
      %s266 = sadd.s32 %s265, 1
      %p269 = scmp.eq.s32.totalorder %s105, 1
      %p270 = scmp.ne.s32.totalorder %s265, %s267
      %p271 = scmp.eq.s32.totalorder %s105, 0
      %p272 = por %p270, %p271
      %p273 = scmp.ne.s32.totalorder %s265, %s267
      %p274 = scmp.eq.s32.totalorder %s110, 1
      %p275 = por %p273, %p274
      %p276 = scmp.ne.s32.totalorder %s267, %s268
      %p277 = scmp.eq.s32.totalorder %s110, 0
      %p278 = por %p276, %p277
      %p279 = scmp.ne.s32.totalorder %s267, %s268
      %p280 = scmp.eq.s32.totalorder %s111, 1
      %p281 = por %p279, %p280
      %p283 = scmp.ne.s32.totalorder %s268, %s282
      %p284 = scmp.eq.s32.totalorder %s111, 0
      %p285 = por %p283, %p284
      %s287 = sadd.s32 %s286, 1
      %p290 = scmp.eq.s32.totalorder %s105, 1
      %p291 = scmp.ne.s32.totalorder %s286, %s288
      %p292 = scmp.eq.s32.totalorder %s105, 0
      %p293 = por %p291, %p292
      %p294 = scmp.ne.s32.totalorder %s286, %s288
      %p295 = scmp.eq.s32.totalorder %s110, 1
      %p296 = por %p294, %p295
      %p297 = scmp.ne.s32.totalorder %s288, %s289
      %p298 = scmp.eq.s32.totalorder %s110, 0
      %p299 = por %p297, %p298
      %p300 = scmp.ne.s32.totalorder %s288, %s289
      %p301 = scmp.eq.s32.totalorder %s111, 1
      %p302 = por %p300, %p301
      %p304 = scmp.ne.s32.totalorder %s289, %s303
      %p305 = scmp.eq.s32.totalorder %s111, 0
      %p306 = por %p304, %p305
      %s308 = sadd.s32 %s307, 1
      %p311 = scmp.eq.s32.totalorder %s105, 1
      %p312 = scmp.ne.s32.totalorder %s307, %s309
      %p313 = scmp.eq.s32.totalorder %s105, 0
      %p314 = por %p312, %p313
      %p315 = scmp.ne.s32.totalorder %s307, %s309
      %p316 = scmp.eq.s32.totalorder %s110, 1
      %p317 = por %p315, %p316
      %p318 = scmp.ne.s32.totalorder %s309, %s310
      %p319 = scmp.eq.s32.totalorder %s110, 0
      %p320 = por %p318, %p319
      %p321 = scmp.ne.s32.totalorder %s309, %s310
      %p322 = scmp.eq.s32.totalorder %s111, 1
      %p323 = por %p321, %p322
      %p325 = scmp.ne.s32.totalorder %s310, %s324
      %p326 = scmp.eq.s32.totalorder %s111, 0
      %p327 = por %p325, %p326
      %s329 = sadd.s32 %s328, 1
      %p332 = scmp.eq.s32.totalorder %s105, 1
      %p333 = scmp.ne.s32.totalorder %s328, %s330
      %p334 = scmp.eq.s32.totalorder %s105, 0
      %p335 = por %p333, %p334
      %p336 = scmp.ne.s32.totalorder %s328, %s330
      %p337 = scmp.eq.s32.totalorder %s110, 1
      %p338 = por %p336, %p337
      %p339 = scmp.ne.s32.totalorder %s330, %s331
      %p340 = scmp.eq.s32.totalorder %s110, 0
      %p341 = por %p339, %p340
      %p342 = scmp.ne.s32.totalorder %s330, %s331
      %p343 = scmp.eq.s32.totalorder %s111, 1
      %p344 = por %p342, %p343
      %p346 = scmp.ne.s32.totalorder %s331, %s345
      %p347 = scmp.eq.s32.totalorder %s111, 0
      %p348 = por %p346, %p347
      %s350 = sadd.s32 %s349, 1
      %p353 = scmp.eq.s32.totalorder %s105, 1
      %p354 = scmp.ne.s32.totalorder %s349, %s351
      %p355 = scmp.eq.s32.totalorder %s105, 0
      %p356 = por %p354, %p355
      %p357 = scmp.ne.s32.totalorder %s349, %s351
      %p358 = scmp.eq.s32.totalorder %s110, 1
      %p359 = por %p357, %p358
      %p360 = scmp.ne.s32.totalorder %s351, %s352
      %p361 = scmp.eq.s32.totalorder %s110, 0
      %p362 = por %p360, %p361
      %p363 = scmp.ne.s32.totalorder %s351, %s352
      %p364 = scmp.eq.s32.totalorder %s111, 1
      %p365 = por %p363, %p364
      %p367 = scmp.ne.s32.totalorder %s352, %s366
      %p368 = scmp.eq.s32.totalorder %s111, 0
      %p369 = por %p367, %p368
      %s371 = sadd.s32 %s370, 1
      %p374 = scmp.eq.s32.totalorder %s105, 1
      %p375 = scmp.ne.s32.totalorder %s370, %s372
      %p376 = scmp.eq.s32.totalorder %s105, 0
      %p377 = por %p375, %p376
      %p378 = scmp.ne.s32.totalorder %s370, %s372
      %p379 = scmp.eq.s32.totalorder %s110, 1
      %p380 = por %p378, %p379
      %p381 = scmp.ne.s32.totalorder %s372, %s373
      %p382 = scmp.eq.s32.totalorder %s110, 0
      %p383 = por %p381, %p382
      %p384 = scmp.ne.s32.totalorder %s372, %s373
      %p385 = scmp.eq.s32.totalorder %s111, 1
      %p386 = por %p384, %p385
      %p388 = scmp.ne.s32.totalorder %s373, %s387
      %p389 = scmp.eq.s32.totalorder %s111, 0
      %p390 = por %p388, %p389
      %s392 = sadd.s32 %s391, 1
      %p395 = scmp.eq.s32.totalorder %s105, 1
      %p396 = scmp.ne.s32.totalorder %s391, %s393
      %p397 = scmp.eq.s32.totalorder %s105, 0
      %p398 = por %p396, %p397
      %p399 = scmp.ne.s32.totalorder %s391, %s393
      %p400 = scmp.eq.s32.totalorder %s110, 1
      %p401 = por %p399, %p400
      %p402 = scmp.ne.s32.totalorder %s393, %s394
      %p403 = scmp.eq.s32.totalorder %s110, 0
      %p404 = por %p402, %p403
      %p405 = scmp.ne.s32.totalorder %s393, %s394
      %p406 = scmp.eq.s32.totalorder %s111, 1
      %p407 = por %p405, %p406
      %p409 = scmp.ne.s32.totalorder %s394, %s408
      %p410 = scmp.eq.s32.totalorder %s111, 0
      %p411 = por %p409, %p410
      %s413 = sadd.s32 %s412, 1
      %p416 = scmp.eq.s32.totalorder %s105, 1
      %p417 = scmp.ne.s32.totalorder %s412, %s414
      %p418 = scmp.eq.s32.totalorder %s105, 0
      %p419 = por %p417, %p418
      %p420 = scmp.ne.s32.totalorder %s412, %s414
      %p421 = scmp.eq.s32.totalorder %s110, 1
      %p422 = por %p420, %p421
      %p423 = scmp.ne.s32.totalorder %s414, %s415
      %p424 = scmp.eq.s32.totalorder %s110, 0
      %p425 = por %p423, %p424
      %p426 = scmp.ne.s32.totalorder %s414, %s415
      %p427 = scmp.eq.s32.totalorder %s111, 1
      %p428 = por %p426, %p427
      %p430 = scmp.ne.s32.totalorder %s415, %s429
      %p431 = scmp.eq.s32.totalorder %s111, 0
      %p432 = por %p430, %p431
      %s434 = sadd.s32 %s433, 1
      %p437 = scmp.eq.s32.totalorder %s105, 1
      %p438 = scmp.ne.s32.totalorder %s433, %s435
      %p439 = scmp.eq.s32.totalorder %s105, 0
      %p440 = por %p438, %p439
      %p441 = scmp.ne.s32.totalorder %s433, %s435
      %p442 = scmp.eq.s32.totalorder %s110, 1
      %p443 = por %p441, %p442
      %p444 = scmp.ne.s32.totalorder %s435, %s436
      %p445 = scmp.eq.s32.totalorder %s110, 0
      %p446 = por %p444, %p445
      %p447 = scmp.ne.s32.totalorder %s435, %s436
      %p448 = scmp.eq.s32.totalorder %s111, 1
      %p449 = por %p447, %p448
      %p451 = scmp.ne.s32.totalorder %s436, %s450
      %p452 = scmp.eq.s32.totalorder %s111, 0
      %p453 = por %p451, %p452
      %s455 = sadd.s32 %s454, 1
      %p458 = scmp.eq.s32.totalorder %s105, 1
      %p459 = scmp.ne.s32.totalorder %s454, %s456
      %p460 = scmp.eq.s32.totalorder %s105, 0
      %p461 = por %p459, %p460
      %p462 = scmp.ne.s32.totalorder %s454, %s456
      %p463 = scmp.eq.s32.totalorder %s110, 1
      %p464 = por %p462, %p463
      %p465 = scmp.ne.s32.totalorder %s456, %s457
      %p466 = scmp.eq.s32.totalorder %s110, 0
      %p467 = por %p465, %p466
      %p468 = scmp.ne.s32.totalorder %s456, %s457
      %p469 = scmp.eq.s32.totalorder %s111, 1
      %p470 = por %p468, %p469
      %p472 = scmp.ne.s32.totalorder %s457, %s471
      %p473 = scmp.eq.s32.totalorder %s111, 0
      %p474 = por %p472, %p473
      %s476 = sadd.s32 %s475, 1
      %p479 = scmp.eq.s32.totalorder %s105, 1
      %p480 = scmp.ne.s32.totalorder %s475, %s477
      %p481 = scmp.eq.s32.totalorder %s105, 0
      %p482 = por %p480, %p481
      %p483 = scmp.ne.s32.totalorder %s475, %s477
      %p484 = scmp.eq.s32.totalorder %s110, 1
      %p485 = por %p483, %p484
      %p486 = scmp.ne.s32.totalorder %s477, %s478
      %p487 = scmp.eq.s32.totalorder %s110, 0
      %p488 = por %p486, %p487
      %p489 = scmp.ne.s32.totalorder %s477, %s478
      %p490 = scmp.eq.s32.totalorder %s111, 1
      %p491 = por %p489, %p490
      %p493 = scmp.ne.s32.totalorder %s478, %s492
      %p494 = scmp.eq.s32.totalorder %s111, 0
      %p495 = por %p493, %p494
      %s497 = sadd.s32 %s496, 1
      %p500 = scmp.eq.s32.totalorder %s105, 1
      %p501 = scmp.ne.s32.totalorder %s496, %s498
      %p502 = scmp.eq.s32.totalorder %s105, 0
      %p503 = por %p501, %p502
      %p504 = scmp.ne.s32.totalorder %s496, %s498
      %p505 = scmp.eq.s32.totalorder %s110, 1
      %p506 = por %p504, %p505
      %p507 = scmp.ne.s32.totalorder %s498, %s499
      %p508 = scmp.eq.s32.totalorder %s110, 0
      %p509 = por %p507, %p508
      %p510 = scmp.ne.s32.totalorder %s498, %s499
      %p511 = scmp.eq.s32.totalorder %s111, 1
      %p512 = por %p510, %p511
      %p514 = scmp.ne.s32.totalorder %s499, %s513
      %p515 = scmp.eq.s32.totalorder %s111, 0
      %p516 = por %p514, %p515
      %s518 = sadd.s32 %s517, 1
      %p521 = scmp.eq.s32.totalorder %s105, 1
      %p522 = scmp.ne.s32.totalorder %s517, %s519
      %p523 = scmp.eq.s32.totalorder %s105, 0
      %p524 = por %p522, %p523
      %p525 = scmp.ne.s32.totalorder %s517, %s519
      %p526 = scmp.eq.s32.totalorder %s110, 1
      %p527 = por %p525, %p526
      %p528 = scmp.ne.s32.totalorder %s519, %s520
      %p529 = scmp.eq.s32.totalorder %s110, 0
      %p530 = por %p528, %p529
      %p531 = scmp.ne.s32.totalorder %s519, %s520
      %p532 = scmp.eq.s32.totalorder %s111, 1
      %p533 = por %p531, %p532
      %p535 = scmp.ne.s32.totalorder %s520, %s534
      %p536 = scmp.eq.s32.totalorder %s111, 0
      %p537 = por %p535, %p536
      %s539 = sadd.s32 %s538, 1
      %p542 = scmp.eq.s32.totalorder %s105, 1
      %p543 = scmp.ne.s32.totalorder %s538, %s540
      %p544 = scmp.eq.s32.totalorder %s105, 0
      %p545 = por %p543, %p544
      %p546 = scmp.ne.s32.totalorder %s538, %s540
      %p547 = scmp.eq.s32.totalorder %s110, 1
      %p548 = por %p546, %p547
      %p549 = scmp.ne.s32.totalorder %s540, %s541
      %p550 = scmp.eq.s32.totalorder %s110, 0
      %p551 = por %p549, %p550
      %p552 = scmp.ne.s32.totalorder %s540, %s541
      %p553 = scmp.eq.s32.totalorder %s111, 1
      %p554 = por %p552, %p553
      %p556 = scmp.ne.s32.totalorder %s541, %s555
      %p557 = scmp.eq.s32.totalorder %s111, 0
      %p558 = por %p556, %p557
      %s560 = sadd.s32 %s559, 1
      %p563 = scmp.eq.s32.totalorder %s105, 1
      %p564 = scmp.ne.s32.totalorder %s559, %s561
      %p565 = scmp.eq.s32.totalorder %s105, 0
      %p566 = por %p564, %p565
      %p567 = scmp.ne.s32.totalorder %s559, %s561
      %p568 = scmp.eq.s32.totalorder %s110, 1
      %p569 = por %p567, %p568
      %p570 = scmp.ne.s32.totalorder %s561, %s562
      %p571 = scmp.eq.s32.totalorder %s110, 0
      %p572 = por %p570, %p571
      %p573 = scmp.ne.s32.totalorder %s561, %s562
      %p574 = scmp.eq.s32.totalorder %s111, 1
      %p575 = por %p573, %p574
      %p577 = scmp.ne.s32.totalorder %s562, %s576
      %p578 = scmp.eq.s32.totalorder %s111, 0
      %p579 = por %p577, %p578
      %s581 = sadd.s32 %s580, 1
      %p584 = scmp.eq.s32.totalorder %s105, 1
      %p585 = scmp.ne.s32.totalorder %s580, %s582
      %p586 = scmp.eq.s32.totalorder %s105, 0
      %p587 = por %p585, %p586
      %p588 = scmp.ne.s32.totalorder %s580, %s582
      %p589 = scmp.eq.s32.totalorder %s110, 1
      %p590 = por %p588, %p589
      %p591 = scmp.ne.s32.totalorder %s582, %s583
      %p592 = scmp.eq.s32.totalorder %s110, 0
      %p593 = por %p591, %p592
      %p594 = scmp.ne.s32.totalorder %s582, %s583
      %p595 = scmp.eq.s32.totalorder %s111, 1
      %p596 = por %p594, %p595
      %p598 = scmp.ne.s32.totalorder %s583, %s597
      %p599 = scmp.eq.s32.totalorder %s111, 0
      %p600 = por %p598, %p599
      %s602 = sadd.s32 %s601, 1
      %p605 = scmp.eq.s32.totalorder %s105, 1
      %p606 = scmp.ne.s32.totalorder %s601, %s603
      %p607 = scmp.eq.s32.totalorder %s105, 0
      %p608 = por %p606, %p607
      %p609 = scmp.ne.s32.totalorder %s601, %s603
      %p610 = scmp.eq.s32.totalorder %s110, 1
      %p611 = por %p609, %p610
      %p612 = scmp.ne.s32.totalorder %s603, %s604
      %p613 = scmp.eq.s32.totalorder %s110, 0
      %p614 = por %p612, %p613
      %p615 = scmp.ne.s32.totalorder %s603, %s604
      %p616 = scmp.eq.s32.totalorder %s111, 1
      %p617 = por %p615, %p616
      %p619 = scmp.ne.s32.totalorder %s604, %s618
      %p620 = scmp.eq.s32.totalorder %s111, 0
      %p621 = por %p619, %p620
      %s623 = sadd.s32 %s622, 1
      %p626 = scmp.eq.s32.totalorder %s105, 1
      %p627 = scmp.ne.s32.totalorder %s622, %s624
      %p628 = scmp.eq.s32.totalorder %s105, 0
      %p629 = por %p627, %p628
      %p630 = scmp.ne.s32.totalorder %s622, %s624
      %p631 = scmp.eq.s32.totalorder %s110, 1
      %p632 = por %p630, %p631
      %p633 = scmp.ne.s32.totalorder %s624, %s625
      %p634 = scmp.eq.s32.totalorder %s110, 0
      %p635 = por %p633, %p634
      %p636 = scmp.ne.s32.totalorder %s624, %s625
      %p637 = scmp.eq.s32.totalorder %s111, 1
      %p638 = por %p636, %p637
      %p640 = scmp.ne.s32.totalorder %s625, %s639
      %p641 = scmp.eq.s32.totalorder %s111, 0
      %p642 = por %p640, %p641
      %s644 = sadd.s32 %s643, 1
      %p647 = scmp.eq.s32.totalorder %s105, 1
      %p648 = scmp.ne.s32.totalorder %s643, %s645
      %p649 = scmp.eq.s32.totalorder %s105, 0
      %p650 = por %p648, %p649
      %p651 = scmp.ne.s32.totalorder %s643, %s645
      %p652 = scmp.eq.s32.totalorder %s110, 1
      %p653 = por %p651, %p652
      %p654 = scmp.ne.s32.totalorder %s645, %s646
      %p655 = scmp.eq.s32.totalorder %s110, 0
      %p656 = por %p654, %p655
      %p657 = scmp.ne.s32.totalorder %s645, %s646
      %p658 = scmp.eq.s32.totalorder %s111, 1
      %p659 = por %p657, %p658
      %p661 = scmp.ne.s32.totalorder %s646, %s660
      %p662 = scmp.eq.s32.totalorder %s111, 0
      %p663 = por %p661, %p662
      %s665 = sadd.s32 %s664, 1
      %p668 = scmp.eq.s32.totalorder %s105, 1
      %p669 = scmp.ne.s32.totalorder %s664, %s666
      %p670 = scmp.eq.s32.totalorder %s105, 0
      %p671 = por %p669, %p670
      %p672 = scmp.ne.s32.totalorder %s664, %s666
      %p673 = scmp.eq.s32.totalorder %s110, 1
      %p674 = por %p672, %p673
      %p675 = scmp.ne.s32.totalorder %s666, %s667
      %p676 = scmp.eq.s32.totalorder %s110, 0
      %p677 = por %p675, %p676
      %p678 = scmp.ne.s32.totalorder %s666, %s667
      %p679 = scmp.eq.s32.totalorder %s111, 1
      %p680 = por %p678, %p679
      %p682 = scmp.ne.s32.totalorder %s667, %s681
      %p683 = scmp.eq.s32.totalorder %s111, 0
      %p684 = por %p682, %p683
      %s686 = sadd.s32 %s685, 1
      %p689 = scmp.eq.s32.totalorder %s105, 1
      %p690 = scmp.ne.s32.totalorder %s685, %s687
      %p691 = scmp.eq.s32.totalorder %s105, 0
      %p692 = por %p690, %p691
      %p693 = scmp.ne.s32.totalorder %s685, %s687
      %p694 = scmp.eq.s32.totalorder %s110, 1
      %p695 = por %p693, %p694
      %p696 = scmp.ne.s32.totalorder %s687, %s688
      %p697 = scmp.eq.s32.totalorder %s110, 0
      %p698 = por %p696, %p697
      %p699 = scmp.ne.s32.totalorder %s687, %s688
      %p700 = scmp.eq.s32.totalorder %s111, 1
      %p701 = por %p699, %p700
      %p703 = scmp.ne.s32.totalorder %s688, %s702
      %p704 = scmp.eq.s32.totalorder %s111, 0
      %p705 = por %p703, %p704
      %s707 = sadd.s32 %s706, 1
      %p710 = scmp.eq.s32.totalorder %s105, 1
      %p711 = scmp.ne.s32.totalorder %s706, %s708
      %p712 = scmp.eq.s32.totalorder %s105, 0
      %p713 = por %p711, %p712
      %p714 = scmp.ne.s32.totalorder %s706, %s708
      %p715 = scmp.eq.s32.totalorder %s110, 1
      %p716 = por %p714, %p715
      %p717 = scmp.ne.s32.totalorder %s708, %s709
      %p718 = scmp.eq.s32.totalorder %s110, 0
      %p719 = por %p717, %p718
      %p720 = scmp.ne.s32.totalorder %s708, %s709
      %p721 = scmp.eq.s32.totalorder %s111, 1
      %p722 = por %p720, %p721
      %p724 = scmp.ne.s32.totalorder %s709, %s723
      %p725 = scmp.eq.s32.totalorder %s111, 0
      %p726 = por %p724, %p725
      %s728 = sadd.s32 %s727, 1
      %p731 = scmp.eq.s32.totalorder %s105, 1
      %p732 = scmp.ne.s32.totalorder %s727, %s729
      %p733 = scmp.eq.s32.totalorder %s105, 0
      %p734 = por %p732, %p733
      %p735 = scmp.ne.s32.totalorder %s727, %s729
      %p736 = scmp.eq.s32.totalorder %s110, 1
      %p737 = por %p735, %p736
      %p738 = scmp.ne.s32.totalorder %s729, %s730
      %p739 = scmp.eq.s32.totalorder %s110, 0
      %p740 = por %p738, %p739
      %p741 = scmp.ne.s32.totalorder %s729, %s730
      %p742 = scmp.eq.s32.totalorder %s111, 1
      %p743 = por %p741, %p742
      %p745 = scmp.ne.s32.totalorder %s730, %s744
      %p746 = scmp.eq.s32.totalorder %s111, 0
      %p747 = por %p745, %p746
      %s749 = sadd.s32 %s748, 1
      %p752 = scmp.eq.s32.totalorder %s105, 1
      %p753 = scmp.ne.s32.totalorder %s748, %s750
      %p754 = scmp.eq.s32.totalorder %s105, 0
      %p755 = por %p753, %p754
      %p756 = scmp.ne.s32.totalorder %s748, %s750
      %p757 = scmp.eq.s32.totalorder %s110, 1
      %p758 = por %p756, %p757
      %p759 = scmp.ne.s32.totalorder %s750, %s751
      %p760 = scmp.eq.s32.totalorder %s110, 0
      %p761 = por %p759, %p760
      %p762 = scmp.ne.s32.totalorder %s750, %s751
      %p763 = scmp.eq.s32.totalorder %s111, 1
      %p764 = por %p762, %p763
      %p766 = scmp.ne.s32.totalorder %s751, %s765
      %p767 = scmp.eq.s32.totalorder %s111, 0
      %p768 = por %p766, %p767
      %s770 = sadd.s32 %s769, 1
      %p773 = scmp.eq.s32.totalorder %s105, 1
      %p774 = scmp.ne.s32.totalorder %s769, %s771
      %p775 = scmp.eq.s32.totalorder %s105, 0
      %p776 = por %p774, %p775
      %p777 = scmp.ne.s32.totalorder %s769, %s771
      %p778 = scmp.eq.s32.totalorder %s110, 1
      %p779 = por %p777, %p778
      %p780 = scmp.ne.s32.totalorder %s771, %s772
      %p781 = scmp.eq.s32.totalorder %s110, 0
      %p782 = por %p780, %p781
      %p783 = scmp.ne.s32.totalorder %s771, %s772
      %p784 = scmp.eq.s32.totalorder %s111, 1
      %p785 = por %p783, %p784
      %p787 = scmp.ne.s32.totalorder %s772, %s786
      %p788 = scmp.eq.s32.totalorder %s111, 0
      %p789 = por %p787, %p788
      %s791 = sadd.s32 %s790, 1
      %p794 = scmp.eq.s32.totalorder %s105, 1
      %p795 = scmp.ne.s32.totalorder %s790, %s792
      %p796 = scmp.eq.s32.totalorder %s105, 0
      %p797 = por %p795, %p796
      %p798 = scmp.ne.s32.totalorder %s790, %s792
      %p799 = scmp.eq.s32.totalorder %s110, 1
      %p800 = por %p798, %p799
      %p801 = scmp.ne.s32.totalorder %s792, %s793
      %p802 = scmp.eq.s32.totalorder %s110, 0
      %p803 = por %p801, %p802
      %p804 = scmp.ne.s32.totalorder %s792, %s793
      %p805 = scmp.eq.s32.totalorder %s111, 1
      %p806 = por %p804, %p805
      %p808 = scmp.ne.s32.totalorder %s793, %s807
      %p809 = scmp.eq.s32.totalorder %s111, 0
      %p810 = por %p808, %p809
      %s812 = sadd.s32 %s811, 1
      %p815 = scmp.eq.s32.totalorder %s105, 1
      %p816 = scmp.ne.s32.totalorder %s811, %s813
      %p817 = scmp.eq.s32.totalorder %s105, 0
      %p818 = por %p816, %p817
      %p819 = scmp.ne.s32.totalorder %s811, %s813
      %p820 = scmp.eq.s32.totalorder %s110, 1
      %p821 = por %p819, %p820
      %p822 = scmp.ne.s32.totalorder %s813, %s814
      %p823 = scmp.eq.s32.totalorder %s110, 0
      %p824 = por %p822, %p823
      %p825 = scmp.ne.s32.totalorder %s813, %s814
      %p826 = scmp.eq.s32.totalorder %s111, 1
      %p827 = por %p825, %p826
      %p829 = scmp.ne.s32.totalorder %s814, %s828
      %p830 = scmp.eq.s32.totalorder %s111, 0
      %p831 = por %p829, %p830
      %s833 = sadd.s32 %s832, 1
      %p836 = scmp.eq.s32.totalorder %s105, 1
      %p837 = scmp.ne.s32.totalorder %s832, %s834
      %p838 = scmp.eq.s32.totalorder %s105, 0
      %p839 = por %p837, %p838
      %p840 = scmp.ne.s32.totalorder %s832, %s834
      %p841 = scmp.eq.s32.totalorder %s110, 1
      %p842 = por %p840, %p841
      %p843 = scmp.ne.s32.totalorder %s834, %s835
      %p844 = scmp.eq.s32.totalorder %s110, 0
      %p845 = por %p843, %p844
      %p846 = scmp.ne.s32.totalorder %s834, %s835
      %p847 = scmp.eq.s32.totalorder %s111, 1
      %p848 = por %p846, %p847
      %p850 = scmp.ne.s32.totalorder %s835, %s849
      %p851 = scmp.eq.s32.totalorder %s111, 0
      %p852 = por %p850, %p851
      %s854 = sadd.s32 %s853, 1
      %p857 = scmp.eq.s32.totalorder %s105, 1
      %p858 = scmp.ne.s32.totalorder %s853, %s855
      %p859 = scmp.eq.s32.totalorder %s105, 0
      %p860 = por %p858, %p859
      %p861 = scmp.ne.s32.totalorder %s853, %s855
      %p862 = scmp.eq.s32.totalorder %s110, 1
      %p863 = por %p861, %p862
      %p864 = scmp.ne.s32.totalorder %s855, %s856
      %p865 = scmp.eq.s32.totalorder %s110, 0
      %p866 = por %p864, %p865
      %p867 = scmp.ne.s32.totalorder %s855, %s856
      %p868 = scmp.eq.s32.totalorder %s111, 1
      %p869 = por %p867, %p868
      %p871 = scmp.ne.s32.totalorder %s856, %s870
      %p872 = scmp.eq.s32.totalorder %s111, 0
      %p873 = por %p871, %p872
      %s875 = sadd.s32 %s874, 1
      %p878 = scmp.eq.s32.totalorder %s105, 1
      %p879 = scmp.ne.s32.totalorder %s874, %s876
      %p880 = scmp.eq.s32.totalorder %s105, 0
      %p881 = por %p879, %p880
      %p882 = scmp.ne.s32.totalorder %s874, %s876
      %p883 = scmp.eq.s32.totalorder %s110, 1
      %p884 = por %p882, %p883
      %p885 = scmp.ne.s32.totalorder %s876, %s877
      %p886 = scmp.eq.s32.totalorder %s110, 0
      %p887 = por %p885, %p886
      %p888 = scmp.ne.s32.totalorder %s876, %s877
      %p889 = scmp.eq.s32.totalorder %s111, 1
      %p890 = por %p888, %p889
      %p892 = scmp.ne.s32.totalorder %s877, %s891
      %p893 = scmp.eq.s32.totalorder %s111, 0
      %p894 = por %p892, %p893
      %s895 = ssub.s32 %s105, %s112
      %p896 = scmp.eq.s32.totalorder %s895, 0
      %s898 = sadd.s32 %s897, 1
      %s899 = scalar_select %p896, %s897, %s898
      %p902 = pneg %p896
      %p903 = scmp.eq.s32.totalorder %s105, 1
      %p904 = por %p902, %p903
      %p905 = scmp.ne.s32.totalorder %s897, %s900
      %p906 = scmp.eq.s32.totalorder %s105, 0
      %p907 = por %p905, %p906
      %p908 = scmp.ne.s32.totalorder %s897, %s900
      %p909 = scmp.eq.s32.totalorder %s110, 1
      %p910 = por %p908, %p909
      %p911 = scmp.ne.s32.totalorder %s900, %s901
      %p912 = scmp.eq.s32.totalorder %s110, 0
      %p913 = por %p911, %p912
      %p914 = scmp.ne.s32.totalorder %s900, %s901
      %p915 = scmp.eq.s32.totalorder %s111, 1
      %p916 = por %p914, %p915
      %p918 = scmp.ne.s32.totalorder %s901, %s917
      %p919 = scmp.eq.s32.totalorder %s111, 0
      %p920 = por %p918, %p919
      %p921 = scmp.le.s32.totalorder 1, %s105
      %p922 = scmp.lt.s32.totalorder %s105, 3
      %p923 = pnand %p921, %p922
      %p924 = pneg %p923
      // Predicated region
      $region9: #{tpu_custom_call.1} parent=5 // pred_check
        _
      $region10: #{tpu_custom_call.1} parent=5 // pred_check_branch
        %926 = sbr.rel (%p923) target = $region12
      $region11: #{tpu_custom_call.1} parent=5 // pred_region
        %s927 = ssub.s32 %s105, 1
        // Predicated region
        $region13: #{tpu_custom_call.1} parent=11 // pred_check
          %p928 = pneg %p152
        $region14: #{tpu_custom_call.1} parent=11 // pred_check_branch
          %930 = sbr.rel (%p928) target = $region16
        $region15: #{tpu_custom_call.1} parent=11 // pred_region
          %932 = vsyncadd [#allocation6], 0
          %s933 = sshll.u32 %s3, 4
          %s934 = int_to_ptr.hbm [resolvable:$true] %s933
          %s935 = sshll.u32 [#allocation5], 4
          %s936 = int_to_ptr.vmem [resolvable:$true] %s935
          %941 = dma.hbm_to_vmem [thread:$0]  %s934, 16384, %s936, [#allocation6], 1024, 1024, 64
        $region16: #{tpu_custom_call.1} parent=11 // pred_fallthru
          _
        // Predicated region
        $region17: #{tpu_custom_call.1} parent=11 // pred_check
          %p942 = pneg %p173
        $region18: #{tpu_custom_call.1} parent=11 // pred_check_branch
          %944 = sbr.rel (%p942) target = $region20
        $region19: #{tpu_custom_call.1} parent=11 // pred_region
          %946 = vsyncadd [#allocation6], 0
          %s948 = sshll.u32 %s5, 4
          %s949 = int_to_ptr.hbm [resolvable:$true] %s948
          %s950 = sshll.u32 [#allocation7], 4
          %s951 = int_to_ptr.vmem [resolvable:$true] %s950
          %953 = dma.hbm_to_vmem [thread:$0]  %s949, 128, %s951, [#allocation6]
        $region20: #{tpu_custom_call.1} parent=11 // pred_fallthru
          _
        // Predicated region
        $region21: #{tpu_custom_call.1} parent=11 // pred_check
          %p954 = pneg %p194
        $region22: #{tpu_custom_call.1} parent=11 // pred_check_branch
          %956 = sbr.rel (%p954) target = $region24
        $region23: #{tpu_custom_call.1} parent=11 // pred_region
          %958 = vsyncadd [#allocation9], 0
          %s960 = sshll.u32 %s7, 4
          %s961 = int_to_ptr.hbm [resolvable:$true] %s960
          %s962 = sshll.u32 [#allocation8], 4
          %s963 = int_to_ptr.vmem [resolvable:$true] %s962
          %965 = dma.hbm_to_vmem [thread:$0]  %s961, 128, %s963, [#allocation9]
        $region24: #{tpu_custom_call.1} parent=11 // pred_fallthru
          _
        // Predicated region
        $region25: #{tpu_custom_call.1} parent=11 // pred_check
          %p966 = pneg %p215
        $region26: #{tpu_custom_call.1} parent=11 // pred_check_branch
          %968 = sbr.rel (%p966) target = $region28
        $region27: #{tpu_custom_call.1} parent=11 // pred_region
          %970 = vsyncadd [#allocation9], 0
          %s972 = sshll.u32 %s9, 4
          %s973 = int_to_ptr.hbm [resolvable:$true] %s972
          %s974 = sshll.u32 [#allocation10], 4
          %s975 = int_to_ptr.vmem [resolvable:$true] %s974
          %977 = dma.hbm_to_vmem [thread:$0]  %s973, 128, %s975, [#allocation9]
        $region28: #{tpu_custom_call.1} parent=11 // pred_fallthru
          _
        // Predicated region
        $region29: #{tpu_custom_call.1} parent=11 // pred_check
          %p978 = pneg %p236
        $region30: #{tpu_custom_call.1} parent=11 // pred_check_branch
          %980 = sbr.rel (%p978) target = $region32
        $region31: #{tpu_custom_call.1} parent=11 // pred_region
          %982 = vsyncadd [#allocation12], 0
          %s983 = sshll.u32 %s11, 4
          %s984 = int_to_ptr.hbm [resolvable:$true] %s983
          %s985 = sshll.u32 [#allocation11], 4
          %s986 = int_to_ptr.vmem [resolvable:$true] %s985
          %991 = dma.hbm_to_vmem [thread:$0]  %s984, 65536, %s986, [#allocation12], 512, 512, 32
        $region32: #{tpu_custom_call.1} parent=11 // pred_fallthru
          _
        // Predicated region
        $region33: #{tpu_custom_call.1} parent=11 // pred_check
          %p992 = pneg %p257
        $region34: #{tpu_custom_call.1} parent=11 // pred_check_branch
          %994 = sbr.rel (%p992) target = $region36
        $region35: #{tpu_custom_call.1} parent=11 // pred_region
          %996 = vsyncadd [#allocation12], 0
          %s998 = sshll.u32 %s13, 4
          %s999 = int_to_ptr.hbm [resolvable:$true] %s998
          %s1000 = sshll.u32 [#allocation13], 4
          %s1001 = int_to_ptr.vmem [resolvable:$true] %s1000
          %1003 = dma.hbm_to_vmem [thread:$0]  %s999, 64, %s1001, [#allocation12]
        $region36: #{tpu_custom_call.1} parent=11 // pred_fallthru
          _
        // Predicated region
        $region37: #{tpu_custom_call.1} parent=11 // pred_check
          %p1004 = pneg %p278
        $region38: #{tpu_custom_call.1} parent=11 // pred_check_branch
          %1006 = sbr.rel (%p1004) target = $region40
        $region39: #{tpu_custom_call.1} parent=11 // pred_region
          %1008 = vsyncadd [#allocation15], 0
          %s1010 = sshll.u32 %s15, 4
          %s1011 = int_to_ptr.hbm [resolvable:$true] %s1010
          %s1012 = sshll.u32 [#allocation14], 4
          %s1013 = int_to_ptr.vmem [resolvable:$true] %s1012
          %1015 = dma.hbm_to_vmem [thread:$0]  %s1011, 64, %s1013, [#allocation15]
        $region40: #{tpu_custom_call.1} parent=11 // pred_fallthru
          _
        // Predicated region
        $region41: #{tpu_custom_call.1} parent=11 // pred_check
          %p1016 = pneg %p299
        $region42: #{tpu_custom_call.1} parent=11 // pred_check_branch
          %1018 = sbr.rel (%p1016) target = $region44
        $region43: #{tpu_custom_call.1} parent=11 // pred_region
          %1020 = vsyncadd [#allocation15], 0
          %s1022 = sshll.u32 %s17, 4
          %s1023 = int_to_ptr.hbm [resolvable:$true] %s1022
          %s1024 = sshll.u32 [#allocation16], 4
          %s1025 = int_to_ptr.vmem [resolvable:$true] %s1024
          %1027 = dma.hbm_to_vmem [thread:$0]  %s1023, 64, %s1025, [#allocation15]
        $region44: #{tpu_custom_call.1} parent=11 // pred_fallthru
          _
        // Predicated region
        $region45: #{tpu_custom_call.1} parent=11 // pred_check
          %p1028 = pneg %p320
        $region46: #{tpu_custom_call.1} parent=11 // pred_check_branch
          %1030 = sbr.rel (%p1028) target = $region48
        $region47: #{tpu_custom_call.1} parent=11 // pred_region
          %1032 = vsyncadd [#allocation18], 0
          %s1033 = sshll.u32 %s19, 4
          %s1034 = int_to_ptr.hbm [resolvable:$true] %s1033
          %s1035 = sshll.u32 [#allocation17], 4
          %s1036 = int_to_ptr.vmem [resolvable:$true] %s1035
          %1041 = dma.hbm_to_vmem [thread:$0]  %s1034, 16384, %s1036, [#allocation18], 256, 256, 16
        $region48: #{tpu_custom_call.1} parent=11 // pred_fallthru
          _
        // Predicated region
        $region49: #{tpu_custom_call.1} parent=11 // pred_check
          %p1042 = pneg %p341
        $region50: #{tpu_custom_call.1} parent=11 // pred_check_branch
          %1044 = sbr.rel (%p1042) target = $region52
        $region51: #{tpu_custom_call.1} parent=11 // pred_region
          %1046 = vsyncadd [#allocation18], 0
          %s1048 = sshll.u32 %s21, 4
          %s1049 = int_to_ptr.hbm [resolvable:$true] %s1048
          %s1050 = sshll.u32 [#allocation19], 4
          %s1051 = int_to_ptr.vmem [resolvable:$true] %s1050
          %1053 = dma.hbm_to_vmem [thread:$0]  %s1049, 32, %s1051, [#allocation18]
        $region52: #{tpu_custom_call.1} parent=11 // pred_fallthru
          _
        // Predicated region
        $region53: #{tpu_custom_call.1} parent=11 // pred_check
          %p1054 = pneg %p362
        $region54: #{tpu_custom_call.1} parent=11 // pred_check_branch
          %1056 = sbr.rel (%p1054) target = $region56
        $region55: #{tpu_custom_call.1} parent=11 // pred_region
          %1058 = vsyncadd [#allocation21], 0
          %s1060 = sshll.u32 %s23, 4
          %s1061 = int_to_ptr.hbm [resolvable:$true] %s1060
          %s1062 = sshll.u32 [#allocation20], 4
          %s1063 = int_to_ptr.vmem [resolvable:$true] %s1062
          %1065 = dma.hbm_to_vmem [thread:$0]  %s1061, 32, %s1063, [#allocation21]
        $region56: #{tpu_custom_call.1} parent=11 // pred_fallthru
          _
        // Predicated region
        $region57: #{tpu_custom_call.1} parent=11 // pred_check
          %p1066 = pneg %p383
        $region58: #{tpu_custom_call.1} parent=11 // pred_check_branch
          %1068 = sbr.rel (%p1066) target = $region60
        $region59: #{tpu_custom_call.1} parent=11 // pred_region
          %1070 = vsyncadd [#allocation21], 0
          %s1072 = sshll.u32 %s25, 4
          %s1073 = int_to_ptr.hbm [resolvable:$true] %s1072
          %s1074 = sshll.u32 [#allocation22], 4
          %s1075 = int_to_ptr.vmem [resolvable:$true] %s1074
          %1077 = dma.hbm_to_vmem [thread:$0]  %s1073, 32, %s1075, [#allocation21]
        $region60: #{tpu_custom_call.1} parent=11 // pred_fallthru
          _
        // Predicated region
        $region61: #{tpu_custom_call.1} parent=11 // pred_check
          %p1078 = pneg %p404
        $region62: #{tpu_custom_call.1} parent=11 // pred_check_branch
          %1080 = sbr.rel (%p1078) target = $region64
        $region63: #{tpu_custom_call.1} parent=11 // pred_region
          %1082 = vsyncadd [#allocation24], 0
          %s1083 = sshll.u32 %s27, 4
          %s1084 = int_to_ptr.hbm [resolvable:$true] %s1083
          %s1085 = sshll.u32 [#allocation23], 4
          %s1086 = int_to_ptr.vmem [resolvable:$true] %s1085
          %1091 = dma.hbm_to_vmem [thread:$0]  %s1084, 4096, %s1086, [#allocation24], 128, 128, 8
        $region64: #{tpu_custom_call.1} parent=11 // pred_fallthru
          _
        // Predicated region
        $region65: #{tpu_custom_call.1} parent=11 // pred_check
          %p1092 = pneg %p425
        $region66: #{tpu_custom_call.1} parent=11 // pred_check_branch
          %1094 = sbr.rel (%p1092) target = $region68
        $region67: #{tpu_custom_call.1} parent=11 // pred_region
          %1096 = vsyncadd [#allocation24], 0
          %s1098 = sshll.u32 %s29, 4
          %s1099 = int_to_ptr.hbm [resolvable:$true] %s1098
          %s1100 = sshll.u32 [#allocation25], 4
          %s1101 = int_to_ptr.vmem [resolvable:$true] %s1100
          %1103 = dma.hbm_to_vmem [thread:$0]  %s1099, 16, %s1101, [#allocation24]
        $region68: #{tpu_custom_call.1} parent=11 // pred_fallthru
          _
        // Predicated region
        $region69: #{tpu_custom_call.1} parent=11 // pred_check
          %p1104 = pneg %p446
        $region70: #{tpu_custom_call.1} parent=11 // pred_check_branch
          %1106 = sbr.rel (%p1104) target = $region72
        $region71: #{tpu_custom_call.1} parent=11 // pred_region
          %1108 = vsyncadd [#allocation27], 0
          %s1110 = sshll.u32 %s31, 4
          %s1111 = int_to_ptr.hbm [resolvable:$true] %s1110
          %s1112 = sshll.u32 [#allocation26], 4
          %s1113 = int_to_ptr.vmem [resolvable:$true] %s1112
          %1115 = dma.hbm_to_vmem [thread:$0]  %s1111, 16, %s1113, [#allocation27]
        $region72: #{tpu_custom_call.1} parent=11 // pred_fallthru
          _
        // Predicated region
        $region73: #{tpu_custom_call.1} parent=11 // pred_check
          %p1116 = pneg %p467
        $region74: #{tpu_custom_call.1} parent=11 // pred_check_branch
          %1118 = sbr.rel (%p1116) target = $region76
        $region75: #{tpu_custom_call.1} parent=11 // pred_region
          %1120 = vsyncadd [#allocation27], 0
          %s1122 = sshll.u32 %s33, 4
          %s1123 = int_to_ptr.hbm [resolvable:$true] %s1122
          %s1124 = sshll.u32 [#allocation28], 4
          %s1125 = int_to_ptr.vmem [resolvable:$true] %s1124
          %1127 = dma.hbm_to_vmem [thread:$0]  %s1123, 16, %s1125, [#allocation27]
        $region76: #{tpu_custom_call.1} parent=11 // pred_fallthru
          _
        // Predicated region
        $region77: #{tpu_custom_call.1} parent=11 // pred_check
          %p1128 = pneg %p488
        $region78: #{tpu_custom_call.1} parent=11 // pred_check_branch
          %1130 = sbr.rel (%p1128) target = $region80
        $region79: #{tpu_custom_call.1} parent=11 // pred_region
          %1132 = vsyncadd [#allocation30], 0
          %s1133 = sshll.u32 %s35, 4
          %s1134 = int_to_ptr.hbm [resolvable:$true] %s1133
          %s1135 = sshll.u32 [#allocation29], 4
          %s1136 = int_to_ptr.vmem [resolvable:$true] %s1135
          %1141 = dma.hbm_to_vmem [thread:$0]  %s1134, 2048, %s1136, [#allocation30], 128, 128, 8
        $region80: #{tpu_custom_call.1} parent=11 // pred_fallthru
          _
        // Predicated region
        $region81: #{tpu_custom_call.1} parent=11 // pred_check
          %p1142 = pneg %p509
        $region82: #{tpu_custom_call.1} parent=11 // pred_check_branch
          %1144 = sbr.rel (%p1142) target = $region84
        $region83: #{tpu_custom_call.1} parent=11 // pred_region
          %1146 = vsyncadd [#allocation30], 0
          %s1148 = sshll.u32 %s37, 4
          %s1149 = int_to_ptr.hbm [resolvable:$true] %s1148
          %s1150 = sshll.u32 [#allocation31], 4
          %s1151 = int_to_ptr.vmem [resolvable:$true] %s1150
          %1153 = dma.hbm_to_vmem [thread:$0]  %s1149, 16, %s1151, [#allocation30]
        $region84: #{tpu_custom_call.1} parent=11 // pred_fallthru
          _
        // Predicated region
        $region85: #{tpu_custom_call.1} parent=11 // pred_check
          %p1154 = pneg %p530
        $region86: #{tpu_custom_call.1} parent=11 // pred_check_branch
          %1156 = sbr.rel (%p1154) target = $region88
        $region87: #{tpu_custom_call.1} parent=11 // pred_region
          %1158 = vsyncadd [#allocation33], 0
          %s1159 = sshll.u32 %s39, 4
          %s1160 = int_to_ptr.hbm [resolvable:$true] %s1159
          %s1161 = sshll.u32 [#allocation32], 4
          %s1162 = int_to_ptr.vmem [resolvable:$true] %s1161
          %1167 = dma.hbm_to_vmem [thread:$0]  %s1160, 2048, %s1162, [#allocation33], 128, 128, 8
        $region88: #{tpu_custom_call.1} parent=11 // pred_fallthru
          _
        // Predicated region
        $region89: #{tpu_custom_call.1} parent=11 // pred_check
          %p1168 = pneg %p551
        $region90: #{tpu_custom_call.1} parent=11 // pred_check_branch
          %1170 = sbr.rel (%p1168) target = $region92
        $region91: #{tpu_custom_call.1} parent=11 // pred_region
          %1172 = vsyncadd [#allocation33], 0
          %s1174 = sshll.u32 %s41, 4
          %s1175 = int_to_ptr.hbm [resolvable:$true] %s1174
          %s1176 = sshll.u32 [#allocation34], 4
          %s1177 = int_to_ptr.vmem [resolvable:$true] %s1176
          %1179 = dma.hbm_to_vmem [thread:$0]  %s1175, 16, %s1177, [#allocation33]
        $region92: #{tpu_custom_call.1} parent=11 // pred_fallthru
          _
        // Predicated region
        $region93: #{tpu_custom_call.1} parent=11 // pred_check
          %p1180 = pneg %p572
        $region94: #{tpu_custom_call.1} parent=11 // pred_check_branch
          %1182 = sbr.rel (%p1180) target = $region96
        $region95: #{tpu_custom_call.1} parent=11 // pred_region
          %1184 = vsyncadd [#allocation36], 0
          %s1186 = sshll.u32 %s43, 4
          %s1187 = int_to_ptr.hbm [resolvable:$true] %s1186
          %s1188 = sshll.u32 [#allocation35], 4
          %s1189 = int_to_ptr.vmem [resolvable:$true] %s1188
          %1191 = dma.hbm_to_vmem [thread:$0]  %s1187, 16, %s1189, [#allocation36]
        $region96: #{tpu_custom_call.1} parent=11 // pred_fallthru
          _
        // Predicated region
        $region97: #{tpu_custom_call.1} parent=11 // pred_check
          %p1192 = pneg %p593
        $region98: #{tpu_custom_call.1} parent=11 // pred_check_branch
          %1194 = sbr.rel (%p1192) target = $region100
        $region99: #{tpu_custom_call.1} parent=11 // pred_region
          %1196 = vsyncadd [#allocation36], 0
          %s1198 = sshll.u32 %s45, 4
          %s1199 = int_to_ptr.hbm [resolvable:$true] %s1198
          %s1200 = sshll.u32 [#allocation37], 4
          %s1201 = int_to_ptr.vmem [resolvable:$true] %s1200
          %1203 = dma.hbm_to_vmem [thread:$0]  %s1199, 16, %s1201, [#allocation36]
        $region100: #{tpu_custom_call.1} parent=11 // pred_fallthru
          _
        // Predicated region
        $region101: #{tpu_custom_call.1} parent=11 // pred_check
          %p1204 = pneg %p614
        $region102: #{tpu_custom_call.1} parent=11 // pred_check_branch
          %1206 = sbr.rel (%p1204) target = $region104
        $region103: #{tpu_custom_call.1} parent=11 // pred_region
          %1208 = vsyncadd [#allocation39], 0
          %s1209 = sshll.u32 %s47, 4
          %s1210 = int_to_ptr.hbm [resolvable:$true] %s1209
          %s1211 = sshll.u32 [#allocation38], 4
          %s1212 = int_to_ptr.vmem [resolvable:$true] %s1211
          %1217 = dma.hbm_to_vmem [thread:$0]  %s1210, 4096, %s1212, [#allocation39], 256, 256, 16
        $region104: #{tpu_custom_call.1} parent=11 // pred_fallthru
          _
        // Predicated region
        $region105: #{tpu_custom_call.1} parent=11 // pred_check
          %p1218 = pneg %p635
        $region106: #{tpu_custom_call.1} parent=11 // pred_check_branch
          %1220 = sbr.rel (%p1218) target = $region108
        $region107: #{tpu_custom_call.1} parent=11 // pred_region
          %1222 = vsyncadd [#allocation39], 0
          %s1224 = sshll.u32 %s49, 4
          %s1225 = int_to_ptr.hbm [resolvable:$true] %s1224
          %s1226 = sshll.u32 [#allocation40], 4
          %s1227 = int_to_ptr.vmem [resolvable:$true] %s1226
          %1229 = dma.hbm_to_vmem [thread:$0]  %s1225, 32, %s1227, [#allocation39]
        $region108: #{tpu_custom_call.1} parent=11 // pred_fallthru
          _
        // Predicated region
        $region109: #{tpu_custom_call.1} parent=11 // pred_check
          %p1230 = pneg %p656
        $region110: #{tpu_custom_call.1} parent=11 // pred_check_branch
          %1232 = sbr.rel (%p1230) target = $region112
        $region111: #{tpu_custom_call.1} parent=11 // pred_region
          %1234 = vsyncadd [#allocation42], 0
          %s1236 = sshll.u32 %s51, 4
          %s1237 = int_to_ptr.hbm [resolvable:$true] %s1236
          %s1238 = sshll.u32 [#allocation41], 4
          %s1239 = int_to_ptr.vmem [resolvable:$true] %s1238
          %1241 = dma.hbm_to_vmem [thread:$0]  %s1237, 32, %s1239, [#allocation42]
        $region112: #{tpu_custom_call.1} parent=11 // pred_fallthru
          _
        // Predicated region
        $region113: #{tpu_custom_call.1} parent=11 // pred_check
          %p1242 = pneg %p677
        $region114: #{tpu_custom_call.1} parent=11 // pred_check_branch
          %1244 = sbr.rel (%p1242) target = $region116
        $region115: #{tpu_custom_call.1} parent=11 // pred_region
          %1246 = vsyncadd [#allocation42], 0
          %s1248 = sshll.u32 %s53, 4
          %s1249 = int_to_ptr.hbm [resolvable:$true] %s1248
          %s1250 = sshll.u32 [#allocation43], 4
          %s1251 = int_to_ptr.vmem [resolvable:$true] %s1250
          %1253 = dma.hbm_to_vmem [thread:$0]  %s1249, 32, %s1251, [#allocation42]
        $region116: #{tpu_custom_call.1} parent=11 // pred_fallthru
          _
        // Predicated region
        $region117: #{tpu_custom_call.1} parent=11 // pred_check
          %p1254 = pneg %p698
        $region118: #{tpu_custom_call.1} parent=11 // pred_check_branch
          %1256 = sbr.rel (%p1254) target = $region120
        $region119: #{tpu_custom_call.1} parent=11 // pred_region
          %1258 = vsyncadd [#allocation45], 0
          %s1259 = sshll.u32 %s55, 4
          %s1260 = int_to_ptr.hbm [resolvable:$true] %s1259
          %s1261 = sshll.u32 [#allocation44], 4
          %s1262 = int_to_ptr.vmem [resolvable:$true] %s1261
          %1267 = dma.hbm_to_vmem [thread:$0]  %s1260, 16384, %s1262, [#allocation45], 512, 512, 32
        $region120: #{tpu_custom_call.1} parent=11 // pred_fallthru
          _
        // Predicated region
        $region121: #{tpu_custom_call.1} parent=11 // pred_check
          %p1268 = pneg %p719
        $region122: #{tpu_custom_call.1} parent=11 // pred_check_branch
          %1270 = sbr.rel (%p1268) target = $region124
        $region123: #{tpu_custom_call.1} parent=11 // pred_region
          %1272 = vsyncadd [#allocation45], 0
          %s1274 = sshll.u32 %s57, 4
          %s1275 = int_to_ptr.hbm [resolvable:$true] %s1274
          %s1276 = sshll.u32 [#allocation46], 4
          %s1277 = int_to_ptr.vmem [resolvable:$true] %s1276
          %1279 = dma.hbm_to_vmem [thread:$0]  %s1275, 64, %s1277, [#allocation45]
        $region124: #{tpu_custom_call.1} parent=11 // pred_fallthru
          _
        // Predicated region
        $region125: #{tpu_custom_call.1} parent=11 // pred_check
          %p1280 = pneg %p740
        $region126: #{tpu_custom_call.1} parent=11 // pred_check_branch
          %1282 = sbr.rel (%p1280) target = $region128
        $region127: #{tpu_custom_call.1} parent=11 // pred_region
          %1284 = vsyncadd [#allocation48], 0
          %s1286 = sshll.u32 %s59, 4
          %s1287 = int_to_ptr.hbm [resolvable:$true] %s1286
          %s1288 = sshll.u32 [#allocation47], 4
          %s1289 = int_to_ptr.vmem [resolvable:$true] %s1288
          %1291 = dma.hbm_to_vmem [thread:$0]  %s1287, 64, %s1289, [#allocation48]
        $region128: #{tpu_custom_call.1} parent=11 // pred_fallthru
          _
        // Predicated region
        $region129: #{tpu_custom_call.1} parent=11 // pred_check
          %p1292 = pneg %p761
        $region130: #{tpu_custom_call.1} parent=11 // pred_check_branch
          %1294 = sbr.rel (%p1292) target = $region132
        $region131: #{tpu_custom_call.1} parent=11 // pred_region
          %1296 = vsyncadd [#allocation48], 0
          %s1298 = sshll.u32 %s61, 4
          %s1299 = int_to_ptr.hbm [resolvable:$true] %s1298
          %s1300 = sshll.u32 [#allocation49], 4
          %s1301 = int_to_ptr.vmem [resolvable:$true] %s1300
          %1303 = dma.hbm_to_vmem [thread:$0]  %s1299, 64, %s1301, [#allocation48]
        $region132: #{tpu_custom_call.1} parent=11 // pred_fallthru
          _
        // Predicated region
        $region133: #{tpu_custom_call.1} parent=11 // pred_check
          %p1304 = pneg %p782
        $region134: #{tpu_custom_call.1} parent=11 // pred_check_branch
          %1306 = sbr.rel (%p1304) target = $region136
        $region135: #{tpu_custom_call.1} parent=11 // pred_region
          %1308 = vsyncadd [#allocation51], 0
          %s1309 = sshll.u32 %s63, 4
          %s1310 = int_to_ptr.hbm [resolvable:$true] %s1309
          %s1311 = sshll.u32 [#allocation50], 4
          %s1312 = int_to_ptr.vmem [resolvable:$true] %s1311
          %1317 = dma.hbm_to_vmem [thread:$0]  %s1310, 65536, %s1312, [#allocation51], 1024, 1024, 64
        $region136: #{tpu_custom_call.1} parent=11 // pred_fallthru
          _
        // Predicated region
        $region137: #{tpu_custom_call.1} parent=11 // pred_check
          %p1318 = pneg %p803
        $region138: #{tpu_custom_call.1} parent=11 // pred_check_branch
          %1320 = sbr.rel (%p1318) target = $region140
        $region139: #{tpu_custom_call.1} parent=11 // pred_region
          %1322 = vsyncadd [#allocation51], 0
          %s1324 = sshll.u32 %s65, 4
          %s1325 = int_to_ptr.hbm [resolvable:$true] %s1324
          %s1326 = sshll.u32 [#allocation52], 4
          %s1327 = int_to_ptr.vmem [resolvable:$true] %s1326
          %1329 = dma.hbm_to_vmem [thread:$0]  %s1325, 128, %s1327, [#allocation51]
        $region140: #{tpu_custom_call.1} parent=11 // pred_fallthru
          _
        // Predicated region
        $region141: #{tpu_custom_call.1} parent=11 // pred_check
          %p1330 = pneg %p824
        $region142: #{tpu_custom_call.1} parent=11 // pred_check_branch
          %1332 = sbr.rel (%p1330) target = $region144
        $region143: #{tpu_custom_call.1} parent=11 // pred_region
          %1334 = vsyncadd [#allocation54], 0
          %s1336 = sshll.u32 %s67, 4
          %s1337 = int_to_ptr.hbm [resolvable:$true] %s1336
          %s1338 = sshll.u32 [#allocation53], 4
          %s1339 = int_to_ptr.vmem [resolvable:$true] %s1338
          %1341 = dma.hbm_to_vmem [thread:$0]  %s1337, 128, %s1339, [#allocation54]
        $region144: #{tpu_custom_call.1} parent=11 // pred_fallthru
          _
        // Predicated region
        $region145: #{tpu_custom_call.1} parent=11 // pred_check
          %p1342 = pneg %p845
        $region146: #{tpu_custom_call.1} parent=11 // pred_check_branch
          %1344 = sbr.rel (%p1342) target = $region148
        $region147: #{tpu_custom_call.1} parent=11 // pred_region
          %1346 = vsyncadd [#allocation54], 0
          %s1348 = sshll.u32 %s69, 4
          %s1349 = int_to_ptr.hbm [resolvable:$true] %s1348
          %s1350 = sshll.u32 [#allocation55], 4
          %s1351 = int_to_ptr.vmem [resolvable:$true] %s1350
          %1353 = dma.hbm_to_vmem [thread:$0]  %s1349, 128, %s1351, [#allocation54]
        $region148: #{tpu_custom_call.1} parent=11 // pred_fallthru
          _
        // Predicated region
        $region149: #{tpu_custom_call.1} parent=11 // pred_check
          %p1354 = pneg %p866
        $region150: #{tpu_custom_call.1} parent=11 // pred_check_branch
          %1356 = sbr.rel (%p1354) target = $region152
        $region151: #{tpu_custom_call.1} parent=11 // pred_region
          %1358 = vsyncadd [#allocation57], 0
          %s1359 = sshll.u32 %s71, 4
          %s1360 = int_to_ptr.hbm [resolvable:$true] %s1359
          %s1361 = sshll.u32 [#allocation56], 4
          %s1362 = int_to_ptr.vmem [resolvable:$true] %s1361
          %1367 = dma.hbm_to_vmem [thread:$0]  %s1360, 16384, %s1362, [#allocation57], 128, 128, 8
        $region152: #{tpu_custom_call.1} parent=11 // pred_fallthru
          _
        // Predicated region
        $region153: #{tpu_custom_call.1} parent=11 // pred_check
          %p1368 = pneg %p887
        $region154: #{tpu_custom_call.1} parent=11 // pred_check_branch
          %1370 = sbr.rel (%p1368) target = $region156
        $region155: #{tpu_custom_call.1} parent=11 // pred_region
          %1372 = vsyncadd [#allocation57], 0
          %s1374 = sshll.u32 %s73, 4
          %s1375 = int_to_ptr.hbm [resolvable:$true] %s1374
          %s1376 = sshll.u32 [#allocation58], 4
          %s1377 = int_to_ptr.vmem [resolvable:$true] %s1376
          %1379 = dma.hbm_to_vmem [thread:$0]  %s1375, 16, %s1377, [#allocation57]
        $region156: #{tpu_custom_call.1} parent=11 // pred_fallthru
          _
      $region12: #{tpu_custom_call.1} parent=5 // pred_fallthru
        _
      %p1380 = scmp.lt.s32.totalorder %s105, 2
      // Predicated region
      $region157: #{tpu_custom_call.1} parent=5 // pred_check
        %p1381 = pneg %p1380
      $region158: #{tpu_custom_call.1} parent=5 // pred_check_branch
        %1383 = sbr.rel (%p1381) target = $region160
      $region159: #{tpu_custom_call.1} parent=5 // pred_region
        // Predicated region
        $region161: #{tpu_custom_call.1} parent=159 // pred_check
          %p1384 = pneg %p125
        $region162: #{tpu_custom_call.1} parent=159 // pred_check_branch
          %1386 = sbr.rel (%p1384) target = $region164
        $region163: #{tpu_custom_call.1} parent=159 // pred_region
          %s1387 = sand.u32 %s115, 1
          %s1388 = scalar_lea.sflag [#allocation3], %s1387
          %s1389 = sand.u32 %s115, 1
          %s1390 = smul.addr %s1389, 8
          %s1391 = scalar_lea.vmem [#allocation2], %s1390
          %1393 = vsyncadd %s1388, 0
          %s1394 = smul.addr %s105, 8
          %s1395 = scalar_lea.hbm %s1, %s1394
          %s1397 = sshll.u32 %s1395, 4
          %s1398 = int_to_ptr.hbm [resolvable:$true] %s1397
          %s1399 = sshll.u32 %s1391, 4
          %s1400 = int_to_ptr.vmem [resolvable:$true] %s1399
          %1402 = dma.hbm_to_vmem [thread:$0]  %s1398, 128, %s1400, %s1388
        $region164: #{tpu_custom_call.1} parent=159 // pred_fallthru
          _
      $region160: #{tpu_custom_call.1} parent=5 // pred_fallthru
        _
      %p1403 = scmp.le.s32.totalorder 1, %s105
      %p1404 = scmp.lt.s32.totalorder %s105, 3
      %p1405 = pnand %p1403, %p1404
      %p1406 = pneg %p1405
      // Predicated region
      $region165: #{tpu_custom_call.1} parent=5 // pred_check
        _
      $region166: #{tpu_custom_call.1} parent=5 // pred_check_branch
        %1408 = sbr.rel (%p1405) target = $region168
      $region167: #{tpu_custom_call.1} parent=5 // pred_region
        %s1409 = ssub.s32 %s105, 1
        %s1410 = sand.u32 %s118, 1
        %s1411 = scalar_lea.sflag [#allocation3], %s1410
        %s1412 = sand.u32 %s118, 1
        %s1413 = smul.addr %s1412, 8
        %s1414 = scalar_lea.vmem [#allocation2], %s1413
        // Predicated region
        $region169: #{tpu_custom_call.1} parent=167 // pred_check
          %p1415 = pneg %p131
        $region170: #{tpu_custom_call.1} parent=167 // pred_check_branch
          %1417 = sbr.rel (%p1415) target = $region172
        $region171: #{tpu_custom_call.1} parent=167 // pred_region
          %1419 = dma.done %s1411, 128
        $region172: #{tpu_custom_call.1} parent=167 // pred_fallthru
          _
        // Predicated region
        $region173: #{tpu_custom_call.1} parent=167 // pred_check
          %p1420 = pneg %p152
        $region174: #{tpu_custom_call.1} parent=167 // pred_check_branch
          %1422 = sbr.rel (%p1420) target = $region176
        $region175: #{tpu_custom_call.1} parent=167 // pred_region
          %1424 = dma.done [#allocation6], 16384
        $region176: #{tpu_custom_call.1} parent=167 // pred_fallthru
          _
        // Predicated region
        $region177: #{tpu_custom_call.1} parent=167 // pred_check
          %p1425 = pneg %p173
        $region178: #{tpu_custom_call.1} parent=167 // pred_check_branch
          %1427 = sbr.rel (%p1425) target = $region180
        $region179: #{tpu_custom_call.1} parent=167 // pred_region
          %1429 = dma.done [#allocation6], 128
        $region180: #{tpu_custom_call.1} parent=167 // pred_fallthru
          _
        // Predicated region
        $region181: #{tpu_custom_call.1} parent=167 // pred_check
          %p1430 = pneg %p194
        $region182: #{tpu_custom_call.1} parent=167 // pred_check_branch
          %1432 = sbr.rel (%p1430) target = $region184
        $region183: #{tpu_custom_call.1} parent=167 // pred_region
          %1434 = dma.done [#allocation9], 128
        $region184: #{tpu_custom_call.1} parent=167 // pred_fallthru
          _
        // Predicated region
        $region185: #{tpu_custom_call.1} parent=167 // pred_check
          %p1435 = pneg %p215
        $region186: #{tpu_custom_call.1} parent=167 // pred_check_branch
          %1437 = sbr.rel (%p1435) target = $region188
        $region187: #{tpu_custom_call.1} parent=167 // pred_region
          %1439 = dma.done [#allocation9], 128
        $region188: #{tpu_custom_call.1} parent=167 // pred_fallthru
          _
        // Predicated region
        $region189: #{tpu_custom_call.1} parent=167 // pred_check
          %p1440 = pneg %p236
        $region190: #{tpu_custom_call.1} parent=167 // pred_check_branch
          %1442 = sbr.rel (%p1440) target = $region192
        $region191: #{tpu_custom_call.1} parent=167 // pred_region
          %1444 = dma.done [#allocation12], 65536
        $region192: #{tpu_custom_call.1} parent=167 // pred_fallthru
          _
        // Predicated region
        $region193: #{tpu_custom_call.1} parent=167 // pred_check
          %p1445 = pneg %p257
        $region194: #{tpu_custom_call.1} parent=167 // pred_check_branch
          %1447 = sbr.rel (%p1445) target = $region196
        $region195: #{tpu_custom_call.1} parent=167 // pred_region
          %1449 = dma.done [#allocation12], 64
        $region196: #{tpu_custom_call.1} parent=167 // pred_fallthru
          _
        // Predicated region
        $region197: #{tpu_custom_call.1} parent=167 // pred_check
          %p1450 = pneg %p278
        $region198: #{tpu_custom_call.1} parent=167 // pred_check_branch
          %1452 = sbr.rel (%p1450) target = $region200
        $region199: #{tpu_custom_call.1} parent=167 // pred_region
          %1454 = dma.done [#allocation15], 64
        $region200: #{tpu_custom_call.1} parent=167 // pred_fallthru
          _
        // Predicated region
        $region201: #{tpu_custom_call.1} parent=167 // pred_check
          %p1455 = pneg %p299
        $region202: #{tpu_custom_call.1} parent=167 // pred_check_branch
          %1457 = sbr.rel (%p1455) target = $region204
        $region203: #{tpu_custom_call.1} parent=167 // pred_region
          %1459 = dma.done [#allocation15], 64
        $region204: #{tpu_custom_call.1} parent=167 // pred_fallthru
          _
        // Predicated region
        $region205: #{tpu_custom_call.1} parent=167 // pred_check
          %p1460 = pneg %p320
        $region206: #{tpu_custom_call.1} parent=167 // pred_check_branch
          %1462 = sbr.rel (%p1460) target = $region208
        $region207: #{tpu_custom_call.1} parent=167 // pred_region
          %1464 = dma.done [#allocation18], 16384
        $region208: #{tpu_custom_call.1} parent=167 // pred_fallthru
          _
        // Predicated region
        $region209: #{tpu_custom_call.1} parent=167 // pred_check
          %p1465 = pneg %p341
        $region210: #{tpu_custom_call.1} parent=167 // pred_check_branch
          %1467 = sbr.rel (%p1465) target = $region212
        $region211: #{tpu_custom_call.1} parent=167 // pred_region
          %1469 = dma.done [#allocation18], 32
        $region212: #{tpu_custom_call.1} parent=167 // pred_fallthru
          _
        // Predicated region
        $region213: #{tpu_custom_call.1} parent=167 // pred_check
          %p1470 = pneg %p362
        $region214: #{tpu_custom_call.1} parent=167 // pred_check_branch
          %1472 = sbr.rel (%p1470) target = $region216
        $region215: #{tpu_custom_call.1} parent=167 // pred_region
          %1474 = dma.done [#allocation21], 32
        $region216: #{tpu_custom_call.1} parent=167 // pred_fallthru
          _
        // Predicated region
        $region217: #{tpu_custom_call.1} parent=167 // pred_check
          %p1475 = pneg %p383
        $region218: #{tpu_custom_call.1} parent=167 // pred_check_branch
          %1477 = sbr.rel (%p1475) target = $region220
        $region219: #{tpu_custom_call.1} parent=167 // pred_region
          %1479 = dma.done [#allocation21], 32
        $region220: #{tpu_custom_call.1} parent=167 // pred_fallthru
          _
        // Predicated region
        $region221: #{tpu_custom_call.1} parent=167 // pred_check
          %p1480 = pneg %p404
        $region222: #{tpu_custom_call.1} parent=167 // pred_check_branch
          %1482 = sbr.rel (%p1480) target = $region224
        $region223: #{tpu_custom_call.1} parent=167 // pred_region
          %1484 = dma.done [#allocation24], 4096
        $region224: #{tpu_custom_call.1} parent=167 // pred_fallthru
          _
        // Predicated region
        $region225: #{tpu_custom_call.1} parent=167 // pred_check
          %p1485 = pneg %p425
        $region226: #{tpu_custom_call.1} parent=167 // pred_check_branch
          %1487 = sbr.rel (%p1485) target = $region228
        $region227: #{tpu_custom_call.1} parent=167 // pred_region
          %1489 = dma.done [#allocation24], 16
        $region228: #{tpu_custom_call.1} parent=167 // pred_fallthru
          _
        // Predicated region
        $region229: #{tpu_custom_call.1} parent=167 // pred_check
          %p1490 = pneg %p446
        $region230: #{tpu_custom_call.1} parent=167 // pred_check_branch
          %1492 = sbr.rel (%p1490) target = $region232
        $region231: #{tpu_custom_call.1} parent=167 // pred_region
          %1494 = dma.done [#allocation27], 16
        $region232: #{tpu_custom_call.1} parent=167 // pred_fallthru
          _
        // Predicated region
        $region233: #{tpu_custom_call.1} parent=167 // pred_check
          %p1495 = pneg %p467
        $region234: #{tpu_custom_call.1} parent=167 // pred_check_branch
          %1497 = sbr.rel (%p1495) target = $region236
        $region235: #{tpu_custom_call.1} parent=167 // pred_region
          %1499 = dma.done [#allocation27], 16
        $region236: #{tpu_custom_call.1} parent=167 // pred_fallthru
          _
        // Predicated region
        $region237: #{tpu_custom_call.1} parent=167 // pred_check
          %p1500 = pneg %p488
        $region238: #{tpu_custom_call.1} parent=167 // pred_check_branch
          %1502 = sbr.rel (%p1500) target = $region240
        $region239: #{tpu_custom_call.1} parent=167 // pred_region
          %1504 = dma.done [#allocation30], 2048
        $region240: #{tpu_custom_call.1} parent=167 // pred_fallthru
          _
        // Predicated region
        $region241: #{tpu_custom_call.1} parent=167 // pred_check
          %p1505 = pneg %p509
        $region242: #{tpu_custom_call.1} parent=167 // pred_check_branch
          %1507 = sbr.rel (%p1505) target = $region244
        $region243: #{tpu_custom_call.1} parent=167 // pred_region
          %1509 = dma.done [#allocation30], 16
        $region244: #{tpu_custom_call.1} parent=167 // pred_fallthru
          _
        // Predicated region
        $region245: #{tpu_custom_call.1} parent=167 // pred_check
          %p1510 = pneg %p530
        $region246: #{tpu_custom_call.1} parent=167 // pred_check_branch
          %1512 = sbr.rel (%p1510) target = $region248
        $region247: #{tpu_custom_call.1} parent=167 // pred_region
          %1514 = dma.done [#allocation33], 2048
        $region248: #{tpu_custom_call.1} parent=167 // pred_fallthru
          _
        // Predicated region
        $region249: #{tpu_custom_call.1} parent=167 // pred_check
          %p1515 = pneg %p551
        $region250: #{tpu_custom_call.1} parent=167 // pred_check_branch
          %1517 = sbr.rel (%p1515) target = $region252
        $region251: #{tpu_custom_call.1} parent=167 // pred_region
          %1519 = dma.done [#allocation33], 16
        $region252: #{tpu_custom_call.1} parent=167 // pred_fallthru
          _
        // Predicated region
        $region253: #{tpu_custom_call.1} parent=167 // pred_check
          %p1520 = pneg %p572
        $region254: #{tpu_custom_call.1} parent=167 // pred_check_branch
          %1522 = sbr.rel (%p1520) target = $region256
        $region255: #{tpu_custom_call.1} parent=167 // pred_region
          %1524 = dma.done [#allocation36], 16
        $region256: #{tpu_custom_call.1} parent=167 // pred_fallthru
          _
        // Predicated region
        $region257: #{tpu_custom_call.1} parent=167 // pred_check
          %p1525 = pneg %p593
        $region258: #{tpu_custom_call.1} parent=167 // pred_check_branch
          %1527 = sbr.rel (%p1525) target = $region260
        $region259: #{tpu_custom_call.1} parent=167 // pred_region
          %1529 = dma.done [#allocation36], 16
        $region260: #{tpu_custom_call.1} parent=167 // pred_fallthru
          _
        // Predicated region
        $region261: #{tpu_custom_call.1} parent=167 // pred_check
          %p1530 = pneg %p614
        $region262: #{tpu_custom_call.1} parent=167 // pred_check_branch
          %1532 = sbr.rel (%p1530) target = $region264
        $region263: #{tpu_custom_call.1} parent=167 // pred_region
          %1534 = dma.done [#allocation39], 4096
        $region264: #{tpu_custom_call.1} parent=167 // pred_fallthru
          _
        // Predicated region
        $region265: #{tpu_custom_call.1} parent=167 // pred_check
          %p1535 = pneg %p635
        $region266: #{tpu_custom_call.1} parent=167 // pred_check_branch
          %1537 = sbr.rel (%p1535) target = $region268
        $region267: #{tpu_custom_call.1} parent=167 // pred_region
          %1539 = dma.done [#allocation39], 32
        $region268: #{tpu_custom_call.1} parent=167 // pred_fallthru
          _
        // Predicated region
        $region269: #{tpu_custom_call.1} parent=167 // pred_check
          %p1540 = pneg %p656
        $region270: #{tpu_custom_call.1} parent=167 // pred_check_branch
          %1542 = sbr.rel (%p1540) target = $region272
        $region271: #{tpu_custom_call.1} parent=167 // pred_region
          %1544 = dma.done [#allocation42], 32
        $region272: #{tpu_custom_call.1} parent=167 // pred_fallthru
          _
        // Predicated region
        $region273: #{tpu_custom_call.1} parent=167 // pred_check
          %p1545 = pneg %p677
        $region274: #{tpu_custom_call.1} parent=167 // pred_check_branch
          %1547 = sbr.rel (%p1545) target = $region276
        $region275: #{tpu_custom_call.1} parent=167 // pred_region
          %1549 = dma.done [#allocation42], 32
        $region276: #{tpu_custom_call.1} parent=167 // pred_fallthru
          _
        // Predicated region
        $region277: #{tpu_custom_call.1} parent=167 // pred_check
          %p1550 = pneg %p698
        $region278: #{tpu_custom_call.1} parent=167 // pred_check_branch
          %1552 = sbr.rel (%p1550) target = $region280
        $region279: #{tpu_custom_call.1} parent=167 // pred_region
          %1554 = dma.done [#allocation45], 16384
        $region280: #{tpu_custom_call.1} parent=167 // pred_fallthru
          _
        // Predicated region
        $region281: #{tpu_custom_call.1} parent=167 // pred_check
          %p1555 = pneg %p719
        $region282: #{tpu_custom_call.1} parent=167 // pred_check_branch
          %1557 = sbr.rel (%p1555) target = $region284
        $region283: #{tpu_custom_call.1} parent=167 // pred_region
          %1559 = dma.done [#allocation45], 64
        $region284: #{tpu_custom_call.1} parent=167 // pred_fallthru
          _
        // Predicated region
        $region285: #{tpu_custom_call.1} parent=167 // pred_check
          %p1560 = pneg %p740
        $region286: #{tpu_custom_call.1} parent=167 // pred_check_branch
          %1562 = sbr.rel (%p1560) target = $region288
        $region287: #{tpu_custom_call.1} parent=167 // pred_region
          %1564 = dma.done [#allocation48], 64
        $region288: #{tpu_custom_call.1} parent=167 // pred_fallthru
          _
        // Predicated region
        $region289: #{tpu_custom_call.1} parent=167 // pred_check
          %p1565 = pneg %p761
        $region290: #{tpu_custom_call.1} parent=167 // pred_check_branch
          %1567 = sbr.rel (%p1565) target = $region292
        $region291: #{tpu_custom_call.1} parent=167 // pred_region
          %1569 = dma.done [#allocation48], 64
        $region292: #{tpu_custom_call.1} parent=167 // pred_fallthru
          _
        // Predicated region
        $region293: #{tpu_custom_call.1} parent=167 // pred_check
          %p1570 = pneg %p782
        $region294: #{tpu_custom_call.1} parent=167 // pred_check_branch
          %1572 = sbr.rel (%p1570) target = $region296
        $region295: #{tpu_custom_call.1} parent=167 // pred_region
          %1574 = dma.done [#allocation51], 65536
        $region296: #{tpu_custom_call.1} parent=167 // pred_fallthru
          _
        // Predicated region
        $region297: #{tpu_custom_call.1} parent=167 // pred_check
          %p1575 = pneg %p803
        $region298: #{tpu_custom_call.1} parent=167 // pred_check_branch
          %1577 = sbr.rel (%p1575) target = $region300
        $region299: #{tpu_custom_call.1} parent=167 // pred_region
          %1579 = dma.done [#allocation51], 128
        $region300: #{tpu_custom_call.1} parent=167 // pred_fallthru
          _
        // Predicated region
        $region301: #{tpu_custom_call.1} parent=167 // pred_check
          %p1580 = pneg %p824
        $region302: #{tpu_custom_call.1} parent=167 // pred_check_branch
          %1582 = sbr.rel (%p1580) target = $region304
        $region303: #{tpu_custom_call.1} parent=167 // pred_region
          %1584 = dma.done [#allocation54], 128
        $region304: #{tpu_custom_call.1} parent=167 // pred_fallthru
          _
        // Predicated region
        $region305: #{tpu_custom_call.1} parent=167 // pred_check
          %p1585 = pneg %p845
        $region306: #{tpu_custom_call.1} parent=167 // pred_check_branch
          %1587 = sbr.rel (%p1585) target = $region308
        $region307: #{tpu_custom_call.1} parent=167 // pred_region
          %1589 = dma.done [#allocation54], 128
        $region308: #{tpu_custom_call.1} parent=167 // pred_fallthru
          _
        // Predicated region
        $region309: #{tpu_custom_call.1} parent=167 // pred_check
          %p1590 = pneg %p866
        $region310: #{tpu_custom_call.1} parent=167 // pred_check_branch
          %1592 = sbr.rel (%p1590) target = $region312
        $region311: #{tpu_custom_call.1} parent=167 // pred_region
          %1594 = dma.done [#allocation57], 16384
        $region312: #{tpu_custom_call.1} parent=167 // pred_fallthru
          _
        // Predicated region
        $region313: #{tpu_custom_call.1} parent=167 // pred_check
          %p1595 = pneg %p887
        $region314: #{tpu_custom_call.1} parent=167 // pred_check_branch
          %1597 = sbr.rel (%p1595) target = $region316
        $region315: #{tpu_custom_call.1} parent=167 // pred_region
          %1599 = dma.done [#allocation57], 16
        $region316: #{tpu_custom_call.1} parent=167 // pred_fallthru
          _
        %s1600 = sand.u32 %s118, 1
        %s1601 = scalar_lea.sflag [#allocation3], %s1600
        %s1602 = sand.u32 %s118, 1
        %s1603 = smul.addr %s1602, 8
        %s1604 = scalar_lea.vmem [#allocation2], %s1603
        %p1605 = pneg %p131
        %p1606 = pneg %p128
        %p1607 = pneg %p152
        %p1608 = pneg %p149
        %p1609 = pneg %p173
        %p1610 = pneg %p170
        %p1611 = pneg %p194
        %p1612 = pneg %p191
        %p1613 = pneg %p215
        %p1614 = pneg %p212
        %p1615 = pneg %p236
        %p1616 = pneg %p233
        %p1617 = pneg %p257
        %p1618 = pneg %p254
        %p1619 = pneg %p278
        %p1620 = pneg %p275
        %p1621 = pneg %p299
        %p1622 = pneg %p296
        %p1623 = pneg %p320
        %p1624 = pneg %p317
        %p1625 = pneg %p341
        %p1626 = pneg %p338
        %p1627 = pneg %p362
        %p1628 = pneg %p359
        %p1629 = pneg %p383
        %p1630 = pneg %p380
        %p1631 = pneg %p404
        %p1632 = pneg %p401
        %p1633 = pneg %p425
        %p1634 = pneg %p422
        %p1635 = pneg %p446
        %p1636 = pneg %p443
        %p1637 = pneg %p467
        %p1638 = pneg %p464
        %p1639 = pneg %p488
        %p1640 = pneg %p485
        %p1641 = pneg %p509
        %p1642 = pneg %p506
        %p1643 = pneg %p530
        %p1644 = pneg %p527
        %p1645 = pneg %p551
        %p1646 = pneg %p548
        %p1647 = pneg %p572
        %p1648 = pneg %p569
        %p1649 = pneg %p593
        %p1650 = pneg %p590
        %p1651 = pneg %p614
        %p1652 = pneg %p611
        %p1653 = pneg %p635
        %p1654 = pneg %p632
        %p1655 = pneg %p656
        %p1656 = pneg %p653
        %p1657 = pneg %p677
        %p1658 = pneg %p674
        %p1659 = pneg %p698
        %p1660 = pneg %p695
        %p1661 = pneg %p719
        %p1662 = pneg %p716
        %p1663 = pneg %p740
        %p1664 = pneg %p737
        %p1665 = pneg %p761
        %p1666 = pneg %p758
        %p1667 = pneg %p782
        %p1668 = pneg %p779
        %p1669 = pneg %p803
        %p1670 = pneg %p800
        %p1671 = pneg %p824
        %p1672 = pneg %p821
        %p1673 = pneg %p845
        %p1674 = pneg %p842
        %p1675 = pneg %p866
        %p1676 = pneg %p863
        %p1677 = pneg %p887
        %p1678 = pneg %p884
        %p1679 = pneg %p913
        %p1680 = pneg %p910
        %s1681 = sand.u32 %s900, 1
        %s1682 = scalar_lea.sflag [#allocation4], %s1681
        %s1683 = sand.u32 %s900, 1
        %s1684 = smul.addr %s1683, 8
        %s1685 = scalar_lea.vmem [#allocation59], %s1684
        %v1686 = vld [vmem:[%s1414] sm:$0xff]
        %v1687 = vld [vmem:[#allocation5] sm:$0xff]
        %v1688 = vld [vmem:[#allocation5 + $0x8] sm:$0xff]
        %v1689 = vld [vmem:[#allocation5 + $0x10] sm:$0xff]
        %v1690 = vld [vmem:[#allocation5 + $0x18] sm:$0xff]
        %v1691 = vld [vmem:[#allocation5 + $0x20] sm:$0xff]
        %v1692 = vld [vmem:[#allocation5 + $0x28] sm:$0xff]
        %v1693 = vld [vmem:[#allocation5 + $0x30] sm:$0xff]
        %v1694 = vld [vmem:[#allocation5 + $0x38] sm:$0xff]
        %v1695 = vld [vmem:[#allocation5 + $0x40] sm:$0xff]
        %v1696 = vld [vmem:[#allocation5 + $0x48] sm:$0xff]
        %v1697 = vld [vmem:[#allocation5 + $0x50] sm:$0xff]
        %v1698 = vld [vmem:[#allocation5 + $0x58] sm:$0xff]
        %v1699 = vld [vmem:[#allocation5 + $0x60] sm:$0xff]
        %v1700 = vld [vmem:[#allocation5 + $0x68] sm:$0xff]
        %v1701 = vld [vmem:[#allocation5 + $0x70] sm:$0xff]
        %v1702 = vld [vmem:[#allocation5 + $0x78] sm:$0xff]
        %v1703 = vld [vmem:[#allocation5 + $0x80] sm:$0xff]
        %v1704 = vld [vmem:[#allocation5 + $0x88] sm:$0xff]
        %v1705 = vld [vmem:[#allocation5 + $0x90] sm:$0xff]
        %v1706 = vld [vmem:[#allocation5 + $0x98] sm:$0xff]
        %v1707 = vld [vmem:[#allocation5 + $0xa0] sm:$0xff]
        %v1708 = vld [vmem:[#allocation5 + $0xa8] sm:$0xff]
        %v1709 = vld [vmem:[#allocation5 + $0xb0] sm:$0xff]
        %v1710 = vld [vmem:[#allocation5 + $0xb8] sm:$0xff]
        %v1711 = vld [vmem:[#allocation5 + $0xc0] sm:$0xff]
        %v1712 = vld [vmem:[#allocation5 + $0xc8] sm:$0xff]
        %v1713 = vld [vmem:[#allocation5 + $0xd0] sm:$0xff]
        %v1714 = vld [vmem:[#allocation5 + $0xd8] sm:$0xff]
        %v1715 = vld [vmem:[#allocation5 + $0xe0] sm:$0xff]
        %v1716 = vld [vmem:[#allocation5 + $0xe8] sm:$0xff]
        %v1717 = vld [vmem:[#allocation5 + $0xf0] sm:$0xff]
        %v1718 = vld [vmem:[#allocation5 + $0xf8] sm:$0xff]
        %v1719 = vld [vmem:[#allocation5 + $0x100] sm:$0xff]
        %v1720 = vld [vmem:[#allocation5 + $0x108] sm:$0xff]
        %v1721 = vld [vmem:[#allocation5 + $0x110] sm:$0xff]
        %v1722 = vld [vmem:[#allocation5 + $0x118] sm:$0xff]
        %v1723 = vld [vmem:[#allocation5 + $0x120] sm:$0xff]
        %v1724 = vld [vmem:[#allocation5 + $0x128] sm:$0xff]
        %v1725 = vld [vmem:[#allocation5 + $0x130] sm:$0xff]
        %v1726 = vld [vmem:[#allocation5 + $0x138] sm:$0xff]
        %v1727 = vld [vmem:[#allocation5 + $0x140] sm:$0xff]
        %v1728 = vld [vmem:[#allocation5 + $0x148] sm:$0xff]
        %v1729 = vld [vmem:[#allocation5 + $0x150] sm:$0xff]
        %v1730 = vld [vmem:[#allocation5 + $0x158] sm:$0xff]
        %v1731 = vld [vmem:[#allocation5 + $0x160] sm:$0xff]
        %v1732 = vld [vmem:[#allocation5 + $0x168] sm:$0xff]
        %v1733 = vld [vmem:[#allocation5 + $0x170] sm:$0xff]
        %v1734 = vld [vmem:[#allocation5 + $0x178] sm:$0xff]
        %v1735 = vld [vmem:[#allocation5 + $0x180] sm:$0xff]
        %v1736 = vld [vmem:[#allocation5 + $0x188] sm:$0xff]
        %v1737 = vld [vmem:[#allocation5 + $0x190] sm:$0xff]
        %v1738 = vld [vmem:[#allocation5 + $0x198] sm:$0xff]
        %v1739 = vld [vmem:[#allocation5 + $0x1a0] sm:$0xff]
        %v1740 = vld [vmem:[#allocation5 + $0x1a8] sm:$0xff]
        %v1741 = vld [vmem:[#allocation5 + $0x1b0] sm:$0xff]
        %v1742 = vld [vmem:[#allocation5 + $0x1b8] sm:$0xff]
        %v1743 = vld [vmem:[#allocation5 + $0x1c0] sm:$0xff]
        %v1744 = vld [vmem:[#allocation5 + $0x1c8] sm:$0xff]
        %v1745 = vld [vmem:[#allocation5 + $0x1d0] sm:$0xff]
        %v1746 = vld [vmem:[#allocation5 + $0x1d8] sm:$0xff]
        %v1747 = vld [vmem:[#allocation5 + $0x1e0] sm:$0xff]
        %v1748 = vld [vmem:[#allocation5 + $0x1e8] sm:$0xff]
        %v1749 = vld [vmem:[#allocation5 + $0x1f0] sm:$0xff]
        %v1750 = vld [vmem:[#allocation5 + $0x1f8] sm:$0xff]
        %v1751 = vld [vmem:[#allocation5 + $0x200] sm:$0xff]
        %v1752 = vld [vmem:[#allocation5 + $0x208] sm:$0xff]
        %v1753 = vld [vmem:[#allocation5 + $0x210] sm:$0xff]
        %v1754 = vld [vmem:[#allocation5 + $0x218] sm:$0xff]
        %v1755 = vld [vmem:[#allocation5 + $0x220] sm:$0xff]
        %v1756 = vld [vmem:[#allocation5 + $0x228] sm:$0xff]
        %v1757 = vld [vmem:[#allocation5 + $0x230] sm:$0xff]
        %v1758 = vld [vmem:[#allocation5 + $0x238] sm:$0xff]
        %v1759 = vld [vmem:[#allocation5 + $0x240] sm:$0xff]
        %v1760 = vld [vmem:[#allocation5 + $0x248] sm:$0xff]
        %v1761 = vld [vmem:[#allocation5 + $0x250] sm:$0xff]
        %v1762 = vld [vmem:[#allocation5 + $0x258] sm:$0xff]
        %v1763 = vld [vmem:[#allocation5 + $0x260] sm:$0xff]
        %v1764 = vld [vmem:[#allocation5 + $0x268] sm:$0xff]
        %v1765 = vld [vmem:[#allocation5 + $0x270] sm:$0xff]
        %v1766 = vld [vmem:[#allocation5 + $0x278] sm:$0xff]
        %v1767 = vld [vmem:[#allocation5 + $0x280] sm:$0xff]
        %v1768 = vld [vmem:[#allocation5 + $0x288] sm:$0xff]
        %v1769 = vld [vmem:[#allocation5 + $0x290] sm:$0xff]
        %v1770 = vld [vmem:[#allocation5 + $0x298] sm:$0xff]
        %v1771 = vld [vmem:[#allocation5 + $0x2a0] sm:$0xff]
        %v1772 = vld [vmem:[#allocation5 + $0x2a8] sm:$0xff]
        %v1773 = vld [vmem:[#allocation5 + $0x2b0] sm:$0xff]
        %v1774 = vld [vmem:[#allocation5 + $0x2b8] sm:$0xff]
        %v1775 = vld [vmem:[#allocation5 + $0x2c0] sm:$0xff]
        %v1776 = vld [vmem:[#allocation5 + $0x2c8] sm:$0xff]
        %v1777 = vld [vmem:[#allocation5 + $0x2d0] sm:$0xff]
        %v1778 = vld [vmem:[#allocation5 + $0x2d8] sm:$0xff]
        %v1779 = vld [vmem:[#allocation5 + $0x2e0] sm:$0xff]
        %v1780 = vld [vmem:[#allocation5 + $0x2e8] sm:$0xff]
        %v1781 = vld [vmem:[#allocation5 + $0x2f0] sm:$0xff]
        %v1782 = vld [vmem:[#allocation5 + $0x2f8] sm:$0xff]
        %v1783 = vld [vmem:[#allocation5 + $0x300] sm:$0xff]
        %v1784 = vld [vmem:[#allocation5 + $0x308] sm:$0xff]
        %v1785 = vld [vmem:[#allocation5 + $0x310] sm:$0xff]
        %v1786 = vld [vmem:[#allocation5 + $0x318] sm:$0xff]
        %v1787 = vld [vmem:[#allocation5 + $0x320] sm:$0xff]
        %v1788 = vld [vmem:[#allocation5 + $0x328] sm:$0xff]
        %v1789 = vld [vmem:[#allocation5 + $0x330] sm:$0xff]
        %v1790 = vld [vmem:[#allocation5 + $0x338] sm:$0xff]
        %v1791 = vld [vmem:[#allocation5 + $0x340] sm:$0xff]
        %v1792 = vld [vmem:[#allocation5 + $0x348] sm:$0xff]
        %v1793 = vld [vmem:[#allocation5 + $0x350] sm:$0xff]
        %v1794 = vld [vmem:[#allocation5 + $0x358] sm:$0xff]
        %v1795 = vld [vmem:[#allocation5 + $0x360] sm:$0xff]
        %v1796 = vld [vmem:[#allocation5 + $0x368] sm:$0xff]
        %v1797 = vld [vmem:[#allocation5 + $0x370] sm:$0xff]
        %v1798 = vld [vmem:[#allocation5 + $0x378] sm:$0xff]
        %v1799 = vld [vmem:[#allocation5 + $0x380] sm:$0xff]
        %v1800 = vld [vmem:[#allocation5 + $0x388] sm:$0xff]
        %v1801 = vld [vmem:[#allocation5 + $0x390] sm:$0xff]
        %v1802 = vld [vmem:[#allocation5 + $0x398] sm:$0xff]
        %v1803 = vld [vmem:[#allocation5 + $0x3a0] sm:$0xff]
        %v1804 = vld [vmem:[#allocation5 + $0x3a8] sm:$0xff]
        %v1805 = vld [vmem:[#allocation5 + $0x3b0] sm:$0xff]
        %v1806 = vld [vmem:[#allocation5 + $0x3b8] sm:$0xff]
        %v1807 = vld [vmem:[#allocation5 + $0x3c0] sm:$0xff]
        %v1808 = vld [vmem:[#allocation5 + $0x3c8] sm:$0xff]
        %v1809 = vld [vmem:[#allocation5 + $0x3d0] sm:$0xff]
        %v1810 = vld [vmem:[#allocation5 + $0x3d8] sm:$0xff]
        %v1811 = vld [vmem:[#allocation5 + $0x3e0] sm:$0xff]
        %v1812 = vld [vmem:[#allocation5 + $0x3e8] sm:$0xff]
        %v1813 = vld [vmem:[#allocation5 + $0x3f0] sm:$0xff]
        %v1814 = vld [vmem:[#allocation5 + $0x3f8] sm:$0xff]
        %v1815 = vld [vmem:[#allocation7] sm:$0xff]
        %v1817 = vperm.slane %v1815, 0
        %v1818 = vperm.slane %v1815, 1
        %v1819 = vperm.slane %v1815, 2
        %v1820 = vperm.slane %v1815, 3
        %v1821 = vperm.slane %v1815, 4
        %v1822 = vperm.slane %v1815, 5
        %v1823 = vperm.slane %v1815, 6
        %v1824 = vperm.slane %v1815, 7
        %1833 = vmatpush.msra.mxu0 %v1807
        %1834 = vmatpush.msra.mxu0 %v1799
        %1835 = vmatpush.msra.mxu0 %v1791
        %1836 = vmatpush.msra.mxu0 %v1783
        %1837 = vmatpush.msra.mxu0 %v1775
        %1838 = vmatpush.msra.mxu0 %v1767
        %1839 = vmatpush.msra.mxu0 %v1759
        %1840 = vmatpush.msra.mxu0 %v1751
        %1841 = vmatpush.msra.mxu0 %v1743
        %1842 = vmatpush.msra.mxu0 %v1735
        %1843 = vmatpush.msra.mxu0 %v1727
        %1844 = vmatpush.msra.mxu0 %v1719
        %1845 = vmatpush.msra.mxu0 %v1711
        %1846 = vmatpush.msra.mxu0 %v1703
        %1847 = vmatpush.msra.mxu0 %v1695
        %1848 = vmatpush.msra.mxu0 %v1687
        %1849 = vmatmul.f32.gmra.mxu0 %v1686
        %v1850 = vpop.f32.mrf.mxu0
        %v1851 = vadd.f32 %v1817, %v1850
        %1852 = vdwg.mxu0
        %1853 = vmatpush.msra.mxu0 %v1808
        %1854 = vmatpush.msra.mxu0 %v1800
        %1855 = vmatpush.msra.mxu0 %v1792
        %1856 = vmatpush.msra.mxu0 %v1784
        %1857 = vmatpush.msra.mxu0 %v1776
        %1858 = vmatpush.msra.mxu0 %v1768
        %1859 = vmatpush.msra.mxu0 %v1760
        %1860 = vmatpush.msra.mxu0 %v1752
        %1861 = vmatpush.msra.mxu0 %v1744
        %1862 = vmatpush.msra.mxu0 %v1736
        %1863 = vmatpush.msra.mxu0 %v1728
        %1864 = vmatpush.msra.mxu0 %v1720
        %1865 = vmatpush.msra.mxu0 %v1712
        %1866 = vmatpush.msra.mxu0 %v1704
        %1867 = vmatpush.msra.mxu0 %v1696
        %1868 = vmatpush.msra.mxu0 %v1688
        %1869 = vmatmul.f32.gmra.mxu0 %v1686
        %v1870 = vpop.f32.mrf.mxu0
        %v1871 = vadd.f32 %v1818, %v1870
        %1872 = vdwg.mxu0
        %1873 = vmatpush.msra.mxu0 %v1809
        %1874 = vmatpush.msra.mxu0 %v1801
        %1875 = vmatpush.msra.mxu0 %v1793
        %1876 = vmatpush.msra.mxu0 %v1785
        %1877 = vmatpush.msra.mxu0 %v1777
        %1878 = vmatpush.msra.mxu0 %v1769
        %1879 = vmatpush.msra.mxu0 %v1761
        %1880 = vmatpush.msra.mxu0 %v1753
        %1881 = vmatpush.msra.mxu0 %v1745
        %1882 = vmatpush.msra.mxu0 %v1737
        %1883 = vmatpush.msra.mxu0 %v1729
        %1884 = vmatpush.msra.mxu0 %v1721
        %1885 = vmatpush.msra.mxu0 %v1713
        %1886 = vmatpush.msra.mxu0 %v1705
        %1887 = vmatpush.msra.mxu0 %v1697
        %1888 = vmatpush.msra.mxu0 %v1689
        %1889 = vmatmul.f32.gmra.mxu0 %v1686
        %v1890 = vpop.f32.mrf.mxu0
        %v1891 = vadd.f32 %v1819, %v1890
        %1892 = vdwg.mxu0
        %1893 = vmatpush.msra.mxu0 %v1810
        %1894 = vmatpush.msra.mxu0 %v1802
        %1895 = vmatpush.msra.mxu0 %v1794
        %1896 = vmatpush.msra.mxu0 %v1786
        %1897 = vmatpush.msra.mxu0 %v1778
        %1898 = vmatpush.msra.mxu0 %v1770
        %1899 = vmatpush.msra.mxu0 %v1762
        %1900 = vmatpush.msra.mxu0 %v1754
        %1901 = vmatpush.msra.mxu0 %v1746
        %1902 = vmatpush.msra.mxu0 %v1738
        %1903 = vmatpush.msra.mxu0 %v1730
        %1904 = vmatpush.msra.mxu0 %v1722
        %1905 = vmatpush.msra.mxu0 %v1714
        %1906 = vmatpush.msra.mxu0 %v1706
        %1907 = vmatpush.msra.mxu0 %v1698
        %1908 = vmatpush.msra.mxu0 %v1690
        %1909 = vmatmul.f32.gmra.mxu0 %v1686
        %v1910 = vpop.f32.mrf.mxu0
        %v1911 = vadd.f32 %v1820, %v1910
        %1912 = vdwg.mxu0
        %1913 = vmatpush.msra.mxu0 %v1811
        %1914 = vmatpush.msra.mxu0 %v1803
        %1915 = vmatpush.msra.mxu0 %v1795
        %1916 = vmatpush.msra.mxu0 %v1787
        %1917 = vmatpush.msra.mxu0 %v1779
        %1918 = vmatpush.msra.mxu0 %v1771
        %1919 = vmatpush.msra.mxu0 %v1763
        %1920 = vmatpush.msra.mxu0 %v1755
        %1921 = vmatpush.msra.mxu0 %v1747
        %1922 = vmatpush.msra.mxu0 %v1739
        %1923 = vmatpush.msra.mxu0 %v1731
        %1924 = vmatpush.msra.mxu0 %v1723
        %1925 = vmatpush.msra.mxu0 %v1715
        %1926 = vmatpush.msra.mxu0 %v1707
        %1927 = vmatpush.msra.mxu0 %v1699
        %1928 = vmatpush.msra.mxu0 %v1691
        %1929 = vmatmul.f32.gmra.mxu0 %v1686
        %v1930 = vpop.f32.mrf.mxu0
        %v1931 = vadd.f32 %v1821, %v1930
        %1932 = vdwg.mxu0
        %1933 = vmatpush.msra.mxu0 %v1812
        %1934 = vmatpush.msra.mxu0 %v1804
        %1935 = vmatpush.msra.mxu0 %v1796
        %1936 = vmatpush.msra.mxu0 %v1788
        %1937 = vmatpush.msra.mxu0 %v1780
        %1938 = vmatpush.msra.mxu0 %v1772
        %1939 = vmatpush.msra.mxu0 %v1764
        %1940 = vmatpush.msra.mxu0 %v1756
        %1941 = vmatpush.msra.mxu0 %v1748
        %1942 = vmatpush.msra.mxu0 %v1740
        %1943 = vmatpush.msra.mxu0 %v1732
        %1944 = vmatpush.msra.mxu0 %v1724
        %1945 = vmatpush.msra.mxu0 %v1716
        %1946 = vmatpush.msra.mxu0 %v1708
        %1947 = vmatpush.msra.mxu0 %v1700
        %1948 = vmatpush.msra.mxu0 %v1692
        %1949 = vmatmul.f32.gmra.mxu0 %v1686
        %v1950 = vpop.f32.mrf.mxu0
        %v1951 = vadd.f32 %v1822, %v1950
        %1952 = vdwg.mxu0
        %1953 = vmatpush.msra.mxu0 %v1813
        %1954 = vmatpush.msra.mxu0 %v1805
        %1955 = vmatpush.msra.mxu0 %v1797
        %1956 = vmatpush.msra.mxu0 %v1789
        %1957 = vmatpush.msra.mxu0 %v1781
        %1958 = vmatpush.msra.mxu0 %v1773
        %1959 = vmatpush.msra.mxu0 %v1765
        %1960 = vmatpush.msra.mxu0 %v1757
        %1961 = vmatpush.msra.mxu0 %v1749
        %1962 = vmatpush.msra.mxu0 %v1741
        %1963 = vmatpush.msra.mxu0 %v1733
        %1964 = vmatpush.msra.mxu0 %v1725
        %1965 = vmatpush.msra.mxu0 %v1717
        %1966 = vmatpush.msra.mxu0 %v1709
        %1967 = vmatpush.msra.mxu0 %v1701
        %1968 = vmatpush.msra.mxu0 %v1693
        %1969 = vmatmul.f32.gmra.mxu0 %v1686
        %v1970 = vpop.f32.mrf.mxu0
        %v1971 = vadd.f32 %v1823, %v1970
        %1972 = vdwg.mxu0
        %1973 = vmatpush.msra.mxu0 %v1814
        %1974 = vmatpush.msra.mxu0 %v1806
        %1975 = vmatpush.msra.mxu0 %v1798
        %1976 = vmatpush.msra.mxu0 %v1790
        %1977 = vmatpush.msra.mxu0 %v1782
        %1978 = vmatpush.msra.mxu0 %v1774
        %1979 = vmatpush.msra.mxu0 %v1766
        %1980 = vmatpush.msra.mxu0 %v1758
        %1981 = vmatpush.msra.mxu0 %v1750
        %1982 = vmatpush.msra.mxu0 %v1742
        %1983 = vmatpush.msra.mxu0 %v1734
        %1984 = vmatpush.msra.mxu0 %v1726
        %1985 = vmatpush.msra.mxu0 %v1718
        %1986 = vmatpush.msra.mxu0 %v1710
        %1987 = vmatpush.msra.mxu0 %v1702
        %1988 = vmatpush.msra.mxu0 %v1694
        %1989 = vmatmul.f32.gmra.mxu0 %v1686
        %v1990 = vpop.f32.mrf.mxu0
        %v1991 = vadd.f32 %v1824, %v1990
        %1992 = vdwg.mxu0
        %v1993 = vld [vmem:[#allocation8] sm:$0xff]
        %v1994 = vld [vmem:[#allocation10] sm:$0xff]
        %v1995 = vmax.f32 %v1851, 0.0
        %v1996 = vmax.f32 %v1871, 0.0
        %v1997 = vmax.f32 %v1891, 0.0
        %v1998 = vmax.f32 %v1911, 0.0
        %v1999 = vmax.f32 %v1931, 0.0
        %v2000 = vmax.f32 %v1951, 0.0
        %v2001 = vmax.f32 %v1971, 0.0
        %v2002 = vmax.f32 %v1991, 0.0
        %v2004 = vperm.slane %v1993, 0
        %v2005 = vperm.slane %v1993, 1
        %v2006 = vperm.slane %v1993, 2
        %v2007 = vperm.slane %v1993, 3
        %v2008 = vperm.slane %v1993, 4
        %v2009 = vperm.slane %v1993, 5
        %v2010 = vperm.slane %v1993, 6
        %v2011 = vperm.slane %v1993, 7
        %v2020 = vmul.f32 %v1995, %v2004
        %v2021 = vmul.f32 %v1996, %v2005
        %v2022 = vmul.f32 %v1997, %v2006
        %v2023 = vmul.f32 %v1998, %v2007
        %v2024 = vmul.f32 %v1999, %v2008
        %v2025 = vmul.f32 %v2000, %v2009
        %v2026 = vmul.f32 %v2001, %v2010
        %v2027 = vmul.f32 %v2002, %v2011
        %v2029 = vperm.slane %v1994, 0
        %v2030 = vperm.slane %v1994, 1
        %v2031 = vperm.slane %v1994, 2
        %v2032 = vperm.slane %v1994, 3
        %v2033 = vperm.slane %v1994, 4
        %v2034 = vperm.slane %v1994, 5
        %v2035 = vperm.slane %v1994, 6
        %v2036 = vperm.slane %v1994, 7
        %v2045 = vadd.f32 %v2020, %v2029
        %v2046 = vadd.f32 %v2021, %v2030
        %v2047 = vadd.f32 %v2022, %v2031
        %v2048 = vadd.f32 %v2023, %v2032
        %v2049 = vadd.f32 %v2024, %v2033
        %v2050 = vadd.f32 %v2025, %v2034
        %v2051 = vadd.f32 %v2026, %v2035
        %v2052 = vadd.f32 %v2027, %v2036
        %v2053 = vld [vmem:[#allocation11] sm:$0xff]
        %v2054 = vld [vmem:[#allocation11 + $0x8] sm:$0xff]
        %v2055 = vld [vmem:[#allocation11 + $0x10] sm:$0xff]
        %v2056 = vld [vmem:[#allocation11 + $0x18] sm:$0xff]
        %v2057 = vld [vmem:[#allocation11 + $0x20] sm:$0xff]
        %v2058 = vld [vmem:[#allocation11 + $0x28] sm:$0xff]
        %v2059 = vld [vmem:[#allocation11 + $0x30] sm:$0xff]
        %v2060 = vld [vmem:[#allocation11 + $0x38] sm:$0xff]
        %v2061 = vld [vmem:[#allocation11 + $0x40] sm:$0xff]
        %v2062 = vld [vmem:[#allocation11 + $0x48] sm:$0xff]
        %v2063 = vld [vmem:[#allocation11 + $0x50] sm:$0xff]
        %v2064 = vld [vmem:[#allocation11 + $0x58] sm:$0xff]
        %v2065 = vld [vmem:[#allocation11 + $0x60] sm:$0xff]
        %v2066 = vld [vmem:[#allocation11 + $0x68] sm:$0xff]
        %v2067 = vld [vmem:[#allocation11 + $0x70] sm:$0xff]
        %v2068 = vld [vmem:[#allocation11 + $0x78] sm:$0xff]
        %v2069 = vld [vmem:[#allocation11 + $0x80] sm:$0xff]
        %v2070 = vld [vmem:[#allocation11 + $0x88] sm:$0xff]
        %v2071 = vld [vmem:[#allocation11 + $0x90] sm:$0xff]
        %v2072 = vld [vmem:[#allocation11 + $0x98] sm:$0xff]
        %v2073 = vld [vmem:[#allocation11 + $0xa0] sm:$0xff]
        %v2074 = vld [vmem:[#allocation11 + $0xa8] sm:$0xff]
        %v2075 = vld [vmem:[#allocation11 + $0xb0] sm:$0xff]
        %v2076 = vld [vmem:[#allocation11 + $0xb8] sm:$0xff]
        %v2077 = vld [vmem:[#allocation11 + $0xc0] sm:$0xff]
        %v2078 = vld [vmem:[#allocation11 + $0xc8] sm:$0xff]
        %v2079 = vld [vmem:[#allocation11 + $0xd0] sm:$0xff]
        %v2080 = vld [vmem:[#allocation11 + $0xd8] sm:$0xff]
        %v2081 = vld [vmem:[#allocation11 + $0xe0] sm:$0xff]
        %v2082 = vld [vmem:[#allocation11 + $0xe8] sm:$0xff]
        %v2083 = vld [vmem:[#allocation11 + $0xf0] sm:$0xff]
        %v2084 = vld [vmem:[#allocation11 + $0xf8] sm:$0xff]
        %v2085 = vld [vmem:[#allocation11 + $0x100] sm:$0xff]
        %v2086 = vld [vmem:[#allocation11 + $0x108] sm:$0xff]
        %v2087 = vld [vmem:[#allocation11 + $0x110] sm:$0xff]
        %v2088 = vld [vmem:[#allocation11 + $0x118] sm:$0xff]
        %v2089 = vld [vmem:[#allocation11 + $0x120] sm:$0xff]
        %v2090 = vld [vmem:[#allocation11 + $0x128] sm:$0xff]
        %v2091 = vld [vmem:[#allocation11 + $0x130] sm:$0xff]
        %v2092 = vld [vmem:[#allocation11 + $0x138] sm:$0xff]
        %v2093 = vld [vmem:[#allocation11 + $0x140] sm:$0xff]
        %v2094 = vld [vmem:[#allocation11 + $0x148] sm:$0xff]
        %v2095 = vld [vmem:[#allocation11 + $0x150] sm:$0xff]
        %v2096 = vld [vmem:[#allocation11 + $0x158] sm:$0xff]
        %v2097 = vld [vmem:[#allocation11 + $0x160] sm:$0xff]
        %v2098 = vld [vmem:[#allocation11 + $0x168] sm:$0xff]
        %v2099 = vld [vmem:[#allocation11 + $0x170] sm:$0xff]
        %v2100 = vld [vmem:[#allocation11 + $0x178] sm:$0xff]
        %v2101 = vld [vmem:[#allocation11 + $0x180] sm:$0xff]
        %v2102 = vld [vmem:[#allocation11 + $0x188] sm:$0xff]
        %v2103 = vld [vmem:[#allocation11 + $0x190] sm:$0xff]
        %v2104 = vld [vmem:[#allocation11 + $0x198] sm:$0xff]
        %v2105 = vld [vmem:[#allocation11 + $0x1a0] sm:$0xff]
        %v2106 = vld [vmem:[#allocation11 + $0x1a8] sm:$0xff]
        %v2107 = vld [vmem:[#allocation11 + $0x1b0] sm:$0xff]
        %v2108 = vld [vmem:[#allocation11 + $0x1b8] sm:$0xff]
        %v2109 = vld [vmem:[#allocation11 + $0x1c0] sm:$0xff]
        %v2110 = vld [vmem:[#allocation11 + $0x1c8] sm:$0xff]
        %v2111 = vld [vmem:[#allocation11 + $0x1d0] sm:$0xff]
        %v2112 = vld [vmem:[#allocation11 + $0x1d8] sm:$0xff]
        %v2113 = vld [vmem:[#allocation11 + $0x1e0] sm:$0xff]
        %v2114 = vld [vmem:[#allocation11 + $0x1e8] sm:$0xff]
        %v2115 = vld [vmem:[#allocation11 + $0x1f0] sm:$0xff]
        %v2116 = vld [vmem:[#allocation11 + $0x1f8] sm:$0xff]
        %v2117 = vld [vmem:[#allocation11 + $0x200] sm:$0xff]
        %v2118 = vld [vmem:[#allocation11 + $0x208] sm:$0xff]
        %v2119 = vld [vmem:[#allocation11 + $0x210] sm:$0xff]
        %v2120 = vld [vmem:[#allocation11 + $0x218] sm:$0xff]
        %v2121 = vld [vmem:[#allocation11 + $0x220] sm:$0xff]
        %v2122 = vld [vmem:[#allocation11 + $0x228] sm:$0xff]
        %v2123 = vld [vmem:[#allocation11 + $0x230] sm:$0xff]
        %v2124 = vld [vmem:[#allocation11 + $0x238] sm:$0xff]
        %v2125 = vld [vmem:[#allocation11 + $0x240] sm:$0xff]
        %v2126 = vld [vmem:[#allocation11 + $0x248] sm:$0xff]
        %v2127 = vld [vmem:[#allocation11 + $0x250] sm:$0xff]
        %v2128 = vld [vmem:[#allocation11 + $0x258] sm:$0xff]
        %v2129 = vld [vmem:[#allocation11 + $0x260] sm:$0xff]
        %v2130 = vld [vmem:[#allocation11 + $0x268] sm:$0xff]
        %v2131 = vld [vmem:[#allocation11 + $0x270] sm:$0xff]
        %v2132 = vld [vmem:[#allocation11 + $0x278] sm:$0xff]
        %v2133 = vld [vmem:[#allocation11 + $0x280] sm:$0xff]
        %v2134 = vld [vmem:[#allocation11 + $0x288] sm:$0xff]
        %v2135 = vld [vmem:[#allocation11 + $0x290] sm:$0xff]
        %v2136 = vld [vmem:[#allocation11 + $0x298] sm:$0xff]
        %v2137 = vld [vmem:[#allocation11 + $0x2a0] sm:$0xff]
        %v2138 = vld [vmem:[#allocation11 + $0x2a8] sm:$0xff]
        %v2139 = vld [vmem:[#allocation11 + $0x2b0] sm:$0xff]
        %v2140 = vld [vmem:[#allocation11 + $0x2b8] sm:$0xff]
        %v2141 = vld [vmem:[#allocation11 + $0x2c0] sm:$0xff]
        %v2142 = vld [vmem:[#allocation11 + $0x2c8] sm:$0xff]
        %v2143 = vld [vmem:[#allocation11 + $0x2d0] sm:$0xff]
        %v2144 = vld [vmem:[#allocation11 + $0x2d8] sm:$0xff]
        %v2145 = vld [vmem:[#allocation11 + $0x2e0] sm:$0xff]
        %v2146 = vld [vmem:[#allocation11 + $0x2e8] sm:$0xff]
        %v2147 = vld [vmem:[#allocation11 + $0x2f0] sm:$0xff]
        %v2148 = vld [vmem:[#allocation11 + $0x2f8] sm:$0xff]
        %v2149 = vld [vmem:[#allocation11 + $0x300] sm:$0xff]
        %v2150 = vld [vmem:[#allocation11 + $0x308] sm:$0xff]
        %v2151 = vld [vmem:[#allocation11 + $0x310] sm:$0xff]
        %v2152 = vld [vmem:[#allocation11 + $0x318] sm:$0xff]
        %v2153 = vld [vmem:[#allocation11 + $0x320] sm:$0xff]
        %v2154 = vld [vmem:[#allocation11 + $0x328] sm:$0xff]
        %v2155 = vld [vmem:[#allocation11 + $0x330] sm:$0xff]
        %v2156 = vld [vmem:[#allocation11 + $0x338] sm:$0xff]
        %v2157 = vld [vmem:[#allocation11 + $0x340] sm:$0xff]
        %v2158 = vld [vmem:[#allocation11 + $0x348] sm:$0xff]
        %v2159 = vld [vmem:[#allocation11 + $0x350] sm:$0xff]
        %v2160 = vld [vmem:[#allocation11 + $0x358] sm:$0xff]
        %v2161 = vld [vmem:[#allocation11 + $0x360] sm:$0xff]
        %v2162 = vld [vmem:[#allocation11 + $0x368] sm:$0xff]
        %v2163 = vld [vmem:[#allocation11 + $0x370] sm:$0xff]
        %v2164 = vld [vmem:[#allocation11 + $0x378] sm:$0xff]
        %v2165 = vld [vmem:[#allocation11 + $0x380] sm:$0xff]
        %v2166 = vld [vmem:[#allocation11 + $0x388] sm:$0xff]
        %v2167 = vld [vmem:[#allocation11 + $0x390] sm:$0xff]
        %v2168 = vld [vmem:[#allocation11 + $0x398] sm:$0xff]
        %v2169 = vld [vmem:[#allocation11 + $0x3a0] sm:$0xff]
        %v2170 = vld [vmem:[#allocation11 + $0x3a8] sm:$0xff]
        %v2171 = vld [vmem:[#allocation11 + $0x3b0] sm:$0xff]
        %v2172 = vld [vmem:[#allocation11 + $0x3b8] sm:$0xff]
        %v2173 = vld [vmem:[#allocation11 + $0x3c0] sm:$0xff]
        %v2174 = vld [vmem:[#allocation11 + $0x3c8] sm:$0xff]
        %v2175 = vld [vmem:[#allocation11 + $0x3d0] sm:$0xff]
        %v2176 = vld [vmem:[#allocation11 + $0x3d8] sm:$0xff]
        %v2177 = vld [vmem:[#allocation11 + $0x3e0] sm:$0xff]
        %v2178 = vld [vmem:[#allocation11 + $0x3e8] sm:$0xff]
        %v2179 = vld [vmem:[#allocation11 + $0x3f0] sm:$0xff]
        %v2180 = vld [vmem:[#allocation11 + $0x3f8] sm:$0xff]
        %v2181 = vld [vmem:[#allocation11 + $0x400] sm:$0xff]
        %v2182 = vld [vmem:[#allocation11 + $0x408] sm:$0xff]
        %v2183 = vld [vmem:[#allocation11 + $0x410] sm:$0xff]
        %v2184 = vld [vmem:[#allocation11 + $0x418] sm:$0xff]
        %v2185 = vld [vmem:[#allocation11 + $0x420] sm:$0xff]
        %v2186 = vld [vmem:[#allocation11 + $0x428] sm:$0xff]
        %v2187 = vld [vmem:[#allocation11 + $0x430] sm:$0xff]
        %v2188 = vld [vmem:[#allocation11 + $0x438] sm:$0xff]
        %v2189 = vld [vmem:[#allocation11 + $0x440] sm:$0xff]
        %v2190 = vld [vmem:[#allocation11 + $0x448] sm:$0xff]
        %v2191 = vld [vmem:[#allocation11 + $0x450] sm:$0xff]
        %v2192 = vld [vmem:[#allocation11 + $0x458] sm:$0xff]
        %v2193 = vld [vmem:[#allocation11 + $0x460] sm:$0xff]
        %v2194 = vld [vmem:[#allocation11 + $0x468] sm:$0xff]
        %v2195 = vld [vmem:[#allocation11 + $0x470] sm:$0xff]
        %v2196 = vld [vmem:[#allocation11 + $0x478] sm:$0xff]
        %v2197 = vld [vmem:[#allocation11 + $0x480] sm:$0xff]
        %v2198 = vld [vmem:[#allocation11 + $0x488] sm:$0xff]
        %v2199 = vld [vmem:[#allocation11 + $0x490] sm:$0xff]
        %v2200 = vld [vmem:[#allocation11 + $0x498] sm:$0xff]
        %v2201 = vld [vmem:[#allocation11 + $0x4a0] sm:$0xff]
        %v2202 = vld [vmem:[#allocation11 + $0x4a8] sm:$0xff]
        %v2203 = vld [vmem:[#allocation11 + $0x4b0] sm:$0xff]
        %v2204 = vld [vmem:[#allocation11 + $0x4b8] sm:$0xff]
        %v2205 = vld [vmem:[#allocation11 + $0x4c0] sm:$0xff]
        %v2206 = vld [vmem:[#allocation11 + $0x4c8] sm:$0xff]
        %v2207 = vld [vmem:[#allocation11 + $0x4d0] sm:$0xff]
        %v2208 = vld [vmem:[#allocation11 + $0x4d8] sm:$0xff]
        %v2209 = vld [vmem:[#allocation11 + $0x4e0] sm:$0xff]
        %v2210 = vld [vmem:[#allocation11 + $0x4e8] sm:$0xff]
        %v2211 = vld [vmem:[#allocation11 + $0x4f0] sm:$0xff]
        %v2212 = vld [vmem:[#allocation11 + $0x4f8] sm:$0xff]
        %v2213 = vld [vmem:[#allocation11 + $0x500] sm:$0xff]
        %v2214 = vld [vmem:[#allocation11 + $0x508] sm:$0xff]
        %v2215 = vld [vmem:[#allocation11 + $0x510] sm:$0xff]
        %v2216 = vld [vmem:[#allocation11 + $0x518] sm:$0xff]
        %v2217 = vld [vmem:[#allocation11 + $0x520] sm:$0xff]
        %v2218 = vld [vmem:[#allocation11 + $0x528] sm:$0xff]
        %v2219 = vld [vmem:[#allocation11 + $0x530] sm:$0xff]
        %v2220 = vld [vmem:[#allocation11 + $0x538] sm:$0xff]
        %v2221 = vld [vmem:[#allocation11 + $0x540] sm:$0xff]
        %v2222 = vld [vmem:[#allocation11 + $0x548] sm:$0xff]
        %v2223 = vld [vmem:[#allocation11 + $0x550] sm:$0xff]
        %v2224 = vld [vmem:[#allocation11 + $0x558] sm:$0xff]
        %v2225 = vld [vmem:[#allocation11 + $0x560] sm:$0xff]
        %v2226 = vld [vmem:[#allocation11 + $0x568] sm:$0xff]
        %v2227 = vld [vmem:[#allocation11 + $0x570] sm:$0xff]
        %v2228 = vld [vmem:[#allocation11 + $0x578] sm:$0xff]
        %v2229 = vld [vmem:[#allocation11 + $0x580] sm:$0xff]
        %v2230 = vld [vmem:[#allocation11 + $0x588] sm:$0xff]
        %v2231 = vld [vmem:[#allocation11 + $0x590] sm:$0xff]
        %v2232 = vld [vmem:[#allocation11 + $0x598] sm:$0xff]
        %v2233 = vld [vmem:[#allocation11 + $0x5a0] sm:$0xff]
        %v2234 = vld [vmem:[#allocation11 + $0x5a8] sm:$0xff]
        %v2235 = vld [vmem:[#allocation11 + $0x5b0] sm:$0xff]
        %v2236 = vld [vmem:[#allocation11 + $0x5b8] sm:$0xff]
        %v2237 = vld [vmem:[#allocation11 + $0x5c0] sm:$0xff]
        %v2238 = vld [vmem:[#allocation11 + $0x5c8] sm:$0xff]
        %v2239 = vld [vmem:[#allocation11 + $0x5d0] sm:$0xff]
        %v2240 = vld [vmem:[#allocation11 + $0x5d8] sm:$0xff]
        %v2241 = vld [vmem:[#allocation11 + $0x5e0] sm:$0xff]
        %v2242 = vld [vmem:[#allocation11 + $0x5e8] sm:$0xff]
        %v2243 = vld [vmem:[#allocation11 + $0x5f0] sm:$0xff]
        %v2244 = vld [vmem:[#allocation11 + $0x5f8] sm:$0xff]
        %v2245 = vld [vmem:[#allocation11 + $0x600] sm:$0xff]
        %v2246 = vld [vmem:[#allocation11 + $0x608] sm:$0xff]
        %v2247 = vld [vmem:[#allocation11 + $0x610] sm:$0xff]
        %v2248 = vld [vmem:[#allocation11 + $0x618] sm:$0xff]
        %v2249 = vld [vmem:[#allocation11 + $0x620] sm:$0xff]
        %v2250 = vld [vmem:[#allocation11 + $0x628] sm:$0xff]
        %v2251 = vld [vmem:[#allocation11 + $0x630] sm:$0xff]
        %v2252 = vld [vmem:[#allocation11 + $0x638] sm:$0xff]
        %v2253 = vld [vmem:[#allocation11 + $0x640] sm:$0xff]
        %v2254 = vld [vmem:[#allocation11 + $0x648] sm:$0xff]
        %v2255 = vld [vmem:[#allocation11 + $0x650] sm:$0xff]
        %v2256 = vld [vmem:[#allocation11 + $0x658] sm:$0xff]
        %v2257 = vld [vmem:[#allocation11 + $0x660] sm:$0xff]
        %v2258 = vld [vmem:[#allocation11 + $0x668] sm:$0xff]
        %v2259 = vld [vmem:[#allocation11 + $0x670] sm:$0xff]
        %v2260 = vld [vmem:[#allocation11 + $0x678] sm:$0xff]
        %v2261 = vld [vmem:[#allocation11 + $0x680] sm:$0xff]
        %v2262 = vld [vmem:[#allocation11 + $0x688] sm:$0xff]
        %v2263 = vld [vmem:[#allocation11 + $0x690] sm:$0xff]
        %v2264 = vld [vmem:[#allocation11 + $0x698] sm:$0xff]
        %v2265 = vld [vmem:[#allocation11 + $0x6a0] sm:$0xff]
        %v2266 = vld [vmem:[#allocation11 + $0x6a8] sm:$0xff]
        %v2267 = vld [vmem:[#allocation11 + $0x6b0] sm:$0xff]
        %v2268 = vld [vmem:[#allocation11 + $0x6b8] sm:$0xff]
        %v2269 = vld [vmem:[#allocation11 + $0x6c0] sm:$0xff]
        %v2270 = vld [vmem:[#allocation11 + $0x6c8] sm:$0xff]
        %v2271 = vld [vmem:[#allocation11 + $0x6d0] sm:$0xff]
        %v2272 = vld [vmem:[#allocation11 + $0x6d8] sm:$0xff]
        %v2273 = vld [vmem:[#allocation11 + $0x6e0] sm:$0xff]
        %v2274 = vld [vmem:[#allocation11 + $0x6e8] sm:$0xff]
        %v2275 = vld [vmem:[#allocation11 + $0x6f0] sm:$0xff]
        %v2276 = vld [vmem:[#allocation11 + $0x6f8] sm:$0xff]
        %v2277 = vld [vmem:[#allocation11 + $0x700] sm:$0xff]
        %v2278 = vld [vmem:[#allocation11 + $0x708] sm:$0xff]
        %v2279 = vld [vmem:[#allocation11 + $0x710] sm:$0xff]
        %v2280 = vld [vmem:[#allocation11 + $0x718] sm:$0xff]
        %v2281 = vld [vmem:[#allocation11 + $0x720] sm:$0xff]
        %v2282 = vld [vmem:[#allocation11 + $0x728] sm:$0xff]
        %v2283 = vld [vmem:[#allocation11 + $0x730] sm:$0xff]
        %v2284 = vld [vmem:[#allocation11 + $0x738] sm:$0xff]
        %v2285 = vld [vmem:[#allocation11 + $0x740] sm:$0xff]
        %v2286 = vld [vmem:[#allocation11 + $0x748] sm:$0xff]
        %v2287 = vld [vmem:[#allocation11 + $0x750] sm:$0xff]
        %v2288 = vld [vmem:[#allocation11 + $0x758] sm:$0xff]
        %v2289 = vld [vmem:[#allocation11 + $0x760] sm:$0xff]
        %v2290 = vld [vmem:[#allocation11 + $0x768] sm:$0xff]
        %v2291 = vld [vmem:[#allocation11 + $0x770] sm:$0xff]
        %v2292 = vld [vmem:[#allocation11 + $0x778] sm:$0xff]
        %v2293 = vld [vmem:[#allocation11 + $0x780] sm:$0xff]
        %v2294 = vld [vmem:[#allocation11 + $0x788] sm:$0xff]
        %v2295 = vld [vmem:[#allocation11 + $0x790] sm:$0xff]
        %v2296 = vld [vmem:[#allocation11 + $0x798] sm:$0xff]
        %v2297 = vld [vmem:[#allocation11 + $0x7a0] sm:$0xff]
        %v2298 = vld [vmem:[#allocation11 + $0x7a8] sm:$0xff]
        %v2299 = vld [vmem:[#allocation11 + $0x7b0] sm:$0xff]
        %v2300 = vld [vmem:[#allocation11 + $0x7b8] sm:$0xff]
        %v2301 = vld [vmem:[#allocation11 + $0x7c0] sm:$0xff]
        %v2302 = vld [vmem:[#allocation11 + $0x7c8] sm:$0xff]
        %v2303 = vld [vmem:[#allocation11 + $0x7d0] sm:$0xff]
        %v2304 = vld [vmem:[#allocation11 + $0x7d8] sm:$0xff]
        %v2305 = vld [vmem:[#allocation11 + $0x7e0] sm:$0xff]
        %v2306 = vld [vmem:[#allocation11 + $0x7e8] sm:$0xff]
        %v2307 = vld [vmem:[#allocation11 + $0x7f0] sm:$0xff]
        %v2308 = vld [vmem:[#allocation11 + $0x7f8] sm:$0xff]
        %v2309 = vld [vmem:[#allocation11 + $0x800] sm:$0xff]
        %v2310 = vld [vmem:[#allocation11 + $0x808] sm:$0xff]
        %v2311 = vld [vmem:[#allocation11 + $0x810] sm:$0xff]
        %v2312 = vld [vmem:[#allocation11 + $0x818] sm:$0xff]
        %v2313 = vld [vmem:[#allocation11 + $0x820] sm:$0xff]
        %v2314 = vld [vmem:[#allocation11 + $0x828] sm:$0xff]
        %v2315 = vld [vmem:[#allocation11 + $0x830] sm:$0xff]
        %v2316 = vld [vmem:[#allocation11 + $0x838] sm:$0xff]
        %v2317 = vld [vmem:[#allocation11 + $0x840] sm:$0xff]
        %v2318 = vld [vmem:[#allocation11 + $0x848] sm:$0xff]
        %v2319 = vld [vmem:[#allocation11 + $0x850] sm:$0xff]
        %v2320 = vld [vmem:[#allocation11 + $0x858] sm:$0xff]
        %v2321 = vld [vmem:[#allocation11 + $0x860] sm:$0xff]
        %v2322 = vld [vmem:[#allocation11 + $0x868] sm:$0xff]
        %v2323 = vld [vmem:[#allocation11 + $0x870] sm:$0xff]
        %v2324 = vld [vmem:[#allocation11 + $0x878] sm:$0xff]
        %v2325 = vld [vmem:[#allocation11 + $0x880] sm:$0xff]
        %v2326 = vld [vmem:[#allocation11 + $0x888] sm:$0xff]
        %v2327 = vld [vmem:[#allocation11 + $0x890] sm:$0xff]
        %v2328 = vld [vmem:[#allocation11 + $0x898] sm:$0xff]
        %v2329 = vld [vmem:[#allocation11 + $0x8a0] sm:$0xff]
        %v2330 = vld [vmem:[#allocation11 + $0x8a8] sm:$0xff]
        %v2331 = vld [vmem:[#allocation11 + $0x8b0] sm:$0xff]
        %v2332 = vld [vmem:[#allocation11 + $0x8b8] sm:$0xff]
        %v2333 = vld [vmem:[#allocation11 + $0x8c0] sm:$0xff]
        %v2334 = vld [vmem:[#allocation11 + $0x8c8] sm:$0xff]
        %v2335 = vld [vmem:[#allocation11 + $0x8d0] sm:$0xff]
        %v2336 = vld [vmem:[#allocation11 + $0x8d8] sm:$0xff]
        %v2337 = vld [vmem:[#allocation11 + $0x8e0] sm:$0xff]
        %v2338 = vld [vmem:[#allocation11 + $0x8e8] sm:$0xff]
        %v2339 = vld [vmem:[#allocation11 + $0x8f0] sm:$0xff]
        %v2340 = vld [vmem:[#allocation11 + $0x8f8] sm:$0xff]
        %v2341 = vld [vmem:[#allocation11 + $0x900] sm:$0xff]
        %v2342 = vld [vmem:[#allocation11 + $0x908] sm:$0xff]
        %v2343 = vld [vmem:[#allocation11 + $0x910] sm:$0xff]
        %v2344 = vld [vmem:[#allocation11 + $0x918] sm:$0xff]
        %v2345 = vld [vmem:[#allocation11 + $0x920] sm:$0xff]
        %v2346 = vld [vmem:[#allocation11 + $0x928] sm:$0xff]
        %v2347 = vld [vmem:[#allocation11 + $0x930] sm:$0xff]
        %v2348 = vld [vmem:[#allocation11 + $0x938] sm:$0xff]
        %v2349 = vld [vmem:[#allocation11 + $0x940] sm:$0xff]
        %v2350 = vld [vmem:[#allocation11 + $0x948] sm:$0xff]
        %v2351 = vld [vmem:[#allocation11 + $0x950] sm:$0xff]
        %v2352 = vld [vmem:[#allocation11 + $0x958] sm:$0xff]
        %v2353 = vld [vmem:[#allocation11 + $0x960] sm:$0xff]
        %v2354 = vld [vmem:[#allocation11 + $0x968] sm:$0xff]
        %v2355 = vld [vmem:[#allocation11 + $0x970] sm:$0xff]
        %v2356 = vld [vmem:[#allocation11 + $0x978] sm:$0xff]
        %v2357 = vld [vmem:[#allocation11 + $0x980] sm:$0xff]
        %v2358 = vld [vmem:[#allocation11 + $0x988] sm:$0xff]
        %v2359 = vld [vmem:[#allocation11 + $0x990] sm:$0xff]
        %v2360 = vld [vmem:[#allocation11 + $0x998] sm:$0xff]
        %v2361 = vld [vmem:[#allocation11 + $0x9a0] sm:$0xff]
        %v2362 = vld [vmem:[#allocation11 + $0x9a8] sm:$0xff]
        %v2363 = vld [vmem:[#allocation11 + $0x9b0] sm:$0xff]
        %v2364 = vld [vmem:[#allocation11 + $0x9b8] sm:$0xff]
        %v2365 = vld [vmem:[#allocation11 + $0x9c0] sm:$0xff]
        %v2366 = vld [vmem:[#allocation11 + $0x9c8] sm:$0xff]
        %v2367 = vld [vmem:[#allocation11 + $0x9d0] sm:$0xff]
        %v2368 = vld [vmem:[#allocation11 + $0x9d8] sm:$0xff]
        %v2369 = vld [vmem:[#allocation11 + $0x9e0] sm:$0xff]
        %v2370 = vld [vmem:[#allocation11 + $0x9e8] sm:$0xff]
        %v2371 = vld [vmem:[#allocation11 + $0x9f0] sm:$0xff]
        %v2372 = vld [vmem:[#allocation11 + $0x9f8] sm:$0xff]
        %v2373 = vld [vmem:[#allocation11 + $0xa00] sm:$0xff]
        %v2374 = vld [vmem:[#allocation11 + $0xa08] sm:$0xff]
        %v2375 = vld [vmem:[#allocation11 + $0xa10] sm:$0xff]
        %v2376 = vld [vmem:[#allocation11 + $0xa18] sm:$0xff]
        %v2377 = vld [vmem:[#allocation11 + $0xa20] sm:$0xff]
        %v2378 = vld [vmem:[#allocation11 + $0xa28] sm:$0xff]
        %v2379 = vld [vmem:[#allocation11 + $0xa30] sm:$0xff]
        %v2380 = vld [vmem:[#allocation11 + $0xa38] sm:$0xff]
        %v2381 = vld [vmem:[#allocation11 + $0xa40] sm:$0xff]
        %v2382 = vld [vmem:[#allocation11 + $0xa48] sm:$0xff]
        %v2383 = vld [vmem:[#allocation11 + $0xa50] sm:$0xff]
        %v2384 = vld [vmem:[#allocation11 + $0xa58] sm:$0xff]
        %v2385 = vld [vmem:[#allocation11 + $0xa60] sm:$0xff]
        %v2386 = vld [vmem:[#allocation11 + $0xa68] sm:$0xff]
        %v2387 = vld [vmem:[#allocation11 + $0xa70] sm:$0xff]
        %v2388 = vld [vmem:[#allocation11 + $0xa78] sm:$0xff]
        %v2389 = vld [vmem:[#allocation11 + $0xa80] sm:$0xff]
        %v2390 = vld [vmem:[#allocation11 + $0xa88] sm:$0xff]
        %v2391 = vld [vmem:[#allocation11 + $0xa90] sm:$0xff]
        %v2392 = vld [vmem:[#allocation11 + $0xa98] sm:$0xff]
        %v2393 = vld [vmem:[#allocation11 + $0xaa0] sm:$0xff]
        %v2394 = vld [vmem:[#allocation11 + $0xaa8] sm:$0xff]
        %v2395 = vld [vmem:[#allocation11 + $0xab0] sm:$0xff]
        %v2396 = vld [vmem:[#allocation11 + $0xab8] sm:$0xff]
        %v2397 = vld [vmem:[#allocation11 + $0xac0] sm:$0xff]
        %v2398 = vld [vmem:[#allocation11 + $0xac8] sm:$0xff]
        %v2399 = vld [vmem:[#allocation11 + $0xad0] sm:$0xff]
        %v2400 = vld [vmem:[#allocation11 + $0xad8] sm:$0xff]
        %v2401 = vld [vmem:[#allocation11 + $0xae0] sm:$0xff]
        %v2402 = vld [vmem:[#allocation11 + $0xae8] sm:$0xff]
        %v2403 = vld [vmem:[#allocation11 + $0xaf0] sm:$0xff]
        %v2404 = vld [vmem:[#allocation11 + $0xaf8] sm:$0xff]
        %v2405 = vld [vmem:[#allocation11 + $0xb00] sm:$0xff]
        %v2406 = vld [vmem:[#allocation11 + $0xb08] sm:$0xff]
        %v2407 = vld [vmem:[#allocation11 + $0xb10] sm:$0xff]
        %v2408 = vld [vmem:[#allocation11 + $0xb18] sm:$0xff]
        %v2409 = vld [vmem:[#allocation11 + $0xb20] sm:$0xff]
        %v2410 = vld [vmem:[#allocation11 + $0xb28] sm:$0xff]
        %v2411 = vld [vmem:[#allocation11 + $0xb30] sm:$0xff]
        %v2412 = vld [vmem:[#allocation11 + $0xb38] sm:$0xff]
        %v2413 = vld [vmem:[#allocation11 + $0xb40] sm:$0xff]
        %v2414 = vld [vmem:[#allocation11 + $0xb48] sm:$0xff]
        %v2415 = vld [vmem:[#allocation11 + $0xb50] sm:$0xff]
        %v2416 = vld [vmem:[#allocation11 + $0xb58] sm:$0xff]
        %v2417 = vld [vmem:[#allocation11 + $0xb60] sm:$0xff]
        %v2418 = vld [vmem:[#allocation11 + $0xb68] sm:$0xff]
        %v2419 = vld [vmem:[#allocation11 + $0xb70] sm:$0xff]
        %v2420 = vld [vmem:[#allocation11 + $0xb78] sm:$0xff]
        %v2421 = vld [vmem:[#allocation11 + $0xb80] sm:$0xff]
        %v2422 = vld [vmem:[#allocation11 + $0xb88] sm:$0xff]
        %v2423 = vld [vmem:[#allocation11 + $0xb90] sm:$0xff]
        %v2424 = vld [vmem:[#allocation11 + $0xb98] sm:$0xff]
        %v2425 = vld [vmem:[#allocation11 + $0xba0] sm:$0xff]
        %v2426 = vld [vmem:[#allocation11 + $0xba8] sm:$0xff]
        %v2427 = vld [vmem:[#allocation11 + $0xbb0] sm:$0xff]
        %v2428 = vld [vmem:[#allocation11 + $0xbb8] sm:$0xff]
        %v2429 = vld [vmem:[#allocation11 + $0xbc0] sm:$0xff]
        %v2430 = vld [vmem:[#allocation11 + $0xbc8] sm:$0xff]
        %v2431 = vld [vmem:[#allocation11 + $0xbd0] sm:$0xff]
        %v2432 = vld [vmem:[#allocation11 + $0xbd8] sm:$0xff]
        %v2433 = vld [vmem:[#allocation11 + $0xbe0] sm:$0xff]
        %v2434 = vld [vmem:[#allocation11 + $0xbe8] sm:$0xff]
        %v2435 = vld [vmem:[#allocation11 + $0xbf0] sm:$0xff]
        %v2436 = vld [vmem:[#allocation11 + $0xbf8] sm:$0xff]
        %v2437 = vld [vmem:[#allocation11 + $0xc00] sm:$0xff]
        %v2438 = vld [vmem:[#allocation11 + $0xc08] sm:$0xff]
        %v2439 = vld [vmem:[#allocation11 + $0xc10] sm:$0xff]
        %v2440 = vld [vmem:[#allocation11 + $0xc18] sm:$0xff]
        %v2441 = vld [vmem:[#allocation11 + $0xc20] sm:$0xff]
        %v2442 = vld [vmem:[#allocation11 + $0xc28] sm:$0xff]
        %v2443 = vld [vmem:[#allocation11 + $0xc30] sm:$0xff]
        %v2444 = vld [vmem:[#allocation11 + $0xc38] sm:$0xff]
        %v2445 = vld [vmem:[#allocation11 + $0xc40] sm:$0xff]
        %v2446 = vld [vmem:[#allocation11 + $0xc48] sm:$0xff]
        %v2447 = vld [vmem:[#allocation11 + $0xc50] sm:$0xff]
        %v2448 = vld [vmem:[#allocation11 + $0xc58] sm:$0xff]
        %v2449 = vld [vmem:[#allocation11 + $0xc60] sm:$0xff]
        %v2450 = vld [vmem:[#allocation11 + $0xc68] sm:$0xff]
        %v2451 = vld [vmem:[#allocation11 + $0xc70] sm:$0xff]
        %v2452 = vld [vmem:[#allocation11 + $0xc78] sm:$0xff]
        %v2453 = vld [vmem:[#allocation11 + $0xc80] sm:$0xff]
        %v2454 = vld [vmem:[#allocation11 + $0xc88] sm:$0xff]
        %v2455 = vld [vmem:[#allocation11 + $0xc90] sm:$0xff]
        %v2456 = vld [vmem:[#allocation11 + $0xc98] sm:$0xff]
        %v2457 = vld [vmem:[#allocation11 + $0xca0] sm:$0xff]
        %v2458 = vld [vmem:[#allocation11 + $0xca8] sm:$0xff]
        %v2459 = vld [vmem:[#allocation11 + $0xcb0] sm:$0xff]
        %v2460 = vld [vmem:[#allocation11 + $0xcb8] sm:$0xff]
        %v2461 = vld [vmem:[#allocation11 + $0xcc0] sm:$0xff]
        %v2462 = vld [vmem:[#allocation11 + $0xcc8] sm:$0xff]
        %v2463 = vld [vmem:[#allocation11 + $0xcd0] sm:$0xff]
        %v2464 = vld [vmem:[#allocation11 + $0xcd8] sm:$0xff]
        %v2465 = vld [vmem:[#allocation11 + $0xce0] sm:$0xff]
        %v2466 = vld [vmem:[#allocation11 + $0xce8] sm:$0xff]
        %v2467 = vld [vmem:[#allocation11 + $0xcf0] sm:$0xff]
        %v2468 = vld [vmem:[#allocation11 + $0xcf8] sm:$0xff]
        %v2469 = vld [vmem:[#allocation11 + $0xd00] sm:$0xff]
        %v2470 = vld [vmem:[#allocation11 + $0xd08] sm:$0xff]
        %v2471 = vld [vmem:[#allocation11 + $0xd10] sm:$0xff]
        %v2472 = vld [vmem:[#allocation11 + $0xd18] sm:$0xff]
        %v2473 = vld [vmem:[#allocation11 + $0xd20] sm:$0xff]
        %v2474 = vld [vmem:[#allocation11 + $0xd28] sm:$0xff]
        %v2475 = vld [vmem:[#allocation11 + $0xd30] sm:$0xff]
        %v2476 = vld [vmem:[#allocation11 + $0xd38] sm:$0xff]
        %v2477 = vld [vmem:[#allocation11 + $0xd40] sm:$0xff]
        %v2478 = vld [vmem:[#allocation11 + $0xd48] sm:$0xff]
        %v2479 = vld [vmem:[#allocation11 + $0xd50] sm:$0xff]
        %v2480 = vld [vmem:[#allocation11 + $0xd58] sm:$0xff]
        %v2481 = vld [vmem:[#allocation11 + $0xd60] sm:$0xff]
        %v2482 = vld [vmem:[#allocation11 + $0xd68] sm:$0xff]
        %v2483 = vld [vmem:[#allocation11 + $0xd70] sm:$0xff]
        %v2484 = vld [vmem:[#allocation11 + $0xd78] sm:$0xff]
        %v2485 = vld [vmem:[#allocation11 + $0xd80] sm:$0xff]
        %v2486 = vld [vmem:[#allocation11 + $0xd88] sm:$0xff]
        %v2487 = vld [vmem:[#allocation11 + $0xd90] sm:$0xff]
        %v2488 = vld [vmem:[#allocation11 + $0xd98] sm:$0xff]
        %v2489 = vld [vmem:[#allocation11 + $0xda0] sm:$0xff]
        %v2490 = vld [vmem:[#allocation11 + $0xda8] sm:$0xff]
        %v2491 = vld [vmem:[#allocation11 + $0xdb0] sm:$0xff]
        %v2492 = vld [vmem:[#allocation11 + $0xdb8] sm:$0xff]
        %v2493 = vld [vmem:[#allocation11 + $0xdc0] sm:$0xff]
        %v2494 = vld [vmem:[#allocation11 + $0xdc8] sm:$0xff]
        %v2495 = vld [vmem:[#allocation11 + $0xdd0] sm:$0xff]
        %v2496 = vld [vmem:[#allocation11 + $0xdd8] sm:$0xff]
        %v2497 = vld [vmem:[#allocation11 + $0xde0] sm:$0xff]
        %v2498 = vld [vmem:[#allocation11 + $0xde8] sm:$0xff]
        %v2499 = vld [vmem:[#allocation11 + $0xdf0] sm:$0xff]
        %v2500 = vld [vmem:[#allocation11 + $0xdf8] sm:$0xff]
        %v2501 = vld [vmem:[#allocation11 + $0xe00] sm:$0xff]
        %v2502 = vld [vmem:[#allocation11 + $0xe08] sm:$0xff]
        %v2503 = vld [vmem:[#allocation11 + $0xe10] sm:$0xff]
        %v2504 = vld [vmem:[#allocation11 + $0xe18] sm:$0xff]
        %v2505 = vld [vmem:[#allocation11 + $0xe20] sm:$0xff]
        %v2506 = vld [vmem:[#allocation11 + $0xe28] sm:$0xff]
        %v2507 = vld [vmem:[#allocation11 + $0xe30] sm:$0xff]
        %v2508 = vld [vmem:[#allocation11 + $0xe38] sm:$0xff]
        %v2509 = vld [vmem:[#allocation11 + $0xe40] sm:$0xff]
        %v2510 = vld [vmem:[#allocation11 + $0xe48] sm:$0xff]
        %v2511 = vld [vmem:[#allocation11 + $0xe50] sm:$0xff]
        %v2512 = vld [vmem:[#allocation11 + $0xe58] sm:$0xff]
        %v2513 = vld [vmem:[#allocation11 + $0xe60] sm:$0xff]
        %v2514 = vld [vmem:[#allocation11 + $0xe68] sm:$0xff]
        %v2515 = vld [vmem:[#allocation11 + $0xe70] sm:$0xff]
        %v2516 = vld [vmem:[#allocation11 + $0xe78] sm:$0xff]
        %v2517 = vld [vmem:[#allocation11 + $0xe80] sm:$0xff]
        %v2518 = vld [vmem:[#allocation11 + $0xe88] sm:$0xff]
        %v2519 = vld [vmem:[#allocation11 + $0xe90] sm:$0xff]
        %v2520 = vld [vmem:[#allocation11 + $0xe98] sm:$0xff]
        %v2521 = vld [vmem:[#allocation11 + $0xea0] sm:$0xff]
        %v2522 = vld [vmem:[#allocation11 + $0xea8] sm:$0xff]
        %v2523 = vld [vmem:[#allocation11 + $0xeb0] sm:$0xff]
        %v2524 = vld [vmem:[#allocation11 + $0xeb8] sm:$0xff]
        %v2525 = vld [vmem:[#allocation11 + $0xec0] sm:$0xff]
        %v2526 = vld [vmem:[#allocation11 + $0xec8] sm:$0xff]
        %v2527 = vld [vmem:[#allocation11 + $0xed0] sm:$0xff]
        %v2528 = vld [vmem:[#allocation11 + $0xed8] sm:$0xff]
        %v2529 = vld [vmem:[#allocation11 + $0xee0] sm:$0xff]
        %v2530 = vld [vmem:[#allocation11 + $0xee8] sm:$0xff]
        %v2531 = vld [vmem:[#allocation11 + $0xef0] sm:$0xff]
        %v2532 = vld [vmem:[#allocation11 + $0xef8] sm:$0xff]
        %v2533 = vld [vmem:[#allocation11 + $0xf00] sm:$0xff]
        %v2534 = vld [vmem:[#allocation11 + $0xf08] sm:$0xff]
        %v2535 = vld [vmem:[#allocation11 + $0xf10] sm:$0xff]
        %v2536 = vld [vmem:[#allocation11 + $0xf18] sm:$0xff]
        %v2537 = vld [vmem:[#allocation11 + $0xf20] sm:$0xff]
        %v2538 = vld [vmem:[#allocation11 + $0xf28] sm:$0xff]
        %v2539 = vld [vmem:[#allocation11 + $0xf30] sm:$0xff]
        %v2540 = vld [vmem:[#allocation11 + $0xf38] sm:$0xff]
        %v2541 = vld [vmem:[#allocation11 + $0xf40] sm:$0xff]
        %v2542 = vld [vmem:[#allocation11 + $0xf48] sm:$0xff]
        %v2543 = vld [vmem:[#allocation11 + $0xf50] sm:$0xff]
        %v2544 = vld [vmem:[#allocation11 + $0xf58] sm:$0xff]
        %v2545 = vld [vmem:[#allocation11 + $0xf60] sm:$0xff]
        %v2546 = vld [vmem:[#allocation11 + $0xf68] sm:$0xff]
        %v2547 = vld [vmem:[#allocation11 + $0xf70] sm:$0xff]
        %v2548 = vld [vmem:[#allocation11 + $0xf78] sm:$0xff]
        %v2549 = vld [vmem:[#allocation11 + $0xf80] sm:$0xff]
        %v2550 = vld [vmem:[#allocation11 + $0xf88] sm:$0xff]
        %v2551 = vld [vmem:[#allocation11 + $0xf90] sm:$0xff]
        %v2552 = vld [vmem:[#allocation11 + $0xf98] sm:$0xff]
        %v2553 = vld [vmem:[#allocation11 + $0xfa0] sm:$0xff]
        %v2554 = vld [vmem:[#allocation11 + $0xfa8] sm:$0xff]
        %v2555 = vld [vmem:[#allocation11 + $0xfb0] sm:$0xff]
        %v2556 = vld [vmem:[#allocation11 + $0xfb8] sm:$0xff]
        %v2557 = vld [vmem:[#allocation11 + $0xfc0] sm:$0xff]
        %v2558 = vld [vmem:[#allocation11 + $0xfc8] sm:$0xff]
        %v2559 = vld [vmem:[#allocation11 + $0xfd0] sm:$0xff]
        %v2560 = vld [vmem:[#allocation11 + $0xfd8] sm:$0xff]
        %v2561 = vld [vmem:[#allocation11 + $0xfe0] sm:$0xff]
        %v2562 = vld [vmem:[#allocation11 + $0xfe8] sm:$0xff]
        %v2563 = vld [vmem:[#allocation11 + $0xff0] sm:$0xff]
        %v2564 = vld [vmem:[#allocation11 + $0xff8] sm:$0xff]
        %v2565 = vld [vmem:[#allocation13] sm:$0xf]
        %v2567 = vperm.slane %v2565, 0
        %v2568 = vperm.slane %v2565, 1
        %v2569 = vperm.slane %v2565, 2
        %v2570 = vperm.slane %v2565, 3
        %2575 = vmatpush.msra.mxu0 %v2113
        %2576 = vmatpush.msra.mxu0 %v2109
        %2577 = vmatpush.msra.mxu0 %v2105
        %2578 = vmatpush.msra.mxu0 %v2101
        %2579 = vmatpush.msra.mxu0 %v2097
        %2580 = vmatpush.msra.mxu0 %v2093
        %2581 = vmatpush.msra.mxu0 %v2089
        %2582 = vmatpush.msra.mxu0 %v2085
        %2583 = vmatpush.msra.mxu0 %v2081
        %2584 = vmatpush.msra.mxu0 %v2077
        %2585 = vmatpush.msra.mxu0 %v2073
        %2586 = vmatpush.msra.mxu0 %v2069
        %2587 = vmatpush.msra.mxu0 %v2065
        %2588 = vmatpush.msra.mxu0 %v2061
        %2589 = vmatpush.msra.mxu0 %v2057
        %2590 = vmatpush.msra.mxu0 %v2053
        %2591 = vmatmul.f32.gmra.mxu0 %v2045
        %v2592 = vpop.f32.mrf.mxu0
        %v2593 = vadd.f32 %v2567, %v2592
        %2594 = vdwg.mxu0
        %2595 = vmatpush.msra.mxu0 %v2177
        %2596 = vmatpush.msra.mxu0 %v2173
        %2597 = vmatpush.msra.mxu0 %v2169
        %2598 = vmatpush.msra.mxu0 %v2165
        %2599 = vmatpush.msra.mxu0 %v2161
        %2600 = vmatpush.msra.mxu0 %v2157
        %2601 = vmatpush.msra.mxu0 %v2153
        %2602 = vmatpush.msra.mxu0 %v2149
        %2603 = vmatpush.msra.mxu0 %v2145
        %2604 = vmatpush.msra.mxu0 %v2141
        %2605 = vmatpush.msra.mxu0 %v2137
        %2606 = vmatpush.msra.mxu0 %v2133
        %2607 = vmatpush.msra.mxu0 %v2129
        %2608 = vmatpush.msra.mxu0 %v2125
        %2609 = vmatpush.msra.mxu0 %v2121
        %2610 = vmatpush.msra.mxu0 %v2117
        %2611 = vmatmul.f32.gmra.mxu0 %v2046
        %v2612 = vpop.f32.mrf.mxu0
        %v2613 = vadd.f32 %v2593, %v2612
        %2614 = vdwg.mxu0
        %2615 = vmatpush.msra.mxu0 %v2241
        %2616 = vmatpush.msra.mxu0 %v2237
        %2617 = vmatpush.msra.mxu0 %v2233
        %2618 = vmatpush.msra.mxu0 %v2229
        %2619 = vmatpush.msra.mxu0 %v2225
        %2620 = vmatpush.msra.mxu0 %v2221
        %2621 = vmatpush.msra.mxu0 %v2217
        %2622 = vmatpush.msra.mxu0 %v2213
        %2623 = vmatpush.msra.mxu0 %v2209
        %2624 = vmatpush.msra.mxu0 %v2205
        %2625 = vmatpush.msra.mxu0 %v2201
        %2626 = vmatpush.msra.mxu0 %v2197
        %2627 = vmatpush.msra.mxu0 %v2193
        %2628 = vmatpush.msra.mxu0 %v2189
        %2629 = vmatpush.msra.mxu0 %v2185
        %2630 = vmatpush.msra.mxu0 %v2181
        %2631 = vmatmul.f32.gmra.mxu0 %v2047
        %v2632 = vpop.f32.mrf.mxu0
        %v2633 = vadd.f32 %v2613, %v2632
        %2634 = vdwg.mxu0
        %2635 = vmatpush.msra.mxu0 %v2305
        %2636 = vmatpush.msra.mxu0 %v2301
        %2637 = vmatpush.msra.mxu0 %v2297
        %2638 = vmatpush.msra.mxu0 %v2293
        %2639 = vmatpush.msra.mxu0 %v2289
        %2640 = vmatpush.msra.mxu0 %v2285
        %2641 = vmatpush.msra.mxu0 %v2281
        %2642 = vmatpush.msra.mxu0 %v2277
        %2643 = vmatpush.msra.mxu0 %v2273
        %2644 = vmatpush.msra.mxu0 %v2269
        %2645 = vmatpush.msra.mxu0 %v2265
        %2646 = vmatpush.msra.mxu0 %v2261
        %2647 = vmatpush.msra.mxu0 %v2257
        %2648 = vmatpush.msra.mxu0 %v2253
        %2649 = vmatpush.msra.mxu0 %v2249
        %2650 = vmatpush.msra.mxu0 %v2245
        %2651 = vmatmul.f32.gmra.mxu0 %v2048
        %v2652 = vpop.f32.mrf.mxu0
        %v2653 = vadd.f32 %v2633, %v2652
        %2654 = vdwg.mxu0
        %2655 = vmatpush.msra.mxu0 %v2369
        %2656 = vmatpush.msra.mxu0 %v2365
        %2657 = vmatpush.msra.mxu0 %v2361
        %2658 = vmatpush.msra.mxu0 %v2357
        %2659 = vmatpush.msra.mxu0 %v2353
        %2660 = vmatpush.msra.mxu0 %v2349
        %2661 = vmatpush.msra.mxu0 %v2345
        %2662 = vmatpush.msra.mxu0 %v2341
        %2663 = vmatpush.msra.mxu0 %v2337
        %2664 = vmatpush.msra.mxu0 %v2333
        %2665 = vmatpush.msra.mxu0 %v2329
        %2666 = vmatpush.msra.mxu0 %v2325
        %2667 = vmatpush.msra.mxu0 %v2321
        %2668 = vmatpush.msra.mxu0 %v2317
        %2669 = vmatpush.msra.mxu0 %v2313
        %2670 = vmatpush.msra.mxu0 %v2309
        %2671 = vmatmul.f32.gmra.mxu0 %v2049
        %v2672 = vpop.f32.mrf.mxu0
        %v2673 = vadd.f32 %v2653, %v2672
        %2674 = vdwg.mxu0
        %2675 = vmatpush.msra.mxu0 %v2433
        %2676 = vmatpush.msra.mxu0 %v2429
        %2677 = vmatpush.msra.mxu0 %v2425
        %2678 = vmatpush.msra.mxu0 %v2421
        %2679 = vmatpush.msra.mxu0 %v2417
        %2680 = vmatpush.msra.mxu0 %v2413
        %2681 = vmatpush.msra.mxu0 %v2409
        %2682 = vmatpush.msra.mxu0 %v2405
        %2683 = vmatpush.msra.mxu0 %v2401
        %2684 = vmatpush.msra.mxu0 %v2397
        %2685 = vmatpush.msra.mxu0 %v2393
        %2686 = vmatpush.msra.mxu0 %v2389
        %2687 = vmatpush.msra.mxu0 %v2385
        %2688 = vmatpush.msra.mxu0 %v2381
        %2689 = vmatpush.msra.mxu0 %v2377
        %2690 = vmatpush.msra.mxu0 %v2373
        %2691 = vmatmul.f32.gmra.mxu0 %v2050
        %v2692 = vpop.f32.mrf.mxu0
        %v2693 = vadd.f32 %v2673, %v2692
        %2694 = vdwg.mxu0
        %2695 = vmatpush.msra.mxu0 %v2497
        %2696 = vmatpush.msra.mxu0 %v2493
        %2697 = vmatpush.msra.mxu0 %v2489
        %2698 = vmatpush.msra.mxu0 %v2485
        %2699 = vmatpush.msra.mxu0 %v2481
        %2700 = vmatpush.msra.mxu0 %v2477
        %2701 = vmatpush.msra.mxu0 %v2473
        %2702 = vmatpush.msra.mxu0 %v2469
        %2703 = vmatpush.msra.mxu0 %v2465
        %2704 = vmatpush.msra.mxu0 %v2461
        %2705 = vmatpush.msra.mxu0 %v2457
        %2706 = vmatpush.msra.mxu0 %v2453
        %2707 = vmatpush.msra.mxu0 %v2449
        %2708 = vmatpush.msra.mxu0 %v2445
        %2709 = vmatpush.msra.mxu0 %v2441
        %2710 = vmatpush.msra.mxu0 %v2437
        %2711 = vmatmul.f32.gmra.mxu0 %v2051
        %v2712 = vpop.f32.mrf.mxu0
        %v2713 = vadd.f32 %v2693, %v2712
        %2714 = vdwg.mxu0
        %2715 = vmatpush.msra.mxu0 %v2561
        %2716 = vmatpush.msra.mxu0 %v2557
        %2717 = vmatpush.msra.mxu0 %v2553
        %2718 = vmatpush.msra.mxu0 %v2549
        %2719 = vmatpush.msra.mxu0 %v2545
        %2720 = vmatpush.msra.mxu0 %v2541
        %2721 = vmatpush.msra.mxu0 %v2537
        %2722 = vmatpush.msra.mxu0 %v2533
        %2723 = vmatpush.msra.mxu0 %v2529
        %2724 = vmatpush.msra.mxu0 %v2525
        %2725 = vmatpush.msra.mxu0 %v2521
        %2726 = vmatpush.msra.mxu0 %v2517
        %2727 = vmatpush.msra.mxu0 %v2513
        %2728 = vmatpush.msra.mxu0 %v2509
        %2729 = vmatpush.msra.mxu0 %v2505
        %2730 = vmatpush.msra.mxu0 %v2501
        %2731 = vmatmul.f32.gmra.mxu0 %v2052
        %v2732 = vpop.f32.mrf.mxu0
        %v2733 = vadd.f32 %v2713, %v2732
        %2734 = vdwg.mxu0
        %2735 = vmatpush.msra.mxu0 %v2114
        %2736 = vmatpush.msra.mxu0 %v2110
        %2737 = vmatpush.msra.mxu0 %v2106
        %2738 = vmatpush.msra.mxu0 %v2102
        %2739 = vmatpush.msra.mxu0 %v2098
        %2740 = vmatpush.msra.mxu0 %v2094
        %2741 = vmatpush.msra.mxu0 %v2090
        %2742 = vmatpush.msra.mxu0 %v2086
        %2743 = vmatpush.msra.mxu0 %v2082
        %2744 = vmatpush.msra.mxu0 %v2078
        %2745 = vmatpush.msra.mxu0 %v2074
        %2746 = vmatpush.msra.mxu0 %v2070
        %2747 = vmatpush.msra.mxu0 %v2066
        %2748 = vmatpush.msra.mxu0 %v2062
        %2749 = vmatpush.msra.mxu0 %v2058
        %2750 = vmatpush.msra.mxu0 %v2054
        %2751 = vmatmul.f32.gmra.mxu0 %v2045
        %v2752 = vpop.f32.mrf.mxu0
        %v2753 = vadd.f32 %v2568, %v2752
        %2754 = vdwg.mxu0
        %2755 = vmatpush.msra.mxu0 %v2178
        %2756 = vmatpush.msra.mxu0 %v2174
        %2757 = vmatpush.msra.mxu0 %v2170
        %2758 = vmatpush.msra.mxu0 %v2166
        %2759 = vmatpush.msra.mxu0 %v2162
        %2760 = vmatpush.msra.mxu0 %v2158
        %2761 = vmatpush.msra.mxu0 %v2154
        %2762 = vmatpush.msra.mxu0 %v2150
        %2763 = vmatpush.msra.mxu0 %v2146
        %2764 = vmatpush.msra.mxu0 %v2142
        %2765 = vmatpush.msra.mxu0 %v2138
        %2766 = vmatpush.msra.mxu0 %v2134
        %2767 = vmatpush.msra.mxu0 %v2130
        %2768 = vmatpush.msra.mxu0 %v2126
        %2769 = vmatpush.msra.mxu0 %v2122
        %2770 = vmatpush.msra.mxu0 %v2118
        %2771 = vmatmul.f32.gmra.mxu0 %v2046
        %v2772 = vpop.f32.mrf.mxu0
        %v2773 = vadd.f32 %v2753, %v2772
        %2774 = vdwg.mxu0
        %2775 = vmatpush.msra.mxu0 %v2242
        %2776 = vmatpush.msra.mxu0 %v2238
        %2777 = vmatpush.msra.mxu0 %v2234
        %2778 = vmatpush.msra.mxu0 %v2230
        %2779 = vmatpush.msra.mxu0 %v2226
        %2780 = vmatpush.msra.mxu0 %v2222
        %2781 = vmatpush.msra.mxu0 %v2218
        %2782 = vmatpush.msra.mxu0 %v2214
        %2783 = vmatpush.msra.mxu0 %v2210
        %2784 = vmatpush.msra.mxu0 %v2206
        %2785 = vmatpush.msra.mxu0 %v2202
        %2786 = vmatpush.msra.mxu0 %v2198
        %2787 = vmatpush.msra.mxu0 %v2194
        %2788 = vmatpush.msra.mxu0 %v2190
        %2789 = vmatpush.msra.mxu0 %v2186
        %2790 = vmatpush.msra.mxu0 %v2182
        %2791 = vmatmul.f32.gmra.mxu0 %v2047
        %v2792 = vpop.f32.mrf.mxu0
        %v2793 = vadd.f32 %v2773, %v2792
        %2794 = vdwg.mxu0
        %2795 = vmatpush.msra.mxu0 %v2306
        %2796 = vmatpush.msra.mxu0 %v2302
        %2797 = vmatpush.msra.mxu0 %v2298
        %2798 = vmatpush.msra.mxu0 %v2294
        %2799 = vmatpush.msra.mxu0 %v2290
        %2800 = vmatpush.msra.mxu0 %v2286
        %2801 = vmatpush.msra.mxu0 %v2282
        %2802 = vmatpush.msra.mxu0 %v2278
        %2803 = vmatpush.msra.mxu0 %v2274
        %2804 = vmatpush.msra.mxu0 %v2270
        %2805 = vmatpush.msra.mxu0 %v2266
        %2806 = vmatpush.msra.mxu0 %v2262
        %2807 = vmatpush.msra.mxu0 %v2258
        %2808 = vmatpush.msra.mxu0 %v2254
        %2809 = vmatpush.msra.mxu0 %v2250
        %2810 = vmatpush.msra.mxu0 %v2246
        %2811 = vmatmul.f32.gmra.mxu0 %v2048
        %v2812 = vpop.f32.mrf.mxu0
        %v2813 = vadd.f32 %v2793, %v2812
        %2814 = vdwg.mxu0
        %2815 = vmatpush.msra.mxu0 %v2370
        %2816 = vmatpush.msra.mxu0 %v2366
        %2817 = vmatpush.msra.mxu0 %v2362
        %2818 = vmatpush.msra.mxu0 %v2358
        %2819 = vmatpush.msra.mxu0 %v2354
        %2820 = vmatpush.msra.mxu0 %v2350
        %2821 = vmatpush.msra.mxu0 %v2346
        %2822 = vmatpush.msra.mxu0 %v2342
        %2823 = vmatpush.msra.mxu0 %v2338
        %2824 = vmatpush.msra.mxu0 %v2334
        %2825 = vmatpush.msra.mxu0 %v2330
        %2826 = vmatpush.msra.mxu0 %v2326
        %2827 = vmatpush.msra.mxu0 %v2322
        %2828 = vmatpush.msra.mxu0 %v2318
        %2829 = vmatpush.msra.mxu0 %v2314
        %2830 = vmatpush.msra.mxu0 %v2310
        %2831 = vmatmul.f32.gmra.mxu0 %v2049
        %v2832 = vpop.f32.mrf.mxu0
        %v2833 = vadd.f32 %v2813, %v2832
        %2834 = vdwg.mxu0
        %2835 = vmatpush.msra.mxu0 %v2434
        %2836 = vmatpush.msra.mxu0 %v2430
        %2837 = vmatpush.msra.mxu0 %v2426
        %2838 = vmatpush.msra.mxu0 %v2422
        %2839 = vmatpush.msra.mxu0 %v2418
        %2840 = vmatpush.msra.mxu0 %v2414
        %2841 = vmatpush.msra.mxu0 %v2410
        %2842 = vmatpush.msra.mxu0 %v2406
        %2843 = vmatpush.msra.mxu0 %v2402
        %2844 = vmatpush.msra.mxu0 %v2398
        %2845 = vmatpush.msra.mxu0 %v2394
        %2846 = vmatpush.msra.mxu0 %v2390
        %2847 = vmatpush.msra.mxu0 %v2386
        %2848 = vmatpush.msra.mxu0 %v2382
        %2849 = vmatpush.msra.mxu0 %v2378
        %2850 = vmatpush.msra.mxu0 %v2374
        %2851 = vmatmul.f32.gmra.mxu0 %v2050
        %v2852 = vpop.f32.mrf.mxu0
        %v2853 = vadd.f32 %v2833, %v2852
        %2854 = vdwg.mxu0
        %2855 = vmatpush.msra.mxu0 %v2498
        %2856 = vmatpush.msra.mxu0 %v2494
        %2857 = vmatpush.msra.mxu0 %v2490
        %2858 = vmatpush.msra.mxu0 %v2486
        %2859 = vmatpush.msra.mxu0 %v2482
        %2860 = vmatpush.msra.mxu0 %v2478
        %2861 = vmatpush.msra.mxu0 %v2474
        %2862 = vmatpush.msra.mxu0 %v2470
        %2863 = vmatpush.msra.mxu0 %v2466
        %2864 = vmatpush.msra.mxu0 %v2462
        %2865 = vmatpush.msra.mxu0 %v2458
        %2866 = vmatpush.msra.mxu0 %v2454
        %2867 = vmatpush.msra.mxu0 %v2450
        %2868 = vmatpush.msra.mxu0 %v2446
        %2869 = vmatpush.msra.mxu0 %v2442
        %2870 = vmatpush.msra.mxu0 %v2438
        %2871 = vmatmul.f32.gmra.mxu0 %v2051
        %v2872 = vpop.f32.mrf.mxu0
        %v2873 = vadd.f32 %v2853, %v2872
        %2874 = vdwg.mxu0
        %2875 = vmatpush.msra.mxu0 %v2562
        %2876 = vmatpush.msra.mxu0 %v2558
        %2877 = vmatpush.msra.mxu0 %v2554
        %2878 = vmatpush.msra.mxu0 %v2550
        %2879 = vmatpush.msra.mxu0 %v2546
        %2880 = vmatpush.msra.mxu0 %v2542
        %2881 = vmatpush.msra.mxu0 %v2538
        %2882 = vmatpush.msra.mxu0 %v2534
        %2883 = vmatpush.msra.mxu0 %v2530
        %2884 = vmatpush.msra.mxu0 %v2526
        %2885 = vmatpush.msra.mxu0 %v2522
        %2886 = vmatpush.msra.mxu0 %v2518
        %2887 = vmatpush.msra.mxu0 %v2514
        %2888 = vmatpush.msra.mxu0 %v2510
        %2889 = vmatpush.msra.mxu0 %v2506
        %2890 = vmatpush.msra.mxu0 %v2502
        %2891 = vmatmul.f32.gmra.mxu0 %v2052
        %v2892 = vpop.f32.mrf.mxu0
        %v2893 = vadd.f32 %v2873, %v2892
        %2894 = vdwg.mxu0
        %2895 = vmatpush.msra.mxu0 %v2115
        %2896 = vmatpush.msra.mxu0 %v2111
        %2897 = vmatpush.msra.mxu0 %v2107
        %2898 = vmatpush.msra.mxu0 %v2103
        %2899 = vmatpush.msra.mxu0 %v2099
        %2900 = vmatpush.msra.mxu0 %v2095
        %2901 = vmatpush.msra.mxu0 %v2091
        %2902 = vmatpush.msra.mxu0 %v2087
        %2903 = vmatpush.msra.mxu0 %v2083
        %2904 = vmatpush.msra.mxu0 %v2079
        %2905 = vmatpush.msra.mxu0 %v2075
        %2906 = vmatpush.msra.mxu0 %v2071
        %2907 = vmatpush.msra.mxu0 %v2067
        %2908 = vmatpush.msra.mxu0 %v2063
        %2909 = vmatpush.msra.mxu0 %v2059
        %2910 = vmatpush.msra.mxu0 %v2055
        %2911 = vmatmul.f32.gmra.mxu0 %v2045
        %v2912 = vpop.f32.mrf.mxu0
        %v2913 = vadd.f32 %v2569, %v2912
        %2914 = vdwg.mxu0
        %2915 = vmatpush.msra.mxu0 %v2179
        %2916 = vmatpush.msra.mxu0 %v2175
        %2917 = vmatpush.msra.mxu0 %v2171
        %2918 = vmatpush.msra.mxu0 %v2167
        %2919 = vmatpush.msra.mxu0 %v2163
        %2920 = vmatpush.msra.mxu0 %v2159
        %2921 = vmatpush.msra.mxu0 %v2155
        %2922 = vmatpush.msra.mxu0 %v2151
        %2923 = vmatpush.msra.mxu0 %v2147
        %2924 = vmatpush.msra.mxu0 %v2143
        %2925 = vmatpush.msra.mxu0 %v2139
        %2926 = vmatpush.msra.mxu0 %v2135
        %2927 = vmatpush.msra.mxu0 %v2131
        %2928 = vmatpush.msra.mxu0 %v2127
        %2929 = vmatpush.msra.mxu0 %v2123
        %2930 = vmatpush.msra.mxu0 %v2119
        %2931 = vmatmul.f32.gmra.mxu0 %v2046
        %v2932 = vpop.f32.mrf.mxu0
        %v2933 = vadd.f32 %v2913, %v2932
        %2934 = vdwg.mxu0
        %2935 = vmatpush.msra.mxu0 %v2243
        %2936 = vmatpush.msra.mxu0 %v2239
        %2937 = vmatpush.msra.mxu0 %v2235
        %2938 = vmatpush.msra.mxu0 %v2231
        %2939 = vmatpush.msra.mxu0 %v2227
        %2940 = vmatpush.msra.mxu0 %v2223
        %2941 = vmatpush.msra.mxu0 %v2219
        %2942 = vmatpush.msra.mxu0 %v2215
        %2943 = vmatpush.msra.mxu0 %v2211
        %2944 = vmatpush.msra.mxu0 %v2207
        %2945 = vmatpush.msra.mxu0 %v2203
        %2946 = vmatpush.msra.mxu0 %v2199
        %2947 = vmatpush.msra.mxu0 %v2195
        %2948 = vmatpush.msra.mxu0 %v2191
        %2949 = vmatpush.msra.mxu0 %v2187
        %2950 = vmatpush.msra.mxu0 %v2183
        %2951 = vmatmul.f32.gmra.mxu0 %v2047
        %v2952 = vpop.f32.mrf.mxu0
        %v2953 = vadd.f32 %v2933, %v2952
        %2954 = vdwg.mxu0
        %2955 = vmatpush.msra.mxu0 %v2307
        %2956 = vmatpush.msra.mxu0 %v2303
        %2957 = vmatpush.msra.mxu0 %v2299
        %2958 = vmatpush.msra.mxu0 %v2295
        %2959 = vmatpush.msra.mxu0 %v2291
        %2960 = vmatpush.msra.mxu0 %v2287
        %2961 = vmatpush.msra.mxu0 %v2283
        %2962 = vmatpush.msra.mxu0 %v2279
        %2963 = vmatpush.msra.mxu0 %v2275
        %2964 = vmatpush.msra.mxu0 %v2271
        %2965 = vmatpush.msra.mxu0 %v2267
        %2966 = vmatpush.msra.mxu0 %v2263
        %2967 = vmatpush.msra.mxu0 %v2259
        %2968 = vmatpush.msra.mxu0 %v2255
        %2969 = vmatpush.msra.mxu0 %v2251
        %2970 = vmatpush.msra.mxu0 %v2247
        %2971 = vmatmul.f32.gmra.mxu0 %v2048
        %v2972 = vpop.f32.mrf.mxu0
        %v2973 = vadd.f32 %v2953, %v2972
        %2974 = vdwg.mxu0
        %2975 = vmatpush.msra.mxu0 %v2371
        %2976 = vmatpush.msra.mxu0 %v2367
        %2977 = vmatpush.msra.mxu0 %v2363
        %2978 = vmatpush.msra.mxu0 %v2359
        %2979 = vmatpush.msra.mxu0 %v2355
        %2980 = vmatpush.msra.mxu0 %v2351
        %2981 = vmatpush.msra.mxu0 %v2347
        %2982 = vmatpush.msra.mxu0 %v2343
        %2983 = vmatpush.msra.mxu0 %v2339
        %2984 = vmatpush.msra.mxu0 %v2335
        %2985 = vmatpush.msra.mxu0 %v2331
        %2986 = vmatpush.msra.mxu0 %v2327
        %2987 = vmatpush.msra.mxu0 %v2323
        %2988 = vmatpush.msra.mxu0 %v2319
        %2989 = vmatpush.msra.mxu0 %v2315
        %2990 = vmatpush.msra.mxu0 %v2311
        %2991 = vmatmul.f32.gmra.mxu0 %v2049
        %v2992 = vpop.f32.mrf.mxu0
        %v2993 = vadd.f32 %v2973, %v2992
        %2994 = vdwg.mxu0
        %2995 = vmatpush.msra.mxu0 %v2435
        %2996 = vmatpush.msra.mxu0 %v2431
        %2997 = vmatpush.msra.mxu0 %v2427
        %2998 = vmatpush.msra.mxu0 %v2423
        %2999 = vmatpush.msra.mxu0 %v2419
        %3000 = vmatpush.msra.mxu0 %v2415
        %3001 = vmatpush.msra.mxu0 %v2411
        %3002 = vmatpush.msra.mxu0 %v2407
        %3003 = vmatpush.msra.mxu0 %v2403
        %3004 = vmatpush.msra.mxu0 %v2399
        %3005 = vmatpush.msra.mxu0 %v2395
        %3006 = vmatpush.msra.mxu0 %v2391
        %3007 = vmatpush.msra.mxu0 %v2387
        %3008 = vmatpush.msra.mxu0 %v2383
        %3009 = vmatpush.msra.mxu0 %v2379
        %3010 = vmatpush.msra.mxu0 %v2375
        %3011 = vmatmul.f32.gmra.mxu0 %v2050
        %v3012 = vpop.f32.mrf.mxu0
        %v3013 = vadd.f32 %v2993, %v3012
        %3014 = vdwg.mxu0
        %3015 = vmatpush.msra.mxu0 %v2499
        %3016 = vmatpush.msra.mxu0 %v2495
        %3017 = vmatpush.msra.mxu0 %v2491
        %3018 = vmatpush.msra.mxu0 %v2487
        %3019 = vmatpush.msra.mxu0 %v2483
        %3020 = vmatpush.msra.mxu0 %v2479
        %3021 = vmatpush.msra.mxu0 %v2475
        %3022 = vmatpush.msra.mxu0 %v2471
        %3023 = vmatpush.msra.mxu0 %v2467
        %3024 = vmatpush.msra.mxu0 %v2463
        %3025 = vmatpush.msra.mxu0 %v2459
        %3026 = vmatpush.msra.mxu0 %v2455
        %3027 = vmatpush.msra.mxu0 %v2451
        %3028 = vmatpush.msra.mxu0 %v2447
        %3029 = vmatpush.msra.mxu0 %v2443
        %3030 = vmatpush.msra.mxu0 %v2439
        %3031 = vmatmul.f32.gmra.mxu0 %v2051
        %v3032 = vpop.f32.mrf.mxu0
        %v3033 = vadd.f32 %v3013, %v3032
        %3034 = vdwg.mxu0
        %3035 = vmatpush.msra.mxu0 %v2563
        %3036 = vmatpush.msra.mxu0 %v2559
        %3037 = vmatpush.msra.mxu0 %v2555
        %3038 = vmatpush.msra.mxu0 %v2551
        %3039 = vmatpush.msra.mxu0 %v2547
        %3040 = vmatpush.msra.mxu0 %v2543
        %3041 = vmatpush.msra.mxu0 %v2539
        %3042 = vmatpush.msra.mxu0 %v2535
        %3043 = vmatpush.msra.mxu0 %v2531
        %3044 = vmatpush.msra.mxu0 %v2527
        %3045 = vmatpush.msra.mxu0 %v2523
        %3046 = vmatpush.msra.mxu0 %v2519
        %3047 = vmatpush.msra.mxu0 %v2515
        %3048 = vmatpush.msra.mxu0 %v2511
        %3049 = vmatpush.msra.mxu0 %v2507
        %3050 = vmatpush.msra.mxu0 %v2503
        %3051 = vmatmul.f32.gmra.mxu0 %v2052
        %v3052 = vpop.f32.mrf.mxu0
        %v3053 = vadd.f32 %v3033, %v3052
        %3054 = vdwg.mxu0
        %3055 = vmatpush.msra.mxu0 %v2116
        %3056 = vmatpush.msra.mxu0 %v2112
        %3057 = vmatpush.msra.mxu0 %v2108
        %3058 = vmatpush.msra.mxu0 %v2104
        %3059 = vmatpush.msra.mxu0 %v2100
        %3060 = vmatpush.msra.mxu0 %v2096
        %3061 = vmatpush.msra.mxu0 %v2092
        %3062 = vmatpush.msra.mxu0 %v2088
        %3063 = vmatpush.msra.mxu0 %v2084
        %3064 = vmatpush.msra.mxu0 %v2080
        %3065 = vmatpush.msra.mxu0 %v2076
        %3066 = vmatpush.msra.mxu0 %v2072
        %3067 = vmatpush.msra.mxu0 %v2068
        %3068 = vmatpush.msra.mxu0 %v2064
        %3069 = vmatpush.msra.mxu0 %v2060
        %3070 = vmatpush.msra.mxu0 %v2056
        %3071 = vmatmul.f32.gmra.mxu0 %v2045
        %v3072 = vpop.f32.mrf.mxu0
        %v3073 = vadd.f32 %v2570, %v3072
        %3074 = vdwg.mxu0
        %3075 = vmatpush.msra.mxu0 %v2180
        %3076 = vmatpush.msra.mxu0 %v2176
        %3077 = vmatpush.msra.mxu0 %v2172
        %3078 = vmatpush.msra.mxu0 %v2168
        %3079 = vmatpush.msra.mxu0 %v2164
        %3080 = vmatpush.msra.mxu0 %v2160
        %3081 = vmatpush.msra.mxu0 %v2156
        %3082 = vmatpush.msra.mxu0 %v2152
        %3083 = vmatpush.msra.mxu0 %v2148
        %3084 = vmatpush.msra.mxu0 %v2144
        %3085 = vmatpush.msra.mxu0 %v2140
        %3086 = vmatpush.msra.mxu0 %v2136
        %3087 = vmatpush.msra.mxu0 %v2132
        %3088 = vmatpush.msra.mxu0 %v2128
        %3089 = vmatpush.msra.mxu0 %v2124
        %3090 = vmatpush.msra.mxu0 %v2120
        %3091 = vmatmul.f32.gmra.mxu0 %v2046
        %v3092 = vpop.f32.mrf.mxu0
        %v3093 = vadd.f32 %v3073, %v3092
        %3094 = vdwg.mxu0
        %3095 = vmatpush.msra.mxu0 %v2244
        %3096 = vmatpush.msra.mxu0 %v2240
        %3097 = vmatpush.msra.mxu0 %v2236
        %3098 = vmatpush.msra.mxu0 %v2232
        %3099 = vmatpush.msra.mxu0 %v2228
        %3100 = vmatpush.msra.mxu0 %v2224
        %3101 = vmatpush.msra.mxu0 %v2220
        %3102 = vmatpush.msra.mxu0 %v2216
        %3103 = vmatpush.msra.mxu0 %v2212
        %3104 = vmatpush.msra.mxu0 %v2208
        %3105 = vmatpush.msra.mxu0 %v2204
        %3106 = vmatpush.msra.mxu0 %v2200
        %3107 = vmatpush.msra.mxu0 %v2196
        %3108 = vmatpush.msra.mxu0 %v2192
        %3109 = vmatpush.msra.mxu0 %v2188
        %3110 = vmatpush.msra.mxu0 %v2184
        %3111 = vmatmul.f32.gmra.mxu0 %v2047
        %v3112 = vpop.f32.mrf.mxu0
        %v3113 = vadd.f32 %v3093, %v3112
        %3114 = vdwg.mxu0
        %3115 = vmatpush.msra.mxu0 %v2308
        %3116 = vmatpush.msra.mxu0 %v2304
        %3117 = vmatpush.msra.mxu0 %v2300
        %3118 = vmatpush.msra.mxu0 %v2296
        %3119 = vmatpush.msra.mxu0 %v2292
        %3120 = vmatpush.msra.mxu0 %v2288
        %3121 = vmatpush.msra.mxu0 %v2284
        %3122 = vmatpush.msra.mxu0 %v2280
        %3123 = vmatpush.msra.mxu0 %v2276
        %3124 = vmatpush.msra.mxu0 %v2272
        %3125 = vmatpush.msra.mxu0 %v2268
        %3126 = vmatpush.msra.mxu0 %v2264
        %3127 = vmatpush.msra.mxu0 %v2260
        %3128 = vmatpush.msra.mxu0 %v2256
        %3129 = vmatpush.msra.mxu0 %v2252
        %3130 = vmatpush.msra.mxu0 %v2248
        %3131 = vmatmul.f32.gmra.mxu0 %v2048
        %v3132 = vpop.f32.mrf.mxu0
        %v3133 = vadd.f32 %v3113, %v3132
        %3134 = vdwg.mxu0
        %3135 = vmatpush.msra.mxu0 %v2372
        %3136 = vmatpush.msra.mxu0 %v2368
        %3137 = vmatpush.msra.mxu0 %v2364
        %3138 = vmatpush.msra.mxu0 %v2360
        %3139 = vmatpush.msra.mxu0 %v2356
        %3140 = vmatpush.msra.mxu0 %v2352
        %3141 = vmatpush.msra.mxu0 %v2348
        %3142 = vmatpush.msra.mxu0 %v2344
        %3143 = vmatpush.msra.mxu0 %v2340
        %3144 = vmatpush.msra.mxu0 %v2336
        %3145 = vmatpush.msra.mxu0 %v2332
        %3146 = vmatpush.msra.mxu0 %v2328
        %3147 = vmatpush.msra.mxu0 %v2324
        %3148 = vmatpush.msra.mxu0 %v2320
        %3149 = vmatpush.msra.mxu0 %v2316
        %3150 = vmatpush.msra.mxu0 %v2312
        %3151 = vmatmul.f32.gmra.mxu0 %v2049
        %v3152 = vpop.f32.mrf.mxu0
        %v3153 = vadd.f32 %v3133, %v3152
        %3154 = vdwg.mxu0
        %3155 = vmatpush.msra.mxu0 %v2436
        %3156 = vmatpush.msra.mxu0 %v2432
        %3157 = vmatpush.msra.mxu0 %v2428
        %3158 = vmatpush.msra.mxu0 %v2424
        %3159 = vmatpush.msra.mxu0 %v2420
        %3160 = vmatpush.msra.mxu0 %v2416
        %3161 = vmatpush.msra.mxu0 %v2412
        %3162 = vmatpush.msra.mxu0 %v2408
        %3163 = vmatpush.msra.mxu0 %v2404
        %3164 = vmatpush.msra.mxu0 %v2400
        %3165 = vmatpush.msra.mxu0 %v2396
        %3166 = vmatpush.msra.mxu0 %v2392
        %3167 = vmatpush.msra.mxu0 %v2388
        %3168 = vmatpush.msra.mxu0 %v2384
        %3169 = vmatpush.msra.mxu0 %v2380
        %3170 = vmatpush.msra.mxu0 %v2376
        %3171 = vmatmul.f32.gmra.mxu0 %v2050
        %v3172 = vpop.f32.mrf.mxu0
        %v3173 = vadd.f32 %v3153, %v3172
        %3174 = vdwg.mxu0
        %3175 = vmatpush.msra.mxu0 %v2500
        %3176 = vmatpush.msra.mxu0 %v2496
        %3177 = vmatpush.msra.mxu0 %v2492
        %3178 = vmatpush.msra.mxu0 %v2488
        %3179 = vmatpush.msra.mxu0 %v2484
        %3180 = vmatpush.msra.mxu0 %v2480
        %3181 = vmatpush.msra.mxu0 %v2476
        %3182 = vmatpush.msra.mxu0 %v2472
        %3183 = vmatpush.msra.mxu0 %v2468
        %3184 = vmatpush.msra.mxu0 %v2464
        %3185 = vmatpush.msra.mxu0 %v2460
        %3186 = vmatpush.msra.mxu0 %v2456
        %3187 = vmatpush.msra.mxu0 %v2452
        %3188 = vmatpush.msra.mxu0 %v2448
        %3189 = vmatpush.msra.mxu0 %v2444
        %3190 = vmatpush.msra.mxu0 %v2440
        %3191 = vmatmul.f32.gmra.mxu0 %v2051
        %v3192 = vpop.f32.mrf.mxu0
        %v3193 = vadd.f32 %v3173, %v3192
        %3194 = vdwg.mxu0
        %3195 = vmatpush.msra.mxu0 %v2564
        %3196 = vmatpush.msra.mxu0 %v2560
        %3197 = vmatpush.msra.mxu0 %v2556
        %3198 = vmatpush.msra.mxu0 %v2552
        %3199 = vmatpush.msra.mxu0 %v2548
        %3200 = vmatpush.msra.mxu0 %v2544
        %3201 = vmatpush.msra.mxu0 %v2540
        %3202 = vmatpush.msra.mxu0 %v2536
        %3203 = vmatpush.msra.mxu0 %v2532
        %3204 = vmatpush.msra.mxu0 %v2528
        %3205 = vmatpush.msra.mxu0 %v2524
        %3206 = vmatpush.msra.mxu0 %v2520
        %3207 = vmatpush.msra.mxu0 %v2516
        %3208 = vmatpush.msra.mxu0 %v2512
        %3209 = vmatpush.msra.mxu0 %v2508
        %3210 = vmatpush.msra.mxu0 %v2504
        %3211 = vmatmul.f32.gmra.mxu0 %v2052
        %v3212 = vpop.f32.mrf.mxu0
        %v3213 = vadd.f32 %v3193, %v3212
        %3214 = vdwg.mxu0
        %v3215 = vld [vmem:[#allocation14] sm:$0xf]
        %v3216 = vld [vmem:[#allocation16] sm:$0xf]
        %v3217 = vmax.f32 %v2733, 0.0
        %v3218 = vmax.f32 %v2893, 0.0
        %v3219 = vmax.f32 %v3053, 0.0
        %v3220 = vmax.f32 %v3213, 0.0
        %v3222 = vperm.slane %v3215, 0
        %v3223 = vperm.slane %v3215, 1
        %v3224 = vperm.slane %v3215, 2
        %v3225 = vperm.slane %v3215, 3
        %v3230 = vmul.f32 %v3217, %v3222
        %v3231 = vmul.f32 %v3218, %v3223
        %v3232 = vmul.f32 %v3219, %v3224
        %v3233 = vmul.f32 %v3220, %v3225
        %v3235 = vperm.slane %v3216, 0
        %v3236 = vperm.slane %v3216, 1
        %v3237 = vperm.slane %v3216, 2
        %v3238 = vperm.slane %v3216, 3
        %v3243 = vadd.f32 %v3230, %v3235
        %v3244 = vadd.f32 %v3231, %v3236
        %v3245 = vadd.f32 %v3232, %v3237
        %v3246 = vadd.f32 %v3233, %v3238
        %v3247 = vld [vmem:[#allocation17] sm:$0xff]
        %v3248 = vld [vmem:[#allocation17 + $0x8] sm:$0xff]
        %v3249 = vld [vmem:[#allocation17 + $0x10] sm:$0xff]
        %v3250 = vld [vmem:[#allocation17 + $0x18] sm:$0xff]
        %v3251 = vld [vmem:[#allocation17 + $0x20] sm:$0xff]
        %v3252 = vld [vmem:[#allocation17 + $0x28] sm:$0xff]
        %v3253 = vld [vmem:[#allocation17 + $0x30] sm:$0xff]
        %v3254 = vld [vmem:[#allocation17 + $0x38] sm:$0xff]
        %v3255 = vld [vmem:[#allocation17 + $0x40] sm:$0xff]
        %v3256 = vld [vmem:[#allocation17 + $0x48] sm:$0xff]
        %v3257 = vld [vmem:[#allocation17 + $0x50] sm:$0xff]
        %v3258 = vld [vmem:[#allocation17 + $0x58] sm:$0xff]
        %v3259 = vld [vmem:[#allocation17 + $0x60] sm:$0xff]
        %v3260 = vld [vmem:[#allocation17 + $0x68] sm:$0xff]
        %v3261 = vld [vmem:[#allocation17 + $0x70] sm:$0xff]
        %v3262 = vld [vmem:[#allocation17 + $0x78] sm:$0xff]
        %v3263 = vld [vmem:[#allocation17 + $0x80] sm:$0xff]
        %v3264 = vld [vmem:[#allocation17 + $0x88] sm:$0xff]
        %v3265 = vld [vmem:[#allocation17 + $0x90] sm:$0xff]
        %v3266 = vld [vmem:[#allocation17 + $0x98] sm:$0xff]
        %v3267 = vld [vmem:[#allocation17 + $0xa0] sm:$0xff]
        %v3268 = vld [vmem:[#allocation17 + $0xa8] sm:$0xff]
        %v3269 = vld [vmem:[#allocation17 + $0xb0] sm:$0xff]
        %v3270 = vld [vmem:[#allocation17 + $0xb8] sm:$0xff]
        %v3271 = vld [vmem:[#allocation17 + $0xc0] sm:$0xff]
        %v3272 = vld [vmem:[#allocation17 + $0xc8] sm:$0xff]
        %v3273 = vld [vmem:[#allocation17 + $0xd0] sm:$0xff]
        %v3274 = vld [vmem:[#allocation17 + $0xd8] sm:$0xff]
        %v3275 = vld [vmem:[#allocation17 + $0xe0] sm:$0xff]
        %v3276 = vld [vmem:[#allocation17 + $0xe8] sm:$0xff]
        %v3277 = vld [vmem:[#allocation17 + $0xf0] sm:$0xff]
        %v3278 = vld [vmem:[#allocation17 + $0xf8] sm:$0xff]
        %v3279 = vld [vmem:[#allocation17 + $0x100] sm:$0xff]
        %v3280 = vld [vmem:[#allocation17 + $0x108] sm:$0xff]
        %v3281 = vld [vmem:[#allocation17 + $0x110] sm:$0xff]
        %v3282 = vld [vmem:[#allocation17 + $0x118] sm:$0xff]
        %v3283 = vld [vmem:[#allocation17 + $0x120] sm:$0xff]
        %v3284 = vld [vmem:[#allocation17 + $0x128] sm:$0xff]
        %v3285 = vld [vmem:[#allocation17 + $0x130] sm:$0xff]
        %v3286 = vld [vmem:[#allocation17 + $0x138] sm:$0xff]
        %v3287 = vld [vmem:[#allocation17 + $0x140] sm:$0xff]
        %v3288 = vld [vmem:[#allocation17 + $0x148] sm:$0xff]
        %v3289 = vld [vmem:[#allocation17 + $0x150] sm:$0xff]
        %v3290 = vld [vmem:[#allocation17 + $0x158] sm:$0xff]
        %v3291 = vld [vmem:[#allocation17 + $0x160] sm:$0xff]
        %v3292 = vld [vmem:[#allocation17 + $0x168] sm:$0xff]
        %v3293 = vld [vmem:[#allocation17 + $0x170] sm:$0xff]
        %v3294 = vld [vmem:[#allocation17 + $0x178] sm:$0xff]
        %v3295 = vld [vmem:[#allocation17 + $0x180] sm:$0xff]
        %v3296 = vld [vmem:[#allocation17 + $0x188] sm:$0xff]
        %v3297 = vld [vmem:[#allocation17 + $0x190] sm:$0xff]
        %v3298 = vld [vmem:[#allocation17 + $0x198] sm:$0xff]
        %v3299 = vld [vmem:[#allocation17 + $0x1a0] sm:$0xff]
        %v3300 = vld [vmem:[#allocation17 + $0x1a8] sm:$0xff]
        %v3301 = vld [vmem:[#allocation17 + $0x1b0] sm:$0xff]
        %v3302 = vld [vmem:[#allocation17 + $0x1b8] sm:$0xff]
        %v3303 = vld [vmem:[#allocation17 + $0x1c0] sm:$0xff]
        %v3304 = vld [vmem:[#allocation17 + $0x1c8] sm:$0xff]
        %v3305 = vld [vmem:[#allocation17 + $0x1d0] sm:$0xff]
        %v3306 = vld [vmem:[#allocation17 + $0x1d8] sm:$0xff]
        %v3307 = vld [vmem:[#allocation17 + $0x1e0] sm:$0xff]
        %v3308 = vld [vmem:[#allocation17 + $0x1e8] sm:$0xff]
        %v3309 = vld [vmem:[#allocation17 + $0x1f0] sm:$0xff]
        %v3310 = vld [vmem:[#allocation17 + $0x1f8] sm:$0xff]
        %v3311 = vld [vmem:[#allocation17 + $0x200] sm:$0xff]
        %v3312 = vld [vmem:[#allocation17 + $0x208] sm:$0xff]
        %v3313 = vld [vmem:[#allocation17 + $0x210] sm:$0xff]
        %v3314 = vld [vmem:[#allocation17 + $0x218] sm:$0xff]
        %v3315 = vld [vmem:[#allocation17 + $0x220] sm:$0xff]
        %v3316 = vld [vmem:[#allocation17 + $0x228] sm:$0xff]
        %v3317 = vld [vmem:[#allocation17 + $0x230] sm:$0xff]
        %v3318 = vld [vmem:[#allocation17 + $0x238] sm:$0xff]
        %v3319 = vld [vmem:[#allocation17 + $0x240] sm:$0xff]
        %v3320 = vld [vmem:[#allocation17 + $0x248] sm:$0xff]
        %v3321 = vld [vmem:[#allocation17 + $0x250] sm:$0xff]
        %v3322 = vld [vmem:[#allocation17 + $0x258] sm:$0xff]
        %v3323 = vld [vmem:[#allocation17 + $0x260] sm:$0xff]
        %v3324 = vld [vmem:[#allocation17 + $0x268] sm:$0xff]
        %v3325 = vld [vmem:[#allocation17 + $0x270] sm:$0xff]
        %v3326 = vld [vmem:[#allocation17 + $0x278] sm:$0xff]
        %v3327 = vld [vmem:[#allocation17 + $0x280] sm:$0xff]
        %v3328 = vld [vmem:[#allocation17 + $0x288] sm:$0xff]
        %v3329 = vld [vmem:[#allocation17 + $0x290] sm:$0xff]
        %v3330 = vld [vmem:[#allocation17 + $0x298] sm:$0xff]
        %v3331 = vld [vmem:[#allocation17 + $0x2a0] sm:$0xff]
        %v3332 = vld [vmem:[#allocation17 + $0x2a8] sm:$0xff]
        %v3333 = vld [vmem:[#allocation17 + $0x2b0] sm:$0xff]
        %v3334 = vld [vmem:[#allocation17 + $0x2b8] sm:$0xff]
        %v3335 = vld [vmem:[#allocation17 + $0x2c0] sm:$0xff]
        %v3336 = vld [vmem:[#allocation17 + $0x2c8] sm:$0xff]
        %v3337 = vld [vmem:[#allocation17 + $0x2d0] sm:$0xff]
        %v3338 = vld [vmem:[#allocation17 + $0x2d8] sm:$0xff]
        %v3339 = vld [vmem:[#allocation17 + $0x2e0] sm:$0xff]
        %v3340 = vld [vmem:[#allocation17 + $0x2e8] sm:$0xff]
        %v3341 = vld [vmem:[#allocation17 + $0x2f0] sm:$0xff]
        %v3342 = vld [vmem:[#allocation17 + $0x2f8] sm:$0xff]
        %v3343 = vld [vmem:[#allocation17 + $0x300] sm:$0xff]
        %v3344 = vld [vmem:[#allocation17 + $0x308] sm:$0xff]
        %v3345 = vld [vmem:[#allocation17 + $0x310] sm:$0xff]
        %v3346 = vld [vmem:[#allocation17 + $0x318] sm:$0xff]
        %v3347 = vld [vmem:[#allocation17 + $0x320] sm:$0xff]
        %v3348 = vld [vmem:[#allocation17 + $0x328] sm:$0xff]
        %v3349 = vld [vmem:[#allocation17 + $0x330] sm:$0xff]
        %v3350 = vld [vmem:[#allocation17 + $0x338] sm:$0xff]
        %v3351 = vld [vmem:[#allocation17 + $0x340] sm:$0xff]
        %v3352 = vld [vmem:[#allocation17 + $0x348] sm:$0xff]
        %v3353 = vld [vmem:[#allocation17 + $0x350] sm:$0xff]
        %v3354 = vld [vmem:[#allocation17 + $0x358] sm:$0xff]
        %v3355 = vld [vmem:[#allocation17 + $0x360] sm:$0xff]
        %v3356 = vld [vmem:[#allocation17 + $0x368] sm:$0xff]
        %v3357 = vld [vmem:[#allocation17 + $0x370] sm:$0xff]
        %v3358 = vld [vmem:[#allocation17 + $0x378] sm:$0xff]
        %v3359 = vld [vmem:[#allocation17 + $0x380] sm:$0xff]
        %v3360 = vld [vmem:[#allocation17 + $0x388] sm:$0xff]
        %v3361 = vld [vmem:[#allocation17 + $0x390] sm:$0xff]
        %v3362 = vld [vmem:[#allocation17 + $0x398] sm:$0xff]
        %v3363 = vld [vmem:[#allocation17 + $0x3a0] sm:$0xff]
        %v3364 = vld [vmem:[#allocation17 + $0x3a8] sm:$0xff]
        %v3365 = vld [vmem:[#allocation17 + $0x3b0] sm:$0xff]
        %v3366 = vld [vmem:[#allocation17 + $0x3b8] sm:$0xff]
        %v3367 = vld [vmem:[#allocation17 + $0x3c0] sm:$0xff]
        %v3368 = vld [vmem:[#allocation17 + $0x3c8] sm:$0xff]
        %v3369 = vld [vmem:[#allocation17 + $0x3d0] sm:$0xff]
        %v3370 = vld [vmem:[#allocation17 + $0x3d8] sm:$0xff]
        %v3371 = vld [vmem:[#allocation17 + $0x3e0] sm:$0xff]
        %v3372 = vld [vmem:[#allocation17 + $0x3e8] sm:$0xff]
        %v3373 = vld [vmem:[#allocation17 + $0x3f0] sm:$0xff]
        %v3374 = vld [vmem:[#allocation17 + $0x3f8] sm:$0xff]
        %v3375 = vld [vmem:[#allocation19] sm:$0x3]
        %v3377 = vperm.slane %v3375, 0
        %v3378 = vperm.slane %v3375, 1
        %3381 = vmatpush.msra.mxu0 %v3277
        %3382 = vmatpush.msra.mxu0 %v3275
        %3383 = vmatpush.msra.mxu0 %v3273
        %3384 = vmatpush.msra.mxu0 %v3271
        %3385 = vmatpush.msra.mxu0 %v3269
        %3386 = vmatpush.msra.mxu0 %v3267
        %3387 = vmatpush.msra.mxu0 %v3265
        %3388 = vmatpush.msra.mxu0 %v3263
        %3389 = vmatpush.msra.mxu0 %v3261
        %3390 = vmatpush.msra.mxu0 %v3259
        %3391 = vmatpush.msra.mxu0 %v3257
        %3392 = vmatpush.msra.mxu0 %v3255
        %3393 = vmatpush.msra.mxu0 %v3253
        %3394 = vmatpush.msra.mxu0 %v3251
        %3395 = vmatpush.msra.mxu0 %v3249
        %3396 = vmatpush.msra.mxu0 %v3247
        %3397 = vmatmul.f32.gmra.mxu0 %v3243
        %v3398 = vpop.f32.mrf.mxu0
        %v3399 = vadd.f32 %v3377, %v3398
        %3400 = vdwg.mxu0
        %3401 = vmatpush.msra.mxu0 %v3309
        %3402 = vmatpush.msra.mxu0 %v3307
        %3403 = vmatpush.msra.mxu0 %v3305
        %3404 = vmatpush.msra.mxu0 %v3303
        %3405 = vmatpush.msra.mxu0 %v3301
        %3406 = vmatpush.msra.mxu0 %v3299
        %3407 = vmatpush.msra.mxu0 %v3297
        %3408 = vmatpush.msra.mxu0 %v3295
        %3409 = vmatpush.msra.mxu0 %v3293
        %3410 = vmatpush.msra.mxu0 %v3291
        %3411 = vmatpush.msra.mxu0 %v3289
        %3412 = vmatpush.msra.mxu0 %v3287
        %3413 = vmatpush.msra.mxu0 %v3285
        %3414 = vmatpush.msra.mxu0 %v3283
        %3415 = vmatpush.msra.mxu0 %v3281
        %3416 = vmatpush.msra.mxu0 %v3279
        %3417 = vmatmul.f32.gmra.mxu0 %v3244
        %v3418 = vpop.f32.mrf.mxu0
        %v3419 = vadd.f32 %v3399, %v3418
        %3420 = vdwg.mxu0
        %3421 = vmatpush.msra.mxu0 %v3341
        %3422 = vmatpush.msra.mxu0 %v3339
        %3423 = vmatpush.msra.mxu0 %v3337
        %3424 = vmatpush.msra.mxu0 %v3335
        %3425 = vmatpush.msra.mxu0 %v3333
        %3426 = vmatpush.msra.mxu0 %v3331
        %3427 = vmatpush.msra.mxu0 %v3329
        %3428 = vmatpush.msra.mxu0 %v3327
        %3429 = vmatpush.msra.mxu0 %v3325
        %3430 = vmatpush.msra.mxu0 %v3323
        %3431 = vmatpush.msra.mxu0 %v3321
        %3432 = vmatpush.msra.mxu0 %v3319
        %3433 = vmatpush.msra.mxu0 %v3317
        %3434 = vmatpush.msra.mxu0 %v3315
        %3435 = vmatpush.msra.mxu0 %v3313
        %3436 = vmatpush.msra.mxu0 %v3311
        %3437 = vmatmul.f32.gmra.mxu0 %v3245
        %v3438 = vpop.f32.mrf.mxu0
        %v3439 = vadd.f32 %v3419, %v3438
        %3440 = vdwg.mxu0
        %3441 = vmatpush.msra.mxu0 %v3373
        %3442 = vmatpush.msra.mxu0 %v3371
        %3443 = vmatpush.msra.mxu0 %v3369
        %3444 = vmatpush.msra.mxu0 %v3367
        %3445 = vmatpush.msra.mxu0 %v3365
        %3446 = vmatpush.msra.mxu0 %v3363
        %3447 = vmatpush.msra.mxu0 %v3361
        %3448 = vmatpush.msra.mxu0 %v3359
        %3449 = vmatpush.msra.mxu0 %v3357
        %3450 = vmatpush.msra.mxu0 %v3355
        %3451 = vmatpush.msra.mxu0 %v3353
        %3452 = vmatpush.msra.mxu0 %v3351
        %3453 = vmatpush.msra.mxu0 %v3349
        %3454 = vmatpush.msra.mxu0 %v3347
        %3455 = vmatpush.msra.mxu0 %v3345
        %3456 = vmatpush.msra.mxu0 %v3343
        %3457 = vmatmul.f32.gmra.mxu0 %v3246
        %v3458 = vpop.f32.mrf.mxu0
        %v3459 = vadd.f32 %v3439, %v3458
        %3460 = vdwg.mxu0
        %3461 = vmatpush.msra.mxu0 %v3278
        %3462 = vmatpush.msra.mxu0 %v3276
        %3463 = vmatpush.msra.mxu0 %v3274
        %3464 = vmatpush.msra.mxu0 %v3272
        %3465 = vmatpush.msra.mxu0 %v3270
        %3466 = vmatpush.msra.mxu0 %v3268
        %3467 = vmatpush.msra.mxu0 %v3266
        %3468 = vmatpush.msra.mxu0 %v3264
        %3469 = vmatpush.msra.mxu0 %v3262
        %3470 = vmatpush.msra.mxu0 %v3260
        %3471 = vmatpush.msra.mxu0 %v3258
        %3472 = vmatpush.msra.mxu0 %v3256
        %3473 = vmatpush.msra.mxu0 %v3254
        %3474 = vmatpush.msra.mxu0 %v3252
        %3475 = vmatpush.msra.mxu0 %v3250
        %3476 = vmatpush.msra.mxu0 %v3248
        %3477 = vmatmul.f32.gmra.mxu0 %v3243
        %v3478 = vpop.f32.mrf.mxu0
        %v3479 = vadd.f32 %v3378, %v3478
        %3480 = vdwg.mxu0
        %3481 = vmatpush.msra.mxu0 %v3310
        %3482 = vmatpush.msra.mxu0 %v3308
        %3483 = vmatpush.msra.mxu0 %v3306
        %3484 = vmatpush.msra.mxu0 %v3304
        %3485 = vmatpush.msra.mxu0 %v3302
        %3486 = vmatpush.msra.mxu0 %v3300
        %3487 = vmatpush.msra.mxu0 %v3298
        %3488 = vmatpush.msra.mxu0 %v3296
        %3489 = vmatpush.msra.mxu0 %v3294
        %3490 = vmatpush.msra.mxu0 %v3292
        %3491 = vmatpush.msra.mxu0 %v3290
        %3492 = vmatpush.msra.mxu0 %v3288
        %3493 = vmatpush.msra.mxu0 %v3286
        %3494 = vmatpush.msra.mxu0 %v3284
        %3495 = vmatpush.msra.mxu0 %v3282
        %3496 = vmatpush.msra.mxu0 %v3280
        %3497 = vmatmul.f32.gmra.mxu0 %v3244
        %v3498 = vpop.f32.mrf.mxu0
        %v3499 = vadd.f32 %v3479, %v3498
        %3500 = vdwg.mxu0
        %3501 = vmatpush.msra.mxu0 %v3342
        %3502 = vmatpush.msra.mxu0 %v3340
        %3503 = vmatpush.msra.mxu0 %v3338
        %3504 = vmatpush.msra.mxu0 %v3336
        %3505 = vmatpush.msra.mxu0 %v3334
        %3506 = vmatpush.msra.mxu0 %v3332
        %3507 = vmatpush.msra.mxu0 %v3330
        %3508 = vmatpush.msra.mxu0 %v3328
        %3509 = vmatpush.msra.mxu0 %v3326
        %3510 = vmatpush.msra.mxu0 %v3324
        %3511 = vmatpush.msra.mxu0 %v3322
        %3512 = vmatpush.msra.mxu0 %v3320
        %3513 = vmatpush.msra.mxu0 %v3318
        %3514 = vmatpush.msra.mxu0 %v3316
        %3515 = vmatpush.msra.mxu0 %v3314
        %3516 = vmatpush.msra.mxu0 %v3312
        %3517 = vmatmul.f32.gmra.mxu0 %v3245
        %v3518 = vpop.f32.mrf.mxu0
        %v3519 = vadd.f32 %v3499, %v3518
        %3520 = vdwg.mxu0
        %3521 = vmatpush.msra.mxu0 %v3374
        %3522 = vmatpush.msra.mxu0 %v3372
        %3523 = vmatpush.msra.mxu0 %v3370
        %3524 = vmatpush.msra.mxu0 %v3368
        %3525 = vmatpush.msra.mxu0 %v3366
        %3526 = vmatpush.msra.mxu0 %v3364
        %3527 = vmatpush.msra.mxu0 %v3362
        %3528 = vmatpush.msra.mxu0 %v3360
        %3529 = vmatpush.msra.mxu0 %v3358
        %3530 = vmatpush.msra.mxu0 %v3356
        %3531 = vmatpush.msra.mxu0 %v3354
        %3532 = vmatpush.msra.mxu0 %v3352
        %3533 = vmatpush.msra.mxu0 %v3350
        %3534 = vmatpush.msra.mxu0 %v3348
        %3535 = vmatpush.msra.mxu0 %v3346
        %3536 = vmatpush.msra.mxu0 %v3344
        %3537 = vmatmul.f32.gmra.mxu0 %v3246
        %v3538 = vpop.f32.mrf.mxu0
        %v3539 = vadd.f32 %v3519, %v3538
        %3540 = vdwg.mxu0
        %v3541 = vld [vmem:[#allocation20] sm:$0x3]
        %v3542 = vld [vmem:[#allocation22] sm:$0x3]
        %v3543 = vmax.f32 %v3459, 0.0
        %v3544 = vmax.f32 %v3539, 0.0
        %v3546 = vperm.slane %v3541, 0
        %v3547 = vperm.slane %v3541, 1
        %v3550 = vmul.f32 %v3543, %v3546
        %v3551 = vmul.f32 %v3544, %v3547
        %v3553 = vperm.slane %v3542, 0
        %v3554 = vperm.slane %v3542, 1
        %v3557 = vadd.f32 %v3550, %v3553
        %v3558 = vadd.f32 %v3551, %v3554
        %v3559 = vld [vmem:[#allocation23] sm:$0xff]
        %v3560 = vld [vmem:[#allocation23 + $0x8] sm:$0xff]
        %v3561 = vld [vmem:[#allocation23 + $0x10] sm:$0xff]
        %v3562 = vld [vmem:[#allocation23 + $0x18] sm:$0xff]
        %v3563 = vld [vmem:[#allocation23 + $0x20] sm:$0xff]
        %v3564 = vld [vmem:[#allocation23 + $0x28] sm:$0xff]
        %v3565 = vld [vmem:[#allocation23 + $0x30] sm:$0xff]
        %v3566 = vld [vmem:[#allocation23 + $0x38] sm:$0xff]
        %v3567 = vld [vmem:[#allocation23 + $0x40] sm:$0xff]
        %v3568 = vld [vmem:[#allocation23 + $0x48] sm:$0xff]
        %v3569 = vld [vmem:[#allocation23 + $0x50] sm:$0xff]
        %v3570 = vld [vmem:[#allocation23 + $0x58] sm:$0xff]
        %v3571 = vld [vmem:[#allocation23 + $0x60] sm:$0xff]
        %v3572 = vld [vmem:[#allocation23 + $0x68] sm:$0xff]
        %v3573 = vld [vmem:[#allocation23 + $0x70] sm:$0xff]
        %v3574 = vld [vmem:[#allocation23 + $0x78] sm:$0xff]
        %v3575 = vld [vmem:[#allocation23 + $0x80] sm:$0xff]
        %v3576 = vld [vmem:[#allocation23 + $0x88] sm:$0xff]
        %v3577 = vld [vmem:[#allocation23 + $0x90] sm:$0xff]
        %v3578 = vld [vmem:[#allocation23 + $0x98] sm:$0xff]
        %v3579 = vld [vmem:[#allocation23 + $0xa0] sm:$0xff]
        %v3580 = vld [vmem:[#allocation23 + $0xa8] sm:$0xff]
        %v3581 = vld [vmem:[#allocation23 + $0xb0] sm:$0xff]
        %v3582 = vld [vmem:[#allocation23 + $0xb8] sm:$0xff]
        %v3583 = vld [vmem:[#allocation23 + $0xc0] sm:$0xff]
        %v3584 = vld [vmem:[#allocation23 + $0xc8] sm:$0xff]
        %v3585 = vld [vmem:[#allocation23 + $0xd0] sm:$0xff]
        %v3586 = vld [vmem:[#allocation23 + $0xd8] sm:$0xff]
        %v3587 = vld [vmem:[#allocation23 + $0xe0] sm:$0xff]
        %v3588 = vld [vmem:[#allocation23 + $0xe8] sm:$0xff]
        %v3589 = vld [vmem:[#allocation23 + $0xf0] sm:$0xff]
        %v3590 = vld [vmem:[#allocation23 + $0xf8] sm:$0xff]
        %v3591 = vld [vmem:[#allocation25] sm:$0x1]
        %v3593 = vperm.slane %v3591, 0
        %3595 = vmatpush.msra.mxu0 %v3574
        %3596 = vmatpush.msra.mxu0 %v3573
        %3597 = vmatpush.msra.mxu0 %v3572
        %3598 = vmatpush.msra.mxu0 %v3571
        %3599 = vmatpush.msra.mxu0 %v3570
        %3600 = vmatpush.msra.mxu0 %v3569
        %3601 = vmatpush.msra.mxu0 %v3568
        %3602 = vmatpush.msra.mxu0 %v3567
        %3603 = vmatpush.msra.mxu0 %v3566
        %3604 = vmatpush.msra.mxu0 %v3565
        %3605 = vmatpush.msra.mxu0 %v3564
        %3606 = vmatpush.msra.mxu0 %v3563
        %3607 = vmatpush.msra.mxu0 %v3562
        %3608 = vmatpush.msra.mxu0 %v3561
        %3609 = vmatpush.msra.mxu0 %v3560
        %3610 = vmatpush.msra.mxu0 %v3559
        %3611 = vmatmul.f32.gmra.mxu0 %v3557
        %v3612 = vpop.f32.mrf.mxu0
        %v3613 = vadd.f32 %v3593, %v3612
        %3614 = vdwg.mxu0
        %3615 = vmatpush.msra.mxu0 %v3590
        %3616 = vmatpush.msra.mxu0 %v3589
        %3617 = vmatpush.msra.mxu0 %v3588
        %3618 = vmatpush.msra.mxu0 %v3587
        %3619 = vmatpush.msra.mxu0 %v3586
        %3620 = vmatpush.msra.mxu0 %v3585
        %3621 = vmatpush.msra.mxu0 %v3584
        %3622 = vmatpush.msra.mxu0 %v3583
        %3623 = vmatpush.msra.mxu0 %v3582
        %3624 = vmatpush.msra.mxu0 %v3581
        %3625 = vmatpush.msra.mxu0 %v3580
        %3626 = vmatpush.msra.mxu0 %v3579
        %3627 = vmatpush.msra.mxu0 %v3578
        %3628 = vmatpush.msra.mxu0 %v3577
        %3629 = vmatpush.msra.mxu0 %v3576
        %3630 = vmatpush.msra.mxu0 %v3575
        %3631 = vmatmul.f32.gmra.mxu0 %v3558
        %v3632 = vpop.f32.mrf.mxu0
        %v3633 = vadd.f32 %v3613, %v3632
        %3634 = vdwg.mxu0
        %v3635 = vld [vmem:[#allocation26] sm:$0x1]
        %v3636 = vld [vmem:[#allocation28] sm:$0x1]
        %v3637 = vmax.f32 %v3633, 0.0
        %v3639 = vperm.slane %v3635, 0
        %v3641 = vmul.f32 %v3637, %v3639
        %v3643 = vperm.slane %v3636, 0
        %v3645 = vadd.f32 %v3641, %v3643
        %v3646 = vld [vmem:[#allocation29] sm:$0xff]
        %v3647 = vld [vmem:[#allocation29 + $0x8] sm:$0xff]
        %v3648 = vld [vmem:[#allocation29 + $0x10] sm:$0xff]
        %v3649 = vld [vmem:[#allocation29 + $0x18] sm:$0xff]
        %v3650 = vld [vmem:[#allocation29 + $0x20] sm:$0xff]
        %v3651 = vld [vmem:[#allocation29 + $0x28] sm:$0xff]
        %v3652 = vld [vmem:[#allocation29 + $0x30] sm:$0xff]
        %v3653 = vld [vmem:[#allocation29 + $0x38] sm:$0xff]
        %v3654 = vld [vmem:[#allocation29 + $0x40] sm:$0xff]
        %v3655 = vld [vmem:[#allocation29 + $0x48] sm:$0xff]
        %v3656 = vld [vmem:[#allocation29 + $0x50] sm:$0xff]
        %v3657 = vld [vmem:[#allocation29 + $0x58] sm:$0xff]
        %v3658 = vld [vmem:[#allocation29 + $0x60] sm:$0xff]
        %v3659 = vld [vmem:[#allocation29 + $0x68] sm:$0xff]
        %v3660 = vld [vmem:[#allocation29 + $0x70] sm:$0xff]
        %v3661 = vld [vmem:[#allocation29 + $0x78] sm:$0xff]
        %v3662 = vld [vmem:[#allocation31] sm:$0x1]
        %v3664 = vperm.slane %v3662, 0
        %3666 = vmatpush.msra.mxu0 %v3661
        %3667 = vmatpush.msra.mxu0 %v3660
        %3668 = vmatpush.msra.mxu0 %v3659
        %3669 = vmatpush.msra.mxu0 %v3658
        %3670 = vmatpush.msra.mxu0 %v3657
        %3671 = vmatpush.msra.mxu0 %v3656
        %3672 = vmatpush.msra.mxu0 %v3655
        %3673 = vmatpush.msra.mxu0 %v3654
        %3674 = vmatpush.msra.mxu0 %v3653
        %3675 = vmatpush.msra.mxu0 %v3652
        %3676 = vmatpush.msra.mxu0 %v3651
        %3677 = vmatpush.msra.mxu0 %v3650
        %3678 = vmatpush.msra.mxu0 %v3649
        %3679 = vmatpush.msra.mxu0 %v3648
        %3680 = vmatpush.msra.mxu0 %v3647
        %3681 = vmatpush.msra.mxu0 %v3646
        %3682 = vmatmul.f32.gmra.mxu0 %v3645
        %v3683 = vpop.f32.mrf.mxu0
        %v3684 = vadd.f32 %v3664, %v3683
        %3685 = vdwg.mxu0
        %v3686 = vld [vmem:[#allocation32] sm:$0xff]
        %v3687 = vld [vmem:[#allocation32 + $0x8] sm:$0xff]
        %v3688 = vld [vmem:[#allocation32 + $0x10] sm:$0xff]
        %v3689 = vld [vmem:[#allocation32 + $0x18] sm:$0xff]
        %v3690 = vld [vmem:[#allocation32 + $0x20] sm:$0xff]
        %v3691 = vld [vmem:[#allocation32 + $0x28] sm:$0xff]
        %v3692 = vld [vmem:[#allocation32 + $0x30] sm:$0xff]
        %v3693 = vld [vmem:[#allocation32 + $0x38] sm:$0xff]
        %v3694 = vld [vmem:[#allocation32 + $0x40] sm:$0xff]
        %v3695 = vld [vmem:[#allocation32 + $0x48] sm:$0xff]
        %v3696 = vld [vmem:[#allocation32 + $0x50] sm:$0xff]
        %v3697 = vld [vmem:[#allocation32 + $0x58] sm:$0xff]
        %v3698 = vld [vmem:[#allocation32 + $0x60] sm:$0xff]
        %v3699 = vld [vmem:[#allocation32 + $0x68] sm:$0xff]
        %v3700 = vld [vmem:[#allocation32 + $0x70] sm:$0xff]
        %v3701 = vld [vmem:[#allocation32 + $0x78] sm:$0xff]
        %v3702 = vld [vmem:[#allocation34] sm:$0x1]
        %v3704 = vperm.slane %v3702, 0
        %3706 = vmatpush.msra.mxu0 %v3701
        %3707 = vmatpush.msra.mxu0 %v3700
        %3708 = vmatpush.msra.mxu0 %v3699
        %3709 = vmatpush.msra.mxu0 %v3698
        %3710 = vmatpush.msra.mxu0 %v3697
        %3711 = vmatpush.msra.mxu0 %v3696
        %3712 = vmatpush.msra.mxu0 %v3695
        %3713 = vmatpush.msra.mxu0 %v3694
        %3714 = vmatpush.msra.mxu0 %v3693
        %3715 = vmatpush.msra.mxu0 %v3692
        %3716 = vmatpush.msra.mxu0 %v3691
        %3717 = vmatpush.msra.mxu0 %v3690
        %3718 = vmatpush.msra.mxu0 %v3689
        %3719 = vmatpush.msra.mxu0 %v3688
        %3720 = vmatpush.msra.mxu0 %v3687
        %3721 = vmatpush.msra.mxu0 %v3686
        %3722 = vmatmul.f32.gmra.mxu0 %v3684
        %v3723 = vpop.f32.mrf.mxu0
        %v3724 = vadd.f32 %v3704, %v3723
        %3725 = vdwg.mxu0
        %v3726 = vld [vmem:[#allocation35] sm:$0x1]
        %v3727 = vld [vmem:[#allocation37] sm:$0x1]
        %v3728 = vmax.f32 %v3724, 0.0
        %v3730 = vperm.slane %v3726, 0
        %v3732 = vmul.f32 %v3728, %v3730
        %v3734 = vperm.slane %v3727, 0
        %v3736 = vadd.f32 %v3732, %v3734
        %v3737 = vld [vmem:[#allocation38] sm:$0xff]
        %v3738 = vld [vmem:[#allocation38 + $0x8] sm:$0xff]
        %v3739 = vld [vmem:[#allocation38 + $0x10] sm:$0xff]
        %v3740 = vld [vmem:[#allocation38 + $0x18] sm:$0xff]
        %v3741 = vld [vmem:[#allocation38 + $0x20] sm:$0xff]
        %v3742 = vld [vmem:[#allocation38 + $0x28] sm:$0xff]
        %v3743 = vld [vmem:[#allocation38 + $0x30] sm:$0xff]
        %v3744 = vld [vmem:[#allocation38 + $0x38] sm:$0xff]
        %v3745 = vld [vmem:[#allocation38 + $0x40] sm:$0xff]
        %v3746 = vld [vmem:[#allocation38 + $0x48] sm:$0xff]
        %v3747 = vld [vmem:[#allocation38 + $0x50] sm:$0xff]
        %v3748 = vld [vmem:[#allocation38 + $0x58] sm:$0xff]
        %v3749 = vld [vmem:[#allocation38 + $0x60] sm:$0xff]
        %v3750 = vld [vmem:[#allocation38 + $0x68] sm:$0xff]
        %v3751 = vld [vmem:[#allocation38 + $0x70] sm:$0xff]
        %v3752 = vld [vmem:[#allocation38 + $0x78] sm:$0xff]
        %v3753 = vld [vmem:[#allocation38 + $0x80] sm:$0xff]
        %v3754 = vld [vmem:[#allocation38 + $0x88] sm:$0xff]
        %v3755 = vld [vmem:[#allocation38 + $0x90] sm:$0xff]
        %v3756 = vld [vmem:[#allocation38 + $0x98] sm:$0xff]
        %v3757 = vld [vmem:[#allocation38 + $0xa0] sm:$0xff]
        %v3758 = vld [vmem:[#allocation38 + $0xa8] sm:$0xff]
        %v3759 = vld [vmem:[#allocation38 + $0xb0] sm:$0xff]
        %v3760 = vld [vmem:[#allocation38 + $0xb8] sm:$0xff]
        %v3761 = vld [vmem:[#allocation38 + $0xc0] sm:$0xff]
        %v3762 = vld [vmem:[#allocation38 + $0xc8] sm:$0xff]
        %v3763 = vld [vmem:[#allocation38 + $0xd0] sm:$0xff]
        %v3764 = vld [vmem:[#allocation38 + $0xd8] sm:$0xff]
        %v3765 = vld [vmem:[#allocation38 + $0xe0] sm:$0xff]
        %v3766 = vld [vmem:[#allocation38 + $0xe8] sm:$0xff]
        %v3767 = vld [vmem:[#allocation38 + $0xf0] sm:$0xff]
        %v3768 = vld [vmem:[#allocation38 + $0xf8] sm:$0xff]
        %v3769 = vld [vmem:[#allocation40] sm:$0x3]
        %v3771 = vperm.slane %v3769, 0
        %v3772 = vperm.slane %v3769, 1
        %3775 = vmatpush.msra.mxu0 %v3767
        %3776 = vmatpush.msra.mxu0 %v3765
        %3777 = vmatpush.msra.mxu0 %v3763
        %3778 = vmatpush.msra.mxu0 %v3761
        %3779 = vmatpush.msra.mxu0 %v3759
        %3780 = vmatpush.msra.mxu0 %v3757
        %3781 = vmatpush.msra.mxu0 %v3755
        %3782 = vmatpush.msra.mxu0 %v3753
        %3783 = vmatpush.msra.mxu0 %v3751
        %3784 = vmatpush.msra.mxu0 %v3749
        %3785 = vmatpush.msra.mxu0 %v3747
        %3786 = vmatpush.msra.mxu0 %v3745
        %3787 = vmatpush.msra.mxu0 %v3743
        %3788 = vmatpush.msra.mxu0 %v3741
        %3789 = vmatpush.msra.mxu0 %v3739
        %3790 = vmatpush.msra.mxu0 %v3737
        %3791 = vmatmul.f32.gmra.mxu0 %v3736
        %v3792 = vpop.f32.mrf.mxu0
        %v3793 = vadd.f32 %v3771, %v3792
        %3794 = vdwg.mxu0
        %3795 = vmatpush.msra.mxu0 %v3768
        %3796 = vmatpush.msra.mxu0 %v3766
        %3797 = vmatpush.msra.mxu0 %v3764
        %3798 = vmatpush.msra.mxu0 %v3762
        %3799 = vmatpush.msra.mxu0 %v3760
        %3800 = vmatpush.msra.mxu0 %v3758
        %3801 = vmatpush.msra.mxu0 %v3756
        %3802 = vmatpush.msra.mxu0 %v3754
        %3803 = vmatpush.msra.mxu0 %v3752
        %3804 = vmatpush.msra.mxu0 %v3750
        %3805 = vmatpush.msra.mxu0 %v3748
        %3806 = vmatpush.msra.mxu0 %v3746
        %3807 = vmatpush.msra.mxu0 %v3744
        %3808 = vmatpush.msra.mxu0 %v3742
        %3809 = vmatpush.msra.mxu0 %v3740
        %3810 = vmatpush.msra.mxu0 %v3738
        %3811 = vmatmul.f32.gmra.mxu0 %v3736
        %v3812 = vpop.f32.mrf.mxu0
        %v3813 = vadd.f32 %v3772, %v3812
        %3814 = vdwg.mxu0
        %v3815 = vld [vmem:[#allocation41] sm:$0x3]
        %v3816 = vld [vmem:[#allocation43] sm:$0x3]
        %v3817 = vmax.f32 %v3793, 0.0
        %v3818 = vmax.f32 %v3813, 0.0
        %v3820 = vperm.slane %v3815, 0
        %v3821 = vperm.slane %v3815, 1
        %v3824 = vmul.f32 %v3817, %v3820
        %v3825 = vmul.f32 %v3818, %v3821
        %v3827 = vperm.slane %v3816, 0
        %v3828 = vperm.slane %v3816, 1
        %v3831 = vadd.f32 %v3824, %v3827
        %v3832 = vadd.f32 %v3825, %v3828
        %v3833 = vld [vmem:[#allocation44] sm:$0xff]
        %v3834 = vld [vmem:[#allocation44 + $0x8] sm:$0xff]
        %v3835 = vld [vmem:[#allocation44 + $0x10] sm:$0xff]
        %v3836 = vld [vmem:[#allocation44 + $0x18] sm:$0xff]
        %v3837 = vld [vmem:[#allocation44 + $0x20] sm:$0xff]
        %v3838 = vld [vmem:[#allocation44 + $0x28] sm:$0xff]
        %v3839 = vld [vmem:[#allocation44 + $0x30] sm:$0xff]
        %v3840 = vld [vmem:[#allocation44 + $0x38] sm:$0xff]
        %v3841 = vld [vmem:[#allocation44 + $0x40] sm:$0xff]
        %v3842 = vld [vmem:[#allocation44 + $0x48] sm:$0xff]
        %v3843 = vld [vmem:[#allocation44 + $0x50] sm:$0xff]
        %v3844 = vld [vmem:[#allocation44 + $0x58] sm:$0xff]
        %v3845 = vld [vmem:[#allocation44 + $0x60] sm:$0xff]
        %v3846 = vld [vmem:[#allocation44 + $0x68] sm:$0xff]
        %v3847 = vld [vmem:[#allocation44 + $0x70] sm:$0xff]
        %v3848 = vld [vmem:[#allocation44 + $0x78] sm:$0xff]
        %v3849 = vld [vmem:[#allocation44 + $0x80] sm:$0xff]
        %v3850 = vld [vmem:[#allocation44 + $0x88] sm:$0xff]
        %v3851 = vld [vmem:[#allocation44 + $0x90] sm:$0xff]
        %v3852 = vld [vmem:[#allocation44 + $0x98] sm:$0xff]
        %v3853 = vld [vmem:[#allocation44 + $0xa0] sm:$0xff]
        %v3854 = vld [vmem:[#allocation44 + $0xa8] sm:$0xff]
        %v3855 = vld [vmem:[#allocation44 + $0xb0] sm:$0xff]
        %v3856 = vld [vmem:[#allocation44 + $0xb8] sm:$0xff]
        %v3857 = vld [vmem:[#allocation44 + $0xc0] sm:$0xff]
        %v3858 = vld [vmem:[#allocation44 + $0xc8] sm:$0xff]
        %v3859 = vld [vmem:[#allocation44 + $0xd0] sm:$0xff]
        %v3860 = vld [vmem:[#allocation44 + $0xd8] sm:$0xff]
        %v3861 = vld [vmem:[#allocation44 + $0xe0] sm:$0xff]
        %v3862 = vld [vmem:[#allocation44 + $0xe8] sm:$0xff]
        %v3863 = vld [vmem:[#allocation44 + $0xf0] sm:$0xff]
        %v3864 = vld [vmem:[#allocation44 + $0xf8] sm:$0xff]
        %v3865 = vld [vmem:[#allocation44 + $0x100] sm:$0xff]
        %v3866 = vld [vmem:[#allocation44 + $0x108] sm:$0xff]
        %v3867 = vld [vmem:[#allocation44 + $0x110] sm:$0xff]
        %v3868 = vld [vmem:[#allocation44 + $0x118] sm:$0xff]
        %v3869 = vld [vmem:[#allocation44 + $0x120] sm:$0xff]
        %v3870 = vld [vmem:[#allocation44 + $0x128] sm:$0xff]
        %v3871 = vld [vmem:[#allocation44 + $0x130] sm:$0xff]
        %v3872 = vld [vmem:[#allocation44 + $0x138] sm:$0xff]
        %v3873 = vld [vmem:[#allocation44 + $0x140] sm:$0xff]
        %v3874 = vld [vmem:[#allocation44 + $0x148] sm:$0xff]
        %v3875 = vld [vmem:[#allocation44 + $0x150] sm:$0xff]
        %v3876 = vld [vmem:[#allocation44 + $0x158] sm:$0xff]
        %v3877 = vld [vmem:[#allocation44 + $0x160] sm:$0xff]
        %v3878 = vld [vmem:[#allocation44 + $0x168] sm:$0xff]
        %v3879 = vld [vmem:[#allocation44 + $0x170] sm:$0xff]
        %v3880 = vld [vmem:[#allocation44 + $0x178] sm:$0xff]
        %v3881 = vld [vmem:[#allocation44 + $0x180] sm:$0xff]
        %v3882 = vld [vmem:[#allocation44 + $0x188] sm:$0xff]
        %v3883 = vld [vmem:[#allocation44 + $0x190] sm:$0xff]
        %v3884 = vld [vmem:[#allocation44 + $0x198] sm:$0xff]
        %v3885 = vld [vmem:[#allocation44 + $0x1a0] sm:$0xff]
        %v3886 = vld [vmem:[#allocation44 + $0x1a8] sm:$0xff]
        %v3887 = vld [vmem:[#allocation44 + $0x1b0] sm:$0xff]
        %v3888 = vld [vmem:[#allocation44 + $0x1b8] sm:$0xff]
        %v3889 = vld [vmem:[#allocation44 + $0x1c0] sm:$0xff]
        %v3890 = vld [vmem:[#allocation44 + $0x1c8] sm:$0xff]
        %v3891 = vld [vmem:[#allocation44 + $0x1d0] sm:$0xff]
        %v3892 = vld [vmem:[#allocation44 + $0x1d8] sm:$0xff]
        %v3893 = vld [vmem:[#allocation44 + $0x1e0] sm:$0xff]
        %v3894 = vld [vmem:[#allocation44 + $0x1e8] sm:$0xff]
        %v3895 = vld [vmem:[#allocation44 + $0x1f0] sm:$0xff]
        %v3896 = vld [vmem:[#allocation44 + $0x1f8] sm:$0xff]
        %v3897 = vld [vmem:[#allocation44 + $0x200] sm:$0xff]
        %v3898 = vld [vmem:[#allocation44 + $0x208] sm:$0xff]
        %v3899 = vld [vmem:[#allocation44 + $0x210] sm:$0xff]
        %v3900 = vld [vmem:[#allocation44 + $0x218] sm:$0xff]
        %v3901 = vld [vmem:[#allocation44 + $0x220] sm:$0xff]
        %v3902 = vld [vmem:[#allocation44 + $0x228] sm:$0xff]
        %v3903 = vld [vmem:[#allocation44 + $0x230] sm:$0xff]
        %v3904 = vld [vmem:[#allocation44 + $0x238] sm:$0xff]
        %v3905 = vld [vmem:[#allocation44 + $0x240] sm:$0xff]
        %v3906 = vld [vmem:[#allocation44 + $0x248] sm:$0xff]
        %v3907 = vld [vmem:[#allocation44 + $0x250] sm:$0xff]
        %v3908 = vld [vmem:[#allocation44 + $0x258] sm:$0xff]
        %v3909 = vld [vmem:[#allocation44 + $0x260] sm:$0xff]
        %v3910 = vld [vmem:[#allocation44 + $0x268] sm:$0xff]
        %v3911 = vld [vmem:[#allocation44 + $0x270] sm:$0xff]
        %v3912 = vld [vmem:[#allocation44 + $0x278] sm:$0xff]
        %v3913 = vld [vmem:[#allocation44 + $0x280] sm:$0xff]
        %v3914 = vld [vmem:[#allocation44 + $0x288] sm:$0xff]
        %v3915 = vld [vmem:[#allocation44 + $0x290] sm:$0xff]
        %v3916 = vld [vmem:[#allocation44 + $0x298] sm:$0xff]
        %v3917 = vld [vmem:[#allocation44 + $0x2a0] sm:$0xff]
        %v3918 = vld [vmem:[#allocation44 + $0x2a8] sm:$0xff]
        %v3919 = vld [vmem:[#allocation44 + $0x2b0] sm:$0xff]
        %v3920 = vld [vmem:[#allocation44 + $0x2b8] sm:$0xff]
        %v3921 = vld [vmem:[#allocation44 + $0x2c0] sm:$0xff]
        %v3922 = vld [vmem:[#allocation44 + $0x2c8] sm:$0xff]
        %v3923 = vld [vmem:[#allocation44 + $0x2d0] sm:$0xff]
        %v3924 = vld [vmem:[#allocation44 + $0x2d8] sm:$0xff]
        %v3925 = vld [vmem:[#allocation44 + $0x2e0] sm:$0xff]
        %v3926 = vld [vmem:[#allocation44 + $0x2e8] sm:$0xff]
        %v3927 = vld [vmem:[#allocation44 + $0x2f0] sm:$0xff]
        %v3928 = vld [vmem:[#allocation44 + $0x2f8] sm:$0xff]
        %v3929 = vld [vmem:[#allocation44 + $0x300] sm:$0xff]
        %v3930 = vld [vmem:[#allocation44 + $0x308] sm:$0xff]
        %v3931 = vld [vmem:[#allocation44 + $0x310] sm:$0xff]
        %v3932 = vld [vmem:[#allocation44 + $0x318] sm:$0xff]
        %v3933 = vld [vmem:[#allocation44 + $0x320] sm:$0xff]
        %v3934 = vld [vmem:[#allocation44 + $0x328] sm:$0xff]
        %v3935 = vld [vmem:[#allocation44 + $0x330] sm:$0xff]
        %v3936 = vld [vmem:[#allocation44 + $0x338] sm:$0xff]
        %v3937 = vld [vmem:[#allocation44 + $0x340] sm:$0xff]
        %v3938 = vld [vmem:[#allocation44 + $0x348] sm:$0xff]
        %v3939 = vld [vmem:[#allocation44 + $0x350] sm:$0xff]
        %v3940 = vld [vmem:[#allocation44 + $0x358] sm:$0xff]
        %v3941 = vld [vmem:[#allocation44 + $0x360] sm:$0xff]
        %v3942 = vld [vmem:[#allocation44 + $0x368] sm:$0xff]
        %v3943 = vld [vmem:[#allocation44 + $0x370] sm:$0xff]
        %v3944 = vld [vmem:[#allocation44 + $0x378] sm:$0xff]
        %v3945 = vld [vmem:[#allocation44 + $0x380] sm:$0xff]
        %v3946 = vld [vmem:[#allocation44 + $0x388] sm:$0xff]
        %v3947 = vld [vmem:[#allocation44 + $0x390] sm:$0xff]
        %v3948 = vld [vmem:[#allocation44 + $0x398] sm:$0xff]
        %v3949 = vld [vmem:[#allocation44 + $0x3a0] sm:$0xff]
        %v3950 = vld [vmem:[#allocation44 + $0x3a8] sm:$0xff]
        %v3951 = vld [vmem:[#allocation44 + $0x3b0] sm:$0xff]
        %v3952 = vld [vmem:[#allocation44 + $0x3b8] sm:$0xff]
        %v3953 = vld [vmem:[#allocation44 + $0x3c0] sm:$0xff]
        %v3954 = vld [vmem:[#allocation44 + $0x3c8] sm:$0xff]
        %v3955 = vld [vmem:[#allocation44 + $0x3d0] sm:$0xff]
        %v3956 = vld [vmem:[#allocation44 + $0x3d8] sm:$0xff]
        %v3957 = vld [vmem:[#allocation44 + $0x3e0] sm:$0xff]
        %v3958 = vld [vmem:[#allocation44 + $0x3e8] sm:$0xff]
        %v3959 = vld [vmem:[#allocation44 + $0x3f0] sm:$0xff]
        %v3960 = vld [vmem:[#allocation44 + $0x3f8] sm:$0xff]
        %v3961 = vld [vmem:[#allocation46] sm:$0xf]
        %v3963 = vperm.slane %v3961, 0
        %v3964 = vperm.slane %v3961, 1
        %v3965 = vperm.slane %v3961, 2
        %v3966 = vperm.slane %v3961, 3
        %3971 = vmatpush.msra.mxu0 %v3893
        %3972 = vmatpush.msra.mxu0 %v3889
        %3973 = vmatpush.msra.mxu0 %v3885
        %3974 = vmatpush.msra.mxu0 %v3881
        %3975 = vmatpush.msra.mxu0 %v3877
        %3976 = vmatpush.msra.mxu0 %v3873
        %3977 = vmatpush.msra.mxu0 %v3869
        %3978 = vmatpush.msra.mxu0 %v3865
        %3979 = vmatpush.msra.mxu0 %v3861
        %3980 = vmatpush.msra.mxu0 %v3857
        %3981 = vmatpush.msra.mxu0 %v3853
        %3982 = vmatpush.msra.mxu0 %v3849
        %3983 = vmatpush.msra.mxu0 %v3845
        %3984 = vmatpush.msra.mxu0 %v3841
        %3985 = vmatpush.msra.mxu0 %v3837
        %3986 = vmatpush.msra.mxu0 %v3833
        %3987 = vmatmul.f32.gmra.mxu0 %v3831
        %v3988 = vpop.f32.mrf.mxu0
        %v3989 = vadd.f32 %v3963, %v3988
        %3990 = vdwg.mxu0
        %3991 = vmatpush.msra.mxu0 %v3957
        %3992 = vmatpush.msra.mxu0 %v3953
        %3993 = vmatpush.msra.mxu0 %v3949
        %3994 = vmatpush.msra.mxu0 %v3945
        %3995 = vmatpush.msra.mxu0 %v3941
        %3996 = vmatpush.msra.mxu0 %v3937
        %3997 = vmatpush.msra.mxu0 %v3933
        %3998 = vmatpush.msra.mxu0 %v3929
        %3999 = vmatpush.msra.mxu0 %v3925
        %4000 = vmatpush.msra.mxu0 %v3921
        %4001 = vmatpush.msra.mxu0 %v3917
        %4002 = vmatpush.msra.mxu0 %v3913
        %4003 = vmatpush.msra.mxu0 %v3909
        %4004 = vmatpush.msra.mxu0 %v3905
        %4005 = vmatpush.msra.mxu0 %v3901
        %4006 = vmatpush.msra.mxu0 %v3897
        %4007 = vmatmul.f32.gmra.mxu0 %v3832
        %v4008 = vpop.f32.mrf.mxu0
        %v4009 = vadd.f32 %v3989, %v4008
        %4010 = vdwg.mxu0
        %4011 = vmatpush.msra.mxu0 %v3894
        %4012 = vmatpush.msra.mxu0 %v3890
        %4013 = vmatpush.msra.mxu0 %v3886
        %4014 = vmatpush.msra.mxu0 %v3882
        %4015 = vmatpush.msra.mxu0 %v3878
        %4016 = vmatpush.msra.mxu0 %v3874
        %4017 = vmatpush.msra.mxu0 %v3870
        %4018 = vmatpush.msra.mxu0 %v3866
        %4019 = vmatpush.msra.mxu0 %v3862
        %4020 = vmatpush.msra.mxu0 %v3858
        %4021 = vmatpush.msra.mxu0 %v3854
        %4022 = vmatpush.msra.mxu0 %v3850
        %4023 = vmatpush.msra.mxu0 %v3846
        %4024 = vmatpush.msra.mxu0 %v3842
        %4025 = vmatpush.msra.mxu0 %v3838
        %4026 = vmatpush.msra.mxu0 %v3834
        %4027 = vmatmul.f32.gmra.mxu0 %v3831
        %v4028 = vpop.f32.mrf.mxu0
        %v4029 = vadd.f32 %v3964, %v4028
        %4030 = vdwg.mxu0
        %4031 = vmatpush.msra.mxu0 %v3958
        %4032 = vmatpush.msra.mxu0 %v3954
        %4033 = vmatpush.msra.mxu0 %v3950
        %4034 = vmatpush.msra.mxu0 %v3946
        %4035 = vmatpush.msra.mxu0 %v3942
        %4036 = vmatpush.msra.mxu0 %v3938
        %4037 = vmatpush.msra.mxu0 %v3934
        %4038 = vmatpush.msra.mxu0 %v3930
        %4039 = vmatpush.msra.mxu0 %v3926
        %4040 = vmatpush.msra.mxu0 %v3922
        %4041 = vmatpush.msra.mxu0 %v3918
        %4042 = vmatpush.msra.mxu0 %v3914
        %4043 = vmatpush.msra.mxu0 %v3910
        %4044 = vmatpush.msra.mxu0 %v3906
        %4045 = vmatpush.msra.mxu0 %v3902
        %4046 = vmatpush.msra.mxu0 %v3898
        %4047 = vmatmul.f32.gmra.mxu0 %v3832
        %v4048 = vpop.f32.mrf.mxu0
        %v4049 = vadd.f32 %v4029, %v4048
        %4050 = vdwg.mxu0
        %4051 = vmatpush.msra.mxu0 %v3895
        %4052 = vmatpush.msra.mxu0 %v3891
        %4053 = vmatpush.msra.mxu0 %v3887
        %4054 = vmatpush.msra.mxu0 %v3883
        %4055 = vmatpush.msra.mxu0 %v3879
        %4056 = vmatpush.msra.mxu0 %v3875
        %4057 = vmatpush.msra.mxu0 %v3871
        %4058 = vmatpush.msra.mxu0 %v3867
        %4059 = vmatpush.msra.mxu0 %v3863
        %4060 = vmatpush.msra.mxu0 %v3859
        %4061 = vmatpush.msra.mxu0 %v3855
        %4062 = vmatpush.msra.mxu0 %v3851
        %4063 = vmatpush.msra.mxu0 %v3847
        %4064 = vmatpush.msra.mxu0 %v3843
        %4065 = vmatpush.msra.mxu0 %v3839
        %4066 = vmatpush.msra.mxu0 %v3835
        %4067 = vmatmul.f32.gmra.mxu0 %v3831
        %v4068 = vpop.f32.mrf.mxu0
        %v4069 = vadd.f32 %v3965, %v4068
        %4070 = vdwg.mxu0
        %4071 = vmatpush.msra.mxu0 %v3959
        %4072 = vmatpush.msra.mxu0 %v3955
        %4073 = vmatpush.msra.mxu0 %v3951
        %4074 = vmatpush.msra.mxu0 %v3947
        %4075 = vmatpush.msra.mxu0 %v3943
        %4076 = vmatpush.msra.mxu0 %v3939
        %4077 = vmatpush.msra.mxu0 %v3935
        %4078 = vmatpush.msra.mxu0 %v3931
        %4079 = vmatpush.msra.mxu0 %v3927
        %4080 = vmatpush.msra.mxu0 %v3923
        %4081 = vmatpush.msra.mxu0 %v3919
        %4082 = vmatpush.msra.mxu0 %v3915
        %4083 = vmatpush.msra.mxu0 %v3911
        %4084 = vmatpush.msra.mxu0 %v3907
        %4085 = vmatpush.msra.mxu0 %v3903
        %4086 = vmatpush.msra.mxu0 %v3899
        %4087 = vmatmul.f32.gmra.mxu0 %v3832
        %v4088 = vpop.f32.mrf.mxu0
        %v4089 = vadd.f32 %v4069, %v4088
        %4090 = vdwg.mxu0
        %4091 = vmatpush.msra.mxu0 %v3896
        %4092 = vmatpush.msra.mxu0 %v3892
        %4093 = vmatpush.msra.mxu0 %v3888
        %4094 = vmatpush.msra.mxu0 %v3884
        %4095 = vmatpush.msra.mxu0 %v3880
        %4096 = vmatpush.msra.mxu0 %v3876
        %4097 = vmatpush.msra.mxu0 %v3872
        %4098 = vmatpush.msra.mxu0 %v3868
        %4099 = vmatpush.msra.mxu0 %v3864
        %4100 = vmatpush.msra.mxu0 %v3860
        %4101 = vmatpush.msra.mxu0 %v3856
        %4102 = vmatpush.msra.mxu0 %v3852
        %4103 = vmatpush.msra.mxu0 %v3848
        %4104 = vmatpush.msra.mxu0 %v3844
        %4105 = vmatpush.msra.mxu0 %v3840
        %4106 = vmatpush.msra.mxu0 %v3836
        %4107 = vmatmul.f32.gmra.mxu0 %v3831
        %v4108 = vpop.f32.mrf.mxu0
        %v4109 = vadd.f32 %v3966, %v4108
        %4110 = vdwg.mxu0
        %4111 = vmatpush.msra.mxu0 %v3960
        %4112 = vmatpush.msra.mxu0 %v3956
        %4113 = vmatpush.msra.mxu0 %v3952
        %4114 = vmatpush.msra.mxu0 %v3948
        %4115 = vmatpush.msra.mxu0 %v3944
        %4116 = vmatpush.msra.mxu0 %v3940
        %4117 = vmatpush.msra.mxu0 %v3936
        %4118 = vmatpush.msra.mxu0 %v3932
        %4119 = vmatpush.msra.mxu0 %v3928
        %4120 = vmatpush.msra.mxu0 %v3924
        %4121 = vmatpush.msra.mxu0 %v3920
        %4122 = vmatpush.msra.mxu0 %v3916
        %4123 = vmatpush.msra.mxu0 %v3912
        %4124 = vmatpush.msra.mxu0 %v3908
        %4125 = vmatpush.msra.mxu0 %v3904
        %4126 = vmatpush.msra.mxu0 %v3900
        %4127 = vmatmul.f32.gmra.mxu0 %v3832
        %v4128 = vpop.f32.mrf.mxu0
        %v4129 = vadd.f32 %v4109, %v4128
        %4130 = vdwg.mxu0
        %v4131 = vld [vmem:[#allocation47] sm:$0xf]
        %v4132 = vld [vmem:[#allocation49] sm:$0xf]
        %v4133 = vmax.f32 %v4009, 0.0
        %v4134 = vmax.f32 %v4049, 0.0
        %v4135 = vmax.f32 %v4089, 0.0
        %v4136 = vmax.f32 %v4129, 0.0
        %v4138 = vperm.slane %v4131, 0
        %v4139 = vperm.slane %v4131, 1
        %v4140 = vperm.slane %v4131, 2
        %v4141 = vperm.slane %v4131, 3
        %v4146 = vmul.f32 %v4133, %v4138
        %v4147 = vmul.f32 %v4134, %v4139
        %v4148 = vmul.f32 %v4135, %v4140
        %v4149 = vmul.f32 %v4136, %v4141
        %v4151 = vperm.slane %v4132, 0
        %v4152 = vperm.slane %v4132, 1
        %v4153 = vperm.slane %v4132, 2
        %v4154 = vperm.slane %v4132, 3
        %v4159 = vadd.f32 %v4146, %v4151
        %v4160 = vadd.f32 %v4147, %v4152
        %v4161 = vadd.f32 %v4148, %v4153
        %v4162 = vadd.f32 %v4149, %v4154
        %v4163 = vld [vmem:[#allocation50] sm:$0xff]
        %v4164 = vld [vmem:[#allocation50 + $0x8] sm:$0xff]
        %v4165 = vld [vmem:[#allocation50 + $0x10] sm:$0xff]
        %v4166 = vld [vmem:[#allocation50 + $0x18] sm:$0xff]
        %v4167 = vld [vmem:[#allocation50 + $0x20] sm:$0xff]
        %v4168 = vld [vmem:[#allocation50 + $0x28] sm:$0xff]
        %v4169 = vld [vmem:[#allocation50 + $0x30] sm:$0xff]
        %v4170 = vld [vmem:[#allocation50 + $0x38] sm:$0xff]
        %v4171 = vld [vmem:[#allocation50 + $0x40] sm:$0xff]
        %v4172 = vld [vmem:[#allocation50 + $0x48] sm:$0xff]
        %v4173 = vld [vmem:[#allocation50 + $0x50] sm:$0xff]
        %v4174 = vld [vmem:[#allocation50 + $0x58] sm:$0xff]
        %v4175 = vld [vmem:[#allocation50 + $0x60] sm:$0xff]
        %v4176 = vld [vmem:[#allocation50 + $0x68] sm:$0xff]
        %v4177 = vld [vmem:[#allocation50 + $0x70] sm:$0xff]
        %v4178 = vld [vmem:[#allocation50 + $0x78] sm:$0xff]
        %v4179 = vld [vmem:[#allocation50 + $0x80] sm:$0xff]
        %v4180 = vld [vmem:[#allocation50 + $0x88] sm:$0xff]
        %v4181 = vld [vmem:[#allocation50 + $0x90] sm:$0xff]
        %v4182 = vld [vmem:[#allocation50 + $0x98] sm:$0xff]
        %v4183 = vld [vmem:[#allocation50 + $0xa0] sm:$0xff]
        %v4184 = vld [vmem:[#allocation50 + $0xa8] sm:$0xff]
        %v4185 = vld [vmem:[#allocation50 + $0xb0] sm:$0xff]
        %v4186 = vld [vmem:[#allocation50 + $0xb8] sm:$0xff]
        %v4187 = vld [vmem:[#allocation50 + $0xc0] sm:$0xff]
        %v4188 = vld [vmem:[#allocation50 + $0xc8] sm:$0xff]
        %v4189 = vld [vmem:[#allocation50 + $0xd0] sm:$0xff]
        %v4190 = vld [vmem:[#allocation50 + $0xd8] sm:$0xff]
        %v4191 = vld [vmem:[#allocation50 + $0xe0] sm:$0xff]
        %v4192 = vld [vmem:[#allocation50 + $0xe8] sm:$0xff]
        %v4193 = vld [vmem:[#allocation50 + $0xf0] sm:$0xff]
        %v4194 = vld [vmem:[#allocation50 + $0xf8] sm:$0xff]
        %v4195 = vld [vmem:[#allocation50 + $0x100] sm:$0xff]
        %v4196 = vld [vmem:[#allocation50 + $0x108] sm:$0xff]
        %v4197 = vld [vmem:[#allocation50 + $0x110] sm:$0xff]
        %v4198 = vld [vmem:[#allocation50 + $0x118] sm:$0xff]
        %v4199 = vld [vmem:[#allocation50 + $0x120] sm:$0xff]
        %v4200 = vld [vmem:[#allocation50 + $0x128] sm:$0xff]
        %v4201 = vld [vmem:[#allocation50 + $0x130] sm:$0xff]
        %v4202 = vld [vmem:[#allocation50 + $0x138] sm:$0xff]
        %v4203 = vld [vmem:[#allocation50 + $0x140] sm:$0xff]
        %v4204 = vld [vmem:[#allocation50 + $0x148] sm:$0xff]
        %v4205 = vld [vmem:[#allocation50 + $0x150] sm:$0xff]
        %v4206 = vld [vmem:[#allocation50 + $0x158] sm:$0xff]
        %v4207 = vld [vmem:[#allocation50 + $0x160] sm:$0xff]
        %v4208 = vld [vmem:[#allocation50 + $0x168] sm:$0xff]
        %v4209 = vld [vmem:[#allocation50 + $0x170] sm:$0xff]
        %v4210 = vld [vmem:[#allocation50 + $0x178] sm:$0xff]
        %v4211 = vld [vmem:[#allocation50 + $0x180] sm:$0xff]
        %v4212 = vld [vmem:[#allocation50 + $0x188] sm:$0xff]
        %v4213 = vld [vmem:[#allocation50 + $0x190] sm:$0xff]
        %v4214 = vld [vmem:[#allocation50 + $0x198] sm:$0xff]
        %v4215 = vld [vmem:[#allocation50 + $0x1a0] sm:$0xff]
        %v4216 = vld [vmem:[#allocation50 + $0x1a8] sm:$0xff]
        %v4217 = vld [vmem:[#allocation50 + $0x1b0] sm:$0xff]
        %v4218 = vld [vmem:[#allocation50 + $0x1b8] sm:$0xff]
        %v4219 = vld [vmem:[#allocation50 + $0x1c0] sm:$0xff]
        %v4220 = vld [vmem:[#allocation50 + $0x1c8] sm:$0xff]
        %v4221 = vld [vmem:[#allocation50 + $0x1d0] sm:$0xff]
        %v4222 = vld [vmem:[#allocation50 + $0x1d8] sm:$0xff]
        %v4223 = vld [vmem:[#allocation50 + $0x1e0] sm:$0xff]
        %v4224 = vld [vmem:[#allocation50 + $0x1e8] sm:$0xff]
        %v4225 = vld [vmem:[#allocation50 + $0x1f0] sm:$0xff]
        %v4226 = vld [vmem:[#allocation50 + $0x1f8] sm:$0xff]
        %v4227 = vld [vmem:[#allocation50 + $0x200] sm:$0xff]
        %v4228 = vld [vmem:[#allocation50 + $0x208] sm:$0xff]
        %v4229 = vld [vmem:[#allocation50 + $0x210] sm:$0xff]
        %v4230 = vld [vmem:[#allocation50 + $0x218] sm:$0xff]
        %v4231 = vld [vmem:[#allocation50 + $0x220] sm:$0xff]
        %v4232 = vld [vmem:[#allocation50 + $0x228] sm:$0xff]
        %v4233 = vld [vmem:[#allocation50 + $0x230] sm:$0xff]
        %v4234 = vld [vmem:[#allocation50 + $0x238] sm:$0xff]
        %v4235 = vld [vmem:[#allocation50 + $0x240] sm:$0xff]
        %v4236 = vld [vmem:[#allocation50 + $0x248] sm:$0xff]
        %v4237 = vld [vmem:[#allocation50 + $0x250] sm:$0xff]
        %v4238 = vld [vmem:[#allocation50 + $0x258] sm:$0xff]
        %v4239 = vld [vmem:[#allocation50 + $0x260] sm:$0xff]
        %v4240 = vld [vmem:[#allocation50 + $0x268] sm:$0xff]
        %v4241 = vld [vmem:[#allocation50 + $0x270] sm:$0xff]
        %v4242 = vld [vmem:[#allocation50 + $0x278] sm:$0xff]
        %v4243 = vld [vmem:[#allocation50 + $0x280] sm:$0xff]
        %v4244 = vld [vmem:[#allocation50 + $0x288] sm:$0xff]
        %v4245 = vld [vmem:[#allocation50 + $0x290] sm:$0xff]
        %v4246 = vld [vmem:[#allocation50 + $0x298] sm:$0xff]
        %v4247 = vld [vmem:[#allocation50 + $0x2a0] sm:$0xff]
        %v4248 = vld [vmem:[#allocation50 + $0x2a8] sm:$0xff]
        %v4249 = vld [vmem:[#allocation50 + $0x2b0] sm:$0xff]
        %v4250 = vld [vmem:[#allocation50 + $0x2b8] sm:$0xff]
        %v4251 = vld [vmem:[#allocation50 + $0x2c0] sm:$0xff]
        %v4252 = vld [vmem:[#allocation50 + $0x2c8] sm:$0xff]
        %v4253 = vld [vmem:[#allocation50 + $0x2d0] sm:$0xff]
        %v4254 = vld [vmem:[#allocation50 + $0x2d8] sm:$0xff]
        %v4255 = vld [vmem:[#allocation50 + $0x2e0] sm:$0xff]
        %v4256 = vld [vmem:[#allocation50 + $0x2e8] sm:$0xff]
        %v4257 = vld [vmem:[#allocation50 + $0x2f0] sm:$0xff]
        %v4258 = vld [vmem:[#allocation50 + $0x2f8] sm:$0xff]
        %v4259 = vld [vmem:[#allocation50 + $0x300] sm:$0xff]
        %v4260 = vld [vmem:[#allocation50 + $0x308] sm:$0xff]
        %v4261 = vld [vmem:[#allocation50 + $0x310] sm:$0xff]
        %v4262 = vld [vmem:[#allocation50 + $0x318] sm:$0xff]
        %v4263 = vld [vmem:[#allocation50 + $0x320] sm:$0xff]
        %v4264 = vld [vmem:[#allocation50 + $0x328] sm:$0xff]
        %v4265 = vld [vmem:[#allocation50 + $0x330] sm:$0xff]
        %v4266 = vld [vmem:[#allocation50 + $0x338] sm:$0xff]
        %v4267 = vld [vmem:[#allocation50 + $0x340] sm:$0xff]
        %v4268 = vld [vmem:[#allocation50 + $0x348] sm:$0xff]
        %v4269 = vld [vmem:[#allocation50 + $0x350] sm:$0xff]
        %v4270 = vld [vmem:[#allocation50 + $0x358] sm:$0xff]
        %v4271 = vld [vmem:[#allocation50 + $0x360] sm:$0xff]
        %v4272 = vld [vmem:[#allocation50 + $0x368] sm:$0xff]
        %v4273 = vld [vmem:[#allocation50 + $0x370] sm:$0xff]
        %v4274 = vld [vmem:[#allocation50 + $0x378] sm:$0xff]
        %v4275 = vld [vmem:[#allocation50 + $0x380] sm:$0xff]
        %v4276 = vld [vmem:[#allocation50 + $0x388] sm:$0xff]
        %v4277 = vld [vmem:[#allocation50 + $0x390] sm:$0xff]
        %v4278 = vld [vmem:[#allocation50 + $0x398] sm:$0xff]
        %v4279 = vld [vmem:[#allocation50 + $0x3a0] sm:$0xff]
        %v4280 = vld [vmem:[#allocation50 + $0x3a8] sm:$0xff]
        %v4281 = vld [vmem:[#allocation50 + $0x3b0] sm:$0xff]
        %v4282 = vld [vmem:[#allocation50 + $0x3b8] sm:$0xff]
        %v4283 = vld [vmem:[#allocation50 + $0x3c0] sm:$0xff]
        %v4284 = vld [vmem:[#allocation50 + $0x3c8] sm:$0xff]
        %v4285 = vld [vmem:[#allocation50 + $0x3d0] sm:$0xff]
        %v4286 = vld [vmem:[#allocation50 + $0x3d8] sm:$0xff]
        %v4287 = vld [vmem:[#allocation50 + $0x3e0] sm:$0xff]
        %v4288 = vld [vmem:[#allocation50 + $0x3e8] sm:$0xff]
        %v4289 = vld [vmem:[#allocation50 + $0x3f0] sm:$0xff]
        %v4290 = vld [vmem:[#allocation50 + $0x3f8] sm:$0xff]
        %v4291 = vld [vmem:[#allocation50 + $0x400] sm:$0xff]
        %v4292 = vld [vmem:[#allocation50 + $0x408] sm:$0xff]
        %v4293 = vld [vmem:[#allocation50 + $0x410] sm:$0xff]
        %v4294 = vld [vmem:[#allocation50 + $0x418] sm:$0xff]
        %v4295 = vld [vmem:[#allocation50 + $0x420] sm:$0xff]
        %v4296 = vld [vmem:[#allocation50 + $0x428] sm:$0xff]
        %v4297 = vld [vmem:[#allocation50 + $0x430] sm:$0xff]
        %v4298 = vld [vmem:[#allocation50 + $0x438] sm:$0xff]
        %v4299 = vld [vmem:[#allocation50 + $0x440] sm:$0xff]
        %v4300 = vld [vmem:[#allocation50 + $0x448] sm:$0xff]
        %v4301 = vld [vmem:[#allocation50 + $0x450] sm:$0xff]
        %v4302 = vld [vmem:[#allocation50 + $0x458] sm:$0xff]
        %v4303 = vld [vmem:[#allocation50 + $0x460] sm:$0xff]
        %v4304 = vld [vmem:[#allocation50 + $0x468] sm:$0xff]
        %v4305 = vld [vmem:[#allocation50 + $0x470] sm:$0xff]
        %v4306 = vld [vmem:[#allocation50 + $0x478] sm:$0xff]
        %v4307 = vld [vmem:[#allocation50 + $0x480] sm:$0xff]
        %v4308 = vld [vmem:[#allocation50 + $0x488] sm:$0xff]
        %v4309 = vld [vmem:[#allocation50 + $0x490] sm:$0xff]
        %v4310 = vld [vmem:[#allocation50 + $0x498] sm:$0xff]
        %v4311 = vld [vmem:[#allocation50 + $0x4a0] sm:$0xff]
        %v4312 = vld [vmem:[#allocation50 + $0x4a8] sm:$0xff]
        %v4313 = vld [vmem:[#allocation50 + $0x4b0] sm:$0xff]
        %v4314 = vld [vmem:[#allocation50 + $0x4b8] sm:$0xff]
        %v4315 = vld [vmem:[#allocation50 + $0x4c0] sm:$0xff]
        %v4316 = vld [vmem:[#allocation50 + $0x4c8] sm:$0xff]
        %v4317 = vld [vmem:[#allocation50 + $0x4d0] sm:$0xff]
        %v4318 = vld [vmem:[#allocation50 + $0x4d8] sm:$0xff]
        %v4319 = vld [vmem:[#allocation50 + $0x4e0] sm:$0xff]
        %v4320 = vld [vmem:[#allocation50 + $0x4e8] sm:$0xff]
        %v4321 = vld [vmem:[#allocation50 + $0x4f0] sm:$0xff]
        %v4322 = vld [vmem:[#allocation50 + $0x4f8] sm:$0xff]
        %v4323 = vld [vmem:[#allocation50 + $0x500] sm:$0xff]
        %v4324 = vld [vmem:[#allocation50 + $0x508] sm:$0xff]
        %v4325 = vld [vmem:[#allocation50 + $0x510] sm:$0xff]
        %v4326 = vld [vmem:[#allocation50 + $0x518] sm:$0xff]
        %v4327 = vld [vmem:[#allocation50 + $0x520] sm:$0xff]
        %v4328 = vld [vmem:[#allocation50 + $0x528] sm:$0xff]
        %v4329 = vld [vmem:[#allocation50 + $0x530] sm:$0xff]
        %v4330 = vld [vmem:[#allocation50 + $0x538] sm:$0xff]
        %v4331 = vld [vmem:[#allocation50 + $0x540] sm:$0xff]
        %v4332 = vld [vmem:[#allocation50 + $0x548] sm:$0xff]
        %v4333 = vld [vmem:[#allocation50 + $0x550] sm:$0xff]
        %v4334 = vld [vmem:[#allocation50 + $0x558] sm:$0xff]
        %v4335 = vld [vmem:[#allocation50 + $0x560] sm:$0xff]
        %v4336 = vld [vmem:[#allocation50 + $0x568] sm:$0xff]
        %v4337 = vld [vmem:[#allocation50 + $0x570] sm:$0xff]
        %v4338 = vld [vmem:[#allocation50 + $0x578] sm:$0xff]
        %v4339 = vld [vmem:[#allocation50 + $0x580] sm:$0xff]
        %v4340 = vld [vmem:[#allocation50 + $0x588] sm:$0xff]
        %v4341 = vld [vmem:[#allocation50 + $0x590] sm:$0xff]
        %v4342 = vld [vmem:[#allocation50 + $0x598] sm:$0xff]
        %v4343 = vld [vmem:[#allocation50 + $0x5a0] sm:$0xff]
        %v4344 = vld [vmem:[#allocation50 + $0x5a8] sm:$0xff]
        %v4345 = vld [vmem:[#allocation50 + $0x5b0] sm:$0xff]
        %v4346 = vld [vmem:[#allocation50 + $0x5b8] sm:$0xff]
        %v4347 = vld [vmem:[#allocation50 + $0x5c0] sm:$0xff]
        %v4348 = vld [vmem:[#allocation50 + $0x5c8] sm:$0xff]
        %v4349 = vld [vmem:[#allocation50 + $0x5d0] sm:$0xff]
        %v4350 = vld [vmem:[#allocation50 + $0x5d8] sm:$0xff]
        %v4351 = vld [vmem:[#allocation50 + $0x5e0] sm:$0xff]
        %v4352 = vld [vmem:[#allocation50 + $0x5e8] sm:$0xff]
        %v4353 = vld [vmem:[#allocation50 + $0x5f0] sm:$0xff]
        %v4354 = vld [vmem:[#allocation50 + $0x5f8] sm:$0xff]
        %v4355 = vld [vmem:[#allocation50 + $0x600] sm:$0xff]
        %v4356 = vld [vmem:[#allocation50 + $0x608] sm:$0xff]
        %v4357 = vld [vmem:[#allocation50 + $0x610] sm:$0xff]
        %v4358 = vld [vmem:[#allocation50 + $0x618] sm:$0xff]
        %v4359 = vld [vmem:[#allocation50 + $0x620] sm:$0xff]
        %v4360 = vld [vmem:[#allocation50 + $0x628] sm:$0xff]
        %v4361 = vld [vmem:[#allocation50 + $0x630] sm:$0xff]
        %v4362 = vld [vmem:[#allocation50 + $0x638] sm:$0xff]
        %v4363 = vld [vmem:[#allocation50 + $0x640] sm:$0xff]
        %v4364 = vld [vmem:[#allocation50 + $0x648] sm:$0xff]
        %v4365 = vld [vmem:[#allocation50 + $0x650] sm:$0xff]
        %v4366 = vld [vmem:[#allocation50 + $0x658] sm:$0xff]
        %v4367 = vld [vmem:[#allocation50 + $0x660] sm:$0xff]
        %v4368 = vld [vmem:[#allocation50 + $0x668] sm:$0xff]
        %v4369 = vld [vmem:[#allocation50 + $0x670] sm:$0xff]
        %v4370 = vld [vmem:[#allocation50 + $0x678] sm:$0xff]
        %v4371 = vld [vmem:[#allocation50 + $0x680] sm:$0xff]
        %v4372 = vld [vmem:[#allocation50 + $0x688] sm:$0xff]
        %v4373 = vld [vmem:[#allocation50 + $0x690] sm:$0xff]
        %v4374 = vld [vmem:[#allocation50 + $0x698] sm:$0xff]
        %v4375 = vld [vmem:[#allocation50 + $0x6a0] sm:$0xff]
        %v4376 = vld [vmem:[#allocation50 + $0x6a8] sm:$0xff]
        %v4377 = vld [vmem:[#allocation50 + $0x6b0] sm:$0xff]
        %v4378 = vld [vmem:[#allocation50 + $0x6b8] sm:$0xff]
        %v4379 = vld [vmem:[#allocation50 + $0x6c0] sm:$0xff]
        %v4380 = vld [vmem:[#allocation50 + $0x6c8] sm:$0xff]
        %v4381 = vld [vmem:[#allocation50 + $0x6d0] sm:$0xff]
        %v4382 = vld [vmem:[#allocation50 + $0x6d8] sm:$0xff]
        %v4383 = vld [vmem:[#allocation50 + $0x6e0] sm:$0xff]
        %v4384 = vld [vmem:[#allocation50 + $0x6e8] sm:$0xff]
        %v4385 = vld [vmem:[#allocation50 + $0x6f0] sm:$0xff]
        %v4386 = vld [vmem:[#allocation50 + $0x6f8] sm:$0xff]
        %v4387 = vld [vmem:[#allocation50 + $0x700] sm:$0xff]
        %v4388 = vld [vmem:[#allocation50 + $0x708] sm:$0xff]
        %v4389 = vld [vmem:[#allocation50 + $0x710] sm:$0xff]
        %v4390 = vld [vmem:[#allocation50 + $0x718] sm:$0xff]
        %v4391 = vld [vmem:[#allocation50 + $0x720] sm:$0xff]
        %v4392 = vld [vmem:[#allocation50 + $0x728] sm:$0xff]
        %v4393 = vld [vmem:[#allocation50 + $0x730] sm:$0xff]
        %v4394 = vld [vmem:[#allocation50 + $0x738] sm:$0xff]
        %v4395 = vld [vmem:[#allocation50 + $0x740] sm:$0xff]
        %v4396 = vld [vmem:[#allocation50 + $0x748] sm:$0xff]
        %v4397 = vld [vmem:[#allocation50 + $0x750] sm:$0xff]
        %v4398 = vld [vmem:[#allocation50 + $0x758] sm:$0xff]
        %v4399 = vld [vmem:[#allocation50 + $0x760] sm:$0xff]
        %v4400 = vld [vmem:[#allocation50 + $0x768] sm:$0xff]
        %v4401 = vld [vmem:[#allocation50 + $0x770] sm:$0xff]
        %v4402 = vld [vmem:[#allocation50 + $0x778] sm:$0xff]
        %v4403 = vld [vmem:[#allocation50 + $0x780] sm:$0xff]
        %v4404 = vld [vmem:[#allocation50 + $0x788] sm:$0xff]
        %v4405 = vld [vmem:[#allocation50 + $0x790] sm:$0xff]
        %v4406 = vld [vmem:[#allocation50 + $0x798] sm:$0xff]
        %v4407 = vld [vmem:[#allocation50 + $0x7a0] sm:$0xff]
        %v4408 = vld [vmem:[#allocation50 + $0x7a8] sm:$0xff]
        %v4409 = vld [vmem:[#allocation50 + $0x7b0] sm:$0xff]
        %v4410 = vld [vmem:[#allocation50 + $0x7b8] sm:$0xff]
        %v4411 = vld [vmem:[#allocation50 + $0x7c0] sm:$0xff]
        %v4412 = vld [vmem:[#allocation50 + $0x7c8] sm:$0xff]
        %v4413 = vld [vmem:[#allocation50 + $0x7d0] sm:$0xff]
        %v4414 = vld [vmem:[#allocation50 + $0x7d8] sm:$0xff]
        %v4415 = vld [vmem:[#allocation50 + $0x7e0] sm:$0xff]
        %v4416 = vld [vmem:[#allocation50 + $0x7e8] sm:$0xff]
        %v4417 = vld [vmem:[#allocation50 + $0x7f0] sm:$0xff]
        %v4418 = vld [vmem:[#allocation50 + $0x7f8] sm:$0xff]
        %v4419 = vld [vmem:[#allocation50 + $0x800] sm:$0xff]
        %v4420 = vld [vmem:[#allocation50 + $0x808] sm:$0xff]
        %v4421 = vld [vmem:[#allocation50 + $0x810] sm:$0xff]
        %v4422 = vld [vmem:[#allocation50 + $0x818] sm:$0xff]
        %v4423 = vld [vmem:[#allocation50 + $0x820] sm:$0xff]
        %v4424 = vld [vmem:[#allocation50 + $0x828] sm:$0xff]
        %v4425 = vld [vmem:[#allocation50 + $0x830] sm:$0xff]
        %v4426 = vld [vmem:[#allocation50 + $0x838] sm:$0xff]
        %v4427 = vld [vmem:[#allocation50 + $0x840] sm:$0xff]
        %v4428 = vld [vmem:[#allocation50 + $0x848] sm:$0xff]
        %v4429 = vld [vmem:[#allocation50 + $0x850] sm:$0xff]
        %v4430 = vld [vmem:[#allocation50 + $0x858] sm:$0xff]
        %v4431 = vld [vmem:[#allocation50 + $0x860] sm:$0xff]
        %v4432 = vld [vmem:[#allocation50 + $0x868] sm:$0xff]
        %v4433 = vld [vmem:[#allocation50 + $0x870] sm:$0xff]
        %v4434 = vld [vmem:[#allocation50 + $0x878] sm:$0xff]
        %v4435 = vld [vmem:[#allocation50 + $0x880] sm:$0xff]
        %v4436 = vld [vmem:[#allocation50 + $0x888] sm:$0xff]
        %v4437 = vld [vmem:[#allocation50 + $0x890] sm:$0xff]
        %v4438 = vld [vmem:[#allocation50 + $0x898] sm:$0xff]
        %v4439 = vld [vmem:[#allocation50 + $0x8a0] sm:$0xff]
        %v4440 = vld [vmem:[#allocation50 + $0x8a8] sm:$0xff]
        %v4441 = vld [vmem:[#allocation50 + $0x8b0] sm:$0xff]
        %v4442 = vld [vmem:[#allocation50 + $0x8b8] sm:$0xff]
        %v4443 = vld [vmem:[#allocation50 + $0x8c0] sm:$0xff]
        %v4444 = vld [vmem:[#allocation50 + $0x8c8] sm:$0xff]
        %v4445 = vld [vmem:[#allocation50 + $0x8d0] sm:$0xff]
        %v4446 = vld [vmem:[#allocation50 + $0x8d8] sm:$0xff]
        %v4447 = vld [vmem:[#allocation50 + $0x8e0] sm:$0xff]
        %v4448 = vld [vmem:[#allocation50 + $0x8e8] sm:$0xff]
        %v4449 = vld [vmem:[#allocation50 + $0x8f0] sm:$0xff]
        %v4450 = vld [vmem:[#allocation50 + $0x8f8] sm:$0xff]
        %v4451 = vld [vmem:[#allocation50 + $0x900] sm:$0xff]
        %v4452 = vld [vmem:[#allocation50 + $0x908] sm:$0xff]
        %v4453 = vld [vmem:[#allocation50 + $0x910] sm:$0xff]
        %v4454 = vld [vmem:[#allocation50 + $0x918] sm:$0xff]
        %v4455 = vld [vmem:[#allocation50 + $0x920] sm:$0xff]
        %v4456 = vld [vmem:[#allocation50 + $0x928] sm:$0xff]
        %v4457 = vld [vmem:[#allocation50 + $0x930] sm:$0xff]
        %v4458 = vld [vmem:[#allocation50 + $0x938] sm:$0xff]
        %v4459 = vld [vmem:[#allocation50 + $0x940] sm:$0xff]
        %v4460 = vld [vmem:[#allocation50 + $0x948] sm:$0xff]
        %v4461 = vld [vmem:[#allocation50 + $0x950] sm:$0xff]
        %v4462 = vld [vmem:[#allocation50 + $0x958] sm:$0xff]
        %v4463 = vld [vmem:[#allocation50 + $0x960] sm:$0xff]
        %v4464 = vld [vmem:[#allocation50 + $0x968] sm:$0xff]
        %v4465 = vld [vmem:[#allocation50 + $0x970] sm:$0xff]
        %v4466 = vld [vmem:[#allocation50 + $0x978] sm:$0xff]
        %v4467 = vld [vmem:[#allocation50 + $0x980] sm:$0xff]
        %v4468 = vld [vmem:[#allocation50 + $0x988] sm:$0xff]
        %v4469 = vld [vmem:[#allocation50 + $0x990] sm:$0xff]
        %v4470 = vld [vmem:[#allocation50 + $0x998] sm:$0xff]
        %v4471 = vld [vmem:[#allocation50 + $0x9a0] sm:$0xff]
        %v4472 = vld [vmem:[#allocation50 + $0x9a8] sm:$0xff]
        %v4473 = vld [vmem:[#allocation50 + $0x9b0] sm:$0xff]
        %v4474 = vld [vmem:[#allocation50 + $0x9b8] sm:$0xff]
        %v4475 = vld [vmem:[#allocation50 + $0x9c0] sm:$0xff]
        %v4476 = vld [vmem:[#allocation50 + $0x9c8] sm:$0xff]
        %v4477 = vld [vmem:[#allocation50 + $0x9d0] sm:$0xff]
        %v4478 = vld [vmem:[#allocation50 + $0x9d8] sm:$0xff]
        %v4479 = vld [vmem:[#allocation50 + $0x9e0] sm:$0xff]
        %v4480 = vld [vmem:[#allocation50 + $0x9e8] sm:$0xff]
        %v4481 = vld [vmem:[#allocation50 + $0x9f0] sm:$0xff]
        %v4482 = vld [vmem:[#allocation50 + $0x9f8] sm:$0xff]
        %v4483 = vld [vmem:[#allocation50 + $0xa00] sm:$0xff]
        %v4484 = vld [vmem:[#allocation50 + $0xa08] sm:$0xff]
        %v4485 = vld [vmem:[#allocation50 + $0xa10] sm:$0xff]
        %v4486 = vld [vmem:[#allocation50 + $0xa18] sm:$0xff]
        %v4487 = vld [vmem:[#allocation50 + $0xa20] sm:$0xff]
        %v4488 = vld [vmem:[#allocation50 + $0xa28] sm:$0xff]
        %v4489 = vld [vmem:[#allocation50 + $0xa30] sm:$0xff]
        %v4490 = vld [vmem:[#allocation50 + $0xa38] sm:$0xff]
        %v4491 = vld [vmem:[#allocation50 + $0xa40] sm:$0xff]
        %v4492 = vld [vmem:[#allocation50 + $0xa48] sm:$0xff]
        %v4493 = vld [vmem:[#allocation50 + $0xa50] sm:$0xff]
        %v4494 = vld [vmem:[#allocation50 + $0xa58] sm:$0xff]
        %v4495 = vld [vmem:[#allocation50 + $0xa60] sm:$0xff]
        %v4496 = vld [vmem:[#allocation50 + $0xa68] sm:$0xff]
        %v4497 = vld [vmem:[#allocation50 + $0xa70] sm:$0xff]
        %v4498 = vld [vmem:[#allocation50 + $0xa78] sm:$0xff]
        %v4499 = vld [vmem:[#allocation50 + $0xa80] sm:$0xff]
        %v4500 = vld [vmem:[#allocation50 + $0xa88] sm:$0xff]
        %v4501 = vld [vmem:[#allocation50 + $0xa90] sm:$0xff]
        %v4502 = vld [vmem:[#allocation50 + $0xa98] sm:$0xff]
        %v4503 = vld [vmem:[#allocation50 + $0xaa0] sm:$0xff]
        %v4504 = vld [vmem:[#allocation50 + $0xaa8] sm:$0xff]
        %v4505 = vld [vmem:[#allocation50 + $0xab0] sm:$0xff]
        %v4506 = vld [vmem:[#allocation50 + $0xab8] sm:$0xff]
        %v4507 = vld [vmem:[#allocation50 + $0xac0] sm:$0xff]
        %v4508 = vld [vmem:[#allocation50 + $0xac8] sm:$0xff]
        %v4509 = vld [vmem:[#allocation50 + $0xad0] sm:$0xff]
        %v4510 = vld [vmem:[#allocation50 + $0xad8] sm:$0xff]
        %v4511 = vld [vmem:[#allocation50 + $0xae0] sm:$0xff]
        %v4512 = vld [vmem:[#allocation50 + $0xae8] sm:$0xff]
        %v4513 = vld [vmem:[#allocation50 + $0xaf0] sm:$0xff]
        %v4514 = vld [vmem:[#allocation50 + $0xaf8] sm:$0xff]
        %v4515 = vld [vmem:[#allocation50 + $0xb00] sm:$0xff]
        %v4516 = vld [vmem:[#allocation50 + $0xb08] sm:$0xff]
        %v4517 = vld [vmem:[#allocation50 + $0xb10] sm:$0xff]
        %v4518 = vld [vmem:[#allocation50 + $0xb18] sm:$0xff]
        %v4519 = vld [vmem:[#allocation50 + $0xb20] sm:$0xff]
        %v4520 = vld [vmem:[#allocation50 + $0xb28] sm:$0xff]
        %v4521 = vld [vmem:[#allocation50 + $0xb30] sm:$0xff]
        %v4522 = vld [vmem:[#allocation50 + $0xb38] sm:$0xff]
        %v4523 = vld [vmem:[#allocation50 + $0xb40] sm:$0xff]
        %v4524 = vld [vmem:[#allocation50 + $0xb48] sm:$0xff]
        %v4525 = vld [vmem:[#allocation50 + $0xb50] sm:$0xff]
        %v4526 = vld [vmem:[#allocation50 + $0xb58] sm:$0xff]
        %v4527 = vld [vmem:[#allocation50 + $0xb60] sm:$0xff]
        %v4528 = vld [vmem:[#allocation50 + $0xb68] sm:$0xff]
        %v4529 = vld [vmem:[#allocation50 + $0xb70] sm:$0xff]
        %v4530 = vld [vmem:[#allocation50 + $0xb78] sm:$0xff]
        %v4531 = vld [vmem:[#allocation50 + $0xb80] sm:$0xff]
        %v4532 = vld [vmem:[#allocation50 + $0xb88] sm:$0xff]
        %v4533 = vld [vmem:[#allocation50 + $0xb90] sm:$0xff]
        %v4534 = vld [vmem:[#allocation50 + $0xb98] sm:$0xff]
        %v4535 = vld [vmem:[#allocation50 + $0xba0] sm:$0xff]
        %v4536 = vld [vmem:[#allocation50 + $0xba8] sm:$0xff]
        %v4537 = vld [vmem:[#allocation50 + $0xbb0] sm:$0xff]
        %v4538 = vld [vmem:[#allocation50 + $0xbb8] sm:$0xff]
        %v4539 = vld [vmem:[#allocation50 + $0xbc0] sm:$0xff]
        %v4540 = vld [vmem:[#allocation50 + $0xbc8] sm:$0xff]
        %v4541 = vld [vmem:[#allocation50 + $0xbd0] sm:$0xff]
        %v4542 = vld [vmem:[#allocation50 + $0xbd8] sm:$0xff]
        %v4543 = vld [vmem:[#allocation50 + $0xbe0] sm:$0xff]
        %v4544 = vld [vmem:[#allocation50 + $0xbe8] sm:$0xff]
        %v4545 = vld [vmem:[#allocation50 + $0xbf0] sm:$0xff]
        %v4546 = vld [vmem:[#allocation50 + $0xbf8] sm:$0xff]
        %v4547 = vld [vmem:[#allocation50 + $0xc00] sm:$0xff]
        %v4548 = vld [vmem:[#allocation50 + $0xc08] sm:$0xff]
        %v4549 = vld [vmem:[#allocation50 + $0xc10] sm:$0xff]
        %v4550 = vld [vmem:[#allocation50 + $0xc18] sm:$0xff]
        %v4551 = vld [vmem:[#allocation50 + $0xc20] sm:$0xff]
        %v4552 = vld [vmem:[#allocation50 + $0xc28] sm:$0xff]
        %v4553 = vld [vmem:[#allocation50 + $0xc30] sm:$0xff]
        %v4554 = vld [vmem:[#allocation50 + $0xc38] sm:$0xff]
        %v4555 = vld [vmem:[#allocation50 + $0xc40] sm:$0xff]
        %v4556 = vld [vmem:[#allocation50 + $0xc48] sm:$0xff]
        %v4557 = vld [vmem:[#allocation50 + $0xc50] sm:$0xff]
        %v4558 = vld [vmem:[#allocation50 + $0xc58] sm:$0xff]
        %v4559 = vld [vmem:[#allocation50 + $0xc60] sm:$0xff]
        %v4560 = vld [vmem:[#allocation50 + $0xc68] sm:$0xff]
        %v4561 = vld [vmem:[#allocation50 + $0xc70] sm:$0xff]
        %v4562 = vld [vmem:[#allocation50 + $0xc78] sm:$0xff]
        %v4563 = vld [vmem:[#allocation50 + $0xc80] sm:$0xff]
        %v4564 = vld [vmem:[#allocation50 + $0xc88] sm:$0xff]
        %v4565 = vld [vmem:[#allocation50 + $0xc90] sm:$0xff]
        %v4566 = vld [vmem:[#allocation50 + $0xc98] sm:$0xff]
        %v4567 = vld [vmem:[#allocation50 + $0xca0] sm:$0xff]
        %v4568 = vld [vmem:[#allocation50 + $0xca8] sm:$0xff]
        %v4569 = vld [vmem:[#allocation50 + $0xcb0] sm:$0xff]
        %v4570 = vld [vmem:[#allocation50 + $0xcb8] sm:$0xff]
        %v4571 = vld [vmem:[#allocation50 + $0xcc0] sm:$0xff]
        %v4572 = vld [vmem:[#allocation50 + $0xcc8] sm:$0xff]
        %v4573 = vld [vmem:[#allocation50 + $0xcd0] sm:$0xff]
        %v4574 = vld [vmem:[#allocation50 + $0xcd8] sm:$0xff]
        %v4575 = vld [vmem:[#allocation50 + $0xce0] sm:$0xff]
        %v4576 = vld [vmem:[#allocation50 + $0xce8] sm:$0xff]
        %v4577 = vld [vmem:[#allocation50 + $0xcf0] sm:$0xff]
        %v4578 = vld [vmem:[#allocation50 + $0xcf8] sm:$0xff]
        %v4579 = vld [vmem:[#allocation50 + $0xd00] sm:$0xff]
        %v4580 = vld [vmem:[#allocation50 + $0xd08] sm:$0xff]
        %v4581 = vld [vmem:[#allocation50 + $0xd10] sm:$0xff]
        %v4582 = vld [vmem:[#allocation50 + $0xd18] sm:$0xff]
        %v4583 = vld [vmem:[#allocation50 + $0xd20] sm:$0xff]
        %v4584 = vld [vmem:[#allocation50 + $0xd28] sm:$0xff]
        %v4585 = vld [vmem:[#allocation50 + $0xd30] sm:$0xff]
        %v4586 = vld [vmem:[#allocation50 + $0xd38] sm:$0xff]
        %v4587 = vld [vmem:[#allocation50 + $0xd40] sm:$0xff]
        %v4588 = vld [vmem:[#allocation50 + $0xd48] sm:$0xff]
        %v4589 = vld [vmem:[#allocation50 + $0xd50] sm:$0xff]
        %v4590 = vld [vmem:[#allocation50 + $0xd58] sm:$0xff]
        %v4591 = vld [vmem:[#allocation50 + $0xd60] sm:$0xff]
        %v4592 = vld [vmem:[#allocation50 + $0xd68] sm:$0xff]
        %v4593 = vld [vmem:[#allocation50 + $0xd70] sm:$0xff]
        %v4594 = vld [vmem:[#allocation50 + $0xd78] sm:$0xff]
        %v4595 = vld [vmem:[#allocation50 + $0xd80] sm:$0xff]
        %v4596 = vld [vmem:[#allocation50 + $0xd88] sm:$0xff]
        %v4597 = vld [vmem:[#allocation50 + $0xd90] sm:$0xff]
        %v4598 = vld [vmem:[#allocation50 + $0xd98] sm:$0xff]
        %v4599 = vld [vmem:[#allocation50 + $0xda0] sm:$0xff]
        %v4600 = vld [vmem:[#allocation50 + $0xda8] sm:$0xff]
        %v4601 = vld [vmem:[#allocation50 + $0xdb0] sm:$0xff]
        %v4602 = vld [vmem:[#allocation50 + $0xdb8] sm:$0xff]
        %v4603 = vld [vmem:[#allocation50 + $0xdc0] sm:$0xff]
        %v4604 = vld [vmem:[#allocation50 + $0xdc8] sm:$0xff]
        %v4605 = vld [vmem:[#allocation50 + $0xdd0] sm:$0xff]
        %v4606 = vld [vmem:[#allocation50 + $0xdd8] sm:$0xff]
        %v4607 = vld [vmem:[#allocation50 + $0xde0] sm:$0xff]
        %v4608 = vld [vmem:[#allocation50 + $0xde8] sm:$0xff]
        %v4609 = vld [vmem:[#allocation50 + $0xdf0] sm:$0xff]
        %v4610 = vld [vmem:[#allocation50 + $0xdf8] sm:$0xff]
        %v4611 = vld [vmem:[#allocation50 + $0xe00] sm:$0xff]
        %v4612 = vld [vmem:[#allocation50 + $0xe08] sm:$0xff]
        %v4613 = vld [vmem:[#allocation50 + $0xe10] sm:$0xff]
        %v4614 = vld [vmem:[#allocation50 + $0xe18] sm:$0xff]
        %v4615 = vld [vmem:[#allocation50 + $0xe20] sm:$0xff]
        %v4616 = vld [vmem:[#allocation50 + $0xe28] sm:$0xff]
        %v4617 = vld [vmem:[#allocation50 + $0xe30] sm:$0xff]
        %v4618 = vld [vmem:[#allocation50 + $0xe38] sm:$0xff]
        %v4619 = vld [vmem:[#allocation50 + $0xe40] sm:$0xff]
        %v4620 = vld [vmem:[#allocation50 + $0xe48] sm:$0xff]
        %v4621 = vld [vmem:[#allocation50 + $0xe50] sm:$0xff]
        %v4622 = vld [vmem:[#allocation50 + $0xe58] sm:$0xff]
        %v4623 = vld [vmem:[#allocation50 + $0xe60] sm:$0xff]
        %v4624 = vld [vmem:[#allocation50 + $0xe68] sm:$0xff]
        %v4625 = vld [vmem:[#allocation50 + $0xe70] sm:$0xff]
        %v4626 = vld [vmem:[#allocation50 + $0xe78] sm:$0xff]
        %v4627 = vld [vmem:[#allocation50 + $0xe80] sm:$0xff]
        %v4628 = vld [vmem:[#allocation50 + $0xe88] sm:$0xff]
        %v4629 = vld [vmem:[#allocation50 + $0xe90] sm:$0xff]
        %v4630 = vld [vmem:[#allocation50 + $0xe98] sm:$0xff]
        %v4631 = vld [vmem:[#allocation50 + $0xea0] sm:$0xff]
        %v4632 = vld [vmem:[#allocation50 + $0xea8] sm:$0xff]
        %v4633 = vld [vmem:[#allocation50 + $0xeb0] sm:$0xff]
        %v4634 = vld [vmem:[#allocation50 + $0xeb8] sm:$0xff]
        %v4635 = vld [vmem:[#allocation50 + $0xec0] sm:$0xff]
        %v4636 = vld [vmem:[#allocation50 + $0xec8] sm:$0xff]
        %v4637 = vld [vmem:[#allocation50 + $0xed0] sm:$0xff]
        %v4638 = vld [vmem:[#allocation50 + $0xed8] sm:$0xff]
        %v4639 = vld [vmem:[#allocation50 + $0xee0] sm:$0xff]
        %v4640 = vld [vmem:[#allocation50 + $0xee8] sm:$0xff]
        %v4641 = vld [vmem:[#allocation50 + $0xef0] sm:$0xff]
        %v4642 = vld [vmem:[#allocation50 + $0xef8] sm:$0xff]
        %v4643 = vld [vmem:[#allocation50 + $0xf00] sm:$0xff]
        %v4644 = vld [vmem:[#allocation50 + $0xf08] sm:$0xff]
        %v4645 = vld [vmem:[#allocation50 + $0xf10] sm:$0xff]
        %v4646 = vld [vmem:[#allocation50 + $0xf18] sm:$0xff]
        %v4647 = vld [vmem:[#allocation50 + $0xf20] sm:$0xff]
        %v4648 = vld [vmem:[#allocation50 + $0xf28] sm:$0xff]
        %v4649 = vld [vmem:[#allocation50 + $0xf30] sm:$0xff]
        %v4650 = vld [vmem:[#allocation50 + $0xf38] sm:$0xff]
        %v4651 = vld [vmem:[#allocation50 + $0xf40] sm:$0xff]
        %v4652 = vld [vmem:[#allocation50 + $0xf48] sm:$0xff]
        %v4653 = vld [vmem:[#allocation50 + $0xf50] sm:$0xff]
        %v4654 = vld [vmem:[#allocation50 + $0xf58] sm:$0xff]
        %v4655 = vld [vmem:[#allocation50 + $0xf60] sm:$0xff]
        %v4656 = vld [vmem:[#allocation50 + $0xf68] sm:$0xff]
        %v4657 = vld [vmem:[#allocation50 + $0xf70] sm:$0xff]
        %v4658 = vld [vmem:[#allocation50 + $0xf78] sm:$0xff]
        %v4659 = vld [vmem:[#allocation50 + $0xf80] sm:$0xff]
        %v4660 = vld [vmem:[#allocation50 + $0xf88] sm:$0xff]
        %v4661 = vld [vmem:[#allocation50 + $0xf90] sm:$0xff]
        %v4662 = vld [vmem:[#allocation50 + $0xf98] sm:$0xff]
        %v4663 = vld [vmem:[#allocation50 + $0xfa0] sm:$0xff]
        %v4664 = vld [vmem:[#allocation50 + $0xfa8] sm:$0xff]
        %v4665 = vld [vmem:[#allocation50 + $0xfb0] sm:$0xff]
        %v4666 = vld [vmem:[#allocation50 + $0xfb8] sm:$0xff]
        %v4667 = vld [vmem:[#allocation50 + $0xfc0] sm:$0xff]
        %v4668 = vld [vmem:[#allocation50 + $0xfc8] sm:$0xff]
        %v4669 = vld [vmem:[#allocation50 + $0xfd0] sm:$0xff]
        %v4670 = vld [vmem:[#allocation50 + $0xfd8] sm:$0xff]
        %v4671 = vld [vmem:[#allocation50 + $0xfe0] sm:$0xff]
        %v4672 = vld [vmem:[#allocation50 + $0xfe8] sm:$0xff]
        %v4673 = vld [vmem:[#allocation50 + $0xff0] sm:$0xff]
        %v4674 = vld [vmem:[#allocation50 + $0xff8] sm:$0xff]
        %v4675 = vld [vmem:[#allocation52] sm:$0xff]
        %v4677 = vperm.slane %v4675, 0
        %v4678 = vperm.slane %v4675, 1
        %v4679 = vperm.slane %v4675, 2
        %v4680 = vperm.slane %v4675, 3
        %v4681 = vperm.slane %v4675, 4
        %v4682 = vperm.slane %v4675, 5
        %v4683 = vperm.slane %v4675, 6
        %v4684 = vperm.slane %v4675, 7
        %4693 = vmatpush.msra.mxu0 %v4283
        %4694 = vmatpush.msra.mxu0 %v4275
        %4695 = vmatpush.msra.mxu0 %v4267
        %4696 = vmatpush.msra.mxu0 %v4259
        %4697 = vmatpush.msra.mxu0 %v4251
        %4698 = vmatpush.msra.mxu0 %v4243
        %4699 = vmatpush.msra.mxu0 %v4235
        %4700 = vmatpush.msra.mxu0 %v4227
        %4701 = vmatpush.msra.mxu0 %v4219
        %4702 = vmatpush.msra.mxu0 %v4211
        %4703 = vmatpush.msra.mxu0 %v4203
        %4704 = vmatpush.msra.mxu0 %v4195
        %4705 = vmatpush.msra.mxu0 %v4187
        %4706 = vmatpush.msra.mxu0 %v4179
        %4707 = vmatpush.msra.mxu0 %v4171
        %4708 = vmatpush.msra.mxu0 %v4163
        %4709 = vmatmul.f32.gmra.mxu0 %v4159
        %v4710 = vpop.f32.mrf.mxu0
        %v4711 = vadd.f32 %v4677, %v4710
        %4712 = vdwg.mxu0
        %4713 = vmatpush.msra.mxu0 %v4411
        %4714 = vmatpush.msra.mxu0 %v4403
        %4715 = vmatpush.msra.mxu0 %v4395
        %4716 = vmatpush.msra.mxu0 %v4387
        %4717 = vmatpush.msra.mxu0 %v4379
        %4718 = vmatpush.msra.mxu0 %v4371
        %4719 = vmatpush.msra.mxu0 %v4363
        %4720 = vmatpush.msra.mxu0 %v4355
        %4721 = vmatpush.msra.mxu0 %v4347
        %4722 = vmatpush.msra.mxu0 %v4339
        %4723 = vmatpush.msra.mxu0 %v4331
        %4724 = vmatpush.msra.mxu0 %v4323
        %4725 = vmatpush.msra.mxu0 %v4315
        %4726 = vmatpush.msra.mxu0 %v4307
        %4727 = vmatpush.msra.mxu0 %v4299
        %4728 = vmatpush.msra.mxu0 %v4291
        %4729 = vmatmul.f32.gmra.mxu0 %v4160
        %v4730 = vpop.f32.mrf.mxu0
        %v4731 = vadd.f32 %v4711, %v4730
        %4732 = vdwg.mxu0
        %4733 = vmatpush.msra.mxu0 %v4539
        %4734 = vmatpush.msra.mxu0 %v4531
        %4735 = vmatpush.msra.mxu0 %v4523
        %4736 = vmatpush.msra.mxu0 %v4515
        %4737 = vmatpush.msra.mxu0 %v4507
        %4738 = vmatpush.msra.mxu0 %v4499
        %4739 = vmatpush.msra.mxu0 %v4491
        %4740 = vmatpush.msra.mxu0 %v4483
        %4741 = vmatpush.msra.mxu0 %v4475
        %4742 = vmatpush.msra.mxu0 %v4467
        %4743 = vmatpush.msra.mxu0 %v4459
        %4744 = vmatpush.msra.mxu0 %v4451
        %4745 = vmatpush.msra.mxu0 %v4443
        %4746 = vmatpush.msra.mxu0 %v4435
        %4747 = vmatpush.msra.mxu0 %v4427
        %4748 = vmatpush.msra.mxu0 %v4419
        %4749 = vmatmul.f32.gmra.mxu0 %v4161
        %v4750 = vpop.f32.mrf.mxu0
        %v4751 = vadd.f32 %v4731, %v4750
        %4752 = vdwg.mxu0
        %4753 = vmatpush.msra.mxu0 %v4667
        %4754 = vmatpush.msra.mxu0 %v4659
        %4755 = vmatpush.msra.mxu0 %v4651
        %4756 = vmatpush.msra.mxu0 %v4643
        %4757 = vmatpush.msra.mxu0 %v4635
        %4758 = vmatpush.msra.mxu0 %v4627
        %4759 = vmatpush.msra.mxu0 %v4619
        %4760 = vmatpush.msra.mxu0 %v4611
        %4761 = vmatpush.msra.mxu0 %v4603
        %4762 = vmatpush.msra.mxu0 %v4595
        %4763 = vmatpush.msra.mxu0 %v4587
        %4764 = vmatpush.msra.mxu0 %v4579
        %4765 = vmatpush.msra.mxu0 %v4571
        %4766 = vmatpush.msra.mxu0 %v4563
        %4767 = vmatpush.msra.mxu0 %v4555
        %4768 = vmatpush.msra.mxu0 %v4547
        %4769 = vmatmul.f32.gmra.mxu0 %v4162
        %v4770 = vpop.f32.mrf.mxu0
        %v4771 = vadd.f32 %v4751, %v4770
        %4772 = vdwg.mxu0
        %4773 = vmatpush.msra.mxu0 %v4284
        %4774 = vmatpush.msra.mxu0 %v4276
        %4775 = vmatpush.msra.mxu0 %v4268
        %4776 = vmatpush.msra.mxu0 %v4260
        %4777 = vmatpush.msra.mxu0 %v4252
        %4778 = vmatpush.msra.mxu0 %v4244
        %4779 = vmatpush.msra.mxu0 %v4236
        %4780 = vmatpush.msra.mxu0 %v4228
        %4781 = vmatpush.msra.mxu0 %v4220
        %4782 = vmatpush.msra.mxu0 %v4212
        %4783 = vmatpush.msra.mxu0 %v4204
        %4784 = vmatpush.msra.mxu0 %v4196
        %4785 = vmatpush.msra.mxu0 %v4188
        %4786 = vmatpush.msra.mxu0 %v4180
        %4787 = vmatpush.msra.mxu0 %v4172
        %4788 = vmatpush.msra.mxu0 %v4164
        %4789 = vmatmul.f32.gmra.mxu0 %v4159
        %v4790 = vpop.f32.mrf.mxu0
        %v4791 = vadd.f32 %v4678, %v4790
        %4792 = vdwg.mxu0
        %4793 = vmatpush.msra.mxu0 %v4412
        %4794 = vmatpush.msra.mxu0 %v4404
        %4795 = vmatpush.msra.mxu0 %v4396
        %4796 = vmatpush.msra.mxu0 %v4388
        %4797 = vmatpush.msra.mxu0 %v4380
        %4798 = vmatpush.msra.mxu0 %v4372
        %4799 = vmatpush.msra.mxu0 %v4364
        %4800 = vmatpush.msra.mxu0 %v4356
        %4801 = vmatpush.msra.mxu0 %v4348
        %4802 = vmatpush.msra.mxu0 %v4340
        %4803 = vmatpush.msra.mxu0 %v4332
        %4804 = vmatpush.msra.mxu0 %v4324
        %4805 = vmatpush.msra.mxu0 %v4316
        %4806 = vmatpush.msra.mxu0 %v4308
        %4807 = vmatpush.msra.mxu0 %v4300
        %4808 = vmatpush.msra.mxu0 %v4292
        %4809 = vmatmul.f32.gmra.mxu0 %v4160
        %v4810 = vpop.f32.mrf.mxu0
        %v4811 = vadd.f32 %v4791, %v4810
        %4812 = vdwg.mxu0
        %4813 = vmatpush.msra.mxu0 %v4540
        %4814 = vmatpush.msra.mxu0 %v4532
        %4815 = vmatpush.msra.mxu0 %v4524
        %4816 = vmatpush.msra.mxu0 %v4516
        %4817 = vmatpush.msra.mxu0 %v4508
        %4818 = vmatpush.msra.mxu0 %v4500
        %4819 = vmatpush.msra.mxu0 %v4492
        %4820 = vmatpush.msra.mxu0 %v4484
        %4821 = vmatpush.msra.mxu0 %v4476
        %4822 = vmatpush.msra.mxu0 %v4468
        %4823 = vmatpush.msra.mxu0 %v4460
        %4824 = vmatpush.msra.mxu0 %v4452
        %4825 = vmatpush.msra.mxu0 %v4444
        %4826 = vmatpush.msra.mxu0 %v4436
        %4827 = vmatpush.msra.mxu0 %v4428
        %4828 = vmatpush.msra.mxu0 %v4420
        %4829 = vmatmul.f32.gmra.mxu0 %v4161
        %v4830 = vpop.f32.mrf.mxu0
        %v4831 = vadd.f32 %v4811, %v4830
        %4832 = vdwg.mxu0
        %4833 = vmatpush.msra.mxu0 %v4668
        %4834 = vmatpush.msra.mxu0 %v4660
        %4835 = vmatpush.msra.mxu0 %v4652
        %4836 = vmatpush.msra.mxu0 %v4644
        %4837 = vmatpush.msra.mxu0 %v4636
        %4838 = vmatpush.msra.mxu0 %v4628
        %4839 = vmatpush.msra.mxu0 %v4620
        %4840 = vmatpush.msra.mxu0 %v4612
        %4841 = vmatpush.msra.mxu0 %v4604
        %4842 = vmatpush.msra.mxu0 %v4596
        %4843 = vmatpush.msra.mxu0 %v4588
        %4844 = vmatpush.msra.mxu0 %v4580
        %4845 = vmatpush.msra.mxu0 %v4572
        %4846 = vmatpush.msra.mxu0 %v4564
        %4847 = vmatpush.msra.mxu0 %v4556
        %4848 = vmatpush.msra.mxu0 %v4548
        %4849 = vmatmul.f32.gmra.mxu0 %v4162
        %v4850 = vpop.f32.mrf.mxu0
        %v4851 = vadd.f32 %v4831, %v4850
        %4852 = vdwg.mxu0
        %4853 = vmatpush.msra.mxu0 %v4285
        %4854 = vmatpush.msra.mxu0 %v4277
        %4855 = vmatpush.msra.mxu0 %v4269
        %4856 = vmatpush.msra.mxu0 %v4261
        %4857 = vmatpush.msra.mxu0 %v4253
        %4858 = vmatpush.msra.mxu0 %v4245
        %4859 = vmatpush.msra.mxu0 %v4237
        %4860 = vmatpush.msra.mxu0 %v4229
        %4861 = vmatpush.msra.mxu0 %v4221
        %4862 = vmatpush.msra.mxu0 %v4213
        %4863 = vmatpush.msra.mxu0 %v4205
        %4864 = vmatpush.msra.mxu0 %v4197
        %4865 = vmatpush.msra.mxu0 %v4189
        %4866 = vmatpush.msra.mxu0 %v4181
        %4867 = vmatpush.msra.mxu0 %v4173
        %4868 = vmatpush.msra.mxu0 %v4165
        %4869 = vmatmul.f32.gmra.mxu0 %v4159
        %v4870 = vpop.f32.mrf.mxu0
        %v4871 = vadd.f32 %v4679, %v4870
        %4872 = vdwg.mxu0
        %4873 = vmatpush.msra.mxu0 %v4413
        %4874 = vmatpush.msra.mxu0 %v4405
        %4875 = vmatpush.msra.mxu0 %v4397
        %4876 = vmatpush.msra.mxu0 %v4389
        %4877 = vmatpush.msra.mxu0 %v4381
        %4878 = vmatpush.msra.mxu0 %v4373
        %4879 = vmatpush.msra.mxu0 %v4365
        %4880 = vmatpush.msra.mxu0 %v4357
        %4881 = vmatpush.msra.mxu0 %v4349
        %4882 = vmatpush.msra.mxu0 %v4341
        %4883 = vmatpush.msra.mxu0 %v4333
        %4884 = vmatpush.msra.mxu0 %v4325
        %4885 = vmatpush.msra.mxu0 %v4317
        %4886 = vmatpush.msra.mxu0 %v4309
        %4887 = vmatpush.msra.mxu0 %v4301
        %4888 = vmatpush.msra.mxu0 %v4293
        %4889 = vmatmul.f32.gmra.mxu0 %v4160
        %v4890 = vpop.f32.mrf.mxu0
        %v4891 = vadd.f32 %v4871, %v4890
        %4892 = vdwg.mxu0
        %4893 = vmatpush.msra.mxu0 %v4541
        %4894 = vmatpush.msra.mxu0 %v4533
        %4895 = vmatpush.msra.mxu0 %v4525
        %4896 = vmatpush.msra.mxu0 %v4517
        %4897 = vmatpush.msra.mxu0 %v4509
        %4898 = vmatpush.msra.mxu0 %v4501
        %4899 = vmatpush.msra.mxu0 %v4493
        %4900 = vmatpush.msra.mxu0 %v4485
        %4901 = vmatpush.msra.mxu0 %v4477
        %4902 = vmatpush.msra.mxu0 %v4469
        %4903 = vmatpush.msra.mxu0 %v4461
        %4904 = vmatpush.msra.mxu0 %v4453
        %4905 = vmatpush.msra.mxu0 %v4445
        %4906 = vmatpush.msra.mxu0 %v4437
        %4907 = vmatpush.msra.mxu0 %v4429
        %4908 = vmatpush.msra.mxu0 %v4421
        %4909 = vmatmul.f32.gmra.mxu0 %v4161
        %v4910 = vpop.f32.mrf.mxu0
        %v4911 = vadd.f32 %v4891, %v4910
        %4912 = vdwg.mxu0
        %4913 = vmatpush.msra.mxu0 %v4669
        %4914 = vmatpush.msra.mxu0 %v4661
        %4915 = vmatpush.msra.mxu0 %v4653
        %4916 = vmatpush.msra.mxu0 %v4645
        %4917 = vmatpush.msra.mxu0 %v4637
        %4918 = vmatpush.msra.mxu0 %v4629
        %4919 = vmatpush.msra.mxu0 %v4621
        %4920 = vmatpush.msra.mxu0 %v4613
        %4921 = vmatpush.msra.mxu0 %v4605
        %4922 = vmatpush.msra.mxu0 %v4597
        %4923 = vmatpush.msra.mxu0 %v4589
        %4924 = vmatpush.msra.mxu0 %v4581
        %4925 = vmatpush.msra.mxu0 %v4573
        %4926 = vmatpush.msra.mxu0 %v4565
        %4927 = vmatpush.msra.mxu0 %v4557
        %4928 = vmatpush.msra.mxu0 %v4549
        %4929 = vmatmul.f32.gmra.mxu0 %v4162
        %v4930 = vpop.f32.mrf.mxu0
        %v4931 = vadd.f32 %v4911, %v4930
        %4932 = vdwg.mxu0
        %4933 = vmatpush.msra.mxu0 %v4286
        %4934 = vmatpush.msra.mxu0 %v4278
        %4935 = vmatpush.msra.mxu0 %v4270
        %4936 = vmatpush.msra.mxu0 %v4262
        %4937 = vmatpush.msra.mxu0 %v4254
        %4938 = vmatpush.msra.mxu0 %v4246
        %4939 = vmatpush.msra.mxu0 %v4238
        %4940 = vmatpush.msra.mxu0 %v4230
        %4941 = vmatpush.msra.mxu0 %v4222
        %4942 = vmatpush.msra.mxu0 %v4214
        %4943 = vmatpush.msra.mxu0 %v4206
        %4944 = vmatpush.msra.mxu0 %v4198
        %4945 = vmatpush.msra.mxu0 %v4190
        %4946 = vmatpush.msra.mxu0 %v4182
        %4947 = vmatpush.msra.mxu0 %v4174
        %4948 = vmatpush.msra.mxu0 %v4166
        %4949 = vmatmul.f32.gmra.mxu0 %v4159
        %v4950 = vpop.f32.mrf.mxu0
        %v4951 = vadd.f32 %v4680, %v4950
        %4952 = vdwg.mxu0
        %4953 = vmatpush.msra.mxu0 %v4414
        %4954 = vmatpush.msra.mxu0 %v4406
        %4955 = vmatpush.msra.mxu0 %v4398
        %4956 = vmatpush.msra.mxu0 %v4390
        %4957 = vmatpush.msra.mxu0 %v4382
        %4958 = vmatpush.msra.mxu0 %v4374
        %4959 = vmatpush.msra.mxu0 %v4366
        %4960 = vmatpush.msra.mxu0 %v4358
        %4961 = vmatpush.msra.mxu0 %v4350
        %4962 = vmatpush.msra.mxu0 %v4342
        %4963 = vmatpush.msra.mxu0 %v4334
        %4964 = vmatpush.msra.mxu0 %v4326
        %4965 = vmatpush.msra.mxu0 %v4318
        %4966 = vmatpush.msra.mxu0 %v4310
        %4967 = vmatpush.msra.mxu0 %v4302
        %4968 = vmatpush.msra.mxu0 %v4294
        %4969 = vmatmul.f32.gmra.mxu0 %v4160
        %v4970 = vpop.f32.mrf.mxu0
        %v4971 = vadd.f32 %v4951, %v4970
        %4972 = vdwg.mxu0
        %4973 = vmatpush.msra.mxu0 %v4542
        %4974 = vmatpush.msra.mxu0 %v4534
        %4975 = vmatpush.msra.mxu0 %v4526
        %4976 = vmatpush.msra.mxu0 %v4518
        %4977 = vmatpush.msra.mxu0 %v4510
        %4978 = vmatpush.msra.mxu0 %v4502
        %4979 = vmatpush.msra.mxu0 %v4494
        %4980 = vmatpush.msra.mxu0 %v4486
        %4981 = vmatpush.msra.mxu0 %v4478
        %4982 = vmatpush.msra.mxu0 %v4470
        %4983 = vmatpush.msra.mxu0 %v4462
        %4984 = vmatpush.msra.mxu0 %v4454
        %4985 = vmatpush.msra.mxu0 %v4446
        %4986 = vmatpush.msra.mxu0 %v4438
        %4987 = vmatpush.msra.mxu0 %v4430
        %4988 = vmatpush.msra.mxu0 %v4422
        %4989 = vmatmul.f32.gmra.mxu0 %v4161
        %v4990 = vpop.f32.mrf.mxu0
        %v4991 = vadd.f32 %v4971, %v4990
        %4992 = vdwg.mxu0
        %4993 = vmatpush.msra.mxu0 %v4670
        %4994 = vmatpush.msra.mxu0 %v4662
        %4995 = vmatpush.msra.mxu0 %v4654
        %4996 = vmatpush.msra.mxu0 %v4646
        %4997 = vmatpush.msra.mxu0 %v4638
        %4998 = vmatpush.msra.mxu0 %v4630
        %4999 = vmatpush.msra.mxu0 %v4622
        %5000 = vmatpush.msra.mxu0 %v4614
        %5001 = vmatpush.msra.mxu0 %v4606
        %5002 = vmatpush.msra.mxu0 %v4598
        %5003 = vmatpush.msra.mxu0 %v4590
        %5004 = vmatpush.msra.mxu0 %v4582
        %5005 = vmatpush.msra.mxu0 %v4574
        %5006 = vmatpush.msra.mxu0 %v4566
        %5007 = vmatpush.msra.mxu0 %v4558
        %5008 = vmatpush.msra.mxu0 %v4550
        %5009 = vmatmul.f32.gmra.mxu0 %v4162
        %v5010 = vpop.f32.mrf.mxu0
        %v5011 = vadd.f32 %v4991, %v5010
        %5012 = vdwg.mxu0
        %5013 = vmatpush.msra.mxu0 %v4287
        %5014 = vmatpush.msra.mxu0 %v4279
        %5015 = vmatpush.msra.mxu0 %v4271
        %5016 = vmatpush.msra.mxu0 %v4263
        %5017 = vmatpush.msra.mxu0 %v4255
        %5018 = vmatpush.msra.mxu0 %v4247
        %5019 = vmatpush.msra.mxu0 %v4239
        %5020 = vmatpush.msra.mxu0 %v4231
        %5021 = vmatpush.msra.mxu0 %v4223
        %5022 = vmatpush.msra.mxu0 %v4215
        %5023 = vmatpush.msra.mxu0 %v4207
        %5024 = vmatpush.msra.mxu0 %v4199
        %5025 = vmatpush.msra.mxu0 %v4191
        %5026 = vmatpush.msra.mxu0 %v4183
        %5027 = vmatpush.msra.mxu0 %v4175
        %5028 = vmatpush.msra.mxu0 %v4167
        %5029 = vmatmul.f32.gmra.mxu0 %v4159
        %v5030 = vpop.f32.mrf.mxu0
        %v5031 = vadd.f32 %v4681, %v5030
        %5032 = vdwg.mxu0
        %5033 = vmatpush.msra.mxu0 %v4415
        %5034 = vmatpush.msra.mxu0 %v4407
        %5035 = vmatpush.msra.mxu0 %v4399
        %5036 = vmatpush.msra.mxu0 %v4391
        %5037 = vmatpush.msra.mxu0 %v4383
        %5038 = vmatpush.msra.mxu0 %v4375
        %5039 = vmatpush.msra.mxu0 %v4367
        %5040 = vmatpush.msra.mxu0 %v4359
        %5041 = vmatpush.msra.mxu0 %v4351
        %5042 = vmatpush.msra.mxu0 %v4343
        %5043 = vmatpush.msra.mxu0 %v4335
        %5044 = vmatpush.msra.mxu0 %v4327
        %5045 = vmatpush.msra.mxu0 %v4319
        %5046 = vmatpush.msra.mxu0 %v4311
        %5047 = vmatpush.msra.mxu0 %v4303
        %5048 = vmatpush.msra.mxu0 %v4295
        %5049 = vmatmul.f32.gmra.mxu0 %v4160
        %v5050 = vpop.f32.mrf.mxu0
        %v5051 = vadd.f32 %v5031, %v5050
        %5052 = vdwg.mxu0
        %5053 = vmatpush.msra.mxu0 %v4543
        %5054 = vmatpush.msra.mxu0 %v4535
        %5055 = vmatpush.msra.mxu0 %v4527
        %5056 = vmatpush.msra.mxu0 %v4519
        %5057 = vmatpush.msra.mxu0 %v4511
        %5058 = vmatpush.msra.mxu0 %v4503
        %5059 = vmatpush.msra.mxu0 %v4495
        %5060 = vmatpush.msra.mxu0 %v4487
        %5061 = vmatpush.msra.mxu0 %v4479
        %5062 = vmatpush.msra.mxu0 %v4471
        %5063 = vmatpush.msra.mxu0 %v4463
        %5064 = vmatpush.msra.mxu0 %v4455
        %5065 = vmatpush.msra.mxu0 %v4447
        %5066 = vmatpush.msra.mxu0 %v4439
        %5067 = vmatpush.msra.mxu0 %v4431
        %5068 = vmatpush.msra.mxu0 %v4423
        %5069 = vmatmul.f32.gmra.mxu0 %v4161
        %v5070 = vpop.f32.mrf.mxu0
        %v5071 = vadd.f32 %v5051, %v5070
        %5072 = vdwg.mxu0
        %5073 = vmatpush.msra.mxu0 %v4671
        %5074 = vmatpush.msra.mxu0 %v4663
        %5075 = vmatpush.msra.mxu0 %v4655
        %5076 = vmatpush.msra.mxu0 %v4647
        %5077 = vmatpush.msra.mxu0 %v4639
        %5078 = vmatpush.msra.mxu0 %v4631
        %5079 = vmatpush.msra.mxu0 %v4623
        %5080 = vmatpush.msra.mxu0 %v4615
        %5081 = vmatpush.msra.mxu0 %v4607
        %5082 = vmatpush.msra.mxu0 %v4599
        %5083 = vmatpush.msra.mxu0 %v4591
        %5084 = vmatpush.msra.mxu0 %v4583
        %5085 = vmatpush.msra.mxu0 %v4575
        %5086 = vmatpush.msra.mxu0 %v4567
        %5087 = vmatpush.msra.mxu0 %v4559
        %5088 = vmatpush.msra.mxu0 %v4551
        %5089 = vmatmul.f32.gmra.mxu0 %v4162
        %v5090 = vpop.f32.mrf.mxu0
        %v5091 = vadd.f32 %v5071, %v5090
        %5092 = vdwg.mxu0
        %5093 = vmatpush.msra.mxu0 %v4288
        %5094 = vmatpush.msra.mxu0 %v4280
        %5095 = vmatpush.msra.mxu0 %v4272
        %5096 = vmatpush.msra.mxu0 %v4264
        %5097 = vmatpush.msra.mxu0 %v4256
        %5098 = vmatpush.msra.mxu0 %v4248
        %5099 = vmatpush.msra.mxu0 %v4240
        %5100 = vmatpush.msra.mxu0 %v4232
        %5101 = vmatpush.msra.mxu0 %v4224
        %5102 = vmatpush.msra.mxu0 %v4216
        %5103 = vmatpush.msra.mxu0 %v4208
        %5104 = vmatpush.msra.mxu0 %v4200
        %5105 = vmatpush.msra.mxu0 %v4192
        %5106 = vmatpush.msra.mxu0 %v4184
        %5107 = vmatpush.msra.mxu0 %v4176
        %5108 = vmatpush.msra.mxu0 %v4168
        %5109 = vmatmul.f32.gmra.mxu0 %v4159
        %v5110 = vpop.f32.mrf.mxu0
        %v5111 = vadd.f32 %v4682, %v5110
        %5112 = vdwg.mxu0
        %5113 = vmatpush.msra.mxu0 %v4416
        %5114 = vmatpush.msra.mxu0 %v4408
        %5115 = vmatpush.msra.mxu0 %v4400
        %5116 = vmatpush.msra.mxu0 %v4392
        %5117 = vmatpush.msra.mxu0 %v4384
        %5118 = vmatpush.msra.mxu0 %v4376
        %5119 = vmatpush.msra.mxu0 %v4368
        %5120 = vmatpush.msra.mxu0 %v4360
        %5121 = vmatpush.msra.mxu0 %v4352
        %5122 = vmatpush.msra.mxu0 %v4344
        %5123 = vmatpush.msra.mxu0 %v4336
        %5124 = vmatpush.msra.mxu0 %v4328
        %5125 = vmatpush.msra.mxu0 %v4320
        %5126 = vmatpush.msra.mxu0 %v4312
        %5127 = vmatpush.msra.mxu0 %v4304
        %5128 = vmatpush.msra.mxu0 %v4296
        %5129 = vmatmul.f32.gmra.mxu0 %v4160
        %v5130 = vpop.f32.mrf.mxu0
        %v5131 = vadd.f32 %v5111, %v5130
        %5132 = vdwg.mxu0
        %5133 = vmatpush.msra.mxu0 %v4544
        %5134 = vmatpush.msra.mxu0 %v4536
        %5135 = vmatpush.msra.mxu0 %v4528
        %5136 = vmatpush.msra.mxu0 %v4520
        %5137 = vmatpush.msra.mxu0 %v4512
        %5138 = vmatpush.msra.mxu0 %v4504
        %5139 = vmatpush.msra.mxu0 %v4496
        %5140 = vmatpush.msra.mxu0 %v4488
        %5141 = vmatpush.msra.mxu0 %v4480
        %5142 = vmatpush.msra.mxu0 %v4472
        %5143 = vmatpush.msra.mxu0 %v4464
        %5144 = vmatpush.msra.mxu0 %v4456
        %5145 = vmatpush.msra.mxu0 %v4448
        %5146 = vmatpush.msra.mxu0 %v4440
        %5147 = vmatpush.msra.mxu0 %v4432
        %5148 = vmatpush.msra.mxu0 %v4424
        %5149 = vmatmul.f32.gmra.mxu0 %v4161
        %v5150 = vpop.f32.mrf.mxu0
        %v5151 = vadd.f32 %v5131, %v5150
        %5152 = vdwg.mxu0
        %5153 = vmatpush.msra.mxu0 %v4672
        %5154 = vmatpush.msra.mxu0 %v4664
        %5155 = vmatpush.msra.mxu0 %v4656
        %5156 = vmatpush.msra.mxu0 %v4648
        %5157 = vmatpush.msra.mxu0 %v4640
        %5158 = vmatpush.msra.mxu0 %v4632
        %5159 = vmatpush.msra.mxu0 %v4624
        %5160 = vmatpush.msra.mxu0 %v4616
        %5161 = vmatpush.msra.mxu0 %v4608
        %5162 = vmatpush.msra.mxu0 %v4600
        %5163 = vmatpush.msra.mxu0 %v4592
        %5164 = vmatpush.msra.mxu0 %v4584
        %5165 = vmatpush.msra.mxu0 %v4576
        %5166 = vmatpush.msra.mxu0 %v4568
        %5167 = vmatpush.msra.mxu0 %v4560
        %5168 = vmatpush.msra.mxu0 %v4552
        %5169 = vmatmul.f32.gmra.mxu0 %v4162
        %v5170 = vpop.f32.mrf.mxu0
        %v5171 = vadd.f32 %v5151, %v5170
        %5172 = vdwg.mxu0
        %5173 = vmatpush.msra.mxu0 %v4289
        %5174 = vmatpush.msra.mxu0 %v4281
        %5175 = vmatpush.msra.mxu0 %v4273
        %5176 = vmatpush.msra.mxu0 %v4265
        %5177 = vmatpush.msra.mxu0 %v4257
        %5178 = vmatpush.msra.mxu0 %v4249
        %5179 = vmatpush.msra.mxu0 %v4241
        %5180 = vmatpush.msra.mxu0 %v4233
        %5181 = vmatpush.msra.mxu0 %v4225
        %5182 = vmatpush.msra.mxu0 %v4217
        %5183 = vmatpush.msra.mxu0 %v4209
        %5184 = vmatpush.msra.mxu0 %v4201
        %5185 = vmatpush.msra.mxu0 %v4193
        %5186 = vmatpush.msra.mxu0 %v4185
        %5187 = vmatpush.msra.mxu0 %v4177
        %5188 = vmatpush.msra.mxu0 %v4169
        %5189 = vmatmul.f32.gmra.mxu0 %v4159
        %v5190 = vpop.f32.mrf.mxu0
        %v5191 = vadd.f32 %v4683, %v5190
        %5192 = vdwg.mxu0
        %5193 = vmatpush.msra.mxu0 %v4417
        %5194 = vmatpush.msra.mxu0 %v4409
        %5195 = vmatpush.msra.mxu0 %v4401
        %5196 = vmatpush.msra.mxu0 %v4393
        %5197 = vmatpush.msra.mxu0 %v4385
        %5198 = vmatpush.msra.mxu0 %v4377
        %5199 = vmatpush.msra.mxu0 %v4369
        %5200 = vmatpush.msra.mxu0 %v4361
        %5201 = vmatpush.msra.mxu0 %v4353
        %5202 = vmatpush.msra.mxu0 %v4345
        %5203 = vmatpush.msra.mxu0 %v4337
        %5204 = vmatpush.msra.mxu0 %v4329
        %5205 = vmatpush.msra.mxu0 %v4321
        %5206 = vmatpush.msra.mxu0 %v4313
        %5207 = vmatpush.msra.mxu0 %v4305
        %5208 = vmatpush.msra.mxu0 %v4297
        %5209 = vmatmul.f32.gmra.mxu0 %v4160
        %v5210 = vpop.f32.mrf.mxu0
        %v5211 = vadd.f32 %v5191, %v5210
        %5212 = vdwg.mxu0
        %5213 = vmatpush.msra.mxu0 %v4545
        %5214 = vmatpush.msra.mxu0 %v4537
        %5215 = vmatpush.msra.mxu0 %v4529
        %5216 = vmatpush.msra.mxu0 %v4521
        %5217 = vmatpush.msra.mxu0 %v4513
        %5218 = vmatpush.msra.mxu0 %v4505
        %5219 = vmatpush.msra.mxu0 %v4497
        %5220 = vmatpush.msra.mxu0 %v4489
        %5221 = vmatpush.msra.mxu0 %v4481
        %5222 = vmatpush.msra.mxu0 %v4473
        %5223 = vmatpush.msra.mxu0 %v4465
        %5224 = vmatpush.msra.mxu0 %v4457
        %5225 = vmatpush.msra.mxu0 %v4449
        %5226 = vmatpush.msra.mxu0 %v4441
        %5227 = vmatpush.msra.mxu0 %v4433
        %5228 = vmatpush.msra.mxu0 %v4425
        %5229 = vmatmul.f32.gmra.mxu0 %v4161
        %v5230 = vpop.f32.mrf.mxu0
        %v5231 = vadd.f32 %v5211, %v5230
        %5232 = vdwg.mxu0
        %5233 = vmatpush.msra.mxu0 %v4673
        %5234 = vmatpush.msra.mxu0 %v4665
        %5235 = vmatpush.msra.mxu0 %v4657
        %5236 = vmatpush.msra.mxu0 %v4649
        %5237 = vmatpush.msra.mxu0 %v4641
        %5238 = vmatpush.msra.mxu0 %v4633
        %5239 = vmatpush.msra.mxu0 %v4625
        %5240 = vmatpush.msra.mxu0 %v4617
        %5241 = vmatpush.msra.mxu0 %v4609
        %5242 = vmatpush.msra.mxu0 %v4601
        %5243 = vmatpush.msra.mxu0 %v4593
        %5244 = vmatpush.msra.mxu0 %v4585
        %5245 = vmatpush.msra.mxu0 %v4577
        %5246 = vmatpush.msra.mxu0 %v4569
        %5247 = vmatpush.msra.mxu0 %v4561
        %5248 = vmatpush.msra.mxu0 %v4553
        %5249 = vmatmul.f32.gmra.mxu0 %v4162
        %v5250 = vpop.f32.mrf.mxu0
        %v5251 = vadd.f32 %v5231, %v5250
        %5252 = vdwg.mxu0
        %5253 = vmatpush.msra.mxu0 %v4290
        %5254 = vmatpush.msra.mxu0 %v4282
        %5255 = vmatpush.msra.mxu0 %v4274
        %5256 = vmatpush.msra.mxu0 %v4266
        %5257 = vmatpush.msra.mxu0 %v4258
        %5258 = vmatpush.msra.mxu0 %v4250
        %5259 = vmatpush.msra.mxu0 %v4242
        %5260 = vmatpush.msra.mxu0 %v4234
        %5261 = vmatpush.msra.mxu0 %v4226
        %5262 = vmatpush.msra.mxu0 %v4218
        %5263 = vmatpush.msra.mxu0 %v4210
        %5264 = vmatpush.msra.mxu0 %v4202
        %5265 = vmatpush.msra.mxu0 %v4194
        %5266 = vmatpush.msra.mxu0 %v4186
        %5267 = vmatpush.msra.mxu0 %v4178
        %5268 = vmatpush.msra.mxu0 %v4170
        %5269 = vmatmul.f32.gmra.mxu0 %v4159
        %v5270 = vpop.f32.mrf.mxu0
        %v5271 = vadd.f32 %v4684, %v5270
        %5272 = vdwg.mxu0
        %5273 = vmatpush.msra.mxu0 %v4418
        %5274 = vmatpush.msra.mxu0 %v4410
        %5275 = vmatpush.msra.mxu0 %v4402
        %5276 = vmatpush.msra.mxu0 %v4394
        %5277 = vmatpush.msra.mxu0 %v4386
        %5278 = vmatpush.msra.mxu0 %v4378
        %5279 = vmatpush.msra.mxu0 %v4370
        %5280 = vmatpush.msra.mxu0 %v4362
        %5281 = vmatpush.msra.mxu0 %v4354
        %5282 = vmatpush.msra.mxu0 %v4346
        %5283 = vmatpush.msra.mxu0 %v4338
        %5284 = vmatpush.msra.mxu0 %v4330
        %5285 = vmatpush.msra.mxu0 %v4322
        %5286 = vmatpush.msra.mxu0 %v4314
        %5287 = vmatpush.msra.mxu0 %v4306
        %5288 = vmatpush.msra.mxu0 %v4298
        %5289 = vmatmul.f32.gmra.mxu0 %v4160
        %v5290 = vpop.f32.mrf.mxu0
        %v5291 = vadd.f32 %v5271, %v5290
        %5292 = vdwg.mxu0
        %5293 = vmatpush.msra.mxu0 %v4546
        %5294 = vmatpush.msra.mxu0 %v4538
        %5295 = vmatpush.msra.mxu0 %v4530
        %5296 = vmatpush.msra.mxu0 %v4522
        %5297 = vmatpush.msra.mxu0 %v4514
        %5298 = vmatpush.msra.mxu0 %v4506
        %5299 = vmatpush.msra.mxu0 %v4498
        %5300 = vmatpush.msra.mxu0 %v4490
        %5301 = vmatpush.msra.mxu0 %v4482
        %5302 = vmatpush.msra.mxu0 %v4474
        %5303 = vmatpush.msra.mxu0 %v4466
        %5304 = vmatpush.msra.mxu0 %v4458
        %5305 = vmatpush.msra.mxu0 %v4450
        %5306 = vmatpush.msra.mxu0 %v4442
        %5307 = vmatpush.msra.mxu0 %v4434
        %5308 = vmatpush.msra.mxu0 %v4426
        %5309 = vmatmul.f32.gmra.mxu0 %v4161
        %v5310 = vpop.f32.mrf.mxu0
        %v5311 = vadd.f32 %v5291, %v5310
        %5312 = vdwg.mxu0
        %5313 = vmatpush.msra.mxu0 %v4674
        %5314 = vmatpush.msra.mxu0 %v4666
        %5315 = vmatpush.msra.mxu0 %v4658
        %5316 = vmatpush.msra.mxu0 %v4650
        %5317 = vmatpush.msra.mxu0 %v4642
        %5318 = vmatpush.msra.mxu0 %v4634
        %5319 = vmatpush.msra.mxu0 %v4626
        %5320 = vmatpush.msra.mxu0 %v4618
        %5321 = vmatpush.msra.mxu0 %v4610
        %5322 = vmatpush.msra.mxu0 %v4602
        %5323 = vmatpush.msra.mxu0 %v4594
        %5324 = vmatpush.msra.mxu0 %v4586
        %5325 = vmatpush.msra.mxu0 %v4578
        %5326 = vmatpush.msra.mxu0 %v4570
        %5327 = vmatpush.msra.mxu0 %v4562
        %5328 = vmatpush.msra.mxu0 %v4554
        %5329 = vmatmul.f32.gmra.mxu0 %v4162
        %v5330 = vpop.f32.mrf.mxu0
        %v5331 = vadd.f32 %v5311, %v5330
        %5332 = vdwg.mxu0
        %v5333 = vld [vmem:[#allocation53] sm:$0xff]
        %v5334 = vld [vmem:[#allocation55] sm:$0xff]
        %v5335 = vmax.f32 %v4771, 0.0
        %v5336 = vmax.f32 %v4851, 0.0
        %v5337 = vmax.f32 %v4931, 0.0
        %v5338 = vmax.f32 %v5011, 0.0
        %v5339 = vmax.f32 %v5091, 0.0
        %v5340 = vmax.f32 %v5171, 0.0
        %v5341 = vmax.f32 %v5251, 0.0
        %v5342 = vmax.f32 %v5331, 0.0
        %v5344 = vperm.slane %v5333, 0
        %v5345 = vperm.slane %v5333, 1
        %v5346 = vperm.slane %v5333, 2
        %v5347 = vperm.slane %v5333, 3
        %v5348 = vperm.slane %v5333, 4
        %v5349 = vperm.slane %v5333, 5
        %v5350 = vperm.slane %v5333, 6
        %v5351 = vperm.slane %v5333, 7
        %v5360 = vmul.f32 %v5335, %v5344
        %v5361 = vmul.f32 %v5336, %v5345
        %v5362 = vmul.f32 %v5337, %v5346
        %v5363 = vmul.f32 %v5338, %v5347
        %v5364 = vmul.f32 %v5339, %v5348
        %v5365 = vmul.f32 %v5340, %v5349
        %v5366 = vmul.f32 %v5341, %v5350
        %v5367 = vmul.f32 %v5342, %v5351
        %v5369 = vperm.slane %v5334, 0
        %v5370 = vperm.slane %v5334, 1
        %v5371 = vperm.slane %v5334, 2
        %v5372 = vperm.slane %v5334, 3
        %v5373 = vperm.slane %v5334, 4
        %v5374 = vperm.slane %v5334, 5
        %v5375 = vperm.slane %v5334, 6
        %v5376 = vperm.slane %v5334, 7
        %v5385 = vadd.f32 %v5360, %v5369
        %v5386 = vadd.f32 %v5361, %v5370
        %v5387 = vadd.f32 %v5362, %v5371
        %v5388 = vadd.f32 %v5363, %v5372
        %v5389 = vadd.f32 %v5364, %v5373
        %v5390 = vadd.f32 %v5365, %v5374
        %v5391 = vadd.f32 %v5366, %v5375
        %v5392 = vadd.f32 %v5367, %v5376
        %v5393 = vld [vmem:[#allocation56] sm:$0xff]
        %v5394 = vld [vmem:[#allocation56 + $0x8] sm:$0xff]
        %v5395 = vld [vmem:[#allocation56 + $0x10] sm:$0xff]
        %v5396 = vld [vmem:[#allocation56 + $0x18] sm:$0xff]
        %v5397 = vld [vmem:[#allocation56 + $0x20] sm:$0xff]
        %v5398 = vld [vmem:[#allocation56 + $0x28] sm:$0xff]
        %v5399 = vld [vmem:[#allocation56 + $0x30] sm:$0xff]
        %v5400 = vld [vmem:[#allocation56 + $0x38] sm:$0xff]
        %v5401 = vld [vmem:[#allocation56 + $0x40] sm:$0xff]
        %v5402 = vld [vmem:[#allocation56 + $0x48] sm:$0xff]
        %v5403 = vld [vmem:[#allocation56 + $0x50] sm:$0xff]
        %v5404 = vld [vmem:[#allocation56 + $0x58] sm:$0xff]
        %v5405 = vld [vmem:[#allocation56 + $0x60] sm:$0xff]
        %v5406 = vld [vmem:[#allocation56 + $0x68] sm:$0xff]
        %v5407 = vld [vmem:[#allocation56 + $0x70] sm:$0xff]
        %v5408 = vld [vmem:[#allocation56 + $0x78] sm:$0xff]
        %v5409 = vld [vmem:[#allocation56 + $0x80] sm:$0xff]
        %v5410 = vld [vmem:[#allocation56 + $0x88] sm:$0xff]
        %v5411 = vld [vmem:[#allocation56 + $0x90] sm:$0xff]
        %v5412 = vld [vmem:[#allocation56 + $0x98] sm:$0xff]
        %v5413 = vld [vmem:[#allocation56 + $0xa0] sm:$0xff]
        %v5414 = vld [vmem:[#allocation56 + $0xa8] sm:$0xff]
        %v5415 = vld [vmem:[#allocation56 + $0xb0] sm:$0xff]
        %v5416 = vld [vmem:[#allocation56 + $0xb8] sm:$0xff]
        %v5417 = vld [vmem:[#allocation56 + $0xc0] sm:$0xff]
        %v5418 = vld [vmem:[#allocation56 + $0xc8] sm:$0xff]
        %v5419 = vld [vmem:[#allocation56 + $0xd0] sm:$0xff]
        %v5420 = vld [vmem:[#allocation56 + $0xd8] sm:$0xff]
        %v5421 = vld [vmem:[#allocation56 + $0xe0] sm:$0xff]
        %v5422 = vld [vmem:[#allocation56 + $0xe8] sm:$0xff]
        %v5423 = vld [vmem:[#allocation56 + $0xf0] sm:$0xff]
        %v5424 = vld [vmem:[#allocation56 + $0xf8] sm:$0xff]
        %v5425 = vld [vmem:[#allocation56 + $0x100] sm:$0xff]
        %v5426 = vld [vmem:[#allocation56 + $0x108] sm:$0xff]
        %v5427 = vld [vmem:[#allocation56 + $0x110] sm:$0xff]
        %v5428 = vld [vmem:[#allocation56 + $0x118] sm:$0xff]
        %v5429 = vld [vmem:[#allocation56 + $0x120] sm:$0xff]
        %v5430 = vld [vmem:[#allocation56 + $0x128] sm:$0xff]
        %v5431 = vld [vmem:[#allocation56 + $0x130] sm:$0xff]
        %v5432 = vld [vmem:[#allocation56 + $0x138] sm:$0xff]
        %v5433 = vld [vmem:[#allocation56 + $0x140] sm:$0xff]
        %v5434 = vld [vmem:[#allocation56 + $0x148] sm:$0xff]
        %v5435 = vld [vmem:[#allocation56 + $0x150] sm:$0xff]
        %v5436 = vld [vmem:[#allocation56 + $0x158] sm:$0xff]
        %v5437 = vld [vmem:[#allocation56 + $0x160] sm:$0xff]
        %v5438 = vld [vmem:[#allocation56 + $0x168] sm:$0xff]
        %v5439 = vld [vmem:[#allocation56 + $0x170] sm:$0xff]
        %v5440 = vld [vmem:[#allocation56 + $0x178] sm:$0xff]
        %v5441 = vld [vmem:[#allocation56 + $0x180] sm:$0xff]
        %v5442 = vld [vmem:[#allocation56 + $0x188] sm:$0xff]
        %v5443 = vld [vmem:[#allocation56 + $0x190] sm:$0xff]
        %v5444 = vld [vmem:[#allocation56 + $0x198] sm:$0xff]
        %v5445 = vld [vmem:[#allocation56 + $0x1a0] sm:$0xff]
        %v5446 = vld [vmem:[#allocation56 + $0x1a8] sm:$0xff]
        %v5447 = vld [vmem:[#allocation56 + $0x1b0] sm:$0xff]
        %v5448 = vld [vmem:[#allocation56 + $0x1b8] sm:$0xff]
        %v5449 = vld [vmem:[#allocation56 + $0x1c0] sm:$0xff]
        %v5450 = vld [vmem:[#allocation56 + $0x1c8] sm:$0xff]
        %v5451 = vld [vmem:[#allocation56 + $0x1d0] sm:$0xff]
        %v5452 = vld [vmem:[#allocation56 + $0x1d8] sm:$0xff]
        %v5453 = vld [vmem:[#allocation56 + $0x1e0] sm:$0xff]
        %v5454 = vld [vmem:[#allocation56 + $0x1e8] sm:$0xff]
        %v5455 = vld [vmem:[#allocation56 + $0x1f0] sm:$0xff]
        %v5456 = vld [vmem:[#allocation56 + $0x1f8] sm:$0xff]
        %v5457 = vld [vmem:[#allocation56 + $0x200] sm:$0xff]
        %v5458 = vld [vmem:[#allocation56 + $0x208] sm:$0xff]
        %v5459 = vld [vmem:[#allocation56 + $0x210] sm:$0xff]
        %v5460 = vld [vmem:[#allocation56 + $0x218] sm:$0xff]
        %v5461 = vld [vmem:[#allocation56 + $0x220] sm:$0xff]
        %v5462 = vld [vmem:[#allocation56 + $0x228] sm:$0xff]
        %v5463 = vld [vmem:[#allocation56 + $0x230] sm:$0xff]
        %v5464 = vld [vmem:[#allocation56 + $0x238] sm:$0xff]
        %v5465 = vld [vmem:[#allocation56 + $0x240] sm:$0xff]
        %v5466 = vld [vmem:[#allocation56 + $0x248] sm:$0xff]
        %v5467 = vld [vmem:[#allocation56 + $0x250] sm:$0xff]
        %v5468 = vld [vmem:[#allocation56 + $0x258] sm:$0xff]
        %v5469 = vld [vmem:[#allocation56 + $0x260] sm:$0xff]
        %v5470 = vld [vmem:[#allocation56 + $0x268] sm:$0xff]
        %v5471 = vld [vmem:[#allocation56 + $0x270] sm:$0xff]
        %v5472 = vld [vmem:[#allocation56 + $0x278] sm:$0xff]
        %v5473 = vld [vmem:[#allocation56 + $0x280] sm:$0xff]
        %v5474 = vld [vmem:[#allocation56 + $0x288] sm:$0xff]
        %v5475 = vld [vmem:[#allocation56 + $0x290] sm:$0xff]
        %v5476 = vld [vmem:[#allocation56 + $0x298] sm:$0xff]
        %v5477 = vld [vmem:[#allocation56 + $0x2a0] sm:$0xff]
        %v5478 = vld [vmem:[#allocation56 + $0x2a8] sm:$0xff]
        %v5479 = vld [vmem:[#allocation56 + $0x2b0] sm:$0xff]
        %v5480 = vld [vmem:[#allocation56 + $0x2b8] sm:$0xff]
        %v5481 = vld [vmem:[#allocation56 + $0x2c0] sm:$0xff]
        %v5482 = vld [vmem:[#allocation56 + $0x2c8] sm:$0xff]
        %v5483 = vld [vmem:[#allocation56 + $0x2d0] sm:$0xff]
        %v5484 = vld [vmem:[#allocation56 + $0x2d8] sm:$0xff]
        %v5485 = vld [vmem:[#allocation56 + $0x2e0] sm:$0xff]
        %v5486 = vld [vmem:[#allocation56 + $0x2e8] sm:$0xff]
        %v5487 = vld [vmem:[#allocation56 + $0x2f0] sm:$0xff]
        %v5488 = vld [vmem:[#allocation56 + $0x2f8] sm:$0xff]
        %v5489 = vld [vmem:[#allocation56 + $0x300] sm:$0xff]
        %v5490 = vld [vmem:[#allocation56 + $0x308] sm:$0xff]
        %v5491 = vld [vmem:[#allocation56 + $0x310] sm:$0xff]
        %v5492 = vld [vmem:[#allocation56 + $0x318] sm:$0xff]
        %v5493 = vld [vmem:[#allocation56 + $0x320] sm:$0xff]
        %v5494 = vld [vmem:[#allocation56 + $0x328] sm:$0xff]
        %v5495 = vld [vmem:[#allocation56 + $0x330] sm:$0xff]
        %v5496 = vld [vmem:[#allocation56 + $0x338] sm:$0xff]
        %v5497 = vld [vmem:[#allocation56 + $0x340] sm:$0xff]
        %v5498 = vld [vmem:[#allocation56 + $0x348] sm:$0xff]
        %v5499 = vld [vmem:[#allocation56 + $0x350] sm:$0xff]
        %v5500 = vld [vmem:[#allocation56 + $0x358] sm:$0xff]
        %v5501 = vld [vmem:[#allocation56 + $0x360] sm:$0xff]
        %v5502 = vld [vmem:[#allocation56 + $0x368] sm:$0xff]
        %v5503 = vld [vmem:[#allocation56 + $0x370] sm:$0xff]
        %v5504 = vld [vmem:[#allocation56 + $0x378] sm:$0xff]
        %v5505 = vld [vmem:[#allocation56 + $0x380] sm:$0xff]
        %v5506 = vld [vmem:[#allocation56 + $0x388] sm:$0xff]
        %v5507 = vld [vmem:[#allocation56 + $0x390] sm:$0xff]
        %v5508 = vld [vmem:[#allocation56 + $0x398] sm:$0xff]
        %v5509 = vld [vmem:[#allocation56 + $0x3a0] sm:$0xff]
        %v5510 = vld [vmem:[#allocation56 + $0x3a8] sm:$0xff]
        %v5511 = vld [vmem:[#allocation56 + $0x3b0] sm:$0xff]
        %v5512 = vld [vmem:[#allocation56 + $0x3b8] sm:$0xff]
        %v5513 = vld [vmem:[#allocation56 + $0x3c0] sm:$0xff]
        %v5514 = vld [vmem:[#allocation56 + $0x3c8] sm:$0xff]
        %v5515 = vld [vmem:[#allocation56 + $0x3d0] sm:$0xff]
        %v5516 = vld [vmem:[#allocation56 + $0x3d8] sm:$0xff]
        %v5517 = vld [vmem:[#allocation56 + $0x3e0] sm:$0xff]
        %v5518 = vld [vmem:[#allocation56 + $0x3e8] sm:$0xff]
        %v5519 = vld [vmem:[#allocation56 + $0x3f0] sm:$0xff]
        %v5520 = vld [vmem:[#allocation56 + $0x3f8] sm:$0xff]
        %v5521 = vld [vmem:[#allocation58] sm:$0x1]
        %v5523 = vperm.slane %v5521, 0
        %5525 = vmatpush.msra.mxu0 %v5408
        %5526 = vmatpush.msra.mxu0 %v5407
        %5527 = vmatpush.msra.mxu0 %v5406
        %5528 = vmatpush.msra.mxu0 %v5405
        %5529 = vmatpush.msra.mxu0 %v5404
        %5530 = vmatpush.msra.mxu0 %v5403
        %5531 = vmatpush.msra.mxu0 %v5402
        %5532 = vmatpush.msra.mxu0 %v5401
        %5533 = vmatpush.msra.mxu0 %v5400
        %5534 = vmatpush.msra.mxu0 %v5399
        %5535 = vmatpush.msra.mxu0 %v5398
        %5536 = vmatpush.msra.mxu0 %v5397
        %5537 = vmatpush.msra.mxu0 %v5396
        %5538 = vmatpush.msra.mxu0 %v5395
        %5539 = vmatpush.msra.mxu0 %v5394
        %5540 = vmatpush.msra.mxu0 %v5393
        %5541 = vmatmul.f32.gmra.mxu0 %v5385
        %v5542 = vpop.f32.mrf.mxu0
        %v5543 = vadd.f32 %v5523, %v5542
        %5544 = vdwg.mxu0
        %5545 = vmatpush.msra.mxu0 %v5424
        %5546 = vmatpush.msra.mxu0 %v5423
        %5547 = vmatpush.msra.mxu0 %v5422
        %5548 = vmatpush.msra.mxu0 %v5421
        %5549 = vmatpush.msra.mxu0 %v5420
        %5550 = vmatpush.msra.mxu0 %v5419
        %5551 = vmatpush.msra.mxu0 %v5418
        %5552 = vmatpush.msra.mxu0 %v5417
        %5553 = vmatpush.msra.mxu0 %v5416
        %5554 = vmatpush.msra.mxu0 %v5415
        %5555 = vmatpush.msra.mxu0 %v5414
        %5556 = vmatpush.msra.mxu0 %v5413
        %5557 = vmatpush.msra.mxu0 %v5412
        %5558 = vmatpush.msra.mxu0 %v5411
        %5559 = vmatpush.msra.mxu0 %v5410
        %5560 = vmatpush.msra.mxu0 %v5409
        %5561 = vmatmul.f32.gmra.mxu0 %v5386
        %v5562 = vpop.f32.mrf.mxu0
        %v5563 = vadd.f32 %v5543, %v5562
        %5564 = vdwg.mxu0
        %5565 = vmatpush.msra.mxu0 %v5440
        %5566 = vmatpush.msra.mxu0 %v5439
        %5567 = vmatpush.msra.mxu0 %v5438
        %5568 = vmatpush.msra.mxu0 %v5437
        %5569 = vmatpush.msra.mxu0 %v5436
        %5570 = vmatpush.msra.mxu0 %v5435
        %5571 = vmatpush.msra.mxu0 %v5434
        %5572 = vmatpush.msra.mxu0 %v5433
        %5573 = vmatpush.msra.mxu0 %v5432
        %5574 = vmatpush.msra.mxu0 %v5431
        %5575 = vmatpush.msra.mxu0 %v5430
        %5576 = vmatpush.msra.mxu0 %v5429
        %5577 = vmatpush.msra.mxu0 %v5428
        %5578 = vmatpush.msra.mxu0 %v5427
        %5579 = vmatpush.msra.mxu0 %v5426
        %5580 = vmatpush.msra.mxu0 %v5425
        %5581 = vmatmul.f32.gmra.mxu0 %v5387
        %v5582 = vpop.f32.mrf.mxu0
        %v5583 = vadd.f32 %v5563, %v5582
        %5584 = vdwg.mxu0
        %5585 = vmatpush.msra.mxu0 %v5456
        %5586 = vmatpush.msra.mxu0 %v5455
        %5587 = vmatpush.msra.mxu0 %v5454
        %5588 = vmatpush.msra.mxu0 %v5453
        %5589 = vmatpush.msra.mxu0 %v5452
        %5590 = vmatpush.msra.mxu0 %v5451
        %5591 = vmatpush.msra.mxu0 %v5450
        %5592 = vmatpush.msra.mxu0 %v5449
        %5593 = vmatpush.msra.mxu0 %v5448
        %5594 = vmatpush.msra.mxu0 %v5447
        %5595 = vmatpush.msra.mxu0 %v5446
        %5596 = vmatpush.msra.mxu0 %v5445
        %5597 = vmatpush.msra.mxu0 %v5444
        %5598 = vmatpush.msra.mxu0 %v5443
        %5599 = vmatpush.msra.mxu0 %v5442
        %5600 = vmatpush.msra.mxu0 %v5441
        %5601 = vmatmul.f32.gmra.mxu0 %v5388
        %v5602 = vpop.f32.mrf.mxu0
        %v5603 = vadd.f32 %v5583, %v5602
        %5604 = vdwg.mxu0
        %5605 = vmatpush.msra.mxu0 %v5472
        %5606 = vmatpush.msra.mxu0 %v5471
        %5607 = vmatpush.msra.mxu0 %v5470
        %5608 = vmatpush.msra.mxu0 %v5469
        %5609 = vmatpush.msra.mxu0 %v5468
        %5610 = vmatpush.msra.mxu0 %v5467
        %5611 = vmatpush.msra.mxu0 %v5466
        %5612 = vmatpush.msra.mxu0 %v5465
        %5613 = vmatpush.msra.mxu0 %v5464
        %5614 = vmatpush.msra.mxu0 %v5463
        %5615 = vmatpush.msra.mxu0 %v5462
        %5616 = vmatpush.msra.mxu0 %v5461
        %5617 = vmatpush.msra.mxu0 %v5460
        %5618 = vmatpush.msra.mxu0 %v5459
        %5619 = vmatpush.msra.mxu0 %v5458
        %5620 = vmatpush.msra.mxu0 %v5457
        %5621 = vmatmul.f32.gmra.mxu0 %v5389
        %v5622 = vpop.f32.mrf.mxu0
        %v5623 = vadd.f32 %v5603, %v5622
        %5624 = vdwg.mxu0
        %5625 = vmatpush.msra.mxu0 %v5488
        %5626 = vmatpush.msra.mxu0 %v5487
        %5627 = vmatpush.msra.mxu0 %v5486
        %5628 = vmatpush.msra.mxu0 %v5485
        %5629 = vmatpush.msra.mxu0 %v5484
        %5630 = vmatpush.msra.mxu0 %v5483
        %5631 = vmatpush.msra.mxu0 %v5482
        %5632 = vmatpush.msra.mxu0 %v5481
        %5633 = vmatpush.msra.mxu0 %v5480
        %5634 = vmatpush.msra.mxu0 %v5479
        %5635 = vmatpush.msra.mxu0 %v5478
        %5636 = vmatpush.msra.mxu0 %v5477
        %5637 = vmatpush.msra.mxu0 %v5476
        %5638 = vmatpush.msra.mxu0 %v5475
        %5639 = vmatpush.msra.mxu0 %v5474
        %5640 = vmatpush.msra.mxu0 %v5473
        %5641 = vmatmul.f32.gmra.mxu0 %v5390
        %v5642 = vpop.f32.mrf.mxu0
        %v5643 = vadd.f32 %v5623, %v5642
        %5644 = vdwg.mxu0
        %5645 = vmatpush.msra.mxu0 %v5504
        %5646 = vmatpush.msra.mxu0 %v5503
        %5647 = vmatpush.msra.mxu0 %v5502
        %5648 = vmatpush.msra.mxu0 %v5501
        %5649 = vmatpush.msra.mxu0 %v5500
        %5650 = vmatpush.msra.mxu0 %v5499
        %5651 = vmatpush.msra.mxu0 %v5498
        %5652 = vmatpush.msra.mxu0 %v5497
        %5653 = vmatpush.msra.mxu0 %v5496
        %5654 = vmatpush.msra.mxu0 %v5495
        %5655 = vmatpush.msra.mxu0 %v5494
        %5656 = vmatpush.msra.mxu0 %v5493
        %5657 = vmatpush.msra.mxu0 %v5492
        %5658 = vmatpush.msra.mxu0 %v5491
        %5659 = vmatpush.msra.mxu0 %v5490
        %5660 = vmatpush.msra.mxu0 %v5489
        %5661 = vmatmul.f32.gmra.mxu0 %v5391
        %v5662 = vpop.f32.mrf.mxu0
        %v5663 = vadd.f32 %v5643, %v5662
        %5664 = vdwg.mxu0
        %5665 = vmatpush.msra.mxu0 %v5520
        %5666 = vmatpush.msra.mxu0 %v5519
        %5667 = vmatpush.msra.mxu0 %v5518
        %5668 = vmatpush.msra.mxu0 %v5517
        %5669 = vmatpush.msra.mxu0 %v5516
        %5670 = vmatpush.msra.mxu0 %v5515
        %5671 = vmatpush.msra.mxu0 %v5514
        %5672 = vmatpush.msra.mxu0 %v5513
        %5673 = vmatpush.msra.mxu0 %v5512
        %5674 = vmatpush.msra.mxu0 %v5511
        %5675 = vmatpush.msra.mxu0 %v5510
        %5676 = vmatpush.msra.mxu0 %v5509
        %5677 = vmatpush.msra.mxu0 %v5508
        %5678 = vmatpush.msra.mxu0 %v5507
        %5679 = vmatpush.msra.mxu0 %v5506
        %5680 = vmatpush.msra.mxu0 %v5505
        %5681 = vmatmul.f32.gmra.mxu0 %v5392
        %v5682 = vpop.f32.mrf.mxu0
        %v5683 = vadd.f32 %v5663, %v5682
        %5684 = vdwg.mxu0
        %5685 = vst [vmem:[%s1685] sm:$0xff] %v5683
        %s5686 = sand.u32 %s900, 1
        %s5687 = scalar_lea.sflag [#allocation4], %s5686
        %s5688 = sand.u32 %s900, 1
        %s5689 = smul.addr %s5688, 8
        %s5690 = scalar_lea.vmem [#allocation59], %s5689
        // Predicated region
        $region317: #{tpu_custom_call.1} parent=167 // pred_check
          %p5691 = pneg %p910
        $region318: #{tpu_custom_call.1} parent=167 // pred_check_branch
          %5693 = sbr.rel (%p5691) target = $region320
        $region319: #{tpu_custom_call.1} parent=167 // pred_region
          %5695 = vsyncadd %s5687, 0
          %s5696 = smul.addr %s110, 8
          %s5697 = scalar_lea.hbm %s75, %s5696
          %s5699 = sshll.u32 %s5690, 4
          %s5700 = int_to_ptr.vmem [resolvable:$true] %s5699
          %s5701 = sshll.u32 %s5697, 4
          %s5702 = int_to_ptr.hbm [resolvable:$true] %s5701
          %5704 = dma.vmem_to_hbm [thread:$0]  %s5700, 128, %s5702, %s5687
        $region320: #{tpu_custom_call.1} parent=167 // pred_fallthru
          _
      $region168: #{tpu_custom_call.1} parent=5 // pred_fallthru
        _
      %p5705 = scmp.le.s32.totalorder 2, %s105
      // Predicated region
      $region321: #{tpu_custom_call.1} parent=5 // pred_check
        %p5706 = pneg %p5705
      $region322: #{tpu_custom_call.1} parent=5 // pred_check_branch
        %5708 = sbr.rel (%p5706) target = $region324
      $region323: #{tpu_custom_call.1} parent=5 // pred_region
        %s5709 = ssub.s32 %s105, 2
        // Predicated region
        $region325: #{tpu_custom_call.1} parent=323 // pred_check
          %p5710 = pneg %p916
        $region326: #{tpu_custom_call.1} parent=323 // pred_check_branch
          %5712 = sbr.rel (%p5710) target = $region328
        $region327: #{tpu_custom_call.1} parent=323 // pred_region
          %s5713 = sand.u32 %s901, 1
          %s5714 = scalar_lea.sflag [#allocation4], %s5713
          %s5715 = sand.u32 %s901, 1
          %s5716 = smul.addr %s5715, 8
          %s5717 = scalar_lea.vmem [#allocation59], %s5716
          %5719 = dma.done %s5714, 128
        $region328: #{tpu_custom_call.1} parent=323 // pred_fallthru
          _
      $region324: #{tpu_custom_call.1} parent=5 // pred_fallthru
        _
    $region6: #{tpu_custom_call.1} parent=1 // loop_footer
      %s109 = sadd.s32 1, %s105
    $region7: #{tpu_custom_call.1} parent=1 // loop_footer_branch
      %104 = sbr.rel target = $region3
    $region8: #{tpu_custom_call.1} parent=1 // loop_exit
      _
    %5720 = vsyncpa [#allocation3], 1
    %s5721 = scalar_lea.sflag [#allocation3], 1
    %5722 = vsyncpa %s5721, 1
    %5723 = vsyncpa [#allocation6], 1
    %5724 = vsyncpa [#allocation9], 1
    %5725 = vsyncpa [#allocation12], 1
    %5726 = vsyncpa [#allocation15], 1
    %5727 = vsyncpa [#allocation18], 1
    %5728 = vsyncpa [#allocation21], 1
    %5729 = vsyncpa [#allocation24], 1
    %5730 = vsyncpa [#allocation27], 1
    %5731 = vsyncpa [#allocation30], 1
    %5732 = vsyncpa [#allocation33], 1
    %5733 = vsyncpa [#allocation36], 1
    %5734 = vsyncpa [#allocation39], 1
    %5735 = vsyncpa [#allocation42], 1
    %5736 = vsyncpa [#allocation45], 1
    %5737 = vsyncpa [#allocation48], 1
    %5738 = vsyncpa [#allocation51], 1
    %5739 = vsyncpa [#allocation54], 1
    %5740 = vsyncpa [#allocation57], 1
    %5741 = vsyncpa [#allocation4], 1
    %s5742 = scalar_lea.sflag [#allocation4], 1
    %5743 = vsyncpa %s5742, 1

</llo_original>
